<compile_context>
chip_gen: v7x
topology: tpu7x:2x2x1
jax: 0.10.0
libtpu: 0.0.40
codegen_flags: <defaults>
</compile_context>

<pallas_src>
import math
import functools

import numpy as np
import jax
import jax.numpy as jnp
from jax import lax
from jax.experimental import pallas as pl
from jax.experimental.pallas import tpu as pltpu


def _edm_accum_kernel(coef_ref, x_ref, n_ref, out_ref, *, C, T, TBc,
                      w_const, b_const):
    """Single grid step; walks all T timesteps in TBc-row sub-chunks.

    coef_ref : (T, 8)  f32  per-timestep scalars (resident):
               col0=sigma col1=c_skip col2=c_out*c_in col3=c_out
               col4=weight col5=weight*c_out (cols 6,7 padding)
    x_ref    : (C, 1, HW)  f32   clean transformed image (resident)
    n_ref    : (C, T, HW)  bf16  gaussian noise, all timesteps (resident)
    out_ref  : ((C+1)*TBc, HW) f32 lane-dense partials:
               rows [0:TBc)               -> A partials  (sum_ch w_t*g^2)
               rows [(1+ch)*TBc:(2+ch)*TBc) -> B[ch] partials (w_t*c_out_t*g[ch])
    Final scalar A and per-channel B are reduced in the wrapper.
    """
    HW = out_ref.shape[1]
    n_chunks = T // TBc
    zero = jnp.zeros((TBc, HW), jnp.float32)

    def chunk_body(i, carry):
        a_acc, b_acc = carry
        off = pl.multiple_of(i * TBc, TBc)

        sig = coef_ref[pl.ds(off, TBc), 0:1]      # (TBc, 1)
        cskip = coef_ref[pl.ds(off, TBc), 1:2]
        amix = coef_ref[pl.ds(off, TBc), 2:3]     # c_out * c_in
        cout = coef_ref[pl.ds(off, TBc), 3:4]
        wA = coef_ref[pl.ds(off, TBc), 4:5]       # weight_t
        wB = coef_ref[pl.ds(off, TBc), 5:6]       # weight_t * c_out_t

        # Per-channel noised slabs (TBc, HW): bf16 noise upcast on load, x
        # broadcasts over sublanes, sigma over lanes.
        noised = [x_ref[c] + n_ref[c, pl.ds(off, TBc), :].astype(jnp.float32) * sig
                  for c in range(C)]

        b_new = []
        for o in range(C):
            # Synthetic 1x1-conv channel mix on the VPU — contraction dim C=4 is
            # far too small for the MXU, and the weights are frozen constants.
            mix = w_const[o][0] * noised[0]
            for c in range(1, C):
                mix = mix + w_const[o][c] * noised[c]
            g = cskip * noised[o] - x_ref[o] + amix * mix + cout * b_const[o]
            a_acc = a_acc + wA * (g * g)
            b_new.append(b_acc[o] + wB * g)
        return a_acc, tuple(b_new)

    a_acc, b_acc = lax.fori_loop(
        0, n_chunks, chunk_body,
        (zero, tuple(zero for _ in range(C))),
        unroll=True)

    # One-time, unmasked full-lane slab stores (no RMW, no masked vst).
    out_ref[0:TBc, :] = a_acc
    for o in range(C):
        out_ref[(1 + o) * TBc:(2 + o) * TBc, :] = b_acc[o]


class EDMEulerIntegralWrapedPallas:
    """JAX/Pallas re-implementation of EDMEulerIntegralWraped.forward (batch=1)."""

    def __init__(self, num_classes=3, channels=4, image_size=16,
                 num_timesteps=128, P_mean=-1.2, P_std=1.2, sigma_data=0.5,
                 tile_t=8, seed=0):
        assert num_timesteps % tile_t == 0
        assert tile_t % 8 == 0                    # sublane-aligned sub-chunks
        self.C = channels
        self.HW = image_size * image_size
        self.T = num_timesteps
        self.TBc = tile_t                         # in-kernel sub-chunk (sublanes)
        self.num_classes = num_classes
        self.sigma_data = float(sigma_data)
        self.inv_chw = 1.0 / float(channels * self.HW)

        # --- reset_param (formulas copied verbatim from the PyTorch module,
        #     including the original operator precedence in p_x) ---
        timesteps = jnp.linspace(0.0001, 3.0, num_timesteps + 1, dtype=jnp.float32)
        ts = timesteps[:-1]
        dt = timesteps[1:] - timesteps[:-1]
        p_x = (1.0 / (ts * P_std * math.sqrt(2.0 * math.pi))
               * jnp.exp(-(jnp.log(ts) - P_mean) ** 2 / 2 * P_std ** 2))
        sd = self.sigma_data
        weight = (ts ** 2 + sd ** 2) / (ts * sd) ** 2 * p_x * dt

        denom = ts ** 2 + sd ** 2
        c_skip = sd ** 2 / denom
        c_out = ts * sd / jnp.sqrt(denom)
        c_in = 1.0 / jnp.sqrt(denom)

        self.ts = ts
        self.weight = weight

        # Per-timestep coefficient table, (T, 8) f32, resident in VMEM.
        self.coef = jnp.stack(
            [ts, c_skip, c_out * c_in, c_out, weight, weight * c_out,
             jnp.zeros_like(ts), jnp.zeros_like(ts)], axis=1).astype(jnp.float32)

        # --- deterministic synthetic UNet parameters & noise ---
        key = jax.random.PRNGKey(seed)
        k_w, k_b, k_e, k_n = jax.random.split(key, 4)
        wc = (jnp.eye(channels, dtype=jnp.float32)
              + 0.05 * jax.random.normal(k_w, (channels, channels), jnp.float32))
        b = 0.05 * jax.random.normal(k_b, (channels,), jnp.float32)
        self.emb = 0.1 * jax.random.normal(k_e, (channels, num_classes), jnp.float32)
        self.wc = wc
        self.b = b
        # Frozen (eval-mode) synthetic weights baked as compile-time constants.
        self._w_const = tuple(tuple(float(v) for v in row) for row in np.asarray(wc))
        self._b_const = tuple(float(v) for v in np.asarray(b))

        # One fixed gaussian draw per timestep, stored bf16 (halves the dominant
        # HBM stream); the reference uses the same bf16-quantized values.
        noise = jax.random.normal(k_n, (channels, self.T, self.HW), jnp.float32)
        self.noise = noise.astype(jnp.bfloat16)

        # Class-dependent constant of the factorized loss:
        #   loss_c = inv_chw*(A + 2*emb_c·B) + K_c,
        #   K_c    = inv_chw * (sum_ch emb[ch,c]^2) * HW * sum_t w_t*c_out_t^2
        D = float(self.HW) * jnp.sum(weight * c_out ** 2)
        self.k_class = self.inv_chw * D * jnp.sum(self.emb ** 2, axis=0)

        self._call = jax.jit(self._forward_impl)

    def _forward_impl(self, x):
        C, HW, T, TBc = self.C, self.HW, self.T, self.TBc

        now_x = (x - 0.5) * 2.0                     # transform: [0,1] -> [-1,1]
        x3 = now_x[0].reshape(C, 1, HW)

        kern = functools.partial(_edm_accum_kernel, C=C, T=T, TBc=TBc,
                                 w_const=self._w_const, b_const=self._b_const)

        out = pl.pallas_call(
            kern,
            out_shape=jax.ShapeDtypeStruct(((C + 1) * TBc, HW), jnp.float32),
            grid_spec=pltpu.PrefetchScalarGridSpec(
                num_scalar_prefetch=0,
                grid=(1,),                                            # single step
                in_specs=[
                    pl.BlockSpec((T, 8), lambda t: (0, 0)),           # coef table
                    pl.BlockSpec((C, 1, HW), lambda t: (0, 0, 0)),    # clean image
                    pl.BlockSpec((C, T, HW), lambda t: (0, 0, 0)),    # noise (bf16)
                ],
                out_specs=pl.BlockSpec(((C + 1) * TBc, HW), lambda t: (0, 0)),
            ),
            compiler_params=pltpu.CompilerParams(
                dimension_semantics=("arbitrary",)),
        )(self.coef, x3, self.noise)

        # Final reductions + per-class combination (done where the output is
        # already read; summation order differs from the kernel-side reduce but
        # stays well within tolerance).
        A = jnp.sum(out[0:TBc, :])
        B = jnp.sum(out[TBc:, :].reshape(C, TBc, HW), axis=(1, 2))   # (C,)
        cross = self.emb.T @ B                                       # (num_classes,)
        logits = -(self.inv_chw * (A + 2.0 * cross) + self.k_class)
        return logits[None, :]                                       # (1, num_classes)

    def __call__(self, x):
        assert x.shape[0] == 1, "batch size should be 1"
        return self._call(x)

    # Pure-JAX reference of the same synthetic model (verification only).
    def reference(self, x):
        C, HW = self.C, self.HW
        now_x = (x - 0.5) * 2.0
        xflat = now_x[0].reshape(C, HW)                              # (C, HW)
        sig = self.ts[:, None, None]                                 # (T,1,1)
        noise = jnp.transpose(self.noise.astype(jnp.float32), (1, 0, 2))  # (T,C,HW)
        noised = xflat[None] + noise * sig
        sd = self.sigma_data
        denom = sig * sig + sd * sd
        c_skip = sd * sd / denom
        c_out = sig * sd / jnp.sqrt(denom)
        c_in = 1.0 / jnp.sqrt(denom)
        f = jnp.einsum('oc,tch->toh', self.wc, c_in * noised) + self.b[None, :, None]
        logits = []
        for c in range(self.num_classes):
            pre = c_skip * noised + c_out * (f + self.emb[:, c][None, :, None])
            err = jnp.mean((pre - xflat[None]) ** 2, axis=(1, 2))
            logits.append(-jnp.sum(self.weight * err))
        return jnp.stack(logits)[None, :]


if __name__ == "__main__":
    model = EDMEulerIntegralWrapedPallas(num_classes=3, channels=4, image_size=16,
                                         num_timesteps=128, tile_t=8, seed=0)

    key = jax.random.PRNGKey(0)
    x = jax.random.uniform(key, (1, 4, 16, 16), dtype=jnp.float32)   # image in [0,1]

    logits = jax.block_until_ready(model(x))

    ref = model.reference(x)
    assert logits.shape == (1, 3), logits.shape
    assert bool(jnp.all(jnp.isfinite(logits)))
    assert jnp.allclose(logits, ref, rtol=1e-3, atol=1e-3), (logits, ref)

    print("KERNEL_OK")
</pallas_src>

<mosaic_0001>
module attributes {stable_mosaic.version = 11 : i64} {
  func.func @_edm_accum_kernel(%arg0: i32, %arg1: memref<128x8xf32, #tpu.memory_space<vmem>>, %arg2: memref<4x1x256xf32, #tpu.memory_space<vmem>>, %arg3: memref<4x128x256xbf16, #tpu.memory_space<vmem>>, %arg4: memref<40x256xf32, #tpu.memory_space<vmem>>) attributes {dimension_semantics = [#tpu.dimension_semantics<arbitrary>], iteration_bounds = array<i64: 1>, scalar_prefetch = 0 : i64, scratch_operands = 0 : i64, tpu.core_type = #tpu.core_type<tc>, window_params = [{pipeline_mode = #tpu.pipeline_mode<synchronous>, transform_indices = @transform_0, window_bounds = array<i64: 128, 8>}, {pipeline_mode = #tpu.pipeline_mode<synchronous>, transform_indices = @transform_1, window_bounds = array<i64: 4, 1, 256>}, {pipeline_mode = #tpu.pipeline_mode<synchronous>, transform_indices = @transform_2, window_bounds = array<i64: 4, 128, 256>}, {pipeline_mode = #tpu.pipeline_mode<synchronous>, transform_indices = @transform_3, window_bounds = array<i64: 40, 256>}]} {
    %cst = arith.constant 0.000000e+00 : f32
    %0 = vector.broadcast %cst : f32 to vector<8x256xf32>
    %c0_i32 = arith.constant 0 : i32
    %c8_i32 = arith.constant 8 : i32
    %1 = arith.muli %c0_i32, %c8_i32 : i32
    %2 = tpu.assume_multiple %1, 8 : i32
    %3 = arith.index_cast %2 : i32 to index
    %c0 = arith.constant 0 : index
    %4 = vector.load %arg1[%3, %c0] : memref<128x8xf32, #tpu.memory_space<vmem>>, vector<8x1xf32>
    %5 = arith.index_cast %2 : i32 to index
    %c1 = arith.constant 1 : index
    %6 = vector.load %arg1[%5, %c1] : memref<128x8xf32, #tpu.memory_space<vmem>>, vector<8x1xf32>
    %7 = arith.index_cast %2 : i32 to index
    %c2 = arith.constant 2 : index
    %8 = vector.load %arg1[%7, %c2] : memref<128x8xf32, #tpu.memory_space<vmem>>, vector<8x1xf32>
    %9 = arith.index_cast %2 : i32 to index
    %c3 = arith.constant 3 : index
    %10 = vector.load %arg1[%9, %c3] : memref<128x8xf32, #tpu.memory_space<vmem>>, vector<8x1xf32>
    %11 = arith.index_cast %2 : i32 to index
    %c4 = arith.constant 4 : index
    %12 = vector.load %arg1[%11, %c4] : memref<128x8xf32, #tpu.memory_space<vmem>>, vector<8x1xf32>
    %13 = arith.index_cast %2 : i32 to index
    %c5 = arith.constant 5 : index
    %14 = vector.load %arg1[%13, %c5] : memref<128x8xf32, #tpu.memory_space<vmem>>, vector<8x1xf32>
    %c0_0 = arith.constant 0 : index
    %c0_1 = arith.constant 0 : index
    %c0_2 = arith.constant 0 : index
    %15 = vector.load %arg2[%c0_0, %c0_1, %c0_2] : memref<4x1x256xf32, #tpu.memory_space<vmem>>, vector<1x1x256xf32>
    %16 = vector.shape_cast %15 : vector<1x1x256xf32> to vector<1x256xf32>
    %c0_3 = arith.constant 0 : index
    %17 = arith.index_cast %2 : i32 to index
    %c0_4 = arith.constant 0 : index
    %18 = vector.load %arg3[%c0_3, %17, %c0_4] : memref<4x128x256xbf16, #tpu.memory_space<vmem>>, vector<1x8x256xbf16>
    %19 = vector.shape_cast %18 : vector<1x8x256xbf16> to vector<8x256xbf16>
    %20 = arith.extf %19 : vector<8x256xbf16> to vector<8x256xf32>
    %21 = vector.broadcast %4 : vector<8x1xf32> to vector<8x256xf32>
    %22 = arith.mulf %20, %21 : vector<8x256xf32>
    %23 = vector.broadcast %16 : vector<1x256xf32> to vector<8x256xf32>
    %24 = arith.addf %23, %22 : vector<8x256xf32>
    %c1_5 = arith.constant 1 : index
    %c0_6 = arith.constant 0 : index
    %c0_7 = arith.constant 0 : index
    %25 = vector.load %arg2[%c1_5, %c0_6, %c0_7] : memref<4x1x256xf32, #tpu.memory_space<vmem>>, vector<1x1x256xf32>
    %26 = vector.shape_cast %25 : vector<1x1x256xf32> to vector<1x256xf32>
    %c1_8 = arith.constant 1 : index
    %27 = arith.index_cast %2 : i32 to index
    %c0_9 = arith.constant 0 : index
    %28 = vector.load %arg3[%c1_8, %27, %c0_9] : memref<4x128x256xbf16, #tpu.memory_space<vmem>>, vector<1x8x256xbf16>
    %29 = vector.shape_cast %28 : vector<1x8x256xbf16> to vector<8x256xbf16>
    %30 = arith.extf %29 : vector<8x256xbf16> to vector<8x256xf32>
    %31 = vector.broadcast %4 : vector<8x1xf32> to vector<8x256xf32>
    %32 = arith.mulf %30, %31 : vector<8x256xf32>
    %33 = vector.broadcast %26 : vector<1x256xf32> to vector<8x256xf32>
    %34 = arith.addf %33, %32 : vector<8x256xf32>
    %c2_10 = arith.constant 2 : index
    %c0_11 = arith.constant 0 : index
    %c0_12 = arith.constant 0 : index
    %35 = vector.load %arg2[%c2_10, %c0_11, %c0_12] : memref<4x1x256xf32, #tpu.memory_space<vmem>>, vector<1x1x256xf32>
    %36 = vector.shape_cast %35 : vector<1x1x256xf32> to vector<1x256xf32>
    %c2_13 = arith.constant 2 : index
    %37 = arith.index_cast %2 : i32 to index
    %c0_14 = arith.constant 0 : index
    %38 = vector.load %arg3[%c2_13, %37, %c0_14] : memref<4x128x256xbf16, #tpu.memory_space<vmem>>, vector<1x8x256xbf16>
    %39 = vector.shape_cast %38 : vector<1x8x256xbf16> to vector<8x256xbf16>
    %40 = arith.extf %39 : vector<8x256xbf16> to vector<8x256xf32>
    %41 = vector.broadcast %4 : vector<8x1xf32> to vector<8x256xf32>
    %42 = arith.mulf %40, %41 : vector<8x256xf32>
    %43 = vector.broadcast %36 : vector<1x256xf32> to vector<8x256xf32>
    %44 = arith.addf %43, %42 : vector<8x256xf32>
    %c3_15 = arith.constant 3 : index
    %c0_16 = arith.constant 0 : index
    %c0_17 = arith.constant 0 : index
    %45 = vector.load %arg2[%c3_15, %c0_16, %c0_17] : memref<4x1x256xf32, #tpu.memory_space<vmem>>, vector<1x1x256xf32>
    %46 = vector.shape_cast %45 : vector<1x1x256xf32> to vector<1x256xf32>
    %c3_18 = arith.constant 3 : index
    %47 = arith.index_cast %2 : i32 to index
    %c0_19 = arith.constant 0 : index
    %48 = vector.load %arg3[%c3_18, %47, %c0_19] : memref<4x128x256xbf16, #tpu.memory_space<vmem>>, vector<1x8x256xbf16>
    %49 = vector.shape_cast %48 : vector<1x8x256xbf16> to vector<8x256xbf16>
    %50 = arith.extf %49 : vector<8x256xbf16> to vector<8x256xf32>
    %51 = vector.broadcast %4 : vector<8x1xf32> to vector<8x256xf32>
    %52 = arith.mulf %50, %51 : vector<8x256xf32>
    %53 = vector.broadcast %46 : vector<1x256xf32> to vector<8x256xf32>
    %54 = arith.addf %53, %52 : vector<8x256xf32>
    %cst_20 = arith.constant 1.0502007 : f32
    %55 = vector.broadcast %cst_20 : f32 to vector<8x256xf32>
    %56 = arith.mulf %55, %24 : vector<8x256xf32>
    %cst_21 = arith.constant -0.0453168601 : f32
    %57 = vector.broadcast %cst_21 : f32 to vector<8x256xf32>
    %58 = arith.mulf %57, %34 : vector<8x256xf32>
    %59 = arith.addf %56, %58 : vector<8x256xf32>
    %cst_22 = arith.constant -0.0374086127 : f32
    %60 = vector.broadcast %cst_22 : f32 to vector<8x256xf32>
    %61 = arith.mulf %60, %44 : vector<8x256xf32>
    %62 = arith.addf %59, %61 : vector<8x256xf32>
    %cst_23 = arith.constant -0.0585683472 : f32
    %63 = vector.broadcast %cst_23 : f32 to vector<8x256xf32>
    %64 = arith.mulf %63, %54 : vector<8x256xf32>
    %65 = arith.addf %62, %64 : vector<8x256xf32>
    %66 = vector.broadcast %6 : vector<8x1xf32> to vector<8x256xf32>
    %67 = arith.mulf %66, %24 : vector<8x256xf32>
    %c0_24 = arith.constant 0 : index
    %c0_25 = arith.constant 0 : index
    %c0_26 = arith.constant 0 : index
    %68 = vector.load %arg2[%c0_24, %c0_25, %c0_26] : memref<4x1x256xf32, #tpu.memory_space<vmem>>, vector<1x1x256xf32>
    %69 = vector.shape_cast %68 : vector<1x1x256xf32> to vector<1x256xf32>
    %70 = vector.broadcast %69 : vector<1x256xf32> to vector<8x256xf32>
    %71 = arith.subf %67, %70 : vector<8x256xf32>
    %72 = vector.broadcast %8 : vector<8x1xf32> to vector<8x256xf32>
    %73 = arith.mulf %72, %65 : vector<8x256xf32>
    %74 = arith.addf %71, %73 : vector<8x256xf32>
    %cst_27 = arith.constant -0.122122787 : f32
    %75 = vector.broadcast %cst_27 : f32 to vector<8x1xf32>
    %76 = arith.mulf %10, %75 : vector<8x1xf32>
    %77 = vector.broadcast %76 : vector<8x1xf32> to vector<8x256xf32>
    %78 = arith.addf %74, %77 : vector<8x256xf32>
    %79 = arith.mulf %78, %78 : vector<8x256xf32>
    %80 = vector.broadcast %12 : vector<8x1xf32> to vector<8x256xf32>
    %81 = arith.mulf %80, %79 : vector<8x256xf32>
    %82 = arith.addf %0, %81 : vector<8x256xf32>
    %83 = vector.broadcast %14 : vector<8x1xf32> to vector<8x256xf32>
    %84 = arith.mulf %83, %78 : vector<8x256xf32>
    %85 = arith.addf %0, %84 : vector<8x256xf32>
    %cst_28 = arith.constant -0.0435616411 : f32
    %86 = vector.broadcast %cst_28 : f32 to vector<8x256xf32>
    %87 = arith.mulf %86, %24 : vector<8x256xf32>
    %cst_29 = arith.constant 1.02944195 : f32
    %88 = vector.broadcast %cst_29 : f32 to vector<8x256xf32>
    %89 = arith.mulf %88, %34 : vector<8x256xf32>
    %90 = arith.addf %87, %89 : vector<8x256xf32>
    %cst_30 = arith.constant 0.0361964963 : f32
    %91 = vector.broadcast %cst_30 : f32 to vector<8x256xf32>
    %92 = arith.mulf %91, %44 : vector<8x256xf32>
    %93 = arith.addf %90, %92 : vector<8x256xf32>
    %cst_31 = arith.constant -0.0512799099 : f32
    %94 = vector.broadcast %cst_31 : f32 to vector<8x256xf32>
    %95 = arith.mulf %94, %54 : vector<8x256xf32>
    %96 = arith.addf %93, %95 : vector<8x256xf32>
    %97 = vector.broadcast %6 : vector<8x1xf32> to vector<8x256xf32>
    %98 = arith.mulf %97, %34 : vector<8x256xf32>
    %c1_32 = arith.constant 1 : index
    %c0_33 = arith.constant 0 : index
    %c0_34 = arith.constant 0 : index
    %99 = vector.load %arg2[%c1_32, %c0_33, %c0_34] : memref<4x1x256xf32, #tpu.memory_space<vmem>>, vector<1x1x256xf32>
    %100 = vector.shape_cast %99 : vector<1x1x256xf32> to vector<1x256xf32>
    %101 = vector.broadcast %100 : vector<1x256xf32> to vector<8x256xf32>
    %102 = arith.subf %98, %101 : vector<8x256xf32>
    %103 = vector.broadcast %8 : vector<8x1xf32> to vector<8x256xf32>
    %104 = arith.mulf %103, %96 : vector<8x256xf32>
    %105 = arith.addf %102, %104 : vector<8x256xf32>
    %cst_35 = arith.constant -0.101784028 : f32
    %106 = vector.broadcast %cst_35 : f32 to vector<8x1xf32>
    %107 = arith.mulf %10, %106 : vector<8x1xf32>
    %108 = vector.broadcast %107 : vector<8x1xf32> to vector<8x256xf32>
    %109 = arith.addf %105, %108 : vector<8x256xf32>
    %110 = arith.mulf %109, %109 : vector<8x256xf32>
    %111 = vector.broadcast %12 : vector<8x1xf32> to vector<8x256xf32>
    %112 = arith.mulf %111, %110 : vector<8x256xf32>
    %113 = arith.addf %82, %112 : vector<8x256xf32>
    %114 = vector.broadcast %14 : vector<8x1xf32> to vector<8x256xf32>
    %115 = arith.mulf %114, %109 : vector<8x256xf32>
    %116 = arith.addf %0, %115 : vector<8x256xf32>
    %cst_36 = arith.constant 8.308140e-02 : f32
    %117 = vector.broadcast %cst_36 : f32 to vector<8x256xf32>
    %118 = arith.mulf %117, %24 : vector<8x256xf32>
    %cst_37 = arith.constant -0.0945512577 : f32
    %119 = vector.broadcast %cst_37 : f32 to vector<8x256xf32>
    %120 = arith.mulf %119, %34 : vector<8x256xf32>
    %121 = arith.addf %118, %120 : vector<8x256xf32>
    %cst_38 = arith.constant 0.935553312 : f32
    %122 = vector.broadcast %cst_38 : f32 to vector<8x256xf32>
    %123 = arith.mulf %122, %44 : vector<8x256xf32>
    %124 = arith.addf %121, %123 : vector<8x256xf32>
    %cst_39 = arith.constant 0.00668034563 : f32
    %125 = vector.broadcast %cst_39 : f32 to vector<8x256xf32>
    %126 = arith.mulf %125, %54 : vector<8x256xf32>
    %127 = arith.addf %124, %126 : vector<8x256xf32>
    %128 = vector.broadcast %6 : vector<8x1xf32> to vector<8x256xf32>
    %129 = arith.mulf %128, %44 : vector<8x256xf32>
    %c2_40 = arith.constant 2 : index
    %c0_41 = arith.constant 0 : index
    %c0_42 = arith.constant 0 : index
    %130 = vector.load %arg2[%c2_40, %c0_41, %c0_42] : memref<4x1x256xf32, #tpu.memory_space<vmem>>, vector<1x1x256xf32>
    %131 = vector.shape_cast %130 : vector<1x1x256xf32> to vector<1x256xf32>
    %132 = vector.broadcast %131 : vector<1x256xf32> to vector<8x256xf32>
    %133 = arith.subf %129, %132 : vector<8x256xf32>
    %134 = vector.broadcast %8 : vector<8x1xf32> to vector<8x256xf32>
    %135 = arith.mulf %134, %127 : vector<8x256xf32>
    %136 = arith.addf %133, %135 : vector<8x256xf32>
    %cst_43 = arith.constant 0.0102772117 : f32
    %137 = vector.broadcast %cst_43 : f32 to vector<8x1xf32>
    %138 = arith.mulf %10, %137 : vector<8x1xf32>
    %139 = vector.broadcast %138 : vector<8x1xf32> to vector<8x256xf32>
    %140 = arith.addf %136, %139 : vector<8x256xf32>
    %141 = arith.mulf %140, %140 : vector<8x256xf32>
    %142 = vector.broadcast %12 : vector<8x1xf32> to vector<8x256xf32>
    %143 = arith.mulf %142, %141 : vector<8x256xf32>
    %144 = arith.addf %113, %143 : vector<8x256xf32>
    %145 = vector.broadcast %14 : vector<8x1xf32> to vector<8x256xf32>
    %146 = arith.mulf %145, %140 : vector<8x256xf32>
    %147 = arith.addf %0, %146 : vector<8x256xf32>
    %cst_44 = arith.constant -0.0576519631 : f32
    %148 = vector.broadcast %cst_44 : f32 to vector<8x256xf32>
    %149 = arith.mulf %148, %24 : vector<8x256xf32>
    %cst_45 = arith.constant 0.0119648147 : f32
    %150 = vector.broadcast %cst_45 : f32 to vector<8x256xf32>
    %151 = arith.mulf %150, %34 : vector<8x256xf32>
    %152 = arith.addf %149, %151 : vector<8x256xf32>
    %cst_46 = arith.constant 0.0872403681 : f32
    %153 = vector.broadcast %cst_46 : f32 to vector<8x256xf32>
    %154 = arith.mulf %153, %44 : vector<8x256xf32>
    %155 = arith.addf %152, %154 : vector<8x256xf32>
    %cst_47 = arith.constant 1.02525091 : f32
    %156 = vector.broadcast %cst_47 : f32 to vector<8x256xf32>
    %157 = arith.mulf %156, %54 : vector<8x256xf32>
    %158 = arith.addf %155, %157 : vector<8x256xf32>
    %159 = vector.broadcast %6 : vector<8x1xf32> to vector<8x256xf32>
    %160 = arith.mulf %159, %54 : vector<8x256xf32>
    %c3_48 = arith.constant 3 : index
    %c0_49 = arith.constant 0 : index
    %c0_50 = arith.constant 0 : index
    %161 = vector.load %arg2[%c3_48, %c0_49, %c0_50] : memref<4x1x256xf32, #tpu.memory_space<vmem>>, vector<1x1x256xf32>
    %162 = vector.shape_cast %161 : vector<1x1x256xf32> to vector<1x256xf32>
    %163 = vector.broadcast %162 : vector<1x256xf32> to vector<8x256xf32>
    %164 = arith.subf %160, %163 : vector<8x256xf32>
    %165 = vector.broadcast %8 : vector<8x1xf32> to vector<8x256xf32>
    %166 = arith.mulf %165, %158 : vector<8x256xf32>
    %167 = arith.addf %164, %166 : vector<8x256xf32>
    %cst_51 = arith.constant -0.0176775102 : f32
    %168 = vector.broadcast %cst_51 : f32 to vector<8x1xf32>
    %169 = arith.mulf %10, %168 : vector<8x1xf32>
    %170 = vector.broadcast %169 : vector<8x1xf32> to vector<8x256xf32>
    %171 = arith.addf %167, %170 : vector<8x256xf32>
    %172 = arith.mulf %171, %171 : vector<8x256xf32>
    %173 = vector.broadcast %12 : vector<8x1xf32> to vector<8x256xf32>
    %174 = arith.mulf %173, %172 : vector<8x256xf32>
    %175 = arith.addf %144, %174 : vector<8x256xf32>
    %176 = vector.broadcast %14 : vector<8x1xf32> to vector<8x256xf32>
    %177 = arith.mulf %176, %171 : vector<8x256xf32>
    %178 = arith.addf %0, %177 : vector<8x256xf32>
    %c1_i32 = arith.constant 1 : i32
    %c8_i32_52 = arith.constant 8 : i32
    %179 = arith.muli %c1_i32, %c8_i32_52 : i32
    %180 = tpu.assume_multiple %179, 8 : i32
    %181 = arith.index_cast %180 : i32 to index
    %c0_53 = arith.constant 0 : index
    %182 = vector.load %arg1[%181, %c0_53] : memref<128x8xf32, #tpu.memory_space<vmem>>, vector<8x1xf32>
    %183 = arith.index_cast %180 : i32 to index
    %c1_54 = arith.constant 1 : index
    %184 = vector.load %arg1[%183, %c1_54] : memref<128x8xf32, #tpu.memory_space<vmem>>, vector<8x1xf32>
    %185 = arith.index_cast %180 : i32 to index
    %c2_55 = arith.constant 2 : index
    %186 = vector.load %arg1[%185, %c2_55] : memref<128x8xf32, #tpu.memory_space<vmem>>, vector<8x1xf32>
    %187 = arith.index_cast %180 : i32 to index
    %c3_56 = arith.constant 3 : index
    %188 = vector.load %arg1[%187, %c3_56] : memref<128x8xf32, #tpu.memory_space<vmem>>, vector<8x1xf32>
    %189 = arith.index_cast %180 : i32 to index
    %c4_57 = arith.constant 4 : index
    %190 = vector.load %arg1[%189, %c4_57] : memref<128x8xf32, #tpu.memory_space<vmem>>, vector<8x1xf32>
    %191 = arith.index_cast %180 : i32 to index
    %c5_58 = arith.constant 5 : index
    %192 = vector.load %arg1[%191, %c5_58] : memref<128x8xf32, #tpu.memory_space<vmem>>, vector<8x1xf32>
    %c0_59 = arith.constant 0 : index
    %c0_60 = arith.constant 0 : index
    %c0_61 = arith.constant 0 : index
    %193 = vector.load %arg2[%c0_59, %c0_60, %c0_61] : memref<4x1x256xf32, #tpu.memory_space<vmem>>, vector<1x1x256xf32>
    %194 = vector.shape_cast %193 : vector<1x1x256xf32> to vector<1x256xf32>
    %c0_62 = arith.constant 0 : index
    %195 = arith.index_cast %180 : i32 to index
    %c0_63 = arith.constant 0 : index
    %196 = vector.load %arg3[%c0_62, %195, %c0_63] : memref<4x128x256xbf16, #tpu.memory_space<vmem>>, vector<1x8x256xbf16>
    %197 = vector.shape_cast %196 : vector<1x8x256xbf16> to vector<8x256xbf16>
    %198 = arith.extf %197 : vector<8x256xbf16> to vector<8x256xf32>
    %199 = vector.broadcast %182 : vector<8x1xf32> to vector<8x256xf32>
    %200 = arith.mulf %198, %199 : vector<8x256xf32>
    %201 = vector.broadcast %194 : vector<1x256xf32> to vector<8x256xf32>
    %202 = arith.addf %201, %200 : vector<8x256xf32>
    %c1_64 = arith.constant 1 : index
    %c0_65 = arith.constant 0 : index
    %c0_66 = arith.constant 0 : index
    %203 = vector.load %arg2[%c1_64, %c0_65, %c0_66] : memref<4x1x256xf32, #tpu.memory_space<vmem>>, vector<1x1x256xf32>
    %204 = vector.shape_cast %203 : vector<1x1x256xf32> to vector<1x256xf32>
    %c1_67 = arith.constant 1 : index
    %205 = arith.index_cast %180 : i32 to index
    %c0_68 = arith.constant 0 : index
    %206 = vector.load %arg3[%c1_67, %205, %c0_68] : memref<4x128x256xbf16, #tpu.memory_space<vmem>>, vector<1x8x256xbf16>
    %207 = vector.shape_cast %206 : vector<1x8x256xbf16> to vector<8x256xbf16>
    %208 = arith.extf %207 : vector<8x256xbf16> to vector<8x256xf32>
    %209 = vector.broadcast %182 : vector<8x1xf32> to vector<8x256xf32>
    %210 = arith.mulf %208, %209 : vector<8x256xf32>
    %211 = vector.broadcast %204 : vector<1x256xf32> to vector<8x256xf32>
    %212 = arith.addf %211, %210 : vector<8x256xf32>
    %c2_69 = arith.constant 2 : index
    %c0_70 = arith.constant 0 : index
    %c0_71 = arith.constant 0 : index
    %213 = vector.load %arg2[%c2_69, %c0_70, %c0_71] : memref<4x1x256xf32, #tpu.memory_space<vmem>>, vector<1x1x256xf32>
    %214 = vector.shape_cast %213 : vector<1x1x256xf32> to vector<1x256xf32>
    %c2_72 = arith.constant 2 : index
    %215 = arith.index_cast %180 : i32 to index
    %c0_73 = arith.constant 0 : index
    %216 = vector.load %arg3[%c2_72, %215, %c0_73] : memref<4x128x256xbf16, #tpu.memory_space<vmem>>, vector<1x8x256xbf16>
    %217 = vector.shape_cast %216 : vector<1x8x256xbf16> to vector<8x256xbf16>
    %218 = arith.extf %217 : vector<8x256xbf16> to vector<8x256xf32>
    %219 = vector.broadcast %182 : vector<8x1xf32> to vector<8x256xf32>
    %220 = arith.mulf %218, %219 : vector<8x256xf32>
    %221 = vector.broadcast %214 : vector<1x256xf32> to vector<8x256xf32>
    %222 = arith.addf %221, %220 : vector<8x256xf32>
    %c3_74 = arith.constant 3 : index
    %c0_75 = arith.constant 0 : index
    %c0_76 = arith.constant 0 : index
    %223 = vector.load %arg2[%c3_74, %c0_75, %c0_76] : memref<4x1x256xf32, #tpu.memory_space<vmem>>, vector<1x1x256xf32>
    %224 = vector.shape_cast %223 : vector<1x1x256xf32> to vector<1x256xf32>
    %c3_77 = arith.constant 3 : index
    %225 = arith.index_cast %180 : i32 to index
    %c0_78 = arith.constant 0 : index
    %226 = vector.load %arg3[%c3_77, %225, %c0_78] : memref<4x128x256xbf16, #tpu.memory_space<vmem>>, vector<1x8x256xbf16>
    %227 = vector.shape_cast %226 : vector<1x8x256xbf16> to vector<8x256xbf16>
    %228 = arith.extf %227 : vector<8x256xbf16> to vector<8x256xf32>
    %229 = vector.broadcast %182 : vector<8x1xf32> to vector<8x256xf32>
    %230 = arith.mulf %228, %229 : vector<8x256xf32>
    %231 = vector.broadcast %224 : vector<1x256xf32> to vector<8x256xf32>
    %232 = arith.addf %231, %230 : vector<8x256xf32>
    %cst_79 = arith.constant 1.0502007 : f32
    %233 = vector.broadcast %cst_79 : f32 to vector<8x256xf32>
    %234 = arith.mulf %233, %202 : vector<8x256xf32>
    %cst_80 = arith.constant -0.0453168601 : f32
    %235 = vector.broadcast %cst_80 : f32 to vector<8x256xf32>
    %236 = arith.mulf %235, %212 : vector<8x256xf32>
    %237 = arith.addf %234, %236 : vector<8x256xf32>
    %cst_81 = arith.constant -0.0374086127 : f32
    %238 = vector.broadcast %cst_81 : f32 to vector<8x256xf32>
    %239 = arith.mulf %238, %222 : vector<8x256xf32>
    %240 = arith.addf %237, %239 : vector<8x256xf32>
    %cst_82 = arith.constant -0.0585683472 : f32
    %241 = vector.broadcast %cst_82 : f32 to vector<8x256xf32>
    %242 = arith.mulf %241, %232 : vector<8x256xf32>
    %243 = arith.addf %240, %242 : vector<8x256xf32>
    %244 = vector.broadcast %184 : vector<8x1xf32> to vector<8x256xf32>
    %245 = arith.mulf %244, %202 : vector<8x256xf32>
    %c0_83 = arith.constant 0 : index
    %c0_84 = arith.constant 0 : index
    %c0_85 = arith.constant 0 : index
    %246 = vector.load %arg2[%c0_83, %c0_84, %c0_85] : memref<4x1x256xf32, #tpu.memory_space<vmem>>, vector<1x1x256xf32>
    %247 = vector.shape_cast %246 : vector<1x1x256xf32> to vector<1x256xf32>
    %248 = vector.broadcast %247 : vector<1x256xf32> to vector<8x256xf32>
    %249 = arith.subf %245, %248 : vector<8x256xf32>
    %250 = vector.broadcast %186 : vector<8x1xf32> to vector<8x256xf32>
    %251 = arith.mulf %250, %243 : vector<8x256xf32>
    %252 = arith.addf %249, %251 : vector<8x256xf32>
    %cst_86 = arith.constant -0.122122787 : f32
    %253 = vector.broadcast %cst_86 : f32 to vector<8x1xf32>
    %254 = arith.mulf %188, %253 : vector<8x1xf32>
    %255 = vector.broadcast %254 : vector<8x1xf32> to vector<8x256xf32>
    %256 = arith.addf %252, %255 : vector<8x256xf32>
    %257 = arith.mulf %256, %256 : vector<8x256xf32>
    %258 = vector.broadcast %190 : vector<8x1xf32> to vector<8x256xf32>
    %259 = arith.mulf %258, %257 : vector<8x256xf32>
    %260 = arith.addf %175, %259 : vector<8x256xf32>
    %261 = vector.broadcast %192 : vector<8x1xf32> to vector<8x256xf32>
    %262 = arith.mulf %261, %256 : vector<8x256xf32>
    %263 = arith.addf %85, %262 : vector<8x256xf32>
    %cst_87 = arith.constant -0.0435616411 : f32
    %264 = vector.broadcast %cst_87 : f32 to vector<8x256xf32>
    %265 = arith.mulf %264, %202 : vector<8x256xf32>
    %cst_88 = arith.constant 1.02944195 : f32
    %266 = vector.broadcast %cst_88 : f32 to vector<8x256xf32>
    %267 = arith.mulf %266, %212 : vector<8x256xf32>
    %268 = arith.addf %265, %267 : vector<8x256xf32>
    %cst_89 = arith.constant 0.0361964963 : f32
    %269 = vector.broadcast %cst_89 : f32 to vector<8x256xf32>
    %270 = arith.mulf %269, %222 : vector<8x256xf32>
    %271 = arith.addf %268, %270 : vector<8x256xf32>
    %cst_90 = arith.constant -0.0512799099 : f32
    %272 = vector.broadcast %cst_90 : f32 to vector<8x256xf32>
    %273 = arith.mulf %272, %232 : vector<8x256xf32>
    %274 = arith.addf %271, %273 : vector<8x256xf32>
    %275 = vector.broadcast %184 : vector<8x1xf32> to vector<8x256xf32>
    %276 = arith.mulf %275, %212 : vector<8x256xf32>
    %c1_91 = arith.constant 1 : index
    %c0_92 = arith.constant 0 : index
    %c0_93 = arith.constant 0 : index
    %277 = vector.load %arg2[%c1_91, %c0_92, %c0_93] : memref<4x1x256xf32, #tpu.memory_space<vmem>>, vector<1x1x256xf32>
    %278 = vector.shape_cast %277 : vector<1x1x256xf32> to vector<1x256xf32>
    %279 = vector.broadcast %278 : vector<1x256xf32> to vector<8x256xf32>
    %280 = arith.subf %276, %279 : vector<8x256xf32>
    %281 = vector.broadcast %186 : vector<8x1xf32> to vector<8x256xf32>
    %282 = arith.mulf %281, %274 : vector<8x256xf32>
    %283 = arith.addf %280, %282 : vector<8x256xf32>
    %cst_94 = arith.constant -0.101784028 : f32
    %284 = vector.broadcast %cst_94 : f32 to vector<8x1xf32>
    %285 = arith.mulf %188, %284 : vector<8x1xf32>
    %286 = vector.broadcast %285 : vector<8x1xf32> to vector<8x256xf32>
    %287 = arith.addf %283, %286 : vector<8x256xf32>
    %288 = arith.mulf %287, %287 : vector<8x256xf32>
    %289 = vector.broadcast %190 : vector<8x1xf32> to vector<8x256xf32>
    %290 = arith.mulf %289, %288 : vector<8x256xf32>
    %291 = arith.addf %260, %290 : vector<8x256xf32>
    %292 = vector.broadcast %192 : vector<8x1xf32> to vector<8x256xf32>
    %293 = arith.mulf %292, %287 : vector<8x256xf32>
    %294 = arith.addf %116, %293 : vector<8x256xf32>
    %cst_95 = arith.constant 8.308140e-02 : f32
    %295 = vector.broadcast %cst_95 : f32 to vector<8x256xf32>
    %296 = arith.mulf %295, %202 : vector<8x256xf32>
    %cst_96 = arith.constant -0.0945512577 : f32
    %297 = vector.broadcast %cst_96 : f32 to vector<8x256xf32>
    %298 = arith.mulf %297, %212 : vector<8x256xf32>
    %299 = arith.addf %296, %298 : vector<8x256xf32>
    %cst_97 = arith.constant 0.935553312 : f32
    %300 = vector.broadcast %cst_97 : f32 to vector<8x256xf32>
    %301 = arith.mulf %300, %222 : vector<8x256xf32>
    %302 = arith.addf %299, %301 : vector<8x256xf32>
    %cst_98 = arith.constant 0.00668034563 : f32
    %303 = vector.broadcast %cst_98 : f32 to vector<8x256xf32>
    %304 = arith.mulf %303, %232 : vector<8x256xf32>
    %305 = arith.addf %302, %304 : vector<8x256xf32>
    %306 = vector.broadcast %184 : vector<8x1xf32> to vector<8x256xf32>
    %307 = arith.mulf %306, %222 : vector<8x256xf32>
    %c2_99 = arith.constant 2 : index
    %c0_100 = arith.constant 0 : index
    %c0_101 = arith.constant 0 : index
    %308 = vector.load %arg2[%c2_99, %c0_100, %c0_101] : memref<4x1x256xf32, #tpu.memory_space<vmem>>, vector<1x1x256xf32>
    %309 = vector.shape_cast %308 : vector<1x1x256xf32> to vector<1x256xf32>
    %310 = vector.broadcast %309 : vector<1x256xf32> to vector<8x256xf32>
    %311 = arith.subf %307, %310 : vector<8x256xf32>
    %312 = vector.broadcast %186 : vector<8x1xf32> to vector<8x256xf32>
    %313 = arith.mulf %312, %305 : vector<8x256xf32>
    %314 = arith.addf %311, %313 : vector<8x256xf32>
    %cst_102 = arith.constant 0.0102772117 : f32
    %315 = vector.broadcast %cst_102 : f32 to vector<8x1xf32>
    %316 = arith.mulf %188, %315 : vector<8x1xf32>
    %317 = vector.broadcast %316 : vector<8x1xf32> to vector<8x256xf32>
    %318 = arith.addf %314, %317 : vector<8x256xf32>
    %319 = arith.mulf %318, %318 : vector<8x256xf32>
    %320 = vector.broadcast %190 : vector<8x1xf32> to vector<8x256xf32>
    %321 = arith.mulf %320, %319 : vector<8x256xf32>
    %322 = arith.addf %291, %321 : vector<8x256xf32>
    %323 = vector.broadcast %192 : vector<8x1xf32> to vector<8x256xf32>
    %324 = arith.mulf %323, %318 : vector<8x256xf32>
    %325 = arith.addf %147, %324 : vector<8x256xf32>
    %cst_103 = arith.constant -0.0576519631 : f32
    %326 = vector.broadcast %cst_103 : f32 to vector<8x256xf32>
    %327 = arith.mulf %326, %202 : vector<8x256xf32>
    %cst_104 = arith.constant 0.0119648147 : f32
    %328 = vector.broadcast %cst_104 : f32 to vector<8x256xf32>
    %329 = arith.mulf %328, %212 : vector<8x256xf32>
    %330 = arith.addf %327, %329 : vector<8x256xf32>
    %cst_105 = arith.constant 0.0872403681 : f32
    %331 = vector.broadcast %cst_105 : f32 to vector<8x256xf32>
    %332 = arith.mulf %331, %222 : vector<8x256xf32>
    %333 = arith.addf %330, %332 : vector<8x256xf32>
    %cst_106 = arith.constant 1.02525091 : f32
    %334 = vector.broadcast %cst_106 : f32 to vector<8x256xf32>
    %335 = arith.mulf %334, %232 : vector<8x256xf32>
    %336 = arith.addf %333, %335 : vector<8x256xf32>
    %337 = vector.broadcast %184 : vector<8x1xf32> to vector<8x256xf32>
    %338 = arith.mulf %337, %232 : vector<8x256xf32>
    %c3_107 = arith.constant 3 : index
    %c0_108 = arith.constant 0 : index
    %c0_109 = arith.constant 0 : index
    %339 = vector.load %arg2[%c3_107, %c0_108, %c0_109] : memref<4x1x256xf32, #tpu.memory_space<vmem>>, vector<1x1x256xf32>
    %340 = vector.shape_cast %339 : vector<1x1x256xf32> to vector<1x256xf32>
    %341 = vector.broadcast %340 : vector<1x256xf32> to vector<8x256xf32>
    %342 = arith.subf %338, %341 : vector<8x256xf32>
    %343 = vector.broadcast %186 : vector<8x1xf32> to vector<8x256xf32>
    %344 = arith.mulf %343, %336 : vector<8x256xf32>
    %345 = arith.addf %342, %344 : vector<8x256xf32>
    %cst_110 = arith.constant -0.0176775102 : f32
    %346 = vector.broadcast %cst_110 : f32 to vector<8x1xf32>
    %347 = arith.mulf %188, %346 : vector<8x1xf32>
    %348 = vector.broadcast %347 : vector<8x1xf32> to vector<8x256xf32>
    %349 = arith.addf %345, %348 : vector<8x256xf32>
    %350 = arith.mulf %349, %349 : vector<8x256xf32>
    %351 = vector.broadcast %190 : vector<8x1xf32> to vector<8x256xf32>
    %352 = arith.mulf %351, %350 : vector<8x256xf32>
    %353 = arith.addf %322, %352 : vector<8x256xf32>
    %354 = vector.broadcast %192 : vector<8x1xf32> to vector<8x256xf32>
    %355 = arith.mulf %354, %349 : vector<8x256xf32>
    %356 = arith.addf %178, %355 : vector<8x256xf32>
    %c2_i32 = arith.constant 2 : i32
    %c8_i32_111 = arith.constant 8 : i32
    %357 = arith.muli %c2_i32, %c8_i32_111 : i32
    %358 = tpu.assume_multiple %357, 8 : i32
    %359 = arith.index_cast %358 : i32 to index
    %c0_112 = arith.constant 0 : index
    %360 = vector.load %arg1[%359, %c0_112] : memref<128x8xf32, #tpu.memory_space<vmem>>, vector<8x1xf32>
    %361 = arith.index_cast %358 : i32 to index
    %c1_113 = arith.constant 1 : index
    %362 = vector.load %arg1[%361, %c1_113] : memref<128x8xf32, #tpu.memory_space<vmem>>, vector<8x1xf32>
    %363 = arith.index_cast %358 : i32 to index
    %c2_114 = arith.constant 2 : index
    %364 = vector.load %arg1[%363, %c2_114] : memref<128x8xf32, #tpu.memory_space<vmem>>, vector<8x1xf32>
    %365 = arith.index_cast %358 : i32 to index
    %c3_115 = arith.constant 3 : index
    %366 = vector.load %arg1[%365, %c3_115] : memref<128x8xf32, #tpu.memory_space<vmem>>, vector<8x1xf32>
    %367 = arith.index_cast %358 : i32 to index
    %c4_116 = arith.constant 4 : index
    %368 = vector.load %arg1[%367, %c4_116] : memref<128x8xf32, #tpu.memory_space<vmem>>, vector<8x1xf32>
    %369 = arith.index_cast %358 : i32 to index
    %c5_117 = arith.constant 5 : index
    %370 = vector.load %arg1[%369, %c5_117] : memref<128x8xf32, #tpu.memory_space<vmem>>, vector<8x1xf32>
    %c0_118 = arith.constant 0 : index
    %c0_119 = arith.constant 0 : index
    %c0_120 = arith.constant 0 : index
    %371 = vector.load %arg2[%c0_118, %c0_119, %c0_120] : memref<4x1x256xf32, #tpu.memory_space<vmem>>, vector<1x1x256xf32>
    %372 = vector.shape_cast %371 : vector<1x1x256xf32> to vector<1x256xf32>
    %c0_121 = arith.constant 0 : index
    %373 = arith.index_cast %358 : i32 to index
    %c0_122 = arith.constant 0 : index
    %374 = vector.load %arg3[%c0_121, %373, %c0_122] : memref<4x128x256xbf16, #tpu.memory_space<vmem>>, vector<1x8x256xbf16>
    %375 = vector.shape_cast %374 : vector<1x8x256xbf16> to vector<8x256xbf16>
    %376 = arith.extf %375 : vector<8x256xbf16> to vector<8x256xf32>
    %377 = vector.broadcast %360 : vector<8x1xf32> to vector<8x256xf32>
    %378 = arith.mulf %376, %377 : vector<8x256xf32>
    %379 = vector.broadcast %372 : vector<1x256xf32> to vector<8x256xf32>
    %380 = arith.addf %379, %378 : vector<8x256xf32>
    %c1_123 = arith.constant 1 : index
    %c0_124 = arith.constant 0 : index
    %c0_125 = arith.constant 0 : index
    %381 = vector.load %arg2[%c1_123, %c0_124, %c0_125] : memref<4x1x256xf32, #tpu.memory_space<vmem>>, vector<1x1x256xf32>
    %382 = vector.shape_cast %381 : vector<1x1x256xf32> to vector<1x256xf32>
    %c1_126 = arith.constant 1 : index
    %383 = arith.index_cast %358 : i32 to index
    %c0_127 = arith.constant 0 : index
    %384 = vector.load %arg3[%c1_126, %383, %c0_127] : memref<4x128x256xbf16, #tpu.memory_space<vmem>>, vector<1x8x256xbf16>
    %385 = vector.shape_cast %384 : vector<1x8x256xbf16> to vector<8x256xbf16>
    %386 = arith.extf %385 : vector<8x256xbf16> to vector<8x256xf32>
    %387 = vector.broadcast %360 : vector<8x1xf32> to vector<8x256xf32>
    %388 = arith.mulf %386, %387 : vector<8x256xf32>
    %389 = vector.broadcast %382 : vector<1x256xf32> to vector<8x256xf32>
    %390 = arith.addf %389, %388 : vector<8x256xf32>
    %c2_128 = arith.constant 2 : index
    %c0_129 = arith.constant 0 : index
    %c0_130 = arith.constant 0 : index
    %391 = vector.load %arg2[%c2_128, %c0_129, %c0_130] : memref<4x1x256xf32, #tpu.memory_space<vmem>>, vector<1x1x256xf32>
    %392 = vector.shape_cast %391 : vector<1x1x256xf32> to vector<1x256xf32>
    %c2_131 = arith.constant 2 : index
    %393 = arith.index_cast %358 : i32 to index
    %c0_132 = arith.constant 0 : index
    %394 = vector.load %arg3[%c2_131, %393, %c0_132] : memref<4x128x256xbf16, #tpu.memory_space<vmem>>, vector<1x8x256xbf16>
    %395 = vector.shape_cast %394 : vector<1x8x256xbf16> to vector<8x256xbf16>
    %396 = arith.extf %395 : vector<8x256xbf16> to vector<8x256xf32>
    %397 = vector.broadcast %360 : vector<8x1xf32> to vector<8x256xf32>
    %398 = arith.mulf %396, %397 : vector<8x256xf32>
    %399 = vector.broadcast %392 : vector<1x256xf32> to vector<8x256xf32>
    %400 = arith.addf %399, %398 : vector<8x256xf32>
    %c3_133 = arith.constant 3 : index
    %c0_134 = arith.constant 0 : index
    %c0_135 = arith.constant 0 : index
    %401 = vector.load %arg2[%c3_133, %c0_134, %c0_135] : memref<4x1x256xf32, #tpu.memory_space<vmem>>, vector<1x1x256xf32>
    %402 = vector.shape_cast %401 : vector<1x1x256xf32> to vector<1x256xf32>
    %c3_136 = arith.constant 3 : index
    %403 = arith.index_cast %358 : i32 to index
    %c0_137 = arith.constant 0 : index
    %404 = vector.load %arg3[%c3_136, %403, %c0_137] : memref<4x128x256xbf16, #tpu.memory_space<vmem>>, vector<1x8x256xbf16>
    %405 = vector.shape_cast %404 : vector<1x8x256xbf16> to vector<8x256xbf16>
    %406 = arith.extf %405 : vector<8x256xbf16> to vector<8x256xf32>
    %407 = vector.broadcast %360 : vector<8x1xf32> to vector<8x256xf32>
    %408 = arith.mulf %406, %407 : vector<8x256xf32>
    %409 = vector.broadcast %402 : vector<1x256xf32> to vector<8x256xf32>
    %410 = arith.addf %409, %408 : vector<8x256xf32>
    %cst_138 = arith.constant 1.0502007 : f32
    %411 = vector.broadcast %cst_138 : f32 to vector<8x256xf32>
    %412 = arith.mulf %411, %380 : vector<8x256xf32>
    %cst_139 = arith.constant -0.0453168601 : f32
    %413 = vector.broadcast %cst_139 : f32 to vector<8x256xf32>
    %414 = arith.mulf %413, %390 : vector<8x256xf32>
    %415 = arith.addf %412, %414 : vector<8x256xf32>
    %cst_140 = arith.constant -0.0374086127 : f32
    %416 = vector.broadcast %cst_140 : f32 to vector<8x256xf32>
    %417 = arith.mulf %416, %400 : vector<8x256xf32>
    %418 = arith.addf %415, %417 : vector<8x256xf32>
    %cst_141 = arith.constant -0.0585683472 : f32
    %419 = vector.broadcast %cst_141 : f32 to vector<8x256xf32>
    %420 = arith.mulf %419, %410 : vector<8x256xf32>
    %421 = arith.addf %418, %420 : vector<8x256xf32>
    %422 = vector.broadcast %362 : vector<8x1xf32> to vector<8x256xf32>
    %423 = arith.mulf %422, %380 : vector<8x256xf32>
    %c0_142 = arith.constant 0 : index
    %c0_143 = arith.constant 0 : index
    %c0_144 = arith.constant 0 : index
    %424 = vector.load %arg2[%c0_142, %c0_143, %c0_144] : memref<4x1x256xf32, #tpu.memory_space<vmem>>, vector<1x1x256xf32>
    %425 = vector.shape_cast %424 : vector<1x1x256xf32> to vector<1x256xf32>
    %426 = vector.broadcast %425 : vector<1x256xf32> to vector<8x256xf32>
    %427 = arith.subf %423, %426 : vector<8x256xf32>
    %428 = vector.broadcast %364 : vector<8x1xf32> to vector<8x256xf32>
    %429 = arith.mulf %428, %421 : vector<8x256xf32>
    %430 = arith.addf %427, %429 : vector<8x256xf32>
    %cst_145 = arith.constant -0.122122787 : f32
    %431 = vector.broadcast %cst_145 : f32 to vector<8x1xf32>
    %432 = arith.mulf %366, %431 : vector<8x1xf32>
    %433 = vector.broadcast %432 : vector<8x1xf32> to vector<8x256xf32>
    %434 = arith.addf %430, %433 : vector<8x256xf32>
    %435 = arith.mulf %434, %434 : vector<8x256xf32>
    %436 = vector.broadcast %368 : vector<8x1xf32> to vector<8x256xf32>
    %437 = arith.mulf %436, %435 : vector<8x256xf32>
    %438 = arith.addf %353, %437 : vector<8x256xf32>
    %439 = vector.broadcast %370 : vector<8x1xf32> to vector<8x256xf32>
    %440 = arith.mulf %439, %434 : vector<8x256xf32>
    %441 = arith.addf %263, %440 : vector<8x256xf32>
    %cst_146 = arith.constant -0.0435616411 : f32
    %442 = vector.broadcast %cst_146 : f32 to vector<8x256xf32>
    %443 = arith.mulf %442, %380 : vector<8x256xf32>
    %cst_147 = arith.constant 1.02944195 : f32
    %444 = vector.broadcast %cst_147 : f32 to vector<8x256xf32>
    %445 = arith.mulf %444, %390 : vector<8x256xf32>
    %446 = arith.addf %443, %445 : vector<8x256xf32>
    %cst_148 = arith.constant 0.0361964963 : f32
    %447 = vector.broadcast %cst_148 : f32 to vector<8x256xf32>
    %448 = arith.mulf %447, %400 : vector<8x256xf32>
    %449 = arith.addf %446, %448 : vector<8x256xf32>
    %cst_149 = arith.constant -0.0512799099 : f32
    %450 = vector.broadcast %cst_149 : f32 to vector<8x256xf32>
    %451 = arith.mulf %450, %410 : vector<8x256xf32>
    %452 = arith.addf %449, %451 : vector<8x256xf32>
    %453 = vector.broadcast %362 : vector<8x1xf32> to vector<8x256xf32>
    %454 = arith.mulf %453, %390 : vector<8x256xf32>
    %c1_150 = arith.constant 1 : index
    %c0_151 = arith.constant 0 : index
    %c0_152 = arith.constant 0 : index
    %455 = vector.load %arg2[%c1_150, %c0_151, %c0_152] : memref<4x1x256xf32, #tpu.memory_space<vmem>>, vector<1x1x256xf32>
    %456 = vector.shape_cast %455 : vector<1x1x256xf32> to vector<1x256xf32>
    %457 = vector.broadcast %456 : vector<1x256xf32> to vector<8x256xf32>
    %458 = arith.subf %454, %457 : vector<8x256xf32>
    %459 = vector.broadcast %364 : vector<8x1xf32> to vector<8x256xf32>
    %460 = arith.mulf %459, %452 : vector<8x256xf32>
    %461 = arith.addf %458, %460 : vector<8x256xf32>
    %cst_153 = arith.constant -0.101784028 : f32
    %462 = vector.broadcast %cst_153 : f32 to vector<8x1xf32>
    %463 = arith.mulf %366, %462 : vector<8x1xf32>
    %464 = vector.broadcast %463 : vector<8x1xf32> to vector<8x256xf32>
    %465 = arith.addf %461, %464 : vector<8x256xf32>
    %466 = arith.mulf %465, %465 : vector<8x256xf32>
    %467 = vector.broadcast %368 : vector<8x1xf32> to vector<8x256xf32>
    %468 = arith.mulf %467, %466 : vector<8x256xf32>
    %469 = arith.addf %438, %468 : vector<8x256xf32>
    %470 = vector.broadcast %370 : vector<8x1xf32> to vector<8x256xf32>
    %471 = arith.mulf %470, %465 : vector<8x256xf32>
    %472 = arith.addf %294, %471 : vector<8x256xf32>
    %cst_154 = arith.constant 8.308140e-02 : f32
    %473 = vector.broadcast %cst_154 : f32 to vector<8x256xf32>
    %474 = arith.mulf %473, %380 : vector<8x256xf32>
    %cst_155 = arith.constant -0.0945512577 : f32
    %475 = vector.broadcast %cst_155 : f32 to vector<8x256xf32>
    %476 = arith.mulf %475, %390 : vector<8x256xf32>
    %477 = arith.addf %474, %476 : vector<8x256xf32>
    %cst_156 = arith.constant 0.935553312 : f32
    %478 = vector.broadcast %cst_156 : f32 to vector<8x256xf32>
    %479 = arith.mulf %478, %400 : vector<8x256xf32>
    %480 = arith.addf %477, %479 : vector<8x256xf32>
    %cst_157 = arith.constant 0.00668034563 : f32
    %481 = vector.broadcast %cst_157 : f32 to vector<8x256xf32>
    %482 = arith.mulf %481, %410 : vector<8x256xf32>
    %483 = arith.addf %480, %482 : vector<8x256xf32>
    %484 = vector.broadcast %362 : vector<8x1xf32> to vector<8x256xf32>
    %485 = arith.mulf %484, %400 : vector<8x256xf32>
    %c2_158 = arith.constant 2 : index
    %c0_159 = arith.constant 0 : index
    %c0_160 = arith.constant 0 : index
    %486 = vector.load %arg2[%c2_158, %c0_159, %c0_160] : memref<4x1x256xf32, #tpu.memory_space<vmem>>, vector<1x1x256xf32>
    %487 = vector.shape_cast %486 : vector<1x1x256xf32> to vector<1x256xf32>
    %488 = vector.broadcast %487 : vector<1x256xf32> to vector<8x256xf32>
    %489 = arith.subf %485, %488 : vector<8x256xf32>
    %490 = vector.broadcast %364 : vector<8x1xf32> to vector<8x256xf32>
    %491 = arith.mulf %490, %483 : vector<8x256xf32>
    %492 = arith.addf %489, %491 : vector<8x256xf32>
    %cst_161 = arith.constant 0.0102772117 : f32
    %493 = vector.broadcast %cst_161 : f32 to vector<8x1xf32>
    %494 = arith.mulf %366, %493 : vector<8x1xf32>
    %495 = vector.broadcast %494 : vector<8x1xf32> to vector<8x256xf32>
    %496 = arith.addf %492, %495 : vector<8x256xf32>
    %497 = arith.mulf %496, %496 : vector<8x256xf32>
    %498 = vector.broadcast %368 : vector<8x1xf32> to vector<8x256xf32>
    %499 = arith.mulf %498, %497 : vector<8x256xf32>
    %500 = arith.addf %469, %499 : vector<8x256xf32>
    %501 = vector.broadcast %370 : vector<8x1xf32> to vector<8x256xf32>
    %502 = arith.mulf %501, %496 : vector<8x256xf32>
    %503 = arith.addf %325, %502 : vector<8x256xf32>
    %cst_162 = arith.constant -0.0576519631 : f32
    %504 = vector.broadcast %cst_162 : f32 to vector<8x256xf32>
    %505 = arith.mulf %504, %380 : vector<8x256xf32>
    %cst_163 = arith.constant 0.0119648147 : f32
    %506 = vector.broadcast %cst_163 : f32 to vector<8x256xf32>
    %507 = arith.mulf %506, %390 : vector<8x256xf32>
    %508 = arith.addf %505, %507 : vector<8x256xf32>
    %cst_164 = arith.constant 0.0872403681 : f32
    %509 = vector.broadcast %cst_164 : f32 to vector<8x256xf32>
    %510 = arith.mulf %509, %400 : vector<8x256xf32>
    %511 = arith.addf %508, %510 : vector<8x256xf32>
    %cst_165 = arith.constant 1.02525091 : f32
    %512 = vector.broadcast %cst_165 : f32 to vector<8x256xf32>
    %513 = arith.mulf %512, %410 : vector<8x256xf32>
    %514 = arith.addf %511, %513 : vector<8x256xf32>
    %515 = vector.broadcast %362 : vector<8x1xf32> to vector<8x256xf32>
    %516 = arith.mulf %515, %410 : vector<8x256xf32>
    %c3_166 = arith.constant 3 : index
    %c0_167 = arith.constant 0 : index
    %c0_168 = arith.constant 0 : index
    %517 = vector.load %arg2[%c3_166, %c0_167, %c0_168] : memref<4x1x256xf32, #tpu.memory_space<vmem>>, vector<1x1x256xf32>
    %518 = vector.shape_cast %517 : vector<1x1x256xf32> to vector<1x256xf32>
    %519 = vector.broadcast %518 : vector<1x256xf32> to vector<8x256xf32>
    %520 = arith.subf %516, %519 : vector<8x256xf32>
    %521 = vector.broadcast %364 : vector<8x1xf32> to vector<8x256xf32>
    %522 = arith.mulf %521, %514 : vector<8x256xf32>
    %523 = arith.addf %520, %522 : vector<8x256xf32>
    %cst_169 = arith.constant -0.0176775102 : f32
    %524 = vector.broadcast %cst_169 : f32 to vector<8x1xf32>
    %525 = arith.mulf %366, %524 : vector<8x1xf32>
    %526 = vector.broadcast %525 : vector<8x1xf32> to vector<8x256xf32>
    %527 = arith.addf %523, %526 : vector<8x256xf32>
    %528 = arith.mulf %527, %527 : vector<8x256xf32>
    %529 = vector.broadcast %368 : vector<8x1xf32> to vector<8x256xf32>
    %530 = arith.mulf %529, %528 : vector<8x256xf32>
    %531 = arith.addf %500, %530 : vector<8x256xf32>
    %532 = vector.broadcast %370 : vector<8x1xf32> to vector<8x256xf32>
    %533 = arith.mulf %532, %527 : vector<8x256xf32>
    %534 = arith.addf %356, %533 : vector<8x256xf32>
    %c3_i32 = arith.constant 3 : i32
    %c8_i32_170 = arith.constant 8 : i32
    %535 = arith.muli %c3_i32, %c8_i32_170 : i32
    %536 = tpu.assume_multiple %535, 8 : i32
    %537 = arith.index_cast %536 : i32 to index
    %c0_171 = arith.constant 0 : index
    %538 = vector.load %arg1[%537, %c0_171] : memref<128x8xf32, #tpu.memory_space<vmem>>, vector<8x1xf32>
    %539 = arith.index_cast %536 : i32 to index
    %c1_172 = arith.constant 1 : index
    %540 = vector.load %arg1[%539, %c1_172] : memref<128x8xf32, #tpu.memory_space<vmem>>, vector<8x1xf32>
    %541 = arith.index_cast %536 : i32 to index
    %c2_173 = arith.constant 2 : index
    %542 = vector.load %arg1[%541, %c2_173] : memref<128x8xf32, #tpu.memory_space<vmem>>, vector<8x1xf32>
    %543 = arith.index_cast %536 : i32 to index
    %c3_174 = arith.constant 3 : index
    %544 = vector.load %arg1[%543, %c3_174] : memref<128x8xf32, #tpu.memory_space<vmem>>, vector<8x1xf32>
    %545 = arith.index_cast %536 : i32 to index
    %c4_175 = arith.constant 4 : index
    %546 = vector.load %arg1[%545, %c4_175] : memref<128x8xf32, #tpu.memory_space<vmem>>, vector<8x1xf32>
    %547 = arith.index_cast %536 : i32 to index
    %c5_176 = arith.constant 5 : index
    %548 = vector.load %arg1[%547, %c5_176] : memref<128x8xf32, #tpu.memory_space<vmem>>, vector<8x1xf32>
    %c0_177 = arith.constant 0 : index
    %c0_178 = arith.constant 0 : index
    %c0_179 = arith.constant 0 : index
    %549 = vector.load %arg2[%c0_177, %c0_178, %c0_179] : memref<4x1x256xf32, #tpu.memory_space<vmem>>, vector<1x1x256xf32>
    %550 = vector.shape_cast %549 : vector<1x1x256xf32> to vector<1x256xf32>
    %c0_180 = arith.constant 0 : index
    %551 = arith.index_cast %536 : i32 to index
    %c0_181 = arith.constant 0 : index
    %552 = vector.load %arg3[%c0_180, %551, %c0_181] : memref<4x128x256xbf16, #tpu.memory_space<vmem>>, vector<1x8x256xbf16>
    %553 = vector.shape_cast %552 : vector<1x8x256xbf16> to vector<8x256xbf16>
    %554 = arith.extf %553 : vector<8x256xbf16> to vector<8x256xf32>
    %555 = vector.broadcast %538 : vector<8x1xf32> to vector<8x256xf32>
    %556 = arith.mulf %554, %555 : vector<8x256xf32>
    %557 = vector.broadcast %550 : vector<1x256xf32> to vector<8x256xf32>
    %558 = arith.addf %557, %556 : vector<8x256xf32>
    %c1_182 = arith.constant 1 : index
    %c0_183 = arith.constant 0 : index
    %c0_184 = arith.constant 0 : index
    %559 = vector.load %arg2[%c1_182, %c0_183, %c0_184] : memref<4x1x256xf32, #tpu.memory_space<vmem>>, vector<1x1x256xf32>
    %560 = vector.shape_cast %559 : vector<1x1x256xf32> to vector<1x256xf32>
    %c1_185 = arith.constant 1 : index
    %561 = arith.index_cast %536 : i32 to index
    %c0_186 = arith.constant 0 : index
    %562 = vector.load %arg3[%c1_185, %561, %c0_186] : memref<4x128x256xbf16, #tpu.memory_space<vmem>>, vector<1x8x256xbf16>
    %563 = vector.shape_cast %562 : vector<1x8x256xbf16> to vector<8x256xbf16>
    %564 = arith.extf %563 : vector<8x256xbf16> to vector<8x256xf32>
    %565 = vector.broadcast %538 : vector<8x1xf32> to vector<8x256xf32>
    %566 = arith.mulf %564, %565 : vector<8x256xf32>
    %567 = vector.broadcast %560 : vector<1x256xf32> to vector<8x256xf32>
    %568 = arith.addf %567, %566 : vector<8x256xf32>
    %c2_187 = arith.constant 2 : index
    %c0_188 = arith.constant 0 : index
    %c0_189 = arith.constant 0 : index
    %569 = vector.load %arg2[%c2_187, %c0_188, %c0_189] : memref<4x1x256xf32, #tpu.memory_space<vmem>>, vector<1x1x256xf32>
    %570 = vector.shape_cast %569 : vector<1x1x256xf32> to vector<1x256xf32>
    %c2_190 = arith.constant 2 : index
    %571 = arith.index_cast %536 : i32 to index
    %c0_191 = arith.constant 0 : index
    %572 = vector.load %arg3[%c2_190, %571, %c0_191] : memref<4x128x256xbf16, #tpu.memory_space<vmem>>, vector<1x8x256xbf16>
    %573 = vector.shape_cast %572 : vector<1x8x256xbf16> to vector<8x256xbf16>
    %574 = arith.extf %573 : vector<8x256xbf16> to vector<8x256xf32>
    %575 = vector.broadcast %538 : vector<8x1xf32> to vector<8x256xf32>
    %576 = arith.mulf %574, %575 : vector<8x256xf32>
    %577 = vector.broadcast %570 : vector<1x256xf32> to vector<8x256xf32>
    %578 = arith.addf %577, %576 : vector<8x256xf32>
    %c3_192 = arith.constant 3 : index
    %c0_193 = arith.constant 0 : index
    %c0_194 = arith.constant 0 : index
    %579 = vector.load %arg2[%c3_192, %c0_193, %c0_194] : memref<4x1x256xf32, #tpu.memory_space<vmem>>, vector<1x1x256xf32>
    %580 = vector.shape_cast %579 : vector<1x1x256xf32> to vector<1x256xf32>
    %c3_195 = arith.constant 3 : index
    %581 = arith.index_cast %536 : i32 to index
    %c0_196 = arith.constant 0 : index
    %582 = vector.load %arg3[%c3_195, %581, %c0_196] : memref<4x128x256xbf16, #tpu.memory_space<vmem>>, vector<1x8x256xbf16>
    %583 = vector.shape_cast %582 : vector<1x8x256xbf16> to vector<8x256xbf16>
    %584 = arith.extf %583 : vector<8x256xbf16> to vector<8x256xf32>
    %585 = vector.broadcast %538 : vector<8x1xf32> to vector<8x256xf32>
    %586 = arith.mulf %584, %585 : vector<8x256xf32>
    %587 = vector.broadcast %580 : vector<1x256xf32> to vector<8x256xf32>
    %588 = arith.addf %587, %586 : vector<8x256xf32>
    %cst_197 = arith.constant 1.0502007 : f32
    %589 = vector.broadcast %cst_197 : f32 to vector<8x256xf32>
    %590 = arith.mulf %589, %558 : vector<8x256xf32>
    %cst_198 = arith.constant -0.0453168601 : f32
    %591 = vector.broadcast %cst_198 : f32 to vector<8x256xf32>
    %592 = arith.mulf %591, %568 : vector<8x256xf32>
    %593 = arith.addf %590, %592 : vector<8x256xf32>
    %cst_199 = arith.constant -0.0374086127 : f32
    %594 = vector.broadcast %cst_199 : f32 to vector<8x256xf32>
    %595 = arith.mulf %594, %578 : vector<8x256xf32>
    %596 = arith.addf %593, %595 : vector<8x256xf32>
    %cst_200 = arith.constant -0.0585683472 : f32
    %597 = vector.broadcast %cst_200 : f32 to vector<8x256xf32>
    %598 = arith.mulf %597, %588 : vector<8x256xf32>
    %599 = arith.addf %596, %598 : vector<8x256xf32>
    %600 = vector.broadcast %540 : vector<8x1xf32> to vector<8x256xf32>
    %601 = arith.mulf %600, %558 : vector<8x256xf32>
    %c0_201 = arith.constant 0 : index
    %c0_202 = arith.constant 0 : index
    %c0_203 = arith.constant 0 : index
    %602 = vector.load %arg2[%c0_201, %c0_202, %c0_203] : memref<4x1x256xf32, #tpu.memory_space<vmem>>, vector<1x1x256xf32>
    %603 = vector.shape_cast %602 : vector<1x1x256xf32> to vector<1x256xf32>
    %604 = vector.broadcast %603 : vector<1x256xf32> to vector<8x256xf32>
    %605 = arith.subf %601, %604 : vector<8x256xf32>
    %606 = vector.broadcast %542 : vector<8x1xf32> to vector<8x256xf32>
    %607 = arith.mulf %606, %599 : vector<8x256xf32>
    %608 = arith.addf %605, %607 : vector<8x256xf32>
    %cst_204 = arith.constant -0.122122787 : f32
    %609 = vector.broadcast %cst_204 : f32 to vector<8x1xf32>
    %610 = arith.mulf %544, %609 : vector<8x1xf32>
    %611 = vector.broadcast %610 : vector<8x1xf32> to vector<8x256xf32>
    %612 = arith.addf %608, %611 : vector<8x256xf32>
    %613 = arith.mulf %612, %612 : vector<8x256xf32>
    %614 = vector.broadcast %546 : vector<8x1xf32> to vector<8x256xf32>
    %615 = arith.mulf %614, %613 : vector<8x256xf32>
    %616 = arith.addf %531, %615 : vector<8x256xf32>
    %617 = vector.broadcast %548 : vector<8x1xf32> to vector<8x256xf32>
    %618 = arith.mulf %617, %612 : vector<8x256xf32>
    %619 = arith.addf %441, %618 : vector<8x256xf32>
    %cst_205 = arith.constant -0.0435616411 : f32
    %620 = vector.broadcast %cst_205 : f32 to vector<8x256xf32>
    %621 = arith.mulf %620, %558 : vector<8x256xf32>
    %cst_206 = arith.constant 1.02944195 : f32
    %622 = vector.broadcast %cst_206 : f32 to vector<8x256xf32>
    %623 = arith.mulf %622, %568 : vector<8x256xf32>
    %624 = arith.addf %621, %623 : vector<8x256xf32>
    %cst_207 = arith.constant 0.0361964963 : f32
    %625 = vector.broadcast %cst_207 : f32 to vector<8x256xf32>
    %626 = arith.mulf %625, %578 : vector<8x256xf32>
    %627 = arith.addf %624, %626 : vector<8x256xf32>
    %cst_208 = arith.constant -0.0512799099 : f32
    %628 = vector.broadcast %cst_208 : f32 to vector<8x256xf32>
    %629 = arith.mulf %628, %588 : vector<8x256xf32>
    %630 = arith.addf %627, %629 : vector<8x256xf32>
    %631 = vector.broadcast %540 : vector<8x1xf32> to vector<8x256xf32>
    %632 = arith.mulf %631, %568 : vector<8x256xf32>
    %c1_209 = arith.constant 1 : index
    %c0_210 = arith.constant 0 : index
    %c0_211 = arith.constant 0 : index
    %633 = vector.load %arg2[%c1_209, %c0_210, %c0_211] : memref<4x1x256xf32, #tpu.memory_space<vmem>>, vector<1x1x256xf32>
    %634 = vector.shape_cast %633 : vector<1x1x256xf32> to vector<1x256xf32>
    %635 = vector.broadcast %634 : vector<1x256xf32> to vector<8x256xf32>
    %636 = arith.subf %632, %635 : vector<8x256xf32>
    %637 = vector.broadcast %542 : vector<8x1xf32> to vector<8x256xf32>
    %638 = arith.mulf %637, %630 : vector<8x256xf32>
    %639 = arith.addf %636, %638 : vector<8x256xf32>
    %cst_212 = arith.constant -0.101784028 : f32
    %640 = vector.broadcast %cst_212 : f32 to vector<8x1xf32>
    %641 = arith.mulf %544, %640 : vector<8x1xf32>
    %642 = vector.broadcast %641 : vector<8x1xf32> to vector<8x256xf32>
    %643 = arith.addf %639, %642 : vector<8x256xf32>
    %644 = arith.mulf %643, %643 : vector<8x256xf32>
    %645 = vector.broadcast %546 : vector<8x1xf32> to vector<8x256xf32>
    %646 = arith.mulf %645, %644 : vector<8x256xf32>
    %647 = arith.addf %616, %646 : vector<8x256xf32>
    %648 = vector.broadcast %548 : vector<8x1xf32> to vector<8x256xf32>
    %649 = arith.mulf %648, %643 : vector<8x256xf32>
    %650 = arith.addf %472, %649 : vector<8x256xf32>
    %cst_213 = arith.constant 8.308140e-02 : f32
    %651 = vector.broadcast %cst_213 : f32 to vector<8x256xf32>
    %652 = arith.mulf %651, %558 : vector<8x256xf32>
    %cst_214 = arith.constant -0.0945512577 : f32
    %653 = vector.broadcast %cst_214 : f32 to vector<8x256xf32>
    %654 = arith.mulf %653, %568 : vector<8x256xf32>
    %655 = arith.addf %652, %654 : vector<8x256xf32>
    %cst_215 = arith.constant 0.935553312 : f32
    %656 = vector.broadcast %cst_215 : f32 to vector<8x256xf32>
    %657 = arith.mulf %656, %578 : vector<8x256xf32>
    %658 = arith.addf %655, %657 : vector<8x256xf32>
    %cst_216 = arith.constant 0.00668034563 : f32
    %659 = vector.broadcast %cst_216 : f32 to vector<8x256xf32>
    %660 = arith.mulf %659, %588 : vector<8x256xf32>
    %661 = arith.addf %658, %660 : vector<8x256xf32>
    %662 = vector.broadcast %540 : vector<8x1xf32> to vector<8x256xf32>
    %663 = arith.mulf %662, %578 : vector<8x256xf32>
    %c2_217 = arith.constant 2 : index
    %c0_218 = arith.constant 0 : index
    %c0_219 = arith.constant 0 : index
    %664 = vector.load %arg2[%c2_217, %c0_218, %c0_219] : memref<4x1x256xf32, #tpu.memory_space<vmem>>, vector<1x1x256xf32>
    %665 = vector.shape_cast %664 : vector<1x1x256xf32> to vector<1x256xf32>
    %666 = vector.broadcast %665 : vector<1x256xf32> to vector<8x256xf32>
    %667 = arith.subf %663, %666 : vector<8x256xf32>
    %668 = vector.broadcast %542 : vector<8x1xf32> to vector<8x256xf32>
    %669 = arith.mulf %668, %661 : vector<8x256xf32>
    %670 = arith.addf %667, %669 : vector<8x256xf32>
    %cst_220 = arith.constant 0.0102772117 : f32
    %671 = vector.broadcast %cst_220 : f32 to vector<8x1xf32>
    %672 = arith.mulf %544, %671 : vector<8x1xf32>
    %673 = vector.broadcast %672 : vector<8x1xf32> to vector<8x256xf32>
    %674 = arith.addf %670, %673 : vector<8x256xf32>
    %675 = arith.mulf %674, %674 : vector<8x256xf32>
    %676 = vector.broadcast %546 : vector<8x1xf32> to vector<8x256xf32>
    %677 = arith.mulf %676, %675 : vector<8x256xf32>
    %678 = arith.addf %647, %677 : vector<8x256xf32>
    %679 = vector.broadcast %548 : vector<8x1xf32> to vector<8x256xf32>
    %680 = arith.mulf %679, %674 : vector<8x256xf32>
    %681 = arith.addf %503, %680 : vector<8x256xf32>
    %cst_221 = arith.constant -0.0576519631 : f32
    %682 = vector.broadcast %cst_221 : f32 to vector<8x256xf32>
    %683 = arith.mulf %682, %558 : vector<8x256xf32>
    %cst_222 = arith.constant 0.0119648147 : f32
    %684 = vector.broadcast %cst_222 : f32 to vector<8x256xf32>
    %685 = arith.mulf %684, %568 : vector<8x256xf32>
    %686 = arith.addf %683, %685 : vector<8x256xf32>
    %cst_223 = arith.constant 0.0872403681 : f32
    %687 = vector.broadcast %cst_223 : f32 to vector<8x256xf32>
    %688 = arith.mulf %687, %578 : vector<8x256xf32>
    %689 = arith.addf %686, %688 : vector<8x256xf32>
    %cst_224 = arith.constant 1.02525091 : f32
    %690 = vector.broadcast %cst_224 : f32 to vector<8x256xf32>
    %691 = arith.mulf %690, %588 : vector<8x256xf32>
    %692 = arith.addf %689, %691 : vector<8x256xf32>
    %693 = vector.broadcast %540 : vector<8x1xf32> to vector<8x256xf32>
    %694 = arith.mulf %693, %588 : vector<8x256xf32>
    %c3_225 = arith.constant 3 : index
    %c0_226 = arith.constant 0 : index
    %c0_227 = arith.constant 0 : index
    %695 = vector.load %arg2[%c3_225, %c0_226, %c0_227] : memref<4x1x256xf32, #tpu.memory_space<vmem>>, vector<1x1x256xf32>
    %696 = vector.shape_cast %695 : vector<1x1x256xf32> to vector<1x256xf32>
    %697 = vector.broadcast %696 : vector<1x256xf32> to vector<8x256xf32>
    %698 = arith.subf %694, %697 : vector<8x256xf32>
    %699 = vector.broadcast %542 : vector<8x1xf32> to vector<8x256xf32>
    %700 = arith.mulf %699, %692 : vector<8x256xf32>
    %701 = arith.addf %698, %700 : vector<8x256xf32>
    %cst_228 = arith.constant -0.0176775102 : f32
    %702 = vector.broadcast %cst_228 : f32 to vector<8x1xf32>
    %703 = arith.mulf %544, %702 : vector<8x1xf32>
    %704 = vector.broadcast %703 : vector<8x1xf32> to vector<8x256xf32>
    %705 = arith.addf %701, %704 : vector<8x256xf32>
    %706 = arith.mulf %705, %705 : vector<8x256xf32>
    %707 = vector.broadcast %546 : vector<8x1xf32> to vector<8x256xf32>
    %708 = arith.mulf %707, %706 : vector<8x256xf32>
    %709 = arith.addf %678, %708 : vector<8x256xf32>
    %710 = vector.broadcast %548 : vector<8x1xf32> to vector<8x256xf32>
    %711 = arith.mulf %710, %705 : vector<8x256xf32>
    %712 = arith.addf %534, %711 : vector<8x256xf32>
    %c4_i32 = arith.constant 4 : i32
    %c8_i32_229 = arith.constant 8 : i32
    %713 = arith.muli %c4_i32, %c8_i32_229 : i32
    %714 = tpu.assume_multiple %713, 8 : i32
    %715 = arith.index_cast %714 : i32 to index
    %c0_230 = arith.constant 0 : index
    %716 = vector.load %arg1[%715, %c0_230] : memref<128x8xf32, #tpu.memory_space<vmem>>, vector<8x1xf32>
    %717 = arith.index_cast %714 : i32 to index
    %c1_231 = arith.constant 1 : index
    %718 = vector.load %arg1[%717, %c1_231] : memref<128x8xf32, #tpu.memory_space<vmem>>, vector<8x1xf32>
    %719 = arith.index_cast %714 : i32 to index
    %c2_232 = arith.constant 2 : index
    %720 = vector.load %arg1[%719, %c2_232] : memref<128x8xf32, #tpu.memory_space<vmem>>, vector<8x1xf32>
    %721 = arith.index_cast %714 : i32 to index
    %c3_233 = arith.constant 3 : index
    %722 = vector.load %arg1[%721, %c3_233] : memref<128x8xf32, #tpu.memory_space<vmem>>, vector<8x1xf32>
    %723 = arith.index_cast %714 : i32 to index
    %c4_234 = arith.constant 4 : index
    %724 = vector.load %arg1[%723, %c4_234] : memref<128x8xf32, #tpu.memory_space<vmem>>, vector<8x1xf32>
    %725 = arith.index_cast %714 : i32 to index
    %c5_235 = arith.constant 5 : index
    %726 = vector.load %arg1[%725, %c5_235] : memref<128x8xf32, #tpu.memory_space<vmem>>, vector<8x1xf32>
    %c0_236 = arith.constant 0 : index
    %c0_237 = arith.constant 0 : index
    %c0_238 = arith.constant 0 : index
    %727 = vector.load %arg2[%c0_236, %c0_237, %c0_238] : memref<4x1x256xf32, #tpu.memory_space<vmem>>, vector<1x1x256xf32>
    %728 = vector.shape_cast %727 : vector<1x1x256xf32> to vector<1x256xf32>
    %c0_239 = arith.constant 0 : index
    %729 = arith.index_cast %714 : i32 to index
    %c0_240 = arith.constant 0 : index
    %730 = vector.load %arg3[%c0_239, %729, %c0_240] : memref<4x128x256xbf16, #tpu.memory_space<vmem>>, vector<1x8x256xbf16>
    %731 = vector.shape_cast %730 : vector<1x8x256xbf16> to vector<8x256xbf16>
    %732 = arith.extf %731 : vector<8x256xbf16> to vector<8x256xf32>
    %733 = vector.broadcast %716 : vector<8x1xf32> to vector<8x256xf32>
    %734 = arith.mulf %732, %733 : vector<8x256xf32>
    %735 = vector.broadcast %728 : vector<1x256xf32> to vector<8x256xf32>
    %736 = arith.addf %735, %734 : vector<8x256xf32>
    %c1_241 = arith.constant 1 : index
    %c0_242 = arith.constant 0 : index
    %c0_243 = arith.constant 0 : index
    %737 = vector.load %arg2[%c1_241, %c0_242, %c0_243] : memref<4x1x256xf32, #tpu.memory_space<vmem>>, vector<1x1x256xf32>
    %738 = vector.shape_cast %737 : vector<1x1x256xf32> to vector<1x256xf32>
    %c1_244 = arith.constant 1 : index
    %739 = arith.index_cast %714 : i32 to index
    %c0_245 = arith.constant 0 : index
    %740 = vector.load %arg3[%c1_244, %739, %c0_245] : memref<4x128x256xbf16, #tpu.memory_space<vmem>>, vector<1x8x256xbf16>
    %741 = vector.shape_cast %740 : vector<1x8x256xbf16> to vector<8x256xbf16>
    %742 = arith.extf %741 : vector<8x256xbf16> to vector<8x256xf32>
    %743 = vector.broadcast %716 : vector<8x1xf32> to vector<8x256xf32>
    %744 = arith.mulf %742, %743 : vector<8x256xf32>
    %745 = vector.broadcast %738 : vector<1x256xf32> to vector<8x256xf32>
    %746 = arith.addf %745, %744 : vector<8x256xf32>
    %c2_246 = arith.constant 2 : index
    %c0_247 = arith.constant 0 : index
    %c0_248 = arith.constant 0 : index
    %747 = vector.load %arg2[%c2_246, %c0_247, %c0_248] : memref<4x1x256xf32, #tpu.memory_space<vmem>>, vector<1x1x256xf32>
    %748 = vector.shape_cast %747 : vector<1x1x256xf32> to vector<1x256xf32>
    %c2_249 = arith.constant 2 : index
    %749 = arith.index_cast %714 : i32 to index
    %c0_250 = arith.constant 0 : index
    %750 = vector.load %arg3[%c2_249, %749, %c0_250] : memref<4x128x256xbf16, #tpu.memory_space<vmem>>, vector<1x8x256xbf16>
    %751 = vector.shape_cast %750 : vector<1x8x256xbf16> to vector<8x256xbf16>
    %752 = arith.extf %751 : vector<8x256xbf16> to vector<8x256xf32>
    %753 = vector.broadcast %716 : vector<8x1xf32> to vector<8x256xf32>
    %754 = arith.mulf %752, %753 : vector<8x256xf32>
    %755 = vector.broadcast %748 : vector<1x256xf32> to vector<8x256xf32>
    %756 = arith.addf %755, %754 : vector<8x256xf32>
    %c3_251 = arith.constant 3 : index
    %c0_252 = arith.constant 0 : index
    %c0_253 = arith.constant 0 : index
    %757 = vector.load %arg2[%c3_251, %c0_252, %c0_253] : memref<4x1x256xf32, #tpu.memory_space<vmem>>, vector<1x1x256xf32>
    %758 = vector.shape_cast %757 : vector<1x1x256xf32> to vector<1x256xf32>
    %c3_254 = arith.constant 3 : index
    %759 = arith.index_cast %714 : i32 to index
    %c0_255 = arith.constant 0 : index
    %760 = vector.load %arg3[%c3_254, %759, %c0_255] : memref<4x128x256xbf16, #tpu.memory_space<vmem>>, vector<1x8x256xbf16>
    %761 = vector.shape_cast %760 : vector<1x8x256xbf16> to vector<8x256xbf16>
    %762 = arith.extf %761 : vector<8x256xbf16> to vector<8x256xf32>
    %763 = vector.broadcast %716 : vector<8x1xf32> to vector<8x256xf32>
    %764 = arith.mulf %762, %763 : vector<8x256xf32>
    %765 = vector.broadcast %758 : vector<1x256xf32> to vector<8x256xf32>
    %766 = arith.addf %765, %764 : vector<8x256xf32>
    %cst_256 = arith.constant 1.0502007 : f32
    %767 = vector.broadcast %cst_256 : f32 to vector<8x256xf32>
    %768 = arith.mulf %767, %736 : vector<8x256xf32>
    %cst_257 = arith.constant -0.0453168601 : f32
    %769 = vector.broadcast %cst_257 : f32 to vector<8x256xf32>
    %770 = arith.mulf %769, %746 : vector<8x256xf32>
    %771 = arith.addf %768, %770 : vector<8x256xf32>
    %cst_258 = arith.constant -0.0374086127 : f32
    %772 = vector.broadcast %cst_258 : f32 to vector<8x256xf32>
    %773 = arith.mulf %772, %756 : vector<8x256xf32>
    %774 = arith.addf %771, %773 : vector<8x256xf32>
    %cst_259 = arith.constant -0.0585683472 : f32
    %775 = vector.broadcast %cst_259 : f32 to vector<8x256xf32>
    %776 = arith.mulf %775, %766 : vector<8x256xf32>
    %777 = arith.addf %774, %776 : vector<8x256xf32>
    %778 = vector.broadcast %718 : vector<8x1xf32> to vector<8x256xf32>
    %779 = arith.mulf %778, %736 : vector<8x256xf32>
    %c0_260 = arith.constant 0 : index
    %c0_261 = arith.constant 0 : index
    %c0_262 = arith.constant 0 : index
    %780 = vector.load %arg2[%c0_260, %c0_261, %c0_262] : memref<4x1x256xf32, #tpu.memory_space<vmem>>, vector<1x1x256xf32>
    %781 = vector.shape_cast %780 : vector<1x1x256xf32> to vector<1x256xf32>
    %782 = vector.broadcast %781 : vector<1x256xf32> to vector<8x256xf32>
    %783 = arith.subf %779, %782 : vector<8x256xf32>
    %784 = vector.broadcast %720 : vector<8x1xf32> to vector<8x256xf32>
    %785 = arith.mulf %784, %777 : vector<8x256xf32>
    %786 = arith.addf %783, %785 : vector<8x256xf32>
    %cst_263 = arith.constant -0.122122787 : f32
    %787 = vector.broadcast %cst_263 : f32 to vector<8x1xf32>
    %788 = arith.mulf %722, %787 : vector<8x1xf32>
    %789 = vector.broadcast %788 : vector<8x1xf32> to vector<8x256xf32>
    %790 = arith.addf %786, %789 : vector<8x256xf32>
    %791 = arith.mulf %790, %790 : vector<8x256xf32>
    %792 = vector.broadcast %724 : vector<8x1xf32> to vector<8x256xf32>
    %793 = arith.mulf %792, %791 : vector<8x256xf32>
    %794 = arith.addf %709, %793 : vector<8x256xf32>
    %795 = vector.broadcast %726 : vector<8x1xf32> to vector<8x256xf32>
    %796 = arith.mulf %795, %790 : vector<8x256xf32>
    %797 = arith.addf %619, %796 : vector<8x256xf32>
    %cst_264 = arith.constant -0.0435616411 : f32
    %798 = vector.broadcast %cst_264 : f32 to vector<8x256xf32>
    %799 = arith.mulf %798, %736 : vector<8x256xf32>
    %cst_265 = arith.constant 1.02944195 : f32
    %800 = vector.broadcast %cst_265 : f32 to vector<8x256xf32>
    %801 = arith.mulf %800, %746 : vector<8x256xf32>
    %802 = arith.addf %799, %801 : vector<8x256xf32>
    %cst_266 = arith.constant 0.0361964963 : f32
    %803 = vector.broadcast %cst_266 : f32 to vector<8x256xf32>
    %804 = arith.mulf %803, %756 : vector<8x256xf32>
    %805 = arith.addf %802, %804 : vector<8x256xf32>
    %cst_267 = arith.constant -0.0512799099 : f32
    %806 = vector.broadcast %cst_267 : f32 to vector<8x256xf32>
    %807 = arith.mulf %806, %766 : vector<8x256xf32>
    %808 = arith.addf %805, %807 : vector<8x256xf32>
    %809 = vector.broadcast %718 : vector<8x1xf32> to vector<8x256xf32>
    %810 = arith.mulf %809, %746 : vector<8x256xf32>
    %c1_268 = arith.constant 1 : index
    %c0_269 = arith.constant 0 : index
    %c0_270 = arith.constant 0 : index
    %811 = vector.load %arg2[%c1_268, %c0_269, %c0_270] : memref<4x1x256xf32, #tpu.memory_space<vmem>>, vector<1x1x256xf32>
    %812 = vector.shape_cast %811 : vector<1x1x256xf32> to vector<1x256xf32>
    %813 = vector.broadcast %812 : vector<1x256xf32> to vector<8x256xf32>
    %814 = arith.subf %810, %813 : vector<8x256xf32>
    %815 = vector.broadcast %720 : vector<8x1xf32> to vector<8x256xf32>
    %816 = arith.mulf %815, %808 : vector<8x256xf32>
    %817 = arith.addf %814, %816 : vector<8x256xf32>
    %cst_271 = arith.constant -0.101784028 : f32
    %818 = vector.broadcast %cst_271 : f32 to vector<8x1xf32>
    %819 = arith.mulf %722, %818 : vector<8x1xf32>
    %820 = vector.broadcast %819 : vector<8x1xf32> to vector<8x256xf32>
    %821 = arith.addf %817, %820 : vector<8x256xf32>
    %822 = arith.mulf %821, %821 : vector<8x256xf32>
    %823 = vector.broadcast %724 : vector<8x1xf32> to vector<8x256xf32>
    %824 = arith.mulf %823, %822 : vector<8x256xf32>
    %825 = arith.addf %794, %824 : vector<8x256xf32>
    %826 = vector.broadcast %726 : vector<8x1xf32> to vector<8x256xf32>
    %827 = arith.mulf %826, %821 : vector<8x256xf32>
    %828 = arith.addf %650, %827 : vector<8x256xf32>
    %cst_272 = arith.constant 8.308140e-02 : f32
    %829 = vector.broadcast %cst_272 : f32 to vector<8x256xf32>
    %830 = arith.mulf %829, %736 : vector<8x256xf32>
    %cst_273 = arith.constant -0.0945512577 : f32
    %831 = vector.broadcast %cst_273 : f32 to vector<8x256xf32>
    %832 = arith.mulf %831, %746 : vector<8x256xf32>
    %833 = arith.addf %830, %832 : vector<8x256xf32>
    %cst_274 = arith.constant 0.935553312 : f32
    %834 = vector.broadcast %cst_274 : f32 to vector<8x256xf32>
    %835 = arith.mulf %834, %756 : vector<8x256xf32>
    %836 = arith.addf %833, %835 : vector<8x256xf32>
    %cst_275 = arith.constant 0.00668034563 : f32
    %837 = vector.broadcast %cst_275 : f32 to vector<8x256xf32>
    %838 = arith.mulf %837, %766 : vector<8x256xf32>
    %839 = arith.addf %836, %838 : vector<8x256xf32>
    %840 = vector.broadcast %718 : vector<8x1xf32> to vector<8x256xf32>
    %841 = arith.mulf %840, %756 : vector<8x256xf32>
    %c2_276 = arith.constant 2 : index
    %c0_277 = arith.constant 0 : index
    %c0_278 = arith.constant 0 : index
    %842 = vector.load %arg2[%c2_276, %c0_277, %c0_278] : memref<4x1x256xf32, #tpu.memory_space<vmem>>, vector<1x1x256xf32>
    %843 = vector.shape_cast %842 : vector<1x1x256xf32> to vector<1x256xf32>
    %844 = vector.broadcast %843 : vector<1x256xf32> to vector<8x256xf32>
    %845 = arith.subf %841, %844 : vector<8x256xf32>
    %846 = vector.broadcast %720 : vector<8x1xf32> to vector<8x256xf32>
    %847 = arith.mulf %846, %839 : vector<8x256xf32>
    %848 = arith.addf %845, %847 : vector<8x256xf32>
    %cst_279 = arith.constant 0.0102772117 : f32
    %849 = vector.broadcast %cst_279 : f32 to vector<8x1xf32>
    %850 = arith.mulf %722, %849 : vector<8x1xf32>
    %851 = vector.broadcast %850 : vector<8x1xf32> to vector<8x256xf32>
    %852 = arith.addf %848, %851 : vector<8x256xf32>
    %853 = arith.mulf %852, %852 : vector<8x256xf32>
    %854 = vector.broadcast %724 : vector<8x1xf32> to vector<8x256xf32>
    %855 = arith.mulf %854, %853 : vector<8x256xf32>
    %856 = arith.addf %825, %855 : vector<8x256xf32>
    %857 = vector.broadcast %726 : vector<8x1xf32> to vector<8x256xf32>
    %858 = arith.mulf %857, %852 : vector<8x256xf32>
    %859 = arith.addf %681, %858 : vector<8x256xf32>
    %cst_280 = arith.constant -0.0576519631 : f32
    %860 = vector.broadcast %cst_280 : f32 to vector<8x256xf32>
    %861 = arith.mulf %860, %736 : vector<8x256xf32>
    %cst_281 = arith.constant 0.0119648147 : f32
    %862 = vector.broadcast %cst_281 : f32 to vector<8x256xf32>
    %863 = arith.mulf %862, %746 : vector<8x256xf32>
    %864 = arith.addf %861, %863 : vector<8x256xf32>
    %cst_282 = arith.constant 0.0872403681 : f32
    %865 = vector.broadcast %cst_282 : f32 to vector<8x256xf32>
    %866 = arith.mulf %865, %756 : vector<8x256xf32>
    %867 = arith.addf %864, %866 : vector<8x256xf32>
    %cst_283 = arith.constant 1.02525091 : f32
    %868 = vector.broadcast %cst_283 : f32 to vector<8x256xf32>
    %869 = arith.mulf %868, %766 : vector<8x256xf32>
    %870 = arith.addf %867, %869 : vector<8x256xf32>
    %871 = vector.broadcast %718 : vector<8x1xf32> to vector<8x256xf32>
    %872 = arith.mulf %871, %766 : vector<8x256xf32>
    %c3_284 = arith.constant 3 : index
    %c0_285 = arith.constant 0 : index
    %c0_286 = arith.constant 0 : index
    %873 = vector.load %arg2[%c3_284, %c0_285, %c0_286] : memref<4x1x256xf32, #tpu.memory_space<vmem>>, vector<1x1x256xf32>
    %874 = vector.shape_cast %873 : vector<1x1x256xf32> to vector<1x256xf32>
    %875 = vector.broadcast %874 : vector<1x256xf32> to vector<8x256xf32>
    %876 = arith.subf %872, %875 : vector<8x256xf32>
    %877 = vector.broadcast %720 : vector<8x1xf32> to vector<8x256xf32>
    %878 = arith.mulf %877, %870 : vector<8x256xf32>
    %879 = arith.addf %876, %878 : vector<8x256xf32>
    %cst_287 = arith.constant -0.0176775102 : f32
    %880 = vector.broadcast %cst_287 : f32 to vector<8x1xf32>
    %881 = arith.mulf %722, %880 : vector<8x1xf32>
    %882 = vector.broadcast %881 : vector<8x1xf32> to vector<8x256xf32>
    %883 = arith.addf %879, %882 : vector<8x256xf32>
    %884 = arith.mulf %883, %883 : vector<8x256xf32>
    %885 = vector.broadcast %724 : vector<8x1xf32> to vector<8x256xf32>
    %886 = arith.mulf %885, %884 : vector<8x256xf32>
    %887 = arith.addf %856, %886 : vector<8x256xf32>
    %888 = vector.broadcast %726 : vector<8x1xf32> to vector<8x256xf32>
    %889 = arith.mulf %888, %883 : vector<8x256xf32>
    %890 = arith.addf %712, %889 : vector<8x256xf32>
    %c5_i32 = arith.constant 5 : i32
    %c8_i32_288 = arith.constant 8 : i32
    %891 = arith.muli %c5_i32, %c8_i32_288 : i32
    %892 = tpu.assume_multiple %891, 8 : i32
    %893 = arith.index_cast %892 : i32 to index
    %c0_289 = arith.constant 0 : index
    %894 = vector.load %arg1[%893, %c0_289] : memref<128x8xf32, #tpu.memory_space<vmem>>, vector<8x1xf32>
    %895 = arith.index_cast %892 : i32 to index
    %c1_290 = arith.constant 1 : index
    %896 = vector.load %arg1[%895, %c1_290] : memref<128x8xf32, #tpu.memory_space<vmem>>, vector<8x1xf32>
    %897 = arith.index_cast %892 : i32 to index
    %c2_291 = arith.constant 2 : index
    %898 = vector.load %arg1[%897, %c2_291] : memref<128x8xf32, #tpu.memory_space<vmem>>, vector<8x1xf32>
    %899 = arith.index_cast %892 : i32 to index
    %c3_292 = arith.constant 3 : index
    %900 = vector.load %arg1[%899, %c3_292] : memref<128x8xf32, #tpu.memory_space<vmem>>, vector<8x1xf32>
    %901 = arith.index_cast %892 : i32 to index
    %c4_293 = arith.constant 4 : index
    %902 = vector.load %arg1[%901, %c4_293] : memref<128x8xf32, #tpu.memory_space<vmem>>, vector<8x1xf32>
    %903 = arith.index_cast %892 : i32 to index
    %c5_294 = arith.constant 5 : index
    %904 = vector.load %arg1[%903, %c5_294] : memref<128x8xf32, #tpu.memory_space<vmem>>, vector<8x1xf32>
    %c0_295 = arith.constant 0 : index
    %c0_296 = arith.constant 0 : index
    %c0_297 = arith.constant 0 : index
    %905 = vector.load %arg2[%c0_295, %c0_296, %c0_297] : memref<4x1x256xf32, #tpu.memory_space<vmem>>, vector<1x1x256xf32>
    %906 = vector.shape_cast %905 : vector<1x1x256xf32> to vector<1x256xf32>
    %c0_298 = arith.constant 0 : index
    %907 = arith.index_cast %892 : i32 to index
    %c0_299 = arith.constant 0 : index
    %908 = vector.load %arg3[%c0_298, %907, %c0_299] : memref<4x128x256xbf16, #tpu.memory_space<vmem>>, vector<1x8x256xbf16>
    %909 = vector.shape_cast %908 : vector<1x8x256xbf16> to vector<8x256xbf16>
    %910 = arith.extf %909 : vector<8x256xbf16> to vector<8x256xf32>
    %911 = vector.broadcast %894 : vector<8x1xf32> to vector<8x256xf32>
    %912 = arith.mulf %910, %911 : vector<8x256xf32>
    %913 = vector.broadcast %906 : vector<1x256xf32> to vector<8x256xf32>
    %914 = arith.addf %913, %912 : vector<8x256xf32>
    %c1_300 = arith.constant 1 : index
    %c0_301 = arith.constant 0 : index
    %c0_302 = arith.constant 0 : index
    %915 = vector.load %arg2[%c1_300, %c0_301, %c0_302] : memref<4x1x256xf32, #tpu.memory_space<vmem>>, vector<1x1x256xf32>
    %916 = vector.shape_cast %915 : vector<1x1x256xf32> to vector<1x256xf32>
    %c1_303 = arith.constant 1 : index
    %917 = arith.index_cast %892 : i32 to index
    %c0_304 = arith.constant 0 : index
    %918 = vector.load %arg3[%c1_303, %917, %c0_304] : memref<4x128x256xbf16, #tpu.memory_space<vmem>>, vector<1x8x256xbf16>
    %919 = vector.shape_cast %918 : vector<1x8x256xbf16> to vector<8x256xbf16>
    %920 = arith.extf %919 : vector<8x256xbf16> to vector<8x256xf32>
    %921 = vector.broadcast %894 : vector<8x1xf32> to vector<8x256xf32>
    %922 = arith.mulf %920, %921 : vector<8x256xf32>
    %923 = vector.broadcast %916 : vector<1x256xf32> to vector<8x256xf32>
    %924 = arith.addf %923, %922 : vector<8x256xf32>
    %c2_305 = arith.constant 2 : index
    %c0_306 = arith.constant 0 : index
    %c0_307 = arith.constant 0 : index
    %925 = vector.load %arg2[%c2_305, %c0_306, %c0_307] : memref<4x1x256xf32, #tpu.memory_space<vmem>>, vector<1x1x256xf32>
    %926 = vector.shape_cast %925 : vector<1x1x256xf32> to vector<1x256xf32>
    %c2_308 = arith.constant 2 : index
    %927 = arith.index_cast %892 : i32 to index
    %c0_309 = arith.constant 0 : index
    %928 = vector.load %arg3[%c2_308, %927, %c0_309] : memref<4x128x256xbf16, #tpu.memory_space<vmem>>, vector<1x8x256xbf16>
    %929 = vector.shape_cast %928 : vector<1x8x256xbf16> to vector<8x256xbf16>
    %930 = arith.extf %929 : vector<8x256xbf16> to vector<8x256xf32>
    %931 = vector.broadcast %894 : vector<8x1xf32> to vector<8x256xf32>
    %932 = arith.mulf %930, %931 : vector<8x256xf32>
    %933 = vector.broadcast %926 : vector<1x256xf32> to vector<8x256xf32>
    %934 = arith.addf %933, %932 : vector<8x256xf32>
    %c3_310 = arith.constant 3 : index
    %c0_311 = arith.constant 0 : index
    %c0_312 = arith.constant 0 : index
    %935 = vector.load %arg2[%c3_310, %c0_311, %c0_312] : memref<4x1x256xf32, #tpu.memory_space<vmem>>, vector<1x1x256xf32>
    %936 = vector.shape_cast %935 : vector<1x1x256xf32> to vector<1x256xf32>
    %c3_313 = arith.constant 3 : index
    %937 = arith.index_cast %892 : i32 to index
    %c0_314 = arith.constant 0 : index
    %938 = vector.load %arg3[%c3_313, %937, %c0_314] : memref<4x128x256xbf16, #tpu.memory_space<vmem>>, vector<1x8x256xbf16>
    %939 = vector.shape_cast %938 : vector<1x8x256xbf16> to vector<8x256xbf16>
    %940 = arith.extf %939 : vector<8x256xbf16> to vector<8x256xf32>
    %941 = vector.broadcast %894 : vector<8x1xf32> to vector<8x256xf32>
    %942 = arith.mulf %940, %941 : vector<8x256xf32>
    %943 = vector.broadcast %936 : vector<1x256xf32> to vector<8x256xf32>
    %944 = arith.addf %943, %942 : vector<8x256xf32>
    %cst_315 = arith.constant 1.0502007 : f32
    %945 = vector.broadcast %cst_315 : f32 to vector<8x256xf32>
    %946 = arith.mulf %945, %914 : vector<8x256xf32>
    %cst_316 = arith.constant -0.0453168601 : f32
    %947 = vector.broadcast %cst_316 : f32 to vector<8x256xf32>
    %948 = arith.mulf %947, %924 : vector<8x256xf32>
    %949 = arith.addf %946, %948 : vector<8x256xf32>
    %cst_317 = arith.constant -0.0374086127 : f32
    %950 = vector.broadcast %cst_317 : f32 to vector<8x256xf32>
    %951 = arith.mulf %950, %934 : vector<8x256xf32>
    %952 = arith.addf %949, %951 : vector<8x256xf32>
    %cst_318 = arith.constant -0.0585683472 : f32
    %953 = vector.broadcast %cst_318 : f32 to vector<8x256xf32>
    %954 = arith.mulf %953, %944 : vector<8x256xf32>
    %955 = arith.addf %952, %954 : vector<8x256xf32>
    %956 = vector.broadcast %896 : vector<8x1xf32> to vector<8x256xf32>
    %957 = arith.mulf %956, %914 : vector<8x256xf32>
    %c0_319 = arith.constant 0 : index
    %c0_320 = arith.constant 0 : index
    %c0_321 = arith.constant 0 : index
    %958 = vector.load %arg2[%c0_319, %c0_320, %c0_321] : memref<4x1x256xf32, #tpu.memory_space<vmem>>, vector<1x1x256xf32>
    %959 = vector.shape_cast %958 : vector<1x1x256xf32> to vector<1x256xf32>
    %960 = vector.broadcast %959 : vector<1x256xf32> to vector<8x256xf32>
    %961 = arith.subf %957, %960 : vector<8x256xf32>
    %962 = vector.broadcast %898 : vector<8x1xf32> to vector<8x256xf32>
    %963 = arith.mulf %962, %955 : vector<8x256xf32>
    %964 = arith.addf %961, %963 : vector<8x256xf32>
    %cst_322 = arith.constant -0.122122787 : f32
    %965 = vector.broadcast %cst_322 : f32 to vector<8x1xf32>
    %966 = arith.mulf %900, %965 : vector<8x1xf32>
    %967 = vector.broadcast %966 : vector<8x1xf32> to vector<8x256xf32>
    %968 = arith.addf %964, %967 : vector<8x256xf32>
    %969 = arith.mulf %968, %968 : vector<8x256xf32>
    %970 = vector.broadcast %902 : vector<8x1xf32> to vector<8x256xf32>
    %971 = arith.mulf %970, %969 : vector<8x256xf32>
    %972 = arith.addf %887, %971 : vector<8x256xf32>
    %973 = vector.broadcast %904 : vector<8x1xf32> to vector<8x256xf32>
    %974 = arith.mulf %973, %968 : vector<8x256xf32>
    %975 = arith.addf %797, %974 : vector<8x256xf32>
    %cst_323 = arith.constant -0.0435616411 : f32
    %976 = vector.broadcast %cst_323 : f32 to vector<8x256xf32>
    %977 = arith.mulf %976, %914 : vector<8x256xf32>
    %cst_324 = arith.constant 1.02944195 : f32
    %978 = vector.broadcast %cst_324 : f32 to vector<8x256xf32>
    %979 = arith.mulf %978, %924 : vector<8x256xf32>
    %980 = arith.addf %977, %979 : vector<8x256xf32>
    %cst_325 = arith.constant 0.0361964963 : f32
    %981 = vector.broadcast %cst_325 : f32 to vector<8x256xf32>
    %982 = arith.mulf %981, %934 : vector<8x256xf32>
    %983 = arith.addf %980, %982 : vector<8x256xf32>
    %cst_326 = arith.constant -0.0512799099 : f32
    %984 = vector.broadcast %cst_326 : f32 to vector<8x256xf32>
    %985 = arith.mulf %984, %944 : vector<8x256xf32>
    %986 = arith.addf %983, %985 : vector<8x256xf32>
    %987 = vector.broadcast %896 : vector<8x1xf32> to vector<8x256xf32>
    %988 = arith.mulf %987, %924 : vector<8x256xf32>
    %c1_327 = arith.constant 1 : index
    %c0_328 = arith.constant 0 : index
    %c0_329 = arith.constant 0 : index
    %989 = vector.load %arg2[%c1_327, %c0_328, %c0_329] : memref<4x1x256xf32, #tpu.memory_space<vmem>>, vector<1x1x256xf32>
    %990 = vector.shape_cast %989 : vector<1x1x256xf32> to vector<1x256xf32>
    %991 = vector.broadcast %990 : vector<1x256xf32> to vector<8x256xf32>
    %992 = arith.subf %988, %991 : vector<8x256xf32>
    %993 = vector.broadcast %898 : vector<8x1xf32> to vector<8x256xf32>
    %994 = arith.mulf %993, %986 : vector<8x256xf32>
    %995 = arith.addf %992, %994 : vector<8x256xf32>
    %cst_330 = arith.constant -0.101784028 : f32
    %996 = vector.broadcast %cst_330 : f32 to vector<8x1xf32>
    %997 = arith.mulf %900, %996 : vector<8x1xf32>
    %998 = vector.broadcast %997 : vector<8x1xf32> to vector<8x256xf32>
    %999 = arith.addf %995, %998 : vector<8x256xf32>
    %1000 = arith.mulf %999, %999 : vector<8x256xf32>
    %1001 = vector.broadcast %902 : vector<8x1xf32> to vector<8x256xf32>
    %1002 = arith.mulf %1001, %1000 : vector<8x256xf32>
    %1003 = arith.addf %972, %1002 : vector<8x256xf32>
    %1004 = vector.broadcast %904 : vector<8x1xf32> to vector<8x256xf32>
    %1005 = arith.mulf %1004, %999 : vector<8x256xf32>
    %1006 = arith.addf %828, %1005 : vector<8x256xf32>
    %cst_331 = arith.constant 8.308140e-02 : f32
    %1007 = vector.broadcast %cst_331 : f32 to vector<8x256xf32>
    %1008 = arith.mulf %1007, %914 : vector<8x256xf32>
    %cst_332 = arith.constant -0.0945512577 : f32
    %1009 = vector.broadcast %cst_332 : f32 to vector<8x256xf32>
    %1010 = arith.mulf %1009, %924 : vector<8x256xf32>
    %1011 = arith.addf %1008, %1010 : vector<8x256xf32>
    %cst_333 = arith.constant 0.935553312 : f32
    %1012 = vector.broadcast %cst_333 : f32 to vector<8x256xf32>
    %1013 = arith.mulf %1012, %934 : vector<8x256xf32>
    %1014 = arith.addf %1011, %1013 : vector<8x256xf32>
    %cst_334 = arith.constant 0.00668034563 : f32
    %1015 = vector.broadcast %cst_334 : f32 to vector<8x256xf32>
    %1016 = arith.mulf %1015, %944 : vector<8x256xf32>
    %1017 = arith.addf %1014, %1016 : vector<8x256xf32>
    %1018 = vector.broadcast %896 : vector<8x1xf32> to vector<8x256xf32>
    %1019 = arith.mulf %1018, %934 : vector<8x256xf32>
    %c2_335 = arith.constant 2 : index
    %c0_336 = arith.constant 0 : index
    %c0_337 = arith.constant 0 : index
    %1020 = vector.load %arg2[%c2_335, %c0_336, %c0_337] : memref<4x1x256xf32, #tpu.memory_space<vmem>>, vector<1x1x256xf32>
    %1021 = vector.shape_cast %1020 : vector<1x1x256xf32> to vector<1x256xf32>
    %1022 = vector.broadcast %1021 : vector<1x256xf32> to vector<8x256xf32>
    %1023 = arith.subf %1019, %1022 : vector<8x256xf32>
    %1024 = vector.broadcast %898 : vector<8x1xf32> to vector<8x256xf32>
    %1025 = arith.mulf %1024, %1017 : vector<8x256xf32>
    %1026 = arith.addf %1023, %1025 : vector<8x256xf32>
    %cst_338 = arith.constant 0.0102772117 : f32
    %1027 = vector.broadcast %cst_338 : f32 to vector<8x1xf32>
    %1028 = arith.mulf %900, %1027 : vector<8x1xf32>
    %1029 = vector.broadcast %1028 : vector<8x1xf32> to vector<8x256xf32>
    %1030 = arith.addf %1026, %1029 : vector<8x256xf32>
    %1031 = arith.mulf %1030, %1030 : vector<8x256xf32>
    %1032 = vector.broadcast %902 : vector<8x1xf32> to vector<8x256xf32>
    %1033 = arith.mulf %1032, %1031 : vector<8x256xf32>
    %1034 = arith.addf %1003, %1033 : vector<8x256xf32>
    %1035 = vector.broadcast %904 : vector<8x1xf32> to vector<8x256xf32>
    %1036 = arith.mulf %1035, %1030 : vector<8x256xf32>
    %1037 = arith.addf %859, %1036 : vector<8x256xf32>
    %cst_339 = arith.constant -0.0576519631 : f32
    %1038 = vector.broadcast %cst_339 : f32 to vector<8x256xf32>
    %1039 = arith.mulf %1038, %914 : vector<8x256xf32>
    %cst_340 = arith.constant 0.0119648147 : f32
    %1040 = vector.broadcast %cst_340 : f32 to vector<8x256xf32>
    %1041 = arith.mulf %1040, %924 : vector<8x256xf32>
    %1042 = arith.addf %1039, %1041 : vector<8x256xf32>
    %cst_341 = arith.constant 0.0872403681 : f32
    %1043 = vector.broadcast %cst_341 : f32 to vector<8x256xf32>
    %1044 = arith.mulf %1043, %934 : vector<8x256xf32>
    %1045 = arith.addf %1042, %1044 : vector<8x256xf32>
    %cst_342 = arith.constant 1.02525091 : f32
    %1046 = vector.broadcast %cst_342 : f32 to vector<8x256xf32>
    %1047 = arith.mulf %1046, %944 : vector<8x256xf32>
    %1048 = arith.addf %1045, %1047 : vector<8x256xf32>
    %1049 = vector.broadcast %896 : vector<8x1xf32> to vector<8x256xf32>
    %1050 = arith.mulf %1049, %944 : vector<8x256xf32>
    %c3_343 = arith.constant 3 : index
    %c0_344 = arith.constant 0 : index
    %c0_345 = arith.constant 0 : index
    %1051 = vector.load %arg2[%c3_343, %c0_344, %c0_345] : memref<4x1x256xf32, #tpu.memory_space<vmem>>, vector<1x1x256xf32>
    %1052 = vector.shape_cast %1051 : vector<1x1x256xf32> to vector<1x256xf32>
    %1053 = vector.broadcast %1052 : vector<1x256xf32> to vector<8x256xf32>
    %1054 = arith.subf %1050, %1053 : vector<8x256xf32>
    %1055 = vector.broadcast %898 : vector<8x1xf32> to vector<8x256xf32>
    %1056 = arith.mulf %1055, %1048 : vector<8x256xf32>
    %1057 = arith.addf %1054, %1056 : vector<8x256xf32>
    %cst_346 = arith.constant -0.0176775102 : f32
    %1058 = vector.broadcast %cst_346 : f32 to vector<8x1xf32>
    %1059 = arith.mulf %900, %1058 : vector<8x1xf32>
    %1060 = vector.broadcast %1059 : vector<8x1xf32> to vector<8x256xf32>
    %1061 = arith.addf %1057, %1060 : vector<8x256xf32>
    %1062 = arith.mulf %1061, %1061 : vector<8x256xf32>
    %1063 = vector.broadcast %902 : vector<8x1xf32> to vector<8x256xf32>
    %1064 = arith.mulf %1063, %1062 : vector<8x256xf32>
    %1065 = arith.addf %1034, %1064 : vector<8x256xf32>
    %1066 = vector.broadcast %904 : vector<8x1xf32> to vector<8x256xf32>
    %1067 = arith.mulf %1066, %1061 : vector<8x256xf32>
    %1068 = arith.addf %890, %1067 : vector<8x256xf32>
    %c6_i32 = arith.constant 6 : i32
    %c8_i32_347 = arith.constant 8 : i32
    %1069 = arith.muli %c6_i32, %c8_i32_347 : i32
    %1070 = tpu.assume_multiple %1069, 8 : i32
    %1071 = arith.index_cast %1070 : i32 to index
    %c0_348 = arith.constant 0 : index
    %1072 = vector.load %arg1[%1071, %c0_348] : memref<128x8xf32, #tpu.memory_space<vmem>>, vector<8x1xf32>
    %1073 = arith.index_cast %1070 : i32 to index
    %c1_349 = arith.constant 1 : index
    %1074 = vector.load %arg1[%1073, %c1_349] : memref<128x8xf32, #tpu.memory_space<vmem>>, vector<8x1xf32>
    %1075 = arith.index_cast %1070 : i32 to index
    %c2_350 = arith.constant 2 : index
    %1076 = vector.load %arg1[%1075, %c2_350] : memref<128x8xf32, #tpu.memory_space<vmem>>, vector<8x1xf32>
    %1077 = arith.index_cast %1070 : i32 to index
    %c3_351 = arith.constant 3 : index
    %1078 = vector.load %arg1[%1077, %c3_351] : memref<128x8xf32, #tpu.memory_space<vmem>>, vector<8x1xf32>
    %1079 = arith.index_cast %1070 : i32 to index
    %c4_352 = arith.constant 4 : index
    %1080 = vector.load %arg1[%1079, %c4_352] : memref<128x8xf32, #tpu.memory_space<vmem>>, vector<8x1xf32>
    %1081 = arith.index_cast %1070 : i32 to index
    %c5_353 = arith.constant 5 : index
    %1082 = vector.load %arg1[%1081, %c5_353] : memref<128x8xf32, #tpu.memory_space<vmem>>, vector<8x1xf32>
    %c0_354 = arith.constant 0 : index
    %c0_355 = arith.constant 0 : index
    %c0_356 = arith.constant 0 : index
    %1083 = vector.load %arg2[%c0_354, %c0_355, %c0_356] : memref<4x1x256xf32, #tpu.memory_space<vmem>>, vector<1x1x256xf32>
    %1084 = vector.shape_cast %1083 : vector<1x1x256xf32> to vector<1x256xf32>
    %c0_357 = arith.constant 0 : index
    %1085 = arith.index_cast %1070 : i32 to index
    %c0_358 = arith.constant 0 : index
    %1086 = vector.load %arg3[%c0_357, %1085, %c0_358] : memref<4x128x256xbf16, #tpu.memory_space<vmem>>, vector<1x8x256xbf16>
    %1087 = vector.shape_cast %1086 : vector<1x8x256xbf16> to vector<8x256xbf16>
    %1088 = arith.extf %1087 : vector<8x256xbf16> to vector<8x256xf32>
    %1089 = vector.broadcast %1072 : vector<8x1xf32> to vector<8x256xf32>
    %1090 = arith.mulf %1088, %1089 : vector<8x256xf32>
    %1091 = vector.broadcast %1084 : vector<1x256xf32> to vector<8x256xf32>
    %1092 = arith.addf %1091, %1090 : vector<8x256xf32>
    %c1_359 = arith.constant 1 : index
    %c0_360 = arith.constant 0 : index
    %c0_361 = arith.constant 0 : index
    %1093 = vector.load %arg2[%c1_359, %c0_360, %c0_361] : memref<4x1x256xf32, #tpu.memory_space<vmem>>, vector<1x1x256xf32>
    %1094 = vector.shape_cast %1093 : vector<1x1x256xf32> to vector<1x256xf32>
    %c1_362 = arith.constant 1 : index
    %1095 = arith.index_cast %1070 : i32 to index
    %c0_363 = arith.constant 0 : index
    %1096 = vector.load %arg3[%c1_362, %1095, %c0_363] : memref<4x128x256xbf16, #tpu.memory_space<vmem>>, vector<1x8x256xbf16>
    %1097 = vector.shape_cast %1096 : vector<1x8x256xbf16> to vector<8x256xbf16>
    %1098 = arith.extf %1097 : vector<8x256xbf16> to vector<8x256xf32>
    %1099 = vector.broadcast %1072 : vector<8x1xf32> to vector<8x256xf32>
    %1100 = arith.mulf %1098, %1099 : vector<8x256xf32>
    %1101 = vector.broadcast %1094 : vector<1x256xf32> to vector<8x256xf32>
    %1102 = arith.addf %1101, %1100 : vector<8x256xf32>
    %c2_364 = arith.constant 2 : index
    %c0_365 = arith.constant 0 : index
    %c0_366 = arith.constant 0 : index
    %1103 = vector.load %arg2[%c2_364, %c0_365, %c0_366] : memref<4x1x256xf32, #tpu.memory_space<vmem>>, vector<1x1x256xf32>
    %1104 = vector.shape_cast %1103 : vector<1x1x256xf32> to vector<1x256xf32>
    %c2_367 = arith.constant 2 : index
    %1105 = arith.index_cast %1070 : i32 to index
    %c0_368 = arith.constant 0 : index
    %1106 = vector.load %arg3[%c2_367, %1105, %c0_368] : memref<4x128x256xbf16, #tpu.memory_space<vmem>>, vector<1x8x256xbf16>
    %1107 = vector.shape_cast %1106 : vector<1x8x256xbf16> to vector<8x256xbf16>
    %1108 = arith.extf %1107 : vector<8x256xbf16> to vector<8x256xf32>
    %1109 = vector.broadcast %1072 : vector<8x1xf32> to vector<8x256xf32>
    %1110 = arith.mulf %1108, %1109 : vector<8x256xf32>
    %1111 = vector.broadcast %1104 : vector<1x256xf32> to vector<8x256xf32>
    %1112 = arith.addf %1111, %1110 : vector<8x256xf32>
    %c3_369 = arith.constant 3 : index
    %c0_370 = arith.constant 0 : index
    %c0_371 = arith.constant 0 : index
    %1113 = vector.load %arg2[%c3_369, %c0_370, %c0_371] : memref<4x1x256xf32, #tpu.memory_space<vmem>>, vector<1x1x256xf32>
    %1114 = vector.shape_cast %1113 : vector<1x1x256xf32> to vector<1x256xf32>
    %c3_372 = arith.constant 3 : index
    %1115 = arith.index_cast %1070 : i32 to index
    %c0_373 = arith.constant 0 : index
    %1116 = vector.load %arg3[%c3_372, %1115, %c0_373] : memref<4x128x256xbf16, #tpu.memory_space<vmem>>, vector<1x8x256xbf16>
    %1117 = vector.shape_cast %1116 : vector<1x8x256xbf16> to vector<8x256xbf16>
    %1118 = arith.extf %1117 : vector<8x256xbf16> to vector<8x256xf32>
    %1119 = vector.broadcast %1072 : vector<8x1xf32> to vector<8x256xf32>
    %1120 = arith.mulf %1118, %1119 : vector<8x256xf32>
    %1121 = vector.broadcast %1114 : vector<1x256xf32> to vector<8x256xf32>
    %1122 = arith.addf %1121, %1120 : vector<8x256xf32>
    %cst_374 = arith.constant 1.0502007 : f32
    %1123 = vector.broadcast %cst_374 : f32 to vector<8x256xf32>
    %1124 = arith.mulf %1123, %1092 : vector<8x256xf32>
    %cst_375 = arith.constant -0.0453168601 : f32
    %1125 = vector.broadcast %cst_375 : f32 to vector<8x256xf32>
    %1126 = arith.mulf %1125, %1102 : vector<8x256xf32>
    %1127 = arith.addf %1124, %1126 : vector<8x256xf32>
    %cst_376 = arith.constant -0.0374086127 : f32
    %1128 = vector.broadcast %cst_376 : f32 to vector<8x256xf32>
    %1129 = arith.mulf %1128, %1112 : vector<8x256xf32>
    %1130 = arith.addf %1127, %1129 : vector<8x256xf32>
    %cst_377 = arith.constant -0.0585683472 : f32
    %1131 = vector.broadcast %cst_377 : f32 to vector<8x256xf32>
    %1132 = arith.mulf %1131, %1122 : vector<8x256xf32>
    %1133 = arith.addf %1130, %1132 : vector<8x256xf32>
    %1134 = vector.broadcast %1074 : vector<8x1xf32> to vector<8x256xf32>
    %1135 = arith.mulf %1134, %1092 : vector<8x256xf32>
    %c0_378 = arith.constant 0 : index
    %c0_379 = arith.constant 0 : index
    %c0_380 = arith.constant 0 : index
    %1136 = vector.load %arg2[%c0_378, %c0_379, %c0_380] : memref<4x1x256xf32, #tpu.memory_space<vmem>>, vector<1x1x256xf32>
    %1137 = vector.shape_cast %1136 : vector<1x1x256xf32> to vector<1x256xf32>
    %1138 = vector.broadcast %1137 : vector<1x256xf32> to vector<8x256xf32>
    %1139 = arith.subf %1135, %1138 : vector<8x256xf32>
    %1140 = vector.broadcast %1076 : vector<8x1xf32> to vector<8x256xf32>
    %1141 = arith.mulf %1140, %1133 : vector<8x256xf32>
    %1142 = arith.addf %1139, %1141 : vector<8x256xf32>
    %cst_381 = arith.constant -0.122122787 : f32
    %1143 = vector.broadcast %cst_381 : f32 to vector<8x1xf32>
    %1144 = arith.mulf %1078, %1143 : vector<8x1xf32>
    %1145 = vector.broadcast %1144 : vector<8x1xf32> to vector<8x256xf32>
    %1146 = arith.addf %1142, %1145 : vector<8x256xf32>
    %1147 = arith.mulf %1146, %1146 : vector<8x256xf32>
    %1148 = vector.broadcast %1080 : vector<8x1xf32> to vector<8x256xf32>
    %1149 = arith.mulf %1148, %1147 : vector<8x256xf32>
    %1150 = arith.addf %1065, %1149 : vector<8x256xf32>
    %1151 = vector.broadcast %1082 : vector<8x1xf32> to vector<8x256xf32>
    %1152 = arith.mulf %1151, %1146 : vector<8x256xf32>
    %1153 = arith.addf %975, %1152 : vector<8x256xf32>
    %cst_382 = arith.constant -0.0435616411 : f32
    %1154 = vector.broadcast %cst_382 : f32 to vector<8x256xf32>
    %1155 = arith.mulf %1154, %1092 : vector<8x256xf32>
    %cst_383 = arith.constant 1.02944195 : f32
    %1156 = vector.broadcast %cst_383 : f32 to vector<8x256xf32>
    %1157 = arith.mulf %1156, %1102 : vector<8x256xf32>
    %1158 = arith.addf %1155, %1157 : vector<8x256xf32>
    %cst_384 = arith.constant 0.0361964963 : f32
    %1159 = vector.broadcast %cst_384 : f32 to vector<8x256xf32>
    %1160 = arith.mulf %1159, %1112 : vector<8x256xf32>
    %1161 = arith.addf %1158, %1160 : vector<8x256xf32>
    %cst_385 = arith.constant -0.0512799099 : f32
    %1162 = vector.broadcast %cst_385 : f32 to vector<8x256xf32>
    %1163 = arith.mulf %1162, %1122 : vector<8x256xf32>
    %1164 = arith.addf %1161, %1163 : vector<8x256xf32>
    %1165 = vector.broadcast %1074 : vector<8x1xf32> to vector<8x256xf32>
    %1166 = arith.mulf %1165, %1102 : vector<8x256xf32>
    %c1_386 = arith.constant 1 : index
    %c0_387 = arith.constant 0 : index
    %c0_388 = arith.constant 0 : index
    %1167 = vector.load %arg2[%c1_386, %c0_387, %c0_388] : memref<4x1x256xf32, #tpu.memory_space<vmem>>, vector<1x1x256xf32>
    %1168 = vector.shape_cast %1167 : vector<1x1x256xf32> to vector<1x256xf32>
    %1169 = vector.broadcast %1168 : vector<1x256xf32> to vector<8x256xf32>
    %1170 = arith.subf %1166, %1169 : vector<8x256xf32>
    %1171 = vector.broadcast %1076 : vector<8x1xf32> to vector<8x256xf32>
    %1172 = arith.mulf %1171, %1164 : vector<8x256xf32>
    %1173 = arith.addf %1170, %1172 : vector<8x256xf32>
    %cst_389 = arith.constant -0.101784028 : f32
    %1174 = vector.broadcast %cst_389 : f32 to vector<8x1xf32>
    %1175 = arith.mulf %1078, %1174 : vector<8x1xf32>
    %1176 = vector.broadcast %1175 : vector<8x1xf32> to vector<8x256xf32>
    %1177 = arith.addf %1173, %1176 : vector<8x256xf32>
    %1178 = arith.mulf %1177, %1177 : vector<8x256xf32>
    %1179 = vector.broadcast %1080 : vector<8x1xf32> to vector<8x256xf32>
    %1180 = arith.mulf %1179, %1178 : vector<8x256xf32>
    %1181 = arith.addf %1150, %1180 : vector<8x256xf32>
    %1182 = vector.broadcast %1082 : vector<8x1xf32> to vector<8x256xf32>
    %1183 = arith.mulf %1182, %1177 : vector<8x256xf32>
    %1184 = arith.addf %1006, %1183 : vector<8x256xf32>
    %cst_390 = arith.constant 8.308140e-02 : f32
    %1185 = vector.broadcast %cst_390 : f32 to vector<8x256xf32>
    %1186 = arith.mulf %1185, %1092 : vector<8x256xf32>
    %cst_391 = arith.constant -0.0945512577 : f32
    %1187 = vector.broadcast %cst_391 : f32 to vector<8x256xf32>
    %1188 = arith.mulf %1187, %1102 : vector<8x256xf32>
    %1189 = arith.addf %1186, %1188 : vector<8x256xf32>
    %cst_392 = arith.constant 0.935553312 : f32
    %1190 = vector.broadcast %cst_392 : f32 to vector<8x256xf32>
    %1191 = arith.mulf %1190, %1112 : vector<8x256xf32>
    %1192 = arith.addf %1189, %1191 : vector<8x256xf32>
    %cst_393 = arith.constant 0.00668034563 : f32
    %1193 = vector.broadcast %cst_393 : f32 to vector<8x256xf32>
    %1194 = arith.mulf %1193, %1122 : vector<8x256xf32>
    %1195 = arith.addf %1192, %1194 : vector<8x256xf32>
    %1196 = vector.broadcast %1074 : vector<8x1xf32> to vector<8x256xf32>
    %1197 = arith.mulf %1196, %1112 : vector<8x256xf32>
    %c2_394 = arith.constant 2 : index
    %c0_395 = arith.constant 0 : index
    %c0_396 = arith.constant 0 : index
    %1198 = vector.load %arg2[%c2_394, %c0_395, %c0_396] : memref<4x1x256xf32, #tpu.memory_space<vmem>>, vector<1x1x256xf32>
    %1199 = vector.shape_cast %1198 : vector<1x1x256xf32> to vector<1x256xf32>
    %1200 = vector.broadcast %1199 : vector<1x256xf32> to vector<8x256xf32>
    %1201 = arith.subf %1197, %1200 : vector<8x256xf32>
    %1202 = vector.broadcast %1076 : vector<8x1xf32> to vector<8x256xf32>
    %1203 = arith.mulf %1202, %1195 : vector<8x256xf32>
    %1204 = arith.addf %1201, %1203 : vector<8x256xf32>
    %cst_397 = arith.constant 0.0102772117 : f32
    %1205 = vector.broadcast %cst_397 : f32 to vector<8x1xf32>
    %1206 = arith.mulf %1078, %1205 : vector<8x1xf32>
    %1207 = vector.broadcast %1206 : vector<8x1xf32> to vector<8x256xf32>
    %1208 = arith.addf %1204, %1207 : vector<8x256xf32>
    %1209 = arith.mulf %1208, %1208 : vector<8x256xf32>
    %1210 = vector.broadcast %1080 : vector<8x1xf32> to vector<8x256xf32>
    %1211 = arith.mulf %1210, %1209 : vector<8x256xf32>
    %1212 = arith.addf %1181, %1211 : vector<8x256xf32>
    %1213 = vector.broadcast %1082 : vector<8x1xf32> to vector<8x256xf32>
    %1214 = arith.mulf %1213, %1208 : vector<8x256xf32>
    %1215 = arith.addf %1037, %1214 : vector<8x256xf32>
    %cst_398 = arith.constant -0.0576519631 : f32
    %1216 = vector.broadcast %cst_398 : f32 to vector<8x256xf32>
    %1217 = arith.mulf %1216, %1092 : vector<8x256xf32>
    %cst_399 = arith.constant 0.0119648147 : f32
    %1218 = vector.broadcast %cst_399 : f32 to vector<8x256xf32>
    %1219 = arith.mulf %1218, %1102 : vector<8x256xf32>
    %1220 = arith.addf %1217, %1219 : vector<8x256xf32>
    %cst_400 = arith.constant 0.0872403681 : f32
    %1221 = vector.broadcast %cst_400 : f32 to vector<8x256xf32>
    %1222 = arith.mulf %1221, %1112 : vector<8x256xf32>
    %1223 = arith.addf %1220, %1222 : vector<8x256xf32>
    %cst_401 = arith.constant 1.02525091 : f32
    %1224 = vector.broadcast %cst_401 : f32 to vector<8x256xf32>
    %1225 = arith.mulf %1224, %1122 : vector<8x256xf32>
    %1226 = arith.addf %1223, %1225 : vector<8x256xf32>
    %1227 = vector.broadcast %1074 : vector<8x1xf32> to vector<8x256xf32>
    %1228 = arith.mulf %1227, %1122 : vector<8x256xf32>
    %c3_402 = arith.constant 3 : index
    %c0_403 = arith.constant 0 : index
    %c0_404 = arith.constant 0 : index
    %1229 = vector.load %arg2[%c3_402, %c0_403, %c0_404] : memref<4x1x256xf32, #tpu.memory_space<vmem>>, vector<1x1x256xf32>
    %1230 = vector.shape_cast %1229 : vector<1x1x256xf32> to vector<1x256xf32>
    %1231 = vector.broadcast %1230 : vector<1x256xf32> to vector<8x256xf32>
    %1232 = arith.subf %1228, %1231 : vector<8x256xf32>
    %1233 = vector.broadcast %1076 : vector<8x1xf32> to vector<8x256xf32>
    %1234 = arith.mulf %1233, %1226 : vector<8x256xf32>
    %1235 = arith.addf %1232, %1234 : vector<8x256xf32>
    %cst_405 = arith.constant -0.0176775102 : f32
    %1236 = vector.broadcast %cst_405 : f32 to vector<8x1xf32>
    %1237 = arith.mulf %1078, %1236 : vector<8x1xf32>
    %1238 = vector.broadcast %1237 : vector<8x1xf32> to vector<8x256xf32>
    %1239 = arith.addf %1235, %1238 : vector<8x256xf32>
    %1240 = arith.mulf %1239, %1239 : vector<8x256xf32>
    %1241 = vector.broadcast %1080 : vector<8x1xf32> to vector<8x256xf32>
    %1242 = arith.mulf %1241, %1240 : vector<8x256xf32>
    %1243 = arith.addf %1212, %1242 : vector<8x256xf32>
    %1244 = vector.broadcast %1082 : vector<8x1xf32> to vector<8x256xf32>
    %1245 = arith.mulf %1244, %1239 : vector<8x256xf32>
    %1246 = arith.addf %1068, %1245 : vector<8x256xf32>
    %c7_i32 = arith.constant 7 : i32
    %c8_i32_406 = arith.constant 8 : i32
    %1247 = arith.muli %c7_i32, %c8_i32_406 : i32
    %1248 = tpu.assume_multiple %1247, 8 : i32
    %1249 = arith.index_cast %1248 : i32 to index
    %c0_407 = arith.constant 0 : index
    %1250 = vector.load %arg1[%1249, %c0_407] : memref<128x8xf32, #tpu.memory_space<vmem>>, vector<8x1xf32>
    %1251 = arith.index_cast %1248 : i32 to index
    %c1_408 = arith.constant 1 : index
    %1252 = vector.load %arg1[%1251, %c1_408] : memref<128x8xf32, #tpu.memory_space<vmem>>, vector<8x1xf32>
    %1253 = arith.index_cast %1248 : i32 to index
    %c2_409 = arith.constant 2 : index
    %1254 = vector.load %arg1[%1253, %c2_409] : memref<128x8xf32, #tpu.memory_space<vmem>>, vector<8x1xf32>
    %1255 = arith.index_cast %1248 : i32 to index
    %c3_410 = arith.constant 3 : index
    %1256 = vector.load %arg1[%1255, %c3_410] : memref<128x8xf32, #tpu.memory_space<vmem>>, vector<8x1xf32>
    %1257 = arith.index_cast %1248 : i32 to index
    %c4_411 = arith.constant 4 : index
    %1258 = vector.load %arg1[%1257, %c4_411] : memref<128x8xf32, #tpu.memory_space<vmem>>, vector<8x1xf32>
    %1259 = arith.index_cast %1248 : i32 to index
    %c5_412 = arith.constant 5 : index
    %1260 = vector.load %arg1[%1259, %c5_412] : memref<128x8xf32, #tpu.memory_space<vmem>>, vector<8x1xf32>
    %c0_413 = arith.constant 0 : index
    %c0_414 = arith.constant 0 : index
    %c0_415 = arith.constant 0 : index
    %1261 = vector.load %arg2[%c0_413, %c0_414, %c0_415] : memref<4x1x256xf32, #tpu.memory_space<vmem>>, vector<1x1x256xf32>
    %1262 = vector.shape_cast %1261 : vector<1x1x256xf32> to vector<1x256xf32>
    %c0_416 = arith.constant 0 : index
    %1263 = arith.index_cast %1248 : i32 to index
    %c0_417 = arith.constant 0 : index
    %1264 = vector.load %arg3[%c0_416, %1263, %c0_417] : memref<4x128x256xbf16, #tpu.memory_space<vmem>>, vector<1x8x256xbf16>
    %1265 = vector.shape_cast %1264 : vector<1x8x256xbf16> to vector<8x256xbf16>
    %1266 = arith.extf %1265 : vector<8x256xbf16> to vector<8x256xf32>
    %1267 = vector.broadcast %1250 : vector<8x1xf32> to vector<8x256xf32>
    %1268 = arith.mulf %1266, %1267 : vector<8x256xf32>
    %1269 = vector.broadcast %1262 : vector<1x256xf32> to vector<8x256xf32>
    %1270 = arith.addf %1269, %1268 : vector<8x256xf32>
    %c1_418 = arith.constant 1 : index
    %c0_419 = arith.constant 0 : index
    %c0_420 = arith.constant 0 : index
    %1271 = vector.load %arg2[%c1_418, %c0_419, %c0_420] : memref<4x1x256xf32, #tpu.memory_space<vmem>>, vector<1x1x256xf32>
    %1272 = vector.shape_cast %1271 : vector<1x1x256xf32> to vector<1x256xf32>
    %c1_421 = arith.constant 1 : index
    %1273 = arith.index_cast %1248 : i32 to index
    %c0_422 = arith.constant 0 : index
    %1274 = vector.load %arg3[%c1_421, %1273, %c0_422] : memref<4x128x256xbf16, #tpu.memory_space<vmem>>, vector<1x8x256xbf16>
    %1275 = vector.shape_cast %1274 : vector<1x8x256xbf16> to vector<8x256xbf16>
    %1276 = arith.extf %1275 : vector<8x256xbf16> to vector<8x256xf32>
    %1277 = vector.broadcast %1250 : vector<8x1xf32> to vector<8x256xf32>
    %1278 = arith.mulf %1276, %1277 : vector<8x256xf32>
    %1279 = vector.broadcast %1272 : vector<1x256xf32> to vector<8x256xf32>
    %1280 = arith.addf %1279, %1278 : vector<8x256xf32>
    %c2_423 = arith.constant 2 : index
    %c0_424 = arith.constant 0 : index
    %c0_425 = arith.constant 0 : index
    %1281 = vector.load %arg2[%c2_423, %c0_424, %c0_425] : memref<4x1x256xf32, #tpu.memory_space<vmem>>, vector<1x1x256xf32>
    %1282 = vector.shape_cast %1281 : vector<1x1x256xf32> to vector<1x256xf32>
    %c2_426 = arith.constant 2 : index
    %1283 = arith.index_cast %1248 : i32 to index
    %c0_427 = arith.constant 0 : index
    %1284 = vector.load %arg3[%c2_426, %1283, %c0_427] : memref<4x128x256xbf16, #tpu.memory_space<vmem>>, vector<1x8x256xbf16>
    %1285 = vector.shape_cast %1284 : vector<1x8x256xbf16> to vector<8x256xbf16>
    %1286 = arith.extf %1285 : vector<8x256xbf16> to vector<8x256xf32>
    %1287 = vector.broadcast %1250 : vector<8x1xf32> to vector<8x256xf32>
    %1288 = arith.mulf %1286, %1287 : vector<8x256xf32>
    %1289 = vector.broadcast %1282 : vector<1x256xf32> to vector<8x256xf32>
    %1290 = arith.addf %1289, %1288 : vector<8x256xf32>
    %c3_428 = arith.constant 3 : index
    %c0_429 = arith.constant 0 : index
    %c0_430 = arith.constant 0 : index
    %1291 = vector.load %arg2[%c3_428, %c0_429, %c0_430] : memref<4x1x256xf32, #tpu.memory_space<vmem>>, vector<1x1x256xf32>
    %1292 = vector.shape_cast %1291 : vector<1x1x256xf32> to vector<1x256xf32>
    %c3_431 = arith.constant 3 : index
    %1293 = arith.index_cast %1248 : i32 to index
    %c0_432 = arith.constant 0 : index
    %1294 = vector.load %arg3[%c3_431, %1293, %c0_432] : memref<4x128x256xbf16, #tpu.memory_space<vmem>>, vector<1x8x256xbf16>
    %1295 = vector.shape_cast %1294 : vector<1x8x256xbf16> to vector<8x256xbf16>
    %1296 = arith.extf %1295 : vector<8x256xbf16> to vector<8x256xf32>
    %1297 = vector.broadcast %1250 : vector<8x1xf32> to vector<8x256xf32>
    %1298 = arith.mulf %1296, %1297 : vector<8x256xf32>
    %1299 = vector.broadcast %1292 : vector<1x256xf32> to vector<8x256xf32>
    %1300 = arith.addf %1299, %1298 : vector<8x256xf32>
    %cst_433 = arith.constant 1.0502007 : f32
    %1301 = vector.broadcast %cst_433 : f32 to vector<8x256xf32>
    %1302 = arith.mulf %1301, %1270 : vector<8x256xf32>
    %cst_434 = arith.constant -0.0453168601 : f32
    %1303 = vector.broadcast %cst_434 : f32 to vector<8x256xf32>
    %1304 = arith.mulf %1303, %1280 : vector<8x256xf32>
    %1305 = arith.addf %1302, %1304 : vector<8x256xf32>
    %cst_435 = arith.constant -0.0374086127 : f32
    %1306 = vector.broadcast %cst_435 : f32 to vector<8x256xf32>
    %1307 = arith.mulf %1306, %1290 : vector<8x256xf32>
    %1308 = arith.addf %1305, %1307 : vector<8x256xf32>
    %cst_436 = arith.constant -0.0585683472 : f32
    %1309 = vector.broadcast %cst_436 : f32 to vector<8x256xf32>
    %1310 = arith.mulf %1309, %1300 : vector<8x256xf32>
    %1311 = arith.addf %1308, %1310 : vector<8x256xf32>
    %1312 = vector.broadcast %1252 : vector<8x1xf32> to vector<8x256xf32>
    %1313 = arith.mulf %1312, %1270 : vector<8x256xf32>
    %c0_437 = arith.constant 0 : index
    %c0_438 = arith.constant 0 : index
    %c0_439 = arith.constant 0 : index
    %1314 = vector.load %arg2[%c0_437, %c0_438, %c0_439] : memref<4x1x256xf32, #tpu.memory_space<vmem>>, vector<1x1x256xf32>
    %1315 = vector.shape_cast %1314 : vector<1x1x256xf32> to vector<1x256xf32>
    %1316 = vector.broadcast %1315 : vector<1x256xf32> to vector<8x256xf32>
    %1317 = arith.subf %1313, %1316 : vector<8x256xf32>
    %1318 = vector.broadcast %1254 : vector<8x1xf32> to vector<8x256xf32>
    %1319 = arith.mulf %1318, %1311 : vector<8x256xf32>
    %1320 = arith.addf %1317, %1319 : vector<8x256xf32>
    %cst_440 = arith.constant -0.122122787 : f32
    %1321 = vector.broadcast %cst_440 : f32 to vector<8x1xf32>
    %1322 = arith.mulf %1256, %1321 : vector<8x1xf32>
    %1323 = vector.broadcast %1322 : vector<8x1xf32> to vector<8x256xf32>
    %1324 = arith.addf %1320, %1323 : vector<8x256xf32>
    %1325 = arith.mulf %1324, %1324 : vector<8x256xf32>
    %1326 = vector.broadcast %1258 : vector<8x1xf32> to vector<8x256xf32>
    %1327 = arith.mulf %1326, %1325 : vector<8x256xf32>
    %1328 = arith.addf %1243, %1327 : vector<8x256xf32>
    %1329 = vector.broadcast %1260 : vector<8x1xf32> to vector<8x256xf32>
    %1330 = arith.mulf %1329, %1324 : vector<8x256xf32>
    %1331 = arith.addf %1153, %1330 : vector<8x256xf32>
    %cst_441 = arith.constant -0.0435616411 : f32
    %1332 = vector.broadcast %cst_441 : f32 to vector<8x256xf32>
    %1333 = arith.mulf %1332, %1270 : vector<8x256xf32>
    %cst_442 = arith.constant 1.02944195 : f32
    %1334 = vector.broadcast %cst_442 : f32 to vector<8x256xf32>
    %1335 = arith.mulf %1334, %1280 : vector<8x256xf32>
    %1336 = arith.addf %1333, %1335 : vector<8x256xf32>
    %cst_443 = arith.constant 0.0361964963 : f32
    %1337 = vector.broadcast %cst_443 : f32 to vector<8x256xf32>
    %1338 = arith.mulf %1337, %1290 : vector<8x256xf32>
    %1339 = arith.addf %1336, %1338 : vector<8x256xf32>
    %cst_444 = arith.constant -0.0512799099 : f32
    %1340 = vector.broadcast %cst_444 : f32 to vector<8x256xf32>
    %1341 = arith.mulf %1340, %1300 : vector<8x256xf32>
    %1342 = arith.addf %1339, %1341 : vector<8x256xf32>
    %1343 = vector.broadcast %1252 : vector<8x1xf32> to vector<8x256xf32>
    %1344 = arith.mulf %1343, %1280 : vector<8x256xf32>
    %c1_445 = arith.constant 1 : index
    %c0_446 = arith.constant 0 : index
    %c0_447 = arith.constant 0 : index
    %1345 = vector.load %arg2[%c1_445, %c0_446, %c0_447] : memref<4x1x256xf32, #tpu.memory_space<vmem>>, vector<1x1x256xf32>
    %1346 = vector.shape_cast %1345 : vector<1x1x256xf32> to vector<1x256xf32>
    %1347 = vector.broadcast %1346 : vector<1x256xf32> to vector<8x256xf32>
    %1348 = arith.subf %1344, %1347 : vector<8x256xf32>
    %1349 = vector.broadcast %1254 : vector<8x1xf32> to vector<8x256xf32>
    %1350 = arith.mulf %1349, %1342 : vector<8x256xf32>
    %1351 = arith.addf %1348, %1350 : vector<8x256xf32>
    %cst_448 = arith.constant -0.101784028 : f32
    %1352 = vector.broadcast %cst_448 : f32 to vector<8x1xf32>
    %1353 = arith.mulf %1256, %1352 : vector<8x1xf32>
    %1354 = vector.broadcast %1353 : vector<8x1xf32> to vector<8x256xf32>
    %1355 = arith.addf %1351, %1354 : vector<8x256xf32>
    %1356 = arith.mulf %1355, %1355 : vector<8x256xf32>
    %1357 = vector.broadcast %1258 : vector<8x1xf32> to vector<8x256xf32>
    %1358 = arith.mulf %1357, %1356 : vector<8x256xf32>
    %1359 = arith.addf %1328, %1358 : vector<8x256xf32>
    %1360 = vector.broadcast %1260 : vector<8x1xf32> to vector<8x256xf32>
    %1361 = arith.mulf %1360, %1355 : vector<8x256xf32>
    %1362 = arith.addf %1184, %1361 : vector<8x256xf32>
    %cst_449 = arith.constant 8.308140e-02 : f32
    %1363 = vector.broadcast %cst_449 : f32 to vector<8x256xf32>
    %1364 = arith.mulf %1363, %1270 : vector<8x256xf32>
    %cst_450 = arith.constant -0.0945512577 : f32
    %1365 = vector.broadcast %cst_450 : f32 to vector<8x256xf32>
    %1366 = arith.mulf %1365, %1280 : vector<8x256xf32>
    %1367 = arith.addf %1364, %1366 : vector<8x256xf32>
    %cst_451 = arith.constant 0.935553312 : f32
    %1368 = vector.broadcast %cst_451 : f32 to vector<8x256xf32>
    %1369 = arith.mulf %1368, %1290 : vector<8x256xf32>
    %1370 = arith.addf %1367, %1369 : vector<8x256xf32>
    %cst_452 = arith.constant 0.00668034563 : f32
    %1371 = vector.broadcast %cst_452 : f32 to vector<8x256xf32>
    %1372 = arith.mulf %1371, %1300 : vector<8x256xf32>
    %1373 = arith.addf %1370, %1372 : vector<8x256xf32>
    %1374 = vector.broadcast %1252 : vector<8x1xf32> to vector<8x256xf32>
    %1375 = arith.mulf %1374, %1290 : vector<8x256xf32>
    %c2_453 = arith.constant 2 : index
    %c0_454 = arith.constant 0 : index
    %c0_455 = arith.constant 0 : index
    %1376 = vector.load %arg2[%c2_453, %c0_454, %c0_455] : memref<4x1x256xf32, #tpu.memory_space<vmem>>, vector<1x1x256xf32>
    %1377 = vector.shape_cast %1376 : vector<1x1x256xf32> to vector<1x256xf32>
    %1378 = vector.broadcast %1377 : vector<1x256xf32> to vector<8x256xf32>
    %1379 = arith.subf %1375, %1378 : vector<8x256xf32>
    %1380 = vector.broadcast %1254 : vector<8x1xf32> to vector<8x256xf32>
    %1381 = arith.mulf %1380, %1373 : vector<8x256xf32>
    %1382 = arith.addf %1379, %1381 : vector<8x256xf32>
    %cst_456 = arith.constant 0.0102772117 : f32
    %1383 = vector.broadcast %cst_456 : f32 to vector<8x1xf32>
    %1384 = arith.mulf %1256, %1383 : vector<8x1xf32>
    %1385 = vector.broadcast %1384 : vector<8x1xf32> to vector<8x256xf32>
    %1386 = arith.addf %1382, %1385 : vector<8x256xf32>
    %1387 = arith.mulf %1386, %1386 : vector<8x256xf32>
    %1388 = vector.broadcast %1258 : vector<8x1xf32> to vector<8x256xf32>
    %1389 = arith.mulf %1388, %1387 : vector<8x256xf32>
    %1390 = arith.addf %1359, %1389 : vector<8x256xf32>
    %1391 = vector.broadcast %1260 : vector<8x1xf32> to vector<8x256xf32>
    %1392 = arith.mulf %1391, %1386 : vector<8x256xf32>
    %1393 = arith.addf %1215, %1392 : vector<8x256xf32>
    %cst_457 = arith.constant -0.0576519631 : f32
    %1394 = vector.broadcast %cst_457 : f32 to vector<8x256xf32>
    %1395 = arith.mulf %1394, %1270 : vector<8x256xf32>
    %cst_458 = arith.constant 0.0119648147 : f32
    %1396 = vector.broadcast %cst_458 : f32 to vector<8x256xf32>
    %1397 = arith.mulf %1396, %1280 : vector<8x256xf32>
    %1398 = arith.addf %1395, %1397 : vector<8x256xf32>
    %cst_459 = arith.constant 0.0872403681 : f32
    %1399 = vector.broadcast %cst_459 : f32 to vector<8x256xf32>
    %1400 = arith.mulf %1399, %1290 : vector<8x256xf32>
    %1401 = arith.addf %1398, %1400 : vector<8x256xf32>
    %cst_460 = arith.constant 1.02525091 : f32
    %1402 = vector.broadcast %cst_460 : f32 to vector<8x256xf32>
    %1403 = arith.mulf %1402, %1300 : vector<8x256xf32>
    %1404 = arith.addf %1401, %1403 : vector<8x256xf32>
    %1405 = vector.broadcast %1252 : vector<8x1xf32> to vector<8x256xf32>
    %1406 = arith.mulf %1405, %1300 : vector<8x256xf32>
    %c3_461 = arith.constant 3 : index
    %c0_462 = arith.constant 0 : index
    %c0_463 = arith.constant 0 : index
    %1407 = vector.load %arg2[%c3_461, %c0_462, %c0_463] : memref<4x1x256xf32, #tpu.memory_space<vmem>>, vector<1x1x256xf32>
    %1408 = vector.shape_cast %1407 : vector<1x1x256xf32> to vector<1x256xf32>
    %1409 = vector.broadcast %1408 : vector<1x256xf32> to vector<8x256xf32>
    %1410 = arith.subf %1406, %1409 : vector<8x256xf32>
    %1411 = vector.broadcast %1254 : vector<8x1xf32> to vector<8x256xf32>
    %1412 = arith.mulf %1411, %1404 : vector<8x256xf32>
    %1413 = arith.addf %1410, %1412 : vector<8x256xf32>
    %cst_464 = arith.constant -0.0176775102 : f32
    %1414 = vector.broadcast %cst_464 : f32 to vector<8x1xf32>
    %1415 = arith.mulf %1256, %1414 : vector<8x1xf32>
    %1416 = vector.broadcast %1415 : vector<8x1xf32> to vector<8x256xf32>
    %1417 = arith.addf %1413, %1416 : vector<8x256xf32>
    %1418 = arith.mulf %1417, %1417 : vector<8x256xf32>
    %1419 = vector.broadcast %1258 : vector<8x1xf32> to vector<8x256xf32>
    %1420 = arith.mulf %1419, %1418 : vector<8x256xf32>
    %1421 = arith.addf %1390, %1420 : vector<8x256xf32>
    %1422 = vector.broadcast %1260 : vector<8x1xf32> to vector<8x256xf32>
    %1423 = arith.mulf %1422, %1417 : vector<8x256xf32>
    %1424 = arith.addf %1246, %1423 : vector<8x256xf32>
    %c8_i32_465 = arith.constant 8 : i32
    %c8_i32_466 = arith.constant 8 : i32
    %1425 = arith.muli %c8_i32_465, %c8_i32_466 : i32
    %1426 = tpu.assume_multiple %1425, 8 : i32
    %1427 = arith.index_cast %1426 : i32 to index
    %c0_467 = arith.constant 0 : index
    %1428 = vector.load %arg1[%1427, %c0_467] : memref<128x8xf32, #tpu.memory_space<vmem>>, vector<8x1xf32>
    %1429 = arith.index_cast %1426 : i32 to index
    %c1_468 = arith.constant 1 : index
    %1430 = vector.load %arg1[%1429, %c1_468] : memref<128x8xf32, #tpu.memory_space<vmem>>, vector<8x1xf32>
    %1431 = arith.index_cast %1426 : i32 to index
    %c2_469 = arith.constant 2 : index
    %1432 = vector.load %arg1[%1431, %c2_469] : memref<128x8xf32, #tpu.memory_space<vmem>>, vector<8x1xf32>
    %1433 = arith.index_cast %1426 : i32 to index
    %c3_470 = arith.constant 3 : index
    %1434 = vector.load %arg1[%1433, %c3_470] : memref<128x8xf32, #tpu.memory_space<vmem>>, vector<8x1xf32>
    %1435 = arith.index_cast %1426 : i32 to index
    %c4_471 = arith.constant 4 : index
    %1436 = vector.load %arg1[%1435, %c4_471] : memref<128x8xf32, #tpu.memory_space<vmem>>, vector<8x1xf32>
    %1437 = arith.index_cast %1426 : i32 to index
    %c5_472 = arith.constant 5 : index
    %1438 = vector.load %arg1[%1437, %c5_472] : memref<128x8xf32, #tpu.memory_space<vmem>>, vector<8x1xf32>
    %c0_473 = arith.constant 0 : index
    %c0_474 = arith.constant 0 : index
    %c0_475 = arith.constant 0 : index
    %1439 = vector.load %arg2[%c0_473, %c0_474, %c0_475] : memref<4x1x256xf32, #tpu.memory_space<vmem>>, vector<1x1x256xf32>
    %1440 = vector.shape_cast %1439 : vector<1x1x256xf32> to vector<1x256xf32>
    %c0_476 = arith.constant 0 : index
    %1441 = arith.index_cast %1426 : i32 to index
    %c0_477 = arith.constant 0 : index
    %1442 = vector.load %arg3[%c0_476, %1441, %c0_477] : memref<4x128x256xbf16, #tpu.memory_space<vmem>>, vector<1x8x256xbf16>
    %1443 = vector.shape_cast %1442 : vector<1x8x256xbf16> to vector<8x256xbf16>
    %1444 = arith.extf %1443 : vector<8x256xbf16> to vector<8x256xf32>
    %1445 = vector.broadcast %1428 : vector<8x1xf32> to vector<8x256xf32>
    %1446 = arith.mulf %1444, %1445 : vector<8x256xf32>
    %1447 = vector.broadcast %1440 : vector<1x256xf32> to vector<8x256xf32>
    %1448 = arith.addf %1447, %1446 : vector<8x256xf32>
    %c1_478 = arith.constant 1 : index
    %c0_479 = arith.constant 0 : index
    %c0_480 = arith.constant 0 : index
    %1449 = vector.load %arg2[%c1_478, %c0_479, %c0_480] : memref<4x1x256xf32, #tpu.memory_space<vmem>>, vector<1x1x256xf32>
    %1450 = vector.shape_cast %1449 : vector<1x1x256xf32> to vector<1x256xf32>
    %c1_481 = arith.constant 1 : index
    %1451 = arith.index_cast %1426 : i32 to index
    %c0_482 = arith.constant 0 : index
    %1452 = vector.load %arg3[%c1_481, %1451, %c0_482] : memref<4x128x256xbf16, #tpu.memory_space<vmem>>, vector<1x8x256xbf16>
    %1453 = vector.shape_cast %1452 : vector<1x8x256xbf16> to vector<8x256xbf16>
    %1454 = arith.extf %1453 : vector<8x256xbf16> to vector<8x256xf32>
    %1455 = vector.broadcast %1428 : vector<8x1xf32> to vector<8x256xf32>
    %1456 = arith.mulf %1454, %1455 : vector<8x256xf32>
    %1457 = vector.broadcast %1450 : vector<1x256xf32> to vector<8x256xf32>
    %1458 = arith.addf %1457, %1456 : vector<8x256xf32>
    %c2_483 = arith.constant 2 : index
    %c0_484 = arith.constant 0 : index
    %c0_485 = arith.constant 0 : index
    %1459 = vector.load %arg2[%c2_483, %c0_484, %c0_485] : memref<4x1x256xf32, #tpu.memory_space<vmem>>, vector<1x1x256xf32>
    %1460 = vector.shape_cast %1459 : vector<1x1x256xf32> to vector<1x256xf32>
    %c2_486 = arith.constant 2 : index
    %1461 = arith.index_cast %1426 : i32 to index
    %c0_487 = arith.constant 0 : index
    %1462 = vector.load %arg3[%c2_486, %1461, %c0_487] : memref<4x128x256xbf16, #tpu.memory_space<vmem>>, vector<1x8x256xbf16>
    %1463 = vector.shape_cast %1462 : vector<1x8x256xbf16> to vector<8x256xbf16>
    %1464 = arith.extf %1463 : vector<8x256xbf16> to vector<8x256xf32>
    %1465 = vector.broadcast %1428 : vector<8x1xf32> to vector<8x256xf32>
    %1466 = arith.mulf %1464, %1465 : vector<8x256xf32>
    %1467 = vector.broadcast %1460 : vector<1x256xf32> to vector<8x256xf32>
    %1468 = arith.addf %1467, %1466 : vector<8x256xf32>
    %c3_488 = arith.constant 3 : index
    %c0_489 = arith.constant 0 : index
    %c0_490 = arith.constant 0 : index
    %1469 = vector.load %arg2[%c3_488, %c0_489, %c0_490] : memref<4x1x256xf32, #tpu.memory_space<vmem>>, vector<1x1x256xf32>
    %1470 = vector.shape_cast %1469 : vector<1x1x256xf32> to vector<1x256xf32>
    %c3_491 = arith.constant 3 : index
    %1471 = arith.index_cast %1426 : i32 to index
    %c0_492 = arith.constant 0 : index
    %1472 = vector.load %arg3[%c3_491, %1471, %c0_492] : memref<4x128x256xbf16, #tpu.memory_space<vmem>>, vector<1x8x256xbf16>
    %1473 = vector.shape_cast %1472 : vector<1x8x256xbf16> to vector<8x256xbf16>
    %1474 = arith.extf %1473 : vector<8x256xbf16> to vector<8x256xf32>
    %1475 = vector.broadcast %1428 : vector<8x1xf32> to vector<8x256xf32>
    %1476 = arith.mulf %1474, %1475 : vector<8x256xf32>
    %1477 = vector.broadcast %1470 : vector<1x256xf32> to vector<8x256xf32>
    %1478 = arith.addf %1477, %1476 : vector<8x256xf32>
    %cst_493 = arith.constant 1.0502007 : f32
    %1479 = vector.broadcast %cst_493 : f32 to vector<8x256xf32>
    %1480 = arith.mulf %1479, %1448 : vector<8x256xf32>
    %cst_494 = arith.constant -0.0453168601 : f32
    %1481 = vector.broadcast %cst_494 : f32 to vector<8x256xf32>
    %1482 = arith.mulf %1481, %1458 : vector<8x256xf32>
    %1483 = arith.addf %1480, %1482 : vector<8x256xf32>
    %cst_495 = arith.constant -0.0374086127 : f32
    %1484 = vector.broadcast %cst_495 : f32 to vector<8x256xf32>
    %1485 = arith.mulf %1484, %1468 : vector<8x256xf32>
    %1486 = arith.addf %1483, %1485 : vector<8x256xf32>
    %cst_496 = arith.constant -0.0585683472 : f32
    %1487 = vector.broadcast %cst_496 : f32 to vector<8x256xf32>
    %1488 = arith.mulf %1487, %1478 : vector<8x256xf32>
    %1489 = arith.addf %1486, %1488 : vector<8x256xf32>
    %1490 = vector.broadcast %1430 : vector<8x1xf32> to vector<8x256xf32>
    %1491 = arith.mulf %1490, %1448 : vector<8x256xf32>
    %c0_497 = arith.constant 0 : index
    %c0_498 = arith.constant 0 : index
    %c0_499 = arith.constant 0 : index
    %1492 = vector.load %arg2[%c0_497, %c0_498, %c0_499] : memref<4x1x256xf32, #tpu.memory_space<vmem>>, vector<1x1x256xf32>
    %1493 = vector.shape_cast %1492 : vector<1x1x256xf32> to vector<1x256xf32>
    %1494 = vector.broadcast %1493 : vector<1x256xf32> to vector<8x256xf32>
    %1495 = arith.subf %1491, %1494 : vector<8x256xf32>
    %1496 = vector.broadcast %1432 : vector<8x1xf32> to vector<8x256xf32>
    %1497 = arith.mulf %1496, %1489 : vector<8x256xf32>
    %1498 = arith.addf %1495, %1497 : vector<8x256xf32>
    %cst_500 = arith.constant -0.122122787 : f32
    %1499 = vector.broadcast %cst_500 : f32 to vector<8x1xf32>
    %1500 = arith.mulf %1434, %1499 : vector<8x1xf32>
    %1501 = vector.broadcast %1500 : vector<8x1xf32> to vector<8x256xf32>
    %1502 = arith.addf %1498, %1501 : vector<8x256xf32>
    %1503 = arith.mulf %1502, %1502 : vector<8x256xf32>
    %1504 = vector.broadcast %1436 : vector<8x1xf32> to vector<8x256xf32>
    %1505 = arith.mulf %1504, %1503 : vector<8x256xf32>
    %1506 = arith.addf %1421, %1505 : vector<8x256xf32>
    %1507 = vector.broadcast %1438 : vector<8x1xf32> to vector<8x256xf32>
    %1508 = arith.mulf %1507, %1502 : vector<8x256xf32>
    %1509 = arith.addf %1331, %1508 : vector<8x256xf32>
    %cst_501 = arith.constant -0.0435616411 : f32
    %1510 = vector.broadcast %cst_501 : f32 to vector<8x256xf32>
    %1511 = arith.mulf %1510, %1448 : vector<8x256xf32>
    %cst_502 = arith.constant 1.02944195 : f32
    %1512 = vector.broadcast %cst_502 : f32 to vector<8x256xf32>
    %1513 = arith.mulf %1512, %1458 : vector<8x256xf32>
    %1514 = arith.addf %1511, %1513 : vector<8x256xf32>
    %cst_503 = arith.constant 0.0361964963 : f32
    %1515 = vector.broadcast %cst_503 : f32 to vector<8x256xf32>
    %1516 = arith.mulf %1515, %1468 : vector<8x256xf32>
    %1517 = arith.addf %1514, %1516 : vector<8x256xf32>
    %cst_504 = arith.constant -0.0512799099 : f32
    %1518 = vector.broadcast %cst_504 : f32 to vector<8x256xf32>
    %1519 = arith.mulf %1518, %1478 : vector<8x256xf32>
    %1520 = arith.addf %1517, %1519 : vector<8x256xf32>
    %1521 = vector.broadcast %1430 : vector<8x1xf32> to vector<8x256xf32>
    %1522 = arith.mulf %1521, %1458 : vector<8x256xf32>
    %c1_505 = arith.constant 1 : index
    %c0_506 = arith.constant 0 : index
    %c0_507 = arith.constant 0 : index
    %1523 = vector.load %arg2[%c1_505, %c0_506, %c0_507] : memref<4x1x256xf32, #tpu.memory_space<vmem>>, vector<1x1x256xf32>
    %1524 = vector.shape_cast %1523 : vector<1x1x256xf32> to vector<1x256xf32>
    %1525 = vector.broadcast %1524 : vector<1x256xf32> to vector<8x256xf32>
    %1526 = arith.subf %1522, %1525 : vector<8x256xf32>
    %1527 = vector.broadcast %1432 : vector<8x1xf32> to vector<8x256xf32>
    %1528 = arith.mulf %1527, %1520 : vector<8x256xf32>
    %1529 = arith.addf %1526, %1528 : vector<8x256xf32>
    %cst_508 = arith.constant -0.101784028 : f32
    %1530 = vector.broadcast %cst_508 : f32 to vector<8x1xf32>
    %1531 = arith.mulf %1434, %1530 : vector<8x1xf32>
    %1532 = vector.broadcast %1531 : vector<8x1xf32> to vector<8x256xf32>
    %1533 = arith.addf %1529, %1532 : vector<8x256xf32>
    %1534 = arith.mulf %1533, %1533 : vector<8x256xf32>
    %1535 = vector.broadcast %1436 : vector<8x1xf32> to vector<8x256xf32>
    %1536 = arith.mulf %1535, %1534 : vector<8x256xf32>
    %1537 = arith.addf %1506, %1536 : vector<8x256xf32>
    %1538 = vector.broadcast %1438 : vector<8x1xf32> to vector<8x256xf32>
    %1539 = arith.mulf %1538, %1533 : vector<8x256xf32>
    %1540 = arith.addf %1362, %1539 : vector<8x256xf32>
    %cst_509 = arith.constant 8.308140e-02 : f32
    %1541 = vector.broadcast %cst_509 : f32 to vector<8x256xf32>
    %1542 = arith.mulf %1541, %1448 : vector<8x256xf32>
    %cst_510 = arith.constant -0.0945512577 : f32
    %1543 = vector.broadcast %cst_510 : f32 to vector<8x256xf32>
    %1544 = arith.mulf %1543, %1458 : vector<8x256xf32>
    %1545 = arith.addf %1542, %1544 : vector<8x256xf32>
    %cst_511 = arith.constant 0.935553312 : f32
    %1546 = vector.broadcast %cst_511 : f32 to vector<8x256xf32>
    %1547 = arith.mulf %1546, %1468 : vector<8x256xf32>
    %1548 = arith.addf %1545, %1547 : vector<8x256xf32>
    %cst_512 = arith.constant 0.00668034563 : f32
    %1549 = vector.broadcast %cst_512 : f32 to vector<8x256xf32>
    %1550 = arith.mulf %1549, %1478 : vector<8x256xf32>
    %1551 = arith.addf %1548, %1550 : vector<8x256xf32>
    %1552 = vector.broadcast %1430 : vector<8x1xf32> to vector<8x256xf32>
    %1553 = arith.mulf %1552, %1468 : vector<8x256xf32>
    %c2_513 = arith.constant 2 : index
    %c0_514 = arith.constant 0 : index
    %c0_515 = arith.constant 0 : index
    %1554 = vector.load %arg2[%c2_513, %c0_514, %c0_515] : memref<4x1x256xf32, #tpu.memory_space<vmem>>, vector<1x1x256xf32>
    %1555 = vector.shape_cast %1554 : vector<1x1x256xf32> to vector<1x256xf32>
    %1556 = vector.broadcast %1555 : vector<1x256xf32> to vector<8x256xf32>
    %1557 = arith.subf %1553, %1556 : vector<8x256xf32>
    %1558 = vector.broadcast %1432 : vector<8x1xf32> to vector<8x256xf32>
    %1559 = arith.mulf %1558, %1551 : vector<8x256xf32>
    %1560 = arith.addf %1557, %1559 : vector<8x256xf32>
    %cst_516 = arith.constant 0.0102772117 : f32
    %1561 = vector.broadcast %cst_516 : f32 to vector<8x1xf32>
    %1562 = arith.mulf %1434, %1561 : vector<8x1xf32>
    %1563 = vector.broadcast %1562 : vector<8x1xf32> to vector<8x256xf32>
    %1564 = arith.addf %1560, %1563 : vector<8x256xf32>
    %1565 = arith.mulf %1564, %1564 : vector<8x256xf32>
    %1566 = vector.broadcast %1436 : vector<8x1xf32> to vector<8x256xf32>
    %1567 = arith.mulf %1566, %1565 : vector<8x256xf32>
    %1568 = arith.addf %1537, %1567 : vector<8x256xf32>
    %1569 = vector.broadcast %1438 : vector<8x1xf32> to vector<8x256xf32>
    %1570 = arith.mulf %1569, %1564 : vector<8x256xf32>
    %1571 = arith.addf %1393, %1570 : vector<8x256xf32>
    %cst_517 = arith.constant -0.0576519631 : f32
    %1572 = vector.broadcast %cst_517 : f32 to vector<8x256xf32>
    %1573 = arith.mulf %1572, %1448 : vector<8x256xf32>
    %cst_518 = arith.constant 0.0119648147 : f32
    %1574 = vector.broadcast %cst_518 : f32 to vector<8x256xf32>
    %1575 = arith.mulf %1574, %1458 : vector<8x256xf32>
    %1576 = arith.addf %1573, %1575 : vector<8x256xf32>
    %cst_519 = arith.constant 0.0872403681 : f32
    %1577 = vector.broadcast %cst_519 : f32 to vector<8x256xf32>
    %1578 = arith.mulf %1577, %1468 : vector<8x256xf32>
    %1579 = arith.addf %1576, %1578 : vector<8x256xf32>
    %cst_520 = arith.constant 1.02525091 : f32
    %1580 = vector.broadcast %cst_520 : f32 to vector<8x256xf32>
    %1581 = arith.mulf %1580, %1478 : vector<8x256xf32>
    %1582 = arith.addf %1579, %1581 : vector<8x256xf32>
    %1583 = vector.broadcast %1430 : vector<8x1xf32> to vector<8x256xf32>
    %1584 = arith.mulf %1583, %1478 : vector<8x256xf32>
    %c3_521 = arith.constant 3 : index
    %c0_522 = arith.constant 0 : index
    %c0_523 = arith.constant 0 : index
    %1585 = vector.load %arg2[%c3_521, %c0_522, %c0_523] : memref<4x1x256xf32, #tpu.memory_space<vmem>>, vector<1x1x256xf32>
    %1586 = vector.shape_cast %1585 : vector<1x1x256xf32> to vector<1x256xf32>
    %1587 = vector.broadcast %1586 : vector<1x256xf32> to vector<8x256xf32>
    %1588 = arith.subf %1584, %1587 : vector<8x256xf32>
    %1589 = vector.broadcast %1432 : vector<8x1xf32> to vector<8x256xf32>
    %1590 = arith.mulf %1589, %1582 : vector<8x256xf32>
    %1591 = arith.addf %1588, %1590 : vector<8x256xf32>
    %cst_524 = arith.constant -0.0176775102 : f32
    %1592 = vector.broadcast %cst_524 : f32 to vector<8x1xf32>
    %1593 = arith.mulf %1434, %1592 : vector<8x1xf32>
    %1594 = vector.broadcast %1593 : vector<8x1xf32> to vector<8x256xf32>
    %1595 = arith.addf %1591, %1594 : vector<8x256xf32>
    %1596 = arith.mulf %1595, %1595 : vector<8x256xf32>
    %1597 = vector.broadcast %1436 : vector<8x1xf32> to vector<8x256xf32>
    %1598 = arith.mulf %1597, %1596 : vector<8x256xf32>
    %1599 = arith.addf %1568, %1598 : vector<8x256xf32>
    %1600 = vector.broadcast %1438 : vector<8x1xf32> to vector<8x256xf32>
    %1601 = arith.mulf %1600, %1595 : vector<8x256xf32>
    %1602 = arith.addf %1424, %1601 : vector<8x256xf32>
    %c9_i32 = arith.constant 9 : i32
    %c8_i32_525 = arith.constant 8 : i32
    %1603 = arith.muli %c9_i32, %c8_i32_525 : i32
    %1604 = tpu.assume_multiple %1603, 8 : i32
    %1605 = arith.index_cast %1604 : i32 to index
    %c0_526 = arith.constant 0 : index
    %1606 = vector.load %arg1[%1605, %c0_526] : memref<128x8xf32, #tpu.memory_space<vmem>>, vector<8x1xf32>
    %1607 = arith.index_cast %1604 : i32 to index
    %c1_527 = arith.constant 1 : index
    %1608 = vector.load %arg1[%1607, %c1_527] : memref<128x8xf32, #tpu.memory_space<vmem>>, vector<8x1xf32>
    %1609 = arith.index_cast %1604 : i32 to index
    %c2_528 = arith.constant 2 : index
    %1610 = vector.load %arg1[%1609, %c2_528] : memref<128x8xf32, #tpu.memory_space<vmem>>, vector<8x1xf32>
    %1611 = arith.index_cast %1604 : i32 to index
    %c3_529 = arith.constant 3 : index
    %1612 = vector.load %arg1[%1611, %c3_529] : memref<128x8xf32, #tpu.memory_space<vmem>>, vector<8x1xf32>
    %1613 = arith.index_cast %1604 : i32 to index
    %c4_530 = arith.constant 4 : index
    %1614 = vector.load %arg1[%1613, %c4_530] : memref<128x8xf32, #tpu.memory_space<vmem>>, vector<8x1xf32>
    %1615 = arith.index_cast %1604 : i32 to index
    %c5_531 = arith.constant 5 : index
    %1616 = vector.load %arg1[%1615, %c5_531] : memref<128x8xf32, #tpu.memory_space<vmem>>, vector<8x1xf32>
    %c0_532 = arith.constant 0 : index
    %c0_533 = arith.constant 0 : index
    %c0_534 = arith.constant 0 : index
    %1617 = vector.load %arg2[%c0_532, %c0_533, %c0_534] : memref<4x1x256xf32, #tpu.memory_space<vmem>>, vector<1x1x256xf32>
    %1618 = vector.shape_cast %1617 : vector<1x1x256xf32> to vector<1x256xf32>
    %c0_535 = arith.constant 0 : index
    %1619 = arith.index_cast %1604 : i32 to index
    %c0_536 = arith.constant 0 : index
    %1620 = vector.load %arg3[%c0_535, %1619, %c0_536] : memref<4x128x256xbf16, #tpu.memory_space<vmem>>, vector<1x8x256xbf16>
    %1621 = vector.shape_cast %1620 : vector<1x8x256xbf16> to vector<8x256xbf16>
    %1622 = arith.extf %1621 : vector<8x256xbf16> to vector<8x256xf32>
    %1623 = vector.broadcast %1606 : vector<8x1xf32> to vector<8x256xf32>
    %1624 = arith.mulf %1622, %1623 : vector<8x256xf32>
    %1625 = vector.broadcast %1618 : vector<1x256xf32> to vector<8x256xf32>
    %1626 = arith.addf %1625, %1624 : vector<8x256xf32>
    %c1_537 = arith.constant 1 : index
    %c0_538 = arith.constant 0 : index
    %c0_539 = arith.constant 0 : index
    %1627 = vector.load %arg2[%c1_537, %c0_538, %c0_539] : memref<4x1x256xf32, #tpu.memory_space<vmem>>, vector<1x1x256xf32>
    %1628 = vector.shape_cast %1627 : vector<1x1x256xf32> to vector<1x256xf32>
    %c1_540 = arith.constant 1 : index
    %1629 = arith.index_cast %1604 : i32 to index
    %c0_541 = arith.constant 0 : index
    %1630 = vector.load %arg3[%c1_540, %1629, %c0_541] : memref<4x128x256xbf16, #tpu.memory_space<vmem>>, vector<1x8x256xbf16>
    %1631 = vector.shape_cast %1630 : vector<1x8x256xbf16> to vector<8x256xbf16>
    %1632 = arith.extf %1631 : vector<8x256xbf16> to vector<8x256xf32>
    %1633 = vector.broadcast %1606 : vector<8x1xf32> to vector<8x256xf32>
    %1634 = arith.mulf %1632, %1633 : vector<8x256xf32>
    %1635 = vector.broadcast %1628 : vector<1x256xf32> to vector<8x256xf32>
    %1636 = arith.addf %1635, %1634 : vector<8x256xf32>
    %c2_542 = arith.constant 2 : index
    %c0_543 = arith.constant 0 : index
    %c0_544 = arith.constant 0 : index
    %1637 = vector.load %arg2[%c2_542, %c0_543, %c0_544] : memref<4x1x256xf32, #tpu.memory_space<vmem>>, vector<1x1x256xf32>
    %1638 = vector.shape_cast %1637 : vector<1x1x256xf32> to vector<1x256xf32>
    %c2_545 = arith.constant 2 : index
    %1639 = arith.index_cast %1604 : i32 to index
    %c0_546 = arith.constant 0 : index
    %1640 = vector.load %arg3[%c2_545, %1639, %c0_546] : memref<4x128x256xbf16, #tpu.memory_space<vmem>>, vector<1x8x256xbf16>
    %1641 = vector.shape_cast %1640 : vector<1x8x256xbf16> to vector<8x256xbf16>
    %1642 = arith.extf %1641 : vector<8x256xbf16> to vector<8x256xf32>
    %1643 = vector.broadcast %1606 : vector<8x1xf32> to vector<8x256xf32>
    %1644 = arith.mulf %1642, %1643 : vector<8x256xf32>
    %1645 = vector.broadcast %1638 : vector<1x256xf32> to vector<8x256xf32>
    %1646 = arith.addf %1645, %1644 : vector<8x256xf32>
    %c3_547 = arith.constant 3 : index
    %c0_548 = arith.constant 0 : index
    %c0_549 = arith.constant 0 : index
    %1647 = vector.load %arg2[%c3_547, %c0_548, %c0_549] : memref<4x1x256xf32, #tpu.memory_space<vmem>>, vector<1x1x256xf32>
    %1648 = vector.shape_cast %1647 : vector<1x1x256xf32> to vector<1x256xf32>
    %c3_550 = arith.constant 3 : index
    %1649 = arith.index_cast %1604 : i32 to index
    %c0_551 = arith.constant 0 : index
    %1650 = vector.load %arg3[%c3_550, %1649, %c0_551] : memref<4x128x256xbf16, #tpu.memory_space<vmem>>, vector<1x8x256xbf16>
    %1651 = vector.shape_cast %1650 : vector<1x8x256xbf16> to vector<8x256xbf16>
    %1652 = arith.extf %1651 : vector<8x256xbf16> to vector<8x256xf32>
    %1653 = vector.broadcast %1606 : vector<8x1xf32> to vector<8x256xf32>
    %1654 = arith.mulf %1652, %1653 : vector<8x256xf32>
    %1655 = vector.broadcast %1648 : vector<1x256xf32> to vector<8x256xf32>
    %1656 = arith.addf %1655, %1654 : vector<8x256xf32>
    %cst_552 = arith.constant 1.0502007 : f32
    %1657 = vector.broadcast %cst_552 : f32 to vector<8x256xf32>
    %1658 = arith.mulf %1657, %1626 : vector<8x256xf32>
    %cst_553 = arith.constant -0.0453168601 : f32
    %1659 = vector.broadcast %cst_553 : f32 to vector<8x256xf32>
    %1660 = arith.mulf %1659, %1636 : vector<8x256xf32>
    %1661 = arith.addf %1658, %1660 : vector<8x256xf32>
    %cst_554 = arith.constant -0.0374086127 : f32
    %1662 = vector.broadcast %cst_554 : f32 to vector<8x256xf32>
    %1663 = arith.mulf %1662, %1646 : vector<8x256xf32>
    %1664 = arith.addf %1661, %1663 : vector<8x256xf32>
    %cst_555 = arith.constant -0.0585683472 : f32
    %1665 = vector.broadcast %cst_555 : f32 to vector<8x256xf32>
    %1666 = arith.mulf %1665, %1656 : vector<8x256xf32>
    %1667 = arith.addf %1664, %1666 : vector<8x256xf32>
    %1668 = vector.broadcast %1608 : vector<8x1xf32> to vector<8x256xf32>
    %1669 = arith.mulf %1668, %1626 : vector<8x256xf32>
    %c0_556 = arith.constant 0 : index
    %c0_557 = arith.constant 0 : index
    %c0_558 = arith.constant 0 : index
    %1670 = vector.load %arg2[%c0_556, %c0_557, %c0_558] : memref<4x1x256xf32, #tpu.memory_space<vmem>>, vector<1x1x256xf32>
    %1671 = vector.shape_cast %1670 : vector<1x1x256xf32> to vector<1x256xf32>
    %1672 = vector.broadcast %1671 : vector<1x256xf32> to vector<8x256xf32>
    %1673 = arith.subf %1669, %1672 : vector<8x256xf32>
    %1674 = vector.broadcast %1610 : vector<8x1xf32> to vector<8x256xf32>
    %1675 = arith.mulf %1674, %1667 : vector<8x256xf32>
    %1676 = arith.addf %1673, %1675 : vector<8x256xf32>
    %cst_559 = arith.constant -0.122122787 : f32
    %1677 = vector.broadcast %cst_559 : f32 to vector<8x1xf32>
    %1678 = arith.mulf %1612, %1677 : vector<8x1xf32>
    %1679 = vector.broadcast %1678 : vector<8x1xf32> to vector<8x256xf32>
    %1680 = arith.addf %1676, %1679 : vector<8x256xf32>
    %1681 = arith.mulf %1680, %1680 : vector<8x256xf32>
    %1682 = vector.broadcast %1614 : vector<8x1xf32> to vector<8x256xf32>
    %1683 = arith.mulf %1682, %1681 : vector<8x256xf32>
    %1684 = arith.addf %1599, %1683 : vector<8x256xf32>
    %1685 = vector.broadcast %1616 : vector<8x1xf32> to vector<8x256xf32>
    %1686 = arith.mulf %1685, %1680 : vector<8x256xf32>
    %1687 = arith.addf %1509, %1686 : vector<8x256xf32>
    %cst_560 = arith.constant -0.0435616411 : f32
    %1688 = vector.broadcast %cst_560 : f32 to vector<8x256xf32>
    %1689 = arith.mulf %1688, %1626 : vector<8x256xf32>
    %cst_561 = arith.constant 1.02944195 : f32
    %1690 = vector.broadcast %cst_561 : f32 to vector<8x256xf32>
    %1691 = arith.mulf %1690, %1636 : vector<8x256xf32>
    %1692 = arith.addf %1689, %1691 : vector<8x256xf32>
    %cst_562 = arith.constant 0.0361964963 : f32
    %1693 = vector.broadcast %cst_562 : f32 to vector<8x256xf32>
    %1694 = arith.mulf %1693, %1646 : vector<8x256xf32>
    %1695 = arith.addf %1692, %1694 : vector<8x256xf32>
    %cst_563 = arith.constant -0.0512799099 : f32
    %1696 = vector.broadcast %cst_563 : f32 to vector<8x256xf32>
    %1697 = arith.mulf %1696, %1656 : vector<8x256xf32>
    %1698 = arith.addf %1695, %1697 : vector<8x256xf32>
    %1699 = vector.broadcast %1608 : vector<8x1xf32> to vector<8x256xf32>
    %1700 = arith.mulf %1699, %1636 : vector<8x256xf32>
    %c1_564 = arith.constant 1 : index
    %c0_565 = arith.constant 0 : index
    %c0_566 = arith.constant 0 : index
    %1701 = vector.load %arg2[%c1_564, %c0_565, %c0_566] : memref<4x1x256xf32, #tpu.memory_space<vmem>>, vector<1x1x256xf32>
    %1702 = vector.shape_cast %1701 : vector<1x1x256xf32> to vector<1x256xf32>
    %1703 = vector.broadcast %1702 : vector<1x256xf32> to vector<8x256xf32>
    %1704 = arith.subf %1700, %1703 : vector<8x256xf32>
    %1705 = vector.broadcast %1610 : vector<8x1xf32> to vector<8x256xf32>
    %1706 = arith.mulf %1705, %1698 : vector<8x256xf32>
    %1707 = arith.addf %1704, %1706 : vector<8x256xf32>
    %cst_567 = arith.constant -0.101784028 : f32
    %1708 = vector.broadcast %cst_567 : f32 to vector<8x1xf32>
    %1709 = arith.mulf %1612, %1708 : vector<8x1xf32>
    %1710 = vector.broadcast %1709 : vector<8x1xf32> to vector<8x256xf32>
    %1711 = arith.addf %1707, %1710 : vector<8x256xf32>
    %1712 = arith.mulf %1711, %1711 : vector<8x256xf32>
    %1713 = vector.broadcast %1614 : vector<8x1xf32> to vector<8x256xf32>
    %1714 = arith.mulf %1713, %1712 : vector<8x256xf32>
    %1715 = arith.addf %1684, %1714 : vector<8x256xf32>
    %1716 = vector.broadcast %1616 : vector<8x1xf32> to vector<8x256xf32>
    %1717 = arith.mulf %1716, %1711 : vector<8x256xf32>
    %1718 = arith.addf %1540, %1717 : vector<8x256xf32>
    %cst_568 = arith.constant 8.308140e-02 : f32
    %1719 = vector.broadcast %cst_568 : f32 to vector<8x256xf32>
    %1720 = arith.mulf %1719, %1626 : vector<8x256xf32>
    %cst_569 = arith.constant -0.0945512577 : f32
    %1721 = vector.broadcast %cst_569 : f32 to vector<8x256xf32>
    %1722 = arith.mulf %1721, %1636 : vector<8x256xf32>
    %1723 = arith.addf %1720, %1722 : vector<8x256xf32>
    %cst_570 = arith.constant 0.935553312 : f32
    %1724 = vector.broadcast %cst_570 : f32 to vector<8x256xf32>
    %1725 = arith.mulf %1724, %1646 : vector<8x256xf32>
    %1726 = arith.addf %1723, %1725 : vector<8x256xf32>
    %cst_571 = arith.constant 0.00668034563 : f32
    %1727 = vector.broadcast %cst_571 : f32 to vector<8x256xf32>
    %1728 = arith.mulf %1727, %1656 : vector<8x256xf32>
    %1729 = arith.addf %1726, %1728 : vector<8x256xf32>
    %1730 = vector.broadcast %1608 : vector<8x1xf32> to vector<8x256xf32>
    %1731 = arith.mulf %1730, %1646 : vector<8x256xf32>
    %c2_572 = arith.constant 2 : index
    %c0_573 = arith.constant 0 : index
    %c0_574 = arith.constant 0 : index
    %1732 = vector.load %arg2[%c2_572, %c0_573, %c0_574] : memref<4x1x256xf32, #tpu.memory_space<vmem>>, vector<1x1x256xf32>
    %1733 = vector.shape_cast %1732 : vector<1x1x256xf32> to vector<1x256xf32>
    %1734 = vector.broadcast %1733 : vector<1x256xf32> to vector<8x256xf32>
    %1735 = arith.subf %1731, %1734 : vector<8x256xf32>
    %1736 = vector.broadcast %1610 : vector<8x1xf32> to vector<8x256xf32>
    %1737 = arith.mulf %1736, %1729 : vector<8x256xf32>
    %1738 = arith.addf %1735, %1737 : vector<8x256xf32>
    %cst_575 = arith.constant 0.0102772117 : f32
    %1739 = vector.broadcast %cst_575 : f32 to vector<8x1xf32>
    %1740 = arith.mulf %1612, %1739 : vector<8x1xf32>
    %1741 = vector.broadcast %1740 : vector<8x1xf32> to vector<8x256xf32>
    %1742 = arith.addf %1738, %1741 : vector<8x256xf32>
    %1743 = arith.mulf %1742, %1742 : vector<8x256xf32>
    %1744 = vector.broadcast %1614 : vector<8x1xf32> to vector<8x256xf32>
    %1745 = arith.mulf %1744, %1743 : vector<8x256xf32>
    %1746 = arith.addf %1715, %1745 : vector<8x256xf32>
    %1747 = vector.broadcast %1616 : vector<8x1xf32> to vector<8x256xf32>
    %1748 = arith.mulf %1747, %1742 : vector<8x256xf32>
    %1749 = arith.addf %1571, %1748 : vector<8x256xf32>
    %cst_576 = arith.constant -0.0576519631 : f32
    %1750 = vector.broadcast %cst_576 : f32 to vector<8x256xf32>
    %1751 = arith.mulf %1750, %1626 : vector<8x256xf32>
    %cst_577 = arith.constant 0.0119648147 : f32
    %1752 = vector.broadcast %cst_577 : f32 to vector<8x256xf32>
    %1753 = arith.mulf %1752, %1636 : vector<8x256xf32>
    %1754 = arith.addf %1751, %1753 : vector<8x256xf32>
    %cst_578 = arith.constant 0.0872403681 : f32
    %1755 = vector.broadcast %cst_578 : f32 to vector<8x256xf32>
    %1756 = arith.mulf %1755, %1646 : vector<8x256xf32>
    %1757 = arith.addf %1754, %1756 : vector<8x256xf32>
    %cst_579 = arith.constant 1.02525091 : f32
    %1758 = vector.broadcast %cst_579 : f32 to vector<8x256xf32>
    %1759 = arith.mulf %1758, %1656 : vector<8x256xf32>
    %1760 = arith.addf %1757, %1759 : vector<8x256xf32>
    %1761 = vector.broadcast %1608 : vector<8x1xf32> to vector<8x256xf32>
    %1762 = arith.mulf %1761, %1656 : vector<8x256xf32>
    %c3_580 = arith.constant 3 : index
    %c0_581 = arith.constant 0 : index
    %c0_582 = arith.constant 0 : index
    %1763 = vector.load %arg2[%c3_580, %c0_581, %c0_582] : memref<4x1x256xf32, #tpu.memory_space<vmem>>, vector<1x1x256xf32>
    %1764 = vector.shape_cast %1763 : vector<1x1x256xf32> to vector<1x256xf32>
    %1765 = vector.broadcast %1764 : vector<1x256xf32> to vector<8x256xf32>
    %1766 = arith.subf %1762, %1765 : vector<8x256xf32>
    %1767 = vector.broadcast %1610 : vector<8x1xf32> to vector<8x256xf32>
    %1768 = arith.mulf %1767, %1760 : vector<8x256xf32>
    %1769 = arith.addf %1766, %1768 : vector<8x256xf32>
    %cst_583 = arith.constant -0.0176775102 : f32
    %1770 = vector.broadcast %cst_583 : f32 to vector<8x1xf32>
    %1771 = arith.mulf %1612, %1770 : vector<8x1xf32>
    %1772 = vector.broadcast %1771 : vector<8x1xf32> to vector<8x256xf32>
    %1773 = arith.addf %1769, %1772 : vector<8x256xf32>
    %1774 = arith.mulf %1773, %1773 : vector<8x256xf32>
    %1775 = vector.broadcast %1614 : vector<8x1xf32> to vector<8x256xf32>
    %1776 = arith.mulf %1775, %1774 : vector<8x256xf32>
    %1777 = arith.addf %1746, %1776 : vector<8x256xf32>
    %1778 = vector.broadcast %1616 : vector<8x1xf32> to vector<8x256xf32>
    %1779 = arith.mulf %1778, %1773 : vector<8x256xf32>
    %1780 = arith.addf %1602, %1779 : vector<8x256xf32>
    %c10_i32 = arith.constant 10 : i32
    %c8_i32_584 = arith.constant 8 : i32
    %1781 = arith.muli %c10_i32, %c8_i32_584 : i32
    %1782 = tpu.assume_multiple %1781, 8 : i32
    %1783 = arith.index_cast %1782 : i32 to index
    %c0_585 = arith.constant 0 : index
    %1784 = vector.load %arg1[%1783, %c0_585] : memref<128x8xf32, #tpu.memory_space<vmem>>, vector<8x1xf32>
    %1785 = arith.index_cast %1782 : i32 to index
    %c1_586 = arith.constant 1 : index
    %1786 = vector.load %arg1[%1785, %c1_586] : memref<128x8xf32, #tpu.memory_space<vmem>>, vector<8x1xf32>
    %1787 = arith.index_cast %1782 : i32 to index
    %c2_587 = arith.constant 2 : index
    %1788 = vector.load %arg1[%1787, %c2_587] : memref<128x8xf32, #tpu.memory_space<vmem>>, vector<8x1xf32>
    %1789 = arith.index_cast %1782 : i32 to index
    %c3_588 = arith.constant 3 : index
    %1790 = vector.load %arg1[%1789, %c3_588] : memref<128x8xf32, #tpu.memory_space<vmem>>, vector<8x1xf32>
    %1791 = arith.index_cast %1782 : i32 to index
    %c4_589 = arith.constant 4 : index
    %1792 = vector.load %arg1[%1791, %c4_589] : memref<128x8xf32, #tpu.memory_space<vmem>>, vector<8x1xf32>
    %1793 = arith.index_cast %1782 : i32 to index
    %c5_590 = arith.constant 5 : index
    %1794 = vector.load %arg1[%1793, %c5_590] : memref<128x8xf32, #tpu.memory_space<vmem>>, vector<8x1xf32>
    %c0_591 = arith.constant 0 : index
    %c0_592 = arith.constant 0 : index
    %c0_593 = arith.constant 0 : index
    %1795 = vector.load %arg2[%c0_591, %c0_592, %c0_593] : memref<4x1x256xf32, #tpu.memory_space<vmem>>, vector<1x1x256xf32>
    %1796 = vector.shape_cast %1795 : vector<1x1x256xf32> to vector<1x256xf32>
    %c0_594 = arith.constant 0 : index
    %1797 = arith.index_cast %1782 : i32 to index
    %c0_595 = arith.constant 0 : index
    %1798 = vector.load %arg3[%c0_594, %1797, %c0_595] : memref<4x128x256xbf16, #tpu.memory_space<vmem>>, vector<1x8x256xbf16>
    %1799 = vector.shape_cast %1798 : vector<1x8x256xbf16> to vector<8x256xbf16>
    %1800 = arith.extf %1799 : vector<8x256xbf16> to vector<8x256xf32>
    %1801 = vector.broadcast %1784 : vector<8x1xf32> to vector<8x256xf32>
    %1802 = arith.mulf %1800, %1801 : vector<8x256xf32>
    %1803 = vector.broadcast %1796 : vector<1x256xf32> to vector<8x256xf32>
    %1804 = arith.addf %1803, %1802 : vector<8x256xf32>
    %c1_596 = arith.constant 1 : index
    %c0_597 = arith.constant 0 : index
    %c0_598 = arith.constant 0 : index
    %1805 = vector.load %arg2[%c1_596, %c0_597, %c0_598] : memref<4x1x256xf32, #tpu.memory_space<vmem>>, vector<1x1x256xf32>
    %1806 = vector.shape_cast %1805 : vector<1x1x256xf32> to vector<1x256xf32>
    %c1_599 = arith.constant 1 : index
    %1807 = arith.index_cast %1782 : i32 to index
    %c0_600 = arith.constant 0 : index
    %1808 = vector.load %arg3[%c1_599, %1807, %c0_600] : memref<4x128x256xbf16, #tpu.memory_space<vmem>>, vector<1x8x256xbf16>
    %1809 = vector.shape_cast %1808 : vector<1x8x256xbf16> to vector<8x256xbf16>
    %1810 = arith.extf %1809 : vector<8x256xbf16> to vector<8x256xf32>
    %1811 = vector.broadcast %1784 : vector<8x1xf32> to vector<8x256xf32>
    %1812 = arith.mulf %1810, %1811 : vector<8x256xf32>
    %1813 = vector.broadcast %1806 : vector<1x256xf32> to vector<8x256xf32>
    %1814 = arith.addf %1813, %1812 : vector<8x256xf32>
    %c2_601 = arith.constant 2 : index
    %c0_602 = arith.constant 0 : index
    %c0_603 = arith.constant 0 : index
    %1815 = vector.load %arg2[%c2_601, %c0_602, %c0_603] : memref<4x1x256xf32, #tpu.memory_space<vmem>>, vector<1x1x256xf32>
    %1816 = vector.shape_cast %1815 : vector<1x1x256xf32> to vector<1x256xf32>
    %c2_604 = arith.constant 2 : index
    %1817 = arith.index_cast %1782 : i32 to index
    %c0_605 = arith.constant 0 : index
    %1818 = vector.load %arg3[%c2_604, %1817, %c0_605] : memref<4x128x256xbf16, #tpu.memory_space<vmem>>, vector<1x8x256xbf16>
    %1819 = vector.shape_cast %1818 : vector<1x8x256xbf16> to vector<8x256xbf16>
    %1820 = arith.extf %1819 : vector<8x256xbf16> to vector<8x256xf32>
    %1821 = vector.broadcast %1784 : vector<8x1xf32> to vector<8x256xf32>
    %1822 = arith.mulf %1820, %1821 : vector<8x256xf32>
    %1823 = vector.broadcast %1816 : vector<1x256xf32> to vector<8x256xf32>
    %1824 = arith.addf %1823, %1822 : vector<8x256xf32>
    %c3_606 = arith.constant 3 : index
    %c0_607 = arith.constant 0 : index
    %c0_608 = arith.constant 0 : index
    %1825 = vector.load %arg2[%c3_606, %c0_607, %c0_608] : memref<4x1x256xf32, #tpu.memory_space<vmem>>, vector<1x1x256xf32>
    %1826 = vector.shape_cast %1825 : vector<1x1x256xf32> to vector<1x256xf32>
    %c3_609 = arith.constant 3 : index
    %1827 = arith.index_cast %1782 : i32 to index
    %c0_610 = arith.constant 0 : index
    %1828 = vector.load %arg3[%c3_609, %1827, %c0_610] : memref<4x128x256xbf16, #tpu.memory_space<vmem>>, vector<1x8x256xbf16>
    %1829 = vector.shape_cast %1828 : vector<1x8x256xbf16> to vector<8x256xbf16>
    %1830 = arith.extf %1829 : vector<8x256xbf16> to vector<8x256xf32>
    %1831 = vector.broadcast %1784 : vector<8x1xf32> to vector<8x256xf32>
    %1832 = arith.mulf %1830, %1831 : vector<8x256xf32>
    %1833 = vector.broadcast %1826 : vector<1x256xf32> to vector<8x256xf32>
    %1834 = arith.addf %1833, %1832 : vector<8x256xf32>
    %cst_611 = arith.constant 1.0502007 : f32
    %1835 = vector.broadcast %cst_611 : f32 to vector<8x256xf32>
    %1836 = arith.mulf %1835, %1804 : vector<8x256xf32>
    %cst_612 = arith.constant -0.0453168601 : f32
    %1837 = vector.broadcast %cst_612 : f32 to vector<8x256xf32>
    %1838 = arith.mulf %1837, %1814 : vector<8x256xf32>
    %1839 = arith.addf %1836, %1838 : vector<8x256xf32>
    %cst_613 = arith.constant -0.0374086127 : f32
    %1840 = vector.broadcast %cst_613 : f32 to vector<8x256xf32>
    %1841 = arith.mulf %1840, %1824 : vector<8x256xf32>
    %1842 = arith.addf %1839, %1841 : vector<8x256xf32>
    %cst_614 = arith.constant -0.0585683472 : f32
    %1843 = vector.broadcast %cst_614 : f32 to vector<8x256xf32>
    %1844 = arith.mulf %1843, %1834 : vector<8x256xf32>
    %1845 = arith.addf %1842, %1844 : vector<8x256xf32>
    %1846 = vector.broadcast %1786 : vector<8x1xf32> to vector<8x256xf32>
    %1847 = arith.mulf %1846, %1804 : vector<8x256xf32>
    %c0_615 = arith.constant 0 : index
    %c0_616 = arith.constant 0 : index
    %c0_617 = arith.constant 0 : index
    %1848 = vector.load %arg2[%c0_615, %c0_616, %c0_617] : memref<4x1x256xf32, #tpu.memory_space<vmem>>, vector<1x1x256xf32>
    %1849 = vector.shape_cast %1848 : vector<1x1x256xf32> to vector<1x256xf32>
    %1850 = vector.broadcast %1849 : vector<1x256xf32> to vector<8x256xf32>
    %1851 = arith.subf %1847, %1850 : vector<8x256xf32>
    %1852 = vector.broadcast %1788 : vector<8x1xf32> to vector<8x256xf32>
    %1853 = arith.mulf %1852, %1845 : vector<8x256xf32>
    %1854 = arith.addf %1851, %1853 : vector<8x256xf32>
    %cst_618 = arith.constant -0.122122787 : f32
    %1855 = vector.broadcast %cst_618 : f32 to vector<8x1xf32>
    %1856 = arith.mulf %1790, %1855 : vector<8x1xf32>
    %1857 = vector.broadcast %1856 : vector<8x1xf32> to vector<8x256xf32>
    %1858 = arith.addf %1854, %1857 : vector<8x256xf32>
    %1859 = arith.mulf %1858, %1858 : vector<8x256xf32>
    %1860 = vector.broadcast %1792 : vector<8x1xf32> to vector<8x256xf32>
    %1861 = arith.mulf %1860, %1859 : vector<8x256xf32>
    %1862 = arith.addf %1777, %1861 : vector<8x256xf32>
    %1863 = vector.broadcast %1794 : vector<8x1xf32> to vector<8x256xf32>
    %1864 = arith.mulf %1863, %1858 : vector<8x256xf32>
    %1865 = arith.addf %1687, %1864 : vector<8x256xf32>
    %cst_619 = arith.constant -0.0435616411 : f32
    %1866 = vector.broadcast %cst_619 : f32 to vector<8x256xf32>
    %1867 = arith.mulf %1866, %1804 : vector<8x256xf32>
    %cst_620 = arith.constant 1.02944195 : f32
    %1868 = vector.broadcast %cst_620 : f32 to vector<8x256xf32>
    %1869 = arith.mulf %1868, %1814 : vector<8x256xf32>
    %1870 = arith.addf %1867, %1869 : vector<8x256xf32>
    %cst_621 = arith.constant 0.0361964963 : f32
    %1871 = vector.broadcast %cst_621 : f32 to vector<8x256xf32>
    %1872 = arith.mulf %1871, %1824 : vector<8x256xf32>
    %1873 = arith.addf %1870, %1872 : vector<8x256xf32>
    %cst_622 = arith.constant -0.0512799099 : f32
    %1874 = vector.broadcast %cst_622 : f32 to vector<8x256xf32>
    %1875 = arith.mulf %1874, %1834 : vector<8x256xf32>
    %1876 = arith.addf %1873, %1875 : vector<8x256xf32>
    %1877 = vector.broadcast %1786 : vector<8x1xf32> to vector<8x256xf32>
    %1878 = arith.mulf %1877, %1814 : vector<8x256xf32>
    %c1_623 = arith.constant 1 : index
    %c0_624 = arith.constant 0 : index
    %c0_625 = arith.constant 0 : index
    %1879 = vector.load %arg2[%c1_623, %c0_624, %c0_625] : memref<4x1x256xf32, #tpu.memory_space<vmem>>, vector<1x1x256xf32>
    %1880 = vector.shape_cast %1879 : vector<1x1x256xf32> to vector<1x256xf32>
    %1881 = vector.broadcast %1880 : vector<1x256xf32> to vector<8x256xf32>
    %1882 = arith.subf %1878, %1881 : vector<8x256xf32>
    %1883 = vector.broadcast %1788 : vector<8x1xf32> to vector<8x256xf32>
    %1884 = arith.mulf %1883, %1876 : vector<8x256xf32>
    %1885 = arith.addf %1882, %1884 : vector<8x256xf32>
    %cst_626 = arith.constant -0.101784028 : f32
    %1886 = vector.broadcast %cst_626 : f32 to vector<8x1xf32>
    %1887 = arith.mulf %1790, %1886 : vector<8x1xf32>
    %1888 = vector.broadcast %1887 : vector<8x1xf32> to vector<8x256xf32>
    %1889 = arith.addf %1885, %1888 : vector<8x256xf32>
    %1890 = arith.mulf %1889, %1889 : vector<8x256xf32>
    %1891 = vector.broadcast %1792 : vector<8x1xf32> to vector<8x256xf32>
    %1892 = arith.mulf %1891, %1890 : vector<8x256xf32>
    %1893 = arith.addf %1862, %1892 : vector<8x256xf32>
    %1894 = vector.broadcast %1794 : vector<8x1xf32> to vector<8x256xf32>
    %1895 = arith.mulf %1894, %1889 : vector<8x256xf32>
    %1896 = arith.addf %1718, %1895 : vector<8x256xf32>
    %cst_627 = arith.constant 8.308140e-02 : f32
    %1897 = vector.broadcast %cst_627 : f32 to vector<8x256xf32>
    %1898 = arith.mulf %1897, %1804 : vector<8x256xf32>
    %cst_628 = arith.constant -0.0945512577 : f32
    %1899 = vector.broadcast %cst_628 : f32 to vector<8x256xf32>
    %1900 = arith.mulf %1899, %1814 : vector<8x256xf32>
    %1901 = arith.addf %1898, %1900 : vector<8x256xf32>
    %cst_629 = arith.constant 0.935553312 : f32
    %1902 = vector.broadcast %cst_629 : f32 to vector<8x256xf32>
    %1903 = arith.mulf %1902, %1824 : vector<8x256xf32>
    %1904 = arith.addf %1901, %1903 : vector<8x256xf32>
    %cst_630 = arith.constant 0.00668034563 : f32
    %1905 = vector.broadcast %cst_630 : f32 to vector<8x256xf32>
    %1906 = arith.mulf %1905, %1834 : vector<8x256xf32>
    %1907 = arith.addf %1904, %1906 : vector<8x256xf32>
    %1908 = vector.broadcast %1786 : vector<8x1xf32> to vector<8x256xf32>
    %1909 = arith.mulf %1908, %1824 : vector<8x256xf32>
    %c2_631 = arith.constant 2 : index
    %c0_632 = arith.constant 0 : index
    %c0_633 = arith.constant 0 : index
    %1910 = vector.load %arg2[%c2_631, %c0_632, %c0_633] : memref<4x1x256xf32, #tpu.memory_space<vmem>>, vector<1x1x256xf32>
    %1911 = vector.shape_cast %1910 : vector<1x1x256xf32> to vector<1x256xf32>
    %1912 = vector.broadcast %1911 : vector<1x256xf32> to vector<8x256xf32>
    %1913 = arith.subf %1909, %1912 : vector<8x256xf32>
    %1914 = vector.broadcast %1788 : vector<8x1xf32> to vector<8x256xf32>
    %1915 = arith.mulf %1914, %1907 : vector<8x256xf32>
    %1916 = arith.addf %1913, %1915 : vector<8x256xf32>
    %cst_634 = arith.constant 0.0102772117 : f32
    %1917 = vector.broadcast %cst_634 : f32 to vector<8x1xf32>
    %1918 = arith.mulf %1790, %1917 : vector<8x1xf32>
    %1919 = vector.broadcast %1918 : vector<8x1xf32> to vector<8x256xf32>
    %1920 = arith.addf %1916, %1919 : vector<8x256xf32>
    %1921 = arith.mulf %1920, %1920 : vector<8x256xf32>
    %1922 = vector.broadcast %1792 : vector<8x1xf32> to vector<8x256xf32>
    %1923 = arith.mulf %1922, %1921 : vector<8x256xf32>
    %1924 = arith.addf %1893, %1923 : vector<8x256xf32>
    %1925 = vector.broadcast %1794 : vector<8x1xf32> to vector<8x256xf32>
    %1926 = arith.mulf %1925, %1920 : vector<8x256xf32>
    %1927 = arith.addf %1749, %1926 : vector<8x256xf32>
    %cst_635 = arith.constant -0.0576519631 : f32
    %1928 = vector.broadcast %cst_635 : f32 to vector<8x256xf32>
    %1929 = arith.mulf %1928, %1804 : vector<8x256xf32>
    %cst_636 = arith.constant 0.0119648147 : f32
    %1930 = vector.broadcast %cst_636 : f32 to vector<8x256xf32>
    %1931 = arith.mulf %1930, %1814 : vector<8x256xf32>
    %1932 = arith.addf %1929, %1931 : vector<8x256xf32>
    %cst_637 = arith.constant 0.0872403681 : f32
    %1933 = vector.broadcast %cst_637 : f32 to vector<8x256xf32>
    %1934 = arith.mulf %1933, %1824 : vector<8x256xf32>
    %1935 = arith.addf %1932, %1934 : vector<8x256xf32>
    %cst_638 = arith.constant 1.02525091 : f32
    %1936 = vector.broadcast %cst_638 : f32 to vector<8x256xf32>
    %1937 = arith.mulf %1936, %1834 : vector<8x256xf32>
    %1938 = arith.addf %1935, %1937 : vector<8x256xf32>
    %1939 = vector.broadcast %1786 : vector<8x1xf32> to vector<8x256xf32>
    %1940 = arith.mulf %1939, %1834 : vector<8x256xf32>
    %c3_639 = arith.constant 3 : index
    %c0_640 = arith.constant 0 : index
    %c0_641 = arith.constant 0 : index
    %1941 = vector.load %arg2[%c3_639, %c0_640, %c0_641] : memref<4x1x256xf32, #tpu.memory_space<vmem>>, vector<1x1x256xf32>
    %1942 = vector.shape_cast %1941 : vector<1x1x256xf32> to vector<1x256xf32>
    %1943 = vector.broadcast %1942 : vector<1x256xf32> to vector<8x256xf32>
    %1944 = arith.subf %1940, %1943 : vector<8x256xf32>
    %1945 = vector.broadcast %1788 : vector<8x1xf32> to vector<8x256xf32>
    %1946 = arith.mulf %1945, %1938 : vector<8x256xf32>
    %1947 = arith.addf %1944, %1946 : vector<8x256xf32>
    %cst_642 = arith.constant -0.0176775102 : f32
    %1948 = vector.broadcast %cst_642 : f32 to vector<8x1xf32>
    %1949 = arith.mulf %1790, %1948 : vector<8x1xf32>
    %1950 = vector.broadcast %1949 : vector<8x1xf32> to vector<8x256xf32>
    %1951 = arith.addf %1947, %1950 : vector<8x256xf32>
    %1952 = arith.mulf %1951, %1951 : vector<8x256xf32>
    %1953 = vector.broadcast %1792 : vector<8x1xf32> to vector<8x256xf32>
    %1954 = arith.mulf %1953, %1952 : vector<8x256xf32>
    %1955 = arith.addf %1924, %1954 : vector<8x256xf32>
    %1956 = vector.broadcast %1794 : vector<8x1xf32> to vector<8x256xf32>
    %1957 = arith.mulf %1956, %1951 : vector<8x256xf32>
    %1958 = arith.addf %1780, %1957 : vector<8x256xf32>
    %c11_i32 = arith.constant 11 : i32
    %c8_i32_643 = arith.constant 8 : i32
    %1959 = arith.muli %c11_i32, %c8_i32_643 : i32
    %1960 = tpu.assume_multiple %1959, 8 : i32
    %1961 = arith.index_cast %1960 : i32 to index
    %c0_644 = arith.constant 0 : index
    %1962 = vector.load %arg1[%1961, %c0_644] : memref<128x8xf32, #tpu.memory_space<vmem>>, vector<8x1xf32>
    %1963 = arith.index_cast %1960 : i32 to index
    %c1_645 = arith.constant 1 : index
    %1964 = vector.load %arg1[%1963, %c1_645] : memref<128x8xf32, #tpu.memory_space<vmem>>, vector<8x1xf32>
    %1965 = arith.index_cast %1960 : i32 to index
    %c2_646 = arith.constant 2 : index
    %1966 = vector.load %arg1[%1965, %c2_646] : memref<128x8xf32, #tpu.memory_space<vmem>>, vector<8x1xf32>
    %1967 = arith.index_cast %1960 : i32 to index
    %c3_647 = arith.constant 3 : index
    %1968 = vector.load %arg1[%1967, %c3_647] : memref<128x8xf32, #tpu.memory_space<vmem>>, vector<8x1xf32>
    %1969 = arith.index_cast %1960 : i32 to index
    %c4_648 = arith.constant 4 : index
    %1970 = vector.load %arg1[%1969, %c4_648] : memref<128x8xf32, #tpu.memory_space<vmem>>, vector<8x1xf32>
    %1971 = arith.index_cast %1960 : i32 to index
    %c5_649 = arith.constant 5 : index
    %1972 = vector.load %arg1[%1971, %c5_649] : memref<128x8xf32, #tpu.memory_space<vmem>>, vector<8x1xf32>
    %c0_650 = arith.constant 0 : index
    %c0_651 = arith.constant 0 : index
    %c0_652 = arith.constant 0 : index
    %1973 = vector.load %arg2[%c0_650, %c0_651, %c0_652] : memref<4x1x256xf32, #tpu.memory_space<vmem>>, vector<1x1x256xf32>
    %1974 = vector.shape_cast %1973 : vector<1x1x256xf32> to vector<1x256xf32>
    %c0_653 = arith.constant 0 : index
    %1975 = arith.index_cast %1960 : i32 to index
    %c0_654 = arith.constant 0 : index
    %1976 = vector.load %arg3[%c0_653, %1975, %c0_654] : memref<4x128x256xbf16, #tpu.memory_space<vmem>>, vector<1x8x256xbf16>
    %1977 = vector.shape_cast %1976 : vector<1x8x256xbf16> to vector<8x256xbf16>
    %1978 = arith.extf %1977 : vector<8x256xbf16> to vector<8x256xf32>
    %1979 = vector.broadcast %1962 : vector<8x1xf32> to vector<8x256xf32>
    %1980 = arith.mulf %1978, %1979 : vector<8x256xf32>
    %1981 = vector.broadcast %1974 : vector<1x256xf32> to vector<8x256xf32>
    %1982 = arith.addf %1981, %1980 : vector<8x256xf32>
    %c1_655 = arith.constant 1 : index
    %c0_656 = arith.constant 0 : index
    %c0_657 = arith.constant 0 : index
    %1983 = vector.load %arg2[%c1_655, %c0_656, %c0_657] : memref<4x1x256xf32, #tpu.memory_space<vmem>>, vector<1x1x256xf32>
    %1984 = vector.shape_cast %1983 : vector<1x1x256xf32> to vector<1x256xf32>
    %c1_658 = arith.constant 1 : index
    %1985 = arith.index_cast %1960 : i32 to index
    %c0_659 = arith.constant 0 : index
    %1986 = vector.load %arg3[%c1_658, %1985, %c0_659] : memref<4x128x256xbf16, #tpu.memory_space<vmem>>, vector<1x8x256xbf16>
    %1987 = vector.shape_cast %1986 : vector<1x8x256xbf16> to vector<8x256xbf16>
    %1988 = arith.extf %1987 : vector<8x256xbf16> to vector<8x256xf32>
    %1989 = vector.broadcast %1962 : vector<8x1xf32> to vector<8x256xf32>
    %1990 = arith.mulf %1988, %1989 : vector<8x256xf32>
    %1991 = vector.broadcast %1984 : vector<1x256xf32> to vector<8x256xf32>
    %1992 = arith.addf %1991, %1990 : vector<8x256xf32>
    %c2_660 = arith.constant 2 : index
    %c0_661 = arith.constant 0 : index
    %c0_662 = arith.constant 0 : index
    %1993 = vector.load %arg2[%c2_660, %c0_661, %c0_662] : memref<4x1x256xf32, #tpu.memory_space<vmem>>, vector<1x1x256xf32>
    %1994 = vector.shape_cast %1993 : vector<1x1x256xf32> to vector<1x256xf32>
    %c2_663 = arith.constant 2 : index
    %1995 = arith.index_cast %1960 : i32 to index
    %c0_664 = arith.constant 0 : index
    %1996 = vector.load %arg3[%c2_663, %1995, %c0_664] : memref<4x128x256xbf16, #tpu.memory_space<vmem>>, vector<1x8x256xbf16>
    %1997 = vector.shape_cast %1996 : vector<1x8x256xbf16> to vector<8x256xbf16>
    %1998 = arith.extf %1997 : vector<8x256xbf16> to vector<8x256xf32>
    %1999 = vector.broadcast %1962 : vector<8x1xf32> to vector<8x256xf32>
    %2000 = arith.mulf %1998, %1999 : vector<8x256xf32>
    %2001 = vector.broadcast %1994 : vector<1x256xf32> to vector<8x256xf32>
    %2002 = arith.addf %2001, %2000 : vector<8x256xf32>
    %c3_665 = arith.constant 3 : index
    %c0_666 = arith.constant 0 : index
    %c0_667 = arith.constant 0 : index
    %2003 = vector.load %arg2[%c3_665, %c0_666, %c0_667] : memref<4x1x256xf32, #tpu.memory_space<vmem>>, vector<1x1x256xf32>
    %2004 = vector.shape_cast %2003 : vector<1x1x256xf32> to vector<1x256xf32>
    %c3_668 = arith.constant 3 : index
    %2005 = arith.index_cast %1960 : i32 to index
    %c0_669 = arith.constant 0 : index
    %2006 = vector.load %arg3[%c3_668, %2005, %c0_669] : memref<4x128x256xbf16, #tpu.memory_space<vmem>>, vector<1x8x256xbf16>
    %2007 = vector.shape_cast %2006 : vector<1x8x256xbf16> to vector<8x256xbf16>
    %2008 = arith.extf %2007 : vector<8x256xbf16> to vector<8x256xf32>
    %2009 = vector.broadcast %1962 : vector<8x1xf32> to vector<8x256xf32>
    %2010 = arith.mulf %2008, %2009 : vector<8x256xf32>
    %2011 = vector.broadcast %2004 : vector<1x256xf32> to vector<8x256xf32>
    %2012 = arith.addf %2011, %2010 : vector<8x256xf32>
    %cst_670 = arith.constant 1.0502007 : f32
    %2013 = vector.broadcast %cst_670 : f32 to vector<8x256xf32>
    %2014 = arith.mulf %2013, %1982 : vector<8x256xf32>
    %cst_671 = arith.constant -0.0453168601 : f32
    %2015 = vector.broadcast %cst_671 : f32 to vector<8x256xf32>
    %2016 = arith.mulf %2015, %1992 : vector<8x256xf32>
    %2017 = arith.addf %2014, %2016 : vector<8x256xf32>
    %cst_672 = arith.constant -0.0374086127 : f32
    %2018 = vector.broadcast %cst_672 : f32 to vector<8x256xf32>
    %2019 = arith.mulf %2018, %2002 : vector<8x256xf32>
    %2020 = arith.addf %2017, %2019 : vector<8x256xf32>
    %cst_673 = arith.constant -0.0585683472 : f32
    %2021 = vector.broadcast %cst_673 : f32 to vector<8x256xf32>
    %2022 = arith.mulf %2021, %2012 : vector<8x256xf32>
    %2023 = arith.addf %2020, %2022 : vector<8x256xf32>
    %2024 = vector.broadcast %1964 : vector<8x1xf32> to vector<8x256xf32>
    %2025 = arith.mulf %2024, %1982 : vector<8x256xf32>
    %c0_674 = arith.constant 0 : index
    %c0_675 = arith.constant 0 : index
    %c0_676 = arith.constant 0 : index
    %2026 = vector.load %arg2[%c0_674, %c0_675, %c0_676] : memref<4x1x256xf32, #tpu.memory_space<vmem>>, vector<1x1x256xf32>
    %2027 = vector.shape_cast %2026 : vector<1x1x256xf32> to vector<1x256xf32>
    %2028 = vector.broadcast %2027 : vector<1x256xf32> to vector<8x256xf32>
    %2029 = arith.subf %2025, %2028 : vector<8x256xf32>
    %2030 = vector.broadcast %1966 : vector<8x1xf32> to vector<8x256xf32>
    %2031 = arith.mulf %2030, %2023 : vector<8x256xf32>
    %2032 = arith.addf %2029, %2031 : vector<8x256xf32>
    %cst_677 = arith.constant -0.122122787 : f32
    %2033 = vector.broadcast %cst_677 : f32 to vector<8x1xf32>
    %2034 = arith.mulf %1968, %2033 : vector<8x1xf32>
    %2035 = vector.broadcast %2034 : vector<8x1xf32> to vector<8x256xf32>
    %2036 = arith.addf %2032, %2035 : vector<8x256xf32>
    %2037 = arith.mulf %2036, %2036 : vector<8x256xf32>
    %2038 = vector.broadcast %1970 : vector<8x1xf32> to vector<8x256xf32>
    %2039 = arith.mulf %2038, %2037 : vector<8x256xf32>
    %2040 = arith.addf %1955, %2039 : vector<8x256xf32>
    %2041 = vector.broadcast %1972 : vector<8x1xf32> to vector<8x256xf32>
    %2042 = arith.mulf %2041, %2036 : vector<8x256xf32>
    %2043 = arith.addf %1865, %2042 : vector<8x256xf32>
    %cst_678 = arith.constant -0.0435616411 : f32
    %2044 = vector.broadcast %cst_678 : f32 to vector<8x256xf32>
    %2045 = arith.mulf %2044, %1982 : vector<8x256xf32>
    %cst_679 = arith.constant 1.02944195 : f32
    %2046 = vector.broadcast %cst_679 : f32 to vector<8x256xf32>
    %2047 = arith.mulf %2046, %1992 : vector<8x256xf32>
    %2048 = arith.addf %2045, %2047 : vector<8x256xf32>
    %cst_680 = arith.constant 0.0361964963 : f32
    %2049 = vector.broadcast %cst_680 : f32 to vector<8x256xf32>
    %2050 = arith.mulf %2049, %2002 : vector<8x256xf32>
    %2051 = arith.addf %2048, %2050 : vector<8x256xf32>
    %cst_681 = arith.constant -0.0512799099 : f32
    %2052 = vector.broadcast %cst_681 : f32 to vector<8x256xf32>
    %2053 = arith.mulf %2052, %2012 : vector<8x256xf32>
    %2054 = arith.addf %2051, %2053 : vector<8x256xf32>
    %2055 = vector.broadcast %1964 : vector<8x1xf32> to vector<8x256xf32>
    %2056 = arith.mulf %2055, %1992 : vector<8x256xf32>
    %c1_682 = arith.constant 1 : index
    %c0_683 = arith.constant 0 : index
    %c0_684 = arith.constant 0 : index
    %2057 = vector.load %arg2[%c1_682, %c0_683, %c0_684] : memref<4x1x256xf32, #tpu.memory_space<vmem>>, vector<1x1x256xf32>
    %2058 = vector.shape_cast %2057 : vector<1x1x256xf32> to vector<1x256xf32>
    %2059 = vector.broadcast %2058 : vector<1x256xf32> to vector<8x256xf32>
    %2060 = arith.subf %2056, %2059 : vector<8x256xf32>
    %2061 = vector.broadcast %1966 : vector<8x1xf32> to vector<8x256xf32>
    %2062 = arith.mulf %2061, %2054 : vector<8x256xf32>
    %2063 = arith.addf %2060, %2062 : vector<8x256xf32>
    %cst_685 = arith.constant -0.101784028 : f32
    %2064 = vector.broadcast %cst_685 : f32 to vector<8x1xf32>
    %2065 = arith.mulf %1968, %2064 : vector<8x1xf32>
    %2066 = vector.broadcast %2065 : vector<8x1xf32> to vector<8x256xf32>
    %2067 = arith.addf %2063, %2066 : vector<8x256xf32>
    %2068 = arith.mulf %2067, %2067 : vector<8x256xf32>
    %2069 = vector.broadcast %1970 : vector<8x1xf32> to vector<8x256xf32>
    %2070 = arith.mulf %2069, %2068 : vector<8x256xf32>
    %2071 = arith.addf %2040, %2070 : vector<8x256xf32>
    %2072 = vector.broadcast %1972 : vector<8x1xf32> to vector<8x256xf32>
    %2073 = arith.mulf %2072, %2067 : vector<8x256xf32>
    %2074 = arith.addf %1896, %2073 : vector<8x256xf32>
    %cst_686 = arith.constant 8.308140e-02 : f32
    %2075 = vector.broadcast %cst_686 : f32 to vector<8x256xf32>
    %2076 = arith.mulf %2075, %1982 : vector<8x256xf32>
    %cst_687 = arith.constant -0.0945512577 : f32
    %2077 = vector.broadcast %cst_687 : f32 to vector<8x256xf32>
    %2078 = arith.mulf %2077, %1992 : vector<8x256xf32>
    %2079 = arith.addf %2076, %2078 : vector<8x256xf32>
    %cst_688 = arith.constant 0.935553312 : f32
    %2080 = vector.broadcast %cst_688 : f32 to vector<8x256xf32>
    %2081 = arith.mulf %2080, %2002 : vector<8x256xf32>
    %2082 = arith.addf %2079, %2081 : vector<8x256xf32>
    %cst_689 = arith.constant 0.00668034563 : f32
    %2083 = vector.broadcast %cst_689 : f32 to vector<8x256xf32>
    %2084 = arith.mulf %2083, %2012 : vector<8x256xf32>
    %2085 = arith.addf %2082, %2084 : vector<8x256xf32>
    %2086 = vector.broadcast %1964 : vector<8x1xf32> to vector<8x256xf32>
    %2087 = arith.mulf %2086, %2002 : vector<8x256xf32>
    %c2_690 = arith.constant 2 : index
    %c0_691 = arith.constant 0 : index
    %c0_692 = arith.constant 0 : index
    %2088 = vector.load %arg2[%c2_690, %c0_691, %c0_692] : memref<4x1x256xf32, #tpu.memory_space<vmem>>, vector<1x1x256xf32>
    %2089 = vector.shape_cast %2088 : vector<1x1x256xf32> to vector<1x256xf32>
    %2090 = vector.broadcast %2089 : vector<1x256xf32> to vector<8x256xf32>
    %2091 = arith.subf %2087, %2090 : vector<8x256xf32>
    %2092 = vector.broadcast %1966 : vector<8x1xf32> to vector<8x256xf32>
    %2093 = arith.mulf %2092, %2085 : vector<8x256xf32>
    %2094 = arith.addf %2091, %2093 : vector<8x256xf32>
    %cst_693 = arith.constant 0.0102772117 : f32
    %2095 = vector.broadcast %cst_693 : f32 to vector<8x1xf32>
    %2096 = arith.mulf %1968, %2095 : vector<8x1xf32>
    %2097 = vector.broadcast %2096 : vector<8x1xf32> to vector<8x256xf32>
    %2098 = arith.addf %2094, %2097 : vector<8x256xf32>
    %2099 = arith.mulf %2098, %2098 : vector<8x256xf32>
    %2100 = vector.broadcast %1970 : vector<8x1xf32> to vector<8x256xf32>
    %2101 = arith.mulf %2100, %2099 : vector<8x256xf32>
    %2102 = arith.addf %2071, %2101 : vector<8x256xf32>
    %2103 = vector.broadcast %1972 : vector<8x1xf32> to vector<8x256xf32>
    %2104 = arith.mulf %2103, %2098 : vector<8x256xf32>
    %2105 = arith.addf %1927, %2104 : vector<8x256xf32>
    %cst_694 = arith.constant -0.0576519631 : f32
    %2106 = vector.broadcast %cst_694 : f32 to vector<8x256xf32>
    %2107 = arith.mulf %2106, %1982 : vector<8x256xf32>
    %cst_695 = arith.constant 0.0119648147 : f32
    %2108 = vector.broadcast %cst_695 : f32 to vector<8x256xf32>
    %2109 = arith.mulf %2108, %1992 : vector<8x256xf32>
    %2110 = arith.addf %2107, %2109 : vector<8x256xf32>
    %cst_696 = arith.constant 0.0872403681 : f32
    %2111 = vector.broadcast %cst_696 : f32 to vector<8x256xf32>
    %2112 = arith.mulf %2111, %2002 : vector<8x256xf32>
    %2113 = arith.addf %2110, %2112 : vector<8x256xf32>
    %cst_697 = arith.constant 1.02525091 : f32
    %2114 = vector.broadcast %cst_697 : f32 to vector<8x256xf32>
    %2115 = arith.mulf %2114, %2012 : vector<8x256xf32>
    %2116 = arith.addf %2113, %2115 : vector<8x256xf32>
    %2117 = vector.broadcast %1964 : vector<8x1xf32> to vector<8x256xf32>
    %2118 = arith.mulf %2117, %2012 : vector<8x256xf32>
    %c3_698 = arith.constant 3 : index
    %c0_699 = arith.constant 0 : index
    %c0_700 = arith.constant 0 : index
    %2119 = vector.load %arg2[%c3_698, %c0_699, %c0_700] : memref<4x1x256xf32, #tpu.memory_space<vmem>>, vector<1x1x256xf32>
    %2120 = vector.shape_cast %2119 : vector<1x1x256xf32> to vector<1x256xf32>
    %2121 = vector.broadcast %2120 : vector<1x256xf32> to vector<8x256xf32>
    %2122 = arith.subf %2118, %2121 : vector<8x256xf32>
    %2123 = vector.broadcast %1966 : vector<8x1xf32> to vector<8x256xf32>
    %2124 = arith.mulf %2123, %2116 : vector<8x256xf32>
    %2125 = arith.addf %2122, %2124 : vector<8x256xf32>
    %cst_701 = arith.constant -0.0176775102 : f32
    %2126 = vector.broadcast %cst_701 : f32 to vector<8x1xf32>
    %2127 = arith.mulf %1968, %2126 : vector<8x1xf32>
    %2128 = vector.broadcast %2127 : vector<8x1xf32> to vector<8x256xf32>
    %2129 = arith.addf %2125, %2128 : vector<8x256xf32>
    %2130 = arith.mulf %2129, %2129 : vector<8x256xf32>
    %2131 = vector.broadcast %1970 : vector<8x1xf32> to vector<8x256xf32>
    %2132 = arith.mulf %2131, %2130 : vector<8x256xf32>
    %2133 = arith.addf %2102, %2132 : vector<8x256xf32>
    %2134 = vector.broadcast %1972 : vector<8x1xf32> to vector<8x256xf32>
    %2135 = arith.mulf %2134, %2129 : vector<8x256xf32>
    %2136 = arith.addf %1958, %2135 : vector<8x256xf32>
    %c12_i32 = arith.constant 12 : i32
    %c8_i32_702 = arith.constant 8 : i32
    %2137 = arith.muli %c12_i32, %c8_i32_702 : i32
    %2138 = tpu.assume_multiple %2137, 8 : i32
    %2139 = arith.index_cast %2138 : i32 to index
    %c0_703 = arith.constant 0 : index
    %2140 = vector.load %arg1[%2139, %c0_703] : memref<128x8xf32, #tpu.memory_space<vmem>>, vector<8x1xf32>
    %2141 = arith.index_cast %2138 : i32 to index
    %c1_704 = arith.constant 1 : index
    %2142 = vector.load %arg1[%2141, %c1_704] : memref<128x8xf32, #tpu.memory_space<vmem>>, vector<8x1xf32>
    %2143 = arith.index_cast %2138 : i32 to index
    %c2_705 = arith.constant 2 : index
    %2144 = vector.load %arg1[%2143, %c2_705] : memref<128x8xf32, #tpu.memory_space<vmem>>, vector<8x1xf32>
    %2145 = arith.index_cast %2138 : i32 to index
    %c3_706 = arith.constant 3 : index
    %2146 = vector.load %arg1[%2145, %c3_706] : memref<128x8xf32, #tpu.memory_space<vmem>>, vector<8x1xf32>
    %2147 = arith.index_cast %2138 : i32 to index
    %c4_707 = arith.constant 4 : index
    %2148 = vector.load %arg1[%2147, %c4_707] : memref<128x8xf32, #tpu.memory_space<vmem>>, vector<8x1xf32>
    %2149 = arith.index_cast %2138 : i32 to index
    %c5_708 = arith.constant 5 : index
    %2150 = vector.load %arg1[%2149, %c5_708] : memref<128x8xf32, #tpu.memory_space<vmem>>, vector<8x1xf32>
    %c0_709 = arith.constant 0 : index
    %c0_710 = arith.constant 0 : index
    %c0_711 = arith.constant 0 : index
    %2151 = vector.load %arg2[%c0_709, %c0_710, %c0_711] : memref<4x1x256xf32, #tpu.memory_space<vmem>>, vector<1x1x256xf32>
    %2152 = vector.shape_cast %2151 : vector<1x1x256xf32> to vector<1x256xf32>
    %c0_712 = arith.constant 0 : index
    %2153 = arith.index_cast %2138 : i32 to index
    %c0_713 = arith.constant 0 : index
    %2154 = vector.load %arg3[%c0_712, %2153, %c0_713] : memref<4x128x256xbf16, #tpu.memory_space<vmem>>, vector<1x8x256xbf16>
    %2155 = vector.shape_cast %2154 : vector<1x8x256xbf16> to vector<8x256xbf16>
    %2156 = arith.extf %2155 : vector<8x256xbf16> to vector<8x256xf32>
    %2157 = vector.broadcast %2140 : vector<8x1xf32> to vector<8x256xf32>
    %2158 = arith.mulf %2156, %2157 : vector<8x256xf32>
    %2159 = vector.broadcast %2152 : vector<1x256xf32> to vector<8x256xf32>
    %2160 = arith.addf %2159, %2158 : vector<8x256xf32>
    %c1_714 = arith.constant 1 : index
    %c0_715 = arith.constant 0 : index
    %c0_716 = arith.constant 0 : index
    %2161 = vector.load %arg2[%c1_714, %c0_715, %c0_716] : memref<4x1x256xf32, #tpu.memory_space<vmem>>, vector<1x1x256xf32>
    %2162 = vector.shape_cast %2161 : vector<1x1x256xf32> to vector<1x256xf32>
    %c1_717 = arith.constant 1 : index
    %2163 = arith.index_cast %2138 : i32 to index
    %c0_718 = arith.constant 0 : index
    %2164 = vector.load %arg3[%c1_717, %2163, %c0_718] : memref<4x128x256xbf16, #tpu.memory_space<vmem>>, vector<1x8x256xbf16>
    %2165 = vector.shape_cast %2164 : vector<1x8x256xbf16> to vector<8x256xbf16>
    %2166 = arith.extf %2165 : vector<8x256xbf16> to vector<8x256xf32>
    %2167 = vector.broadcast %2140 : vector<8x1xf32> to vector<8x256xf32>
    %2168 = arith.mulf %2166, %2167 : vector<8x256xf32>
    %2169 = vector.broadcast %2162 : vector<1x256xf32> to vector<8x256xf32>
    %2170 = arith.addf %2169, %2168 : vector<8x256xf32>
    %c2_719 = arith.constant 2 : index
    %c0_720 = arith.constant 0 : index
    %c0_721 = arith.constant 0 : index
    %2171 = vector.load %arg2[%c2_719, %c0_720, %c0_721] : memref<4x1x256xf32, #tpu.memory_space<vmem>>, vector<1x1x256xf32>
    %2172 = vector.shape_cast %2171 : vector<1x1x256xf32> to vector<1x256xf32>
    %c2_722 = arith.constant 2 : index
    %2173 = arith.index_cast %2138 : i32 to index
    %c0_723 = arith.constant 0 : index
    %2174 = vector.load %arg3[%c2_722, %2173, %c0_723] : memref<4x128x256xbf16, #tpu.memory_space<vmem>>, vector<1x8x256xbf16>
    %2175 = vector.shape_cast %2174 : vector<1x8x256xbf16> to vector<8x256xbf16>
    %2176 = arith.extf %2175 : vector<8x256xbf16> to vector<8x256xf32>
    %2177 = vector.broadcast %2140 : vector<8x1xf32> to vector<8x256xf32>
    %2178 = arith.mulf %2176, %2177 : vector<8x256xf32>
    %2179 = vector.broadcast %2172 : vector<1x256xf32> to vector<8x256xf32>
    %2180 = arith.addf %2179, %2178 : vector<8x256xf32>
    %c3_724 = arith.constant 3 : index
    %c0_725 = arith.constant 0 : index
    %c0_726 = arith.constant 0 : index
    %2181 = vector.load %arg2[%c3_724, %c0_725, %c0_726] : memref<4x1x256xf32, #tpu.memory_space<vmem>>, vector<1x1x256xf32>
    %2182 = vector.shape_cast %2181 : vector<1x1x256xf32> to vector<1x256xf32>
    %c3_727 = arith.constant 3 : index
    %2183 = arith.index_cast %2138 : i32 to index
    %c0_728 = arith.constant 0 : index
    %2184 = vector.load %arg3[%c3_727, %2183, %c0_728] : memref<4x128x256xbf16, #tpu.memory_space<vmem>>, vector<1x8x256xbf16>
    %2185 = vector.shape_cast %2184 : vector<1x8x256xbf16> to vector<8x256xbf16>
    %2186 = arith.extf %2185 : vector<8x256xbf16> to vector<8x256xf32>
    %2187 = vector.broadcast %2140 : vector<8x1xf32> to vector<8x256xf32>
    %2188 = arith.mulf %2186, %2187 : vector<8x256xf32>
    %2189 = vector.broadcast %2182 : vector<1x256xf32> to vector<8x256xf32>
    %2190 = arith.addf %2189, %2188 : vector<8x256xf32>
    %cst_729 = arith.constant 1.0502007 : f32
    %2191 = vector.broadcast %cst_729 : f32 to vector<8x256xf32>
    %2192 = arith.mulf %2191, %2160 : vector<8x256xf32>
    %cst_730 = arith.constant -0.0453168601 : f32
    %2193 = vector.broadcast %cst_730 : f32 to vector<8x256xf32>
    %2194 = arith.mulf %2193, %2170 : vector<8x256xf32>
    %2195 = arith.addf %2192, %2194 : vector<8x256xf32>
    %cst_731 = arith.constant -0.0374086127 : f32
    %2196 = vector.broadcast %cst_731 : f32 to vector<8x256xf32>
    %2197 = arith.mulf %2196, %2180 : vector<8x256xf32>
    %2198 = arith.addf %2195, %2197 : vector<8x256xf32>
    %cst_732 = arith.constant -0.0585683472 : f32
    %2199 = vector.broadcast %cst_732 : f32 to vector<8x256xf32>
    %2200 = arith.mulf %2199, %2190 : vector<8x256xf32>
    %2201 = arith.addf %2198, %2200 : vector<8x256xf32>
    %2202 = vector.broadcast %2142 : vector<8x1xf32> to vector<8x256xf32>
    %2203 = arith.mulf %2202, %2160 : vector<8x256xf32>
    %c0_733 = arith.constant 0 : index
    %c0_734 = arith.constant 0 : index
    %c0_735 = arith.constant 0 : index
    %2204 = vector.load %arg2[%c0_733, %c0_734, %c0_735] : memref<4x1x256xf32, #tpu.memory_space<vmem>>, vector<1x1x256xf32>
    %2205 = vector.shape_cast %2204 : vector<1x1x256xf32> to vector<1x256xf32>
    %2206 = vector.broadcast %2205 : vector<1x256xf32> to vector<8x256xf32>
    %2207 = arith.subf %2203, %2206 : vector<8x256xf32>
    %2208 = vector.broadcast %2144 : vector<8x1xf32> to vector<8x256xf32>
    %2209 = arith.mulf %2208, %2201 : vector<8x256xf32>
    %2210 = arith.addf %2207, %2209 : vector<8x256xf32>
    %cst_736 = arith.constant -0.122122787 : f32
    %2211 = vector.broadcast %cst_736 : f32 to vector<8x1xf32>
    %2212 = arith.mulf %2146, %2211 : vector<8x1xf32>
    %2213 = vector.broadcast %2212 : vector<8x1xf32> to vector<8x256xf32>
    %2214 = arith.addf %2210, %2213 : vector<8x256xf32>
    %2215 = arith.mulf %2214, %2214 : vector<8x256xf32>
    %2216 = vector.broadcast %2148 : vector<8x1xf32> to vector<8x256xf32>
    %2217 = arith.mulf %2216, %2215 : vector<8x256xf32>
    %2218 = arith.addf %2133, %2217 : vector<8x256xf32>
    %2219 = vector.broadcast %2150 : vector<8x1xf32> to vector<8x256xf32>
    %2220 = arith.mulf %2219, %2214 : vector<8x256xf32>
    %2221 = arith.addf %2043, %2220 : vector<8x256xf32>
    %cst_737 = arith.constant -0.0435616411 : f32
    %2222 = vector.broadcast %cst_737 : f32 to vector<8x256xf32>
    %2223 = arith.mulf %2222, %2160 : vector<8x256xf32>
    %cst_738 = arith.constant 1.02944195 : f32
    %2224 = vector.broadcast %cst_738 : f32 to vector<8x256xf32>
    %2225 = arith.mulf %2224, %2170 : vector<8x256xf32>
    %2226 = arith.addf %2223, %2225 : vector<8x256xf32>
    %cst_739 = arith.constant 0.0361964963 : f32
    %2227 = vector.broadcast %cst_739 : f32 to vector<8x256xf32>
    %2228 = arith.mulf %2227, %2180 : vector<8x256xf32>
    %2229 = arith.addf %2226, %2228 : vector<8x256xf32>
    %cst_740 = arith.constant -0.0512799099 : f32
    %2230 = vector.broadcast %cst_740 : f32 to vector<8x256xf32>
    %2231 = arith.mulf %2230, %2190 : vector<8x256xf32>
    %2232 = arith.addf %2229, %2231 : vector<8x256xf32>
    %2233 = vector.broadcast %2142 : vector<8x1xf32> to vector<8x256xf32>
    %2234 = arith.mulf %2233, %2170 : vector<8x256xf32>
    %c1_741 = arith.constant 1 : index
    %c0_742 = arith.constant 0 : index
    %c0_743 = arith.constant 0 : index
    %2235 = vector.load %arg2[%c1_741, %c0_742, %c0_743] : memref<4x1x256xf32, #tpu.memory_space<vmem>>, vector<1x1x256xf32>
    %2236 = vector.shape_cast %2235 : vector<1x1x256xf32> to vector<1x256xf32>
    %2237 = vector.broadcast %2236 : vector<1x256xf32> to vector<8x256xf32>
    %2238 = arith.subf %2234, %2237 : vector<8x256xf32>
    %2239 = vector.broadcast %2144 : vector<8x1xf32> to vector<8x256xf32>
    %2240 = arith.mulf %2239, %2232 : vector<8x256xf32>
    %2241 = arith.addf %2238, %2240 : vector<8x256xf32>
    %cst_744 = arith.constant -0.101784028 : f32
    %2242 = vector.broadcast %cst_744 : f32 to vector<8x1xf32>
    %2243 = arith.mulf %2146, %2242 : vector<8x1xf32>
    %2244 = vector.broadcast %2243 : vector<8x1xf32> to vector<8x256xf32>
    %2245 = arith.addf %2241, %2244 : vector<8x256xf32>
    %2246 = arith.mulf %2245, %2245 : vector<8x256xf32>
    %2247 = vector.broadcast %2148 : vector<8x1xf32> to vector<8x256xf32>
    %2248 = arith.mulf %2247, %2246 : vector<8x256xf32>
    %2249 = arith.addf %2218, %2248 : vector<8x256xf32>
    %2250 = vector.broadcast %2150 : vector<8x1xf32> to vector<8x256xf32>
    %2251 = arith.mulf %2250, %2245 : vector<8x256xf32>
    %2252 = arith.addf %2074, %2251 : vector<8x256xf32>
    %cst_745 = arith.constant 8.308140e-02 : f32
    %2253 = vector.broadcast %cst_745 : f32 to vector<8x256xf32>
    %2254 = arith.mulf %2253, %2160 : vector<8x256xf32>
    %cst_746 = arith.constant -0.0945512577 : f32
    %2255 = vector.broadcast %cst_746 : f32 to vector<8x256xf32>
    %2256 = arith.mulf %2255, %2170 : vector<8x256xf32>
    %2257 = arith.addf %2254, %2256 : vector<8x256xf32>
    %cst_747 = arith.constant 0.935553312 : f32
    %2258 = vector.broadcast %cst_747 : f32 to vector<8x256xf32>
    %2259 = arith.mulf %2258, %2180 : vector<8x256xf32>
    %2260 = arith.addf %2257, %2259 : vector<8x256xf32>
    %cst_748 = arith.constant 0.00668034563 : f32
    %2261 = vector.broadcast %cst_748 : f32 to vector<8x256xf32>
    %2262 = arith.mulf %2261, %2190 : vector<8x256xf32>
    %2263 = arith.addf %2260, %2262 : vector<8x256xf32>
    %2264 = vector.broadcast %2142 : vector<8x1xf32> to vector<8x256xf32>
    %2265 = arith.mulf %2264, %2180 : vector<8x256xf32>
    %c2_749 = arith.constant 2 : index
    %c0_750 = arith.constant 0 : index
    %c0_751 = arith.constant 0 : index
    %2266 = vector.load %arg2[%c2_749, %c0_750, %c0_751] : memref<4x1x256xf32, #tpu.memory_space<vmem>>, vector<1x1x256xf32>
    %2267 = vector.shape_cast %2266 : vector<1x1x256xf32> to vector<1x256xf32>
    %2268 = vector.broadcast %2267 : vector<1x256xf32> to vector<8x256xf32>
    %2269 = arith.subf %2265, %2268 : vector<8x256xf32>
    %2270 = vector.broadcast %2144 : vector<8x1xf32> to vector<8x256xf32>
    %2271 = arith.mulf %2270, %2263 : vector<8x256xf32>
    %2272 = arith.addf %2269, %2271 : vector<8x256xf32>
    %cst_752 = arith.constant 0.0102772117 : f32
    %2273 = vector.broadcast %cst_752 : f32 to vector<8x1xf32>
    %2274 = arith.mulf %2146, %2273 : vector<8x1xf32>
    %2275 = vector.broadcast %2274 : vector<8x1xf32> to vector<8x256xf32>
    %2276 = arith.addf %2272, %2275 : vector<8x256xf32>
    %2277 = arith.mulf %2276, %2276 : vector<8x256xf32>
    %2278 = vector.broadcast %2148 : vector<8x1xf32> to vector<8x256xf32>
    %2279 = arith.mulf %2278, %2277 : vector<8x256xf32>
    %2280 = arith.addf %2249, %2279 : vector<8x256xf32>
    %2281 = vector.broadcast %2150 : vector<8x1xf32> to vector<8x256xf32>
    %2282 = arith.mulf %2281, %2276 : vector<8x256xf32>
    %2283 = arith.addf %2105, %2282 : vector<8x256xf32>
    %cst_753 = arith.constant -0.0576519631 : f32
    %2284 = vector.broadcast %cst_753 : f32 to vector<8x256xf32>
    %2285 = arith.mulf %2284, %2160 : vector<8x256xf32>
    %cst_754 = arith.constant 0.0119648147 : f32
    %2286 = vector.broadcast %cst_754 : f32 to vector<8x256xf32>
    %2287 = arith.mulf %2286, %2170 : vector<8x256xf32>
    %2288 = arith.addf %2285, %2287 : vector<8x256xf32>
    %cst_755 = arith.constant 0.0872403681 : f32
    %2289 = vector.broadcast %cst_755 : f32 to vector<8x256xf32>
    %2290 = arith.mulf %2289, %2180 : vector<8x256xf32>
    %2291 = arith.addf %2288, %2290 : vector<8x256xf32>
    %cst_756 = arith.constant 1.02525091 : f32
    %2292 = vector.broadcast %cst_756 : f32 to vector<8x256xf32>
    %2293 = arith.mulf %2292, %2190 : vector<8x256xf32>
    %2294 = arith.addf %2291, %2293 : vector<8x256xf32>
    %2295 = vector.broadcast %2142 : vector<8x1xf32> to vector<8x256xf32>
    %2296 = arith.mulf %2295, %2190 : vector<8x256xf32>
    %c3_757 = arith.constant 3 : index
    %c0_758 = arith.constant 0 : index
    %c0_759 = arith.constant 0 : index
    %2297 = vector.load %arg2[%c3_757, %c0_758, %c0_759] : memref<4x1x256xf32, #tpu.memory_space<vmem>>, vector<1x1x256xf32>
    %2298 = vector.shape_cast %2297 : vector<1x1x256xf32> to vector<1x256xf32>
    %2299 = vector.broadcast %2298 : vector<1x256xf32> to vector<8x256xf32>
    %2300 = arith.subf %2296, %2299 : vector<8x256xf32>
    %2301 = vector.broadcast %2144 : vector<8x1xf32> to vector<8x256xf32>
    %2302 = arith.mulf %2301, %2294 : vector<8x256xf32>
    %2303 = arith.addf %2300, %2302 : vector<8x256xf32>
    %cst_760 = arith.constant -0.0176775102 : f32
    %2304 = vector.broadcast %cst_760 : f32 to vector<8x1xf32>
    %2305 = arith.mulf %2146, %2304 : vector<8x1xf32>
    %2306 = vector.broadcast %2305 : vector<8x1xf32> to vector<8x256xf32>
    %2307 = arith.addf %2303, %2306 : vector<8x256xf32>
    %2308 = arith.mulf %2307, %2307 : vector<8x256xf32>
    %2309 = vector.broadcast %2148 : vector<8x1xf32> to vector<8x256xf32>
    %2310 = arith.mulf %2309, %2308 : vector<8x256xf32>
    %2311 = arith.addf %2280, %2310 : vector<8x256xf32>
    %2312 = vector.broadcast %2150 : vector<8x1xf32> to vector<8x256xf32>
    %2313 = arith.mulf %2312, %2307 : vector<8x256xf32>
    %2314 = arith.addf %2136, %2313 : vector<8x256xf32>
    %c13_i32 = arith.constant 13 : i32
    %c8_i32_761 = arith.constant 8 : i32
    %2315 = arith.muli %c13_i32, %c8_i32_761 : i32
    %2316 = tpu.assume_multiple %2315, 8 : i32
    %2317 = arith.index_cast %2316 : i32 to index
    %c0_762 = arith.constant 0 : index
    %2318 = vector.load %arg1[%2317, %c0_762] : memref<128x8xf32, #tpu.memory_space<vmem>>, vector<8x1xf32>
    %2319 = arith.index_cast %2316 : i32 to index
    %c1_763 = arith.constant 1 : index
    %2320 = vector.load %arg1[%2319, %c1_763] : memref<128x8xf32, #tpu.memory_space<vmem>>, vector<8x1xf32>
    %2321 = arith.index_cast %2316 : i32 to index
    %c2_764 = arith.constant 2 : index
    %2322 = vector.load %arg1[%2321, %c2_764] : memref<128x8xf32, #tpu.memory_space<vmem>>, vector<8x1xf32>
    %2323 = arith.index_cast %2316 : i32 to index
    %c3_765 = arith.constant 3 : index
    %2324 = vector.load %arg1[%2323, %c3_765] : memref<128x8xf32, #tpu.memory_space<vmem>>, vector<8x1xf32>
    %2325 = arith.index_cast %2316 : i32 to index
    %c4_766 = arith.constant 4 : index
    %2326 = vector.load %arg1[%2325, %c4_766] : memref<128x8xf32, #tpu.memory_space<vmem>>, vector<8x1xf32>
    %2327 = arith.index_cast %2316 : i32 to index
    %c5_767 = arith.constant 5 : index
    %2328 = vector.load %arg1[%2327, %c5_767] : memref<128x8xf32, #tpu.memory_space<vmem>>, vector<8x1xf32>
    %c0_768 = arith.constant 0 : index
    %c0_769 = arith.constant 0 : index
    %c0_770 = arith.constant 0 : index
    %2329 = vector.load %arg2[%c0_768, %c0_769, %c0_770] : memref<4x1x256xf32, #tpu.memory_space<vmem>>, vector<1x1x256xf32>
    %2330 = vector.shape_cast %2329 : vector<1x1x256xf32> to vector<1x256xf32>
    %c0_771 = arith.constant 0 : index
    %2331 = arith.index_cast %2316 : i32 to index
    %c0_772 = arith.constant 0 : index
    %2332 = vector.load %arg3[%c0_771, %2331, %c0_772] : memref<4x128x256xbf16, #tpu.memory_space<vmem>>, vector<1x8x256xbf16>
    %2333 = vector.shape_cast %2332 : vector<1x8x256xbf16> to vector<8x256xbf16>
    %2334 = arith.extf %2333 : vector<8x256xbf16> to vector<8x256xf32>
    %2335 = vector.broadcast %2318 : vector<8x1xf32> to vector<8x256xf32>
    %2336 = arith.mulf %2334, %2335 : vector<8x256xf32>
    %2337 = vector.broadcast %2330 : vector<1x256xf32> to vector<8x256xf32>
    %2338 = arith.addf %2337, %2336 : vector<8x256xf32>
    %c1_773 = arith.constant 1 : index
    %c0_774 = arith.constant 0 : index
    %c0_775 = arith.constant 0 : index
    %2339 = vector.load %arg2[%c1_773, %c0_774, %c0_775] : memref<4x1x256xf32, #tpu.memory_space<vmem>>, vector<1x1x256xf32>
    %2340 = vector.shape_cast %2339 : vector<1x1x256xf32> to vector<1x256xf32>
    %c1_776 = arith.constant 1 : index
    %2341 = arith.index_cast %2316 : i32 to index
    %c0_777 = arith.constant 0 : index
    %2342 = vector.load %arg3[%c1_776, %2341, %c0_777] : memref<4x128x256xbf16, #tpu.memory_space<vmem>>, vector<1x8x256xbf16>
    %2343 = vector.shape_cast %2342 : vector<1x8x256xbf16> to vector<8x256xbf16>
    %2344 = arith.extf %2343 : vector<8x256xbf16> to vector<8x256xf32>
    %2345 = vector.broadcast %2318 : vector<8x1xf32> to vector<8x256xf32>
    %2346 = arith.mulf %2344, %2345 : vector<8x256xf32>
    %2347 = vector.broadcast %2340 : vector<1x256xf32> to vector<8x256xf32>
    %2348 = arith.addf %2347, %2346 : vector<8x256xf32>
    %c2_778 = arith.constant 2 : index
    %c0_779 = arith.constant 0 : index
    %c0_780 = arith.constant 0 : index
    %2349 = vector.load %arg2[%c2_778, %c0_779, %c0_780] : memref<4x1x256xf32, #tpu.memory_space<vmem>>, vector<1x1x256xf32>
    %2350 = vector.shape_cast %2349 : vector<1x1x256xf32> to vector<1x256xf32>
    %c2_781 = arith.constant 2 : index
    %2351 = arith.index_cast %2316 : i32 to index
    %c0_782 = arith.constant 0 : index
    %2352 = vector.load %arg3[%c2_781, %2351, %c0_782] : memref<4x128x256xbf16, #tpu.memory_space<vmem>>, vector<1x8x256xbf16>
    %2353 = vector.shape_cast %2352 : vector<1x8x256xbf16> to vector<8x256xbf16>
    %2354 = arith.extf %2353 : vector<8x256xbf16> to vector<8x256xf32>
    %2355 = vector.broadcast %2318 : vector<8x1xf32> to vector<8x256xf32>
    %2356 = arith.mulf %2354, %2355 : vector<8x256xf32>
    %2357 = vector.broadcast %2350 : vector<1x256xf32> to vector<8x256xf32>
    %2358 = arith.addf %2357, %2356 : vector<8x256xf32>
    %c3_783 = arith.constant 3 : index
    %c0_784 = arith.constant 0 : index
    %c0_785 = arith.constant 0 : index
    %2359 = vector.load %arg2[%c3_783, %c0_784, %c0_785] : memref<4x1x256xf32, #tpu.memory_space<vmem>>, vector<1x1x256xf32>
    %2360 = vector.shape_cast %2359 : vector<1x1x256xf32> to vector<1x256xf32>
    %c3_786 = arith.constant 3 : index
    %2361 = arith.index_cast %2316 : i32 to index
    %c0_787 = arith.constant 0 : index
    %2362 = vector.load %arg3[%c3_786, %2361, %c0_787] : memref<4x128x256xbf16, #tpu.memory_space<vmem>>, vector<1x8x256xbf16>
    %2363 = vector.shape_cast %2362 : vector<1x8x256xbf16> to vector<8x256xbf16>
    %2364 = arith.extf %2363 : vector<8x256xbf16> to vector<8x256xf32>
    %2365 = vector.broadcast %2318 : vector<8x1xf32> to vector<8x256xf32>
    %2366 = arith.mulf %2364, %2365 : vector<8x256xf32>
    %2367 = vector.broadcast %2360 : vector<1x256xf32> to vector<8x256xf32>
    %2368 = arith.addf %2367, %2366 : vector<8x256xf32>
    %cst_788 = arith.constant 1.0502007 : f32
    %2369 = vector.broadcast %cst_788 : f32 to vector<8x256xf32>
    %2370 = arith.mulf %2369, %2338 : vector<8x256xf32>
    %cst_789 = arith.constant -0.0453168601 : f32
    %2371 = vector.broadcast %cst_789 : f32 to vector<8x256xf32>
    %2372 = arith.mulf %2371, %2348 : vector<8x256xf32>
    %2373 = arith.addf %2370, %2372 : vector<8x256xf32>
    %cst_790 = arith.constant -0.0374086127 : f32
    %2374 = vector.broadcast %cst_790 : f32 to vector<8x256xf32>
    %2375 = arith.mulf %2374, %2358 : vector<8x256xf32>
    %2376 = arith.addf %2373, %2375 : vector<8x256xf32>
    %cst_791 = arith.constant -0.0585683472 : f32
    %2377 = vector.broadcast %cst_791 : f32 to vector<8x256xf32>
    %2378 = arith.mulf %2377, %2368 : vector<8x256xf32>
    %2379 = arith.addf %2376, %2378 : vector<8x256xf32>
    %2380 = vector.broadcast %2320 : vector<8x1xf32> to vector<8x256xf32>
    %2381 = arith.mulf %2380, %2338 : vector<8x256xf32>
    %c0_792 = arith.constant 0 : index
    %c0_793 = arith.constant 0 : index
    %c0_794 = arith.constant 0 : index
    %2382 = vector.load %arg2[%c0_792, %c0_793, %c0_794] : memref<4x1x256xf32, #tpu.memory_space<vmem>>, vector<1x1x256xf32>
    %2383 = vector.shape_cast %2382 : vector<1x1x256xf32> to vector<1x256xf32>
    %2384 = vector.broadcast %2383 : vector<1x256xf32> to vector<8x256xf32>
    %2385 = arith.subf %2381, %2384 : vector<8x256xf32>
    %2386 = vector.broadcast %2322 : vector<8x1xf32> to vector<8x256xf32>
    %2387 = arith.mulf %2386, %2379 : vector<8x256xf32>
    %2388 = arith.addf %2385, %2387 : vector<8x256xf32>
    %cst_795 = arith.constant -0.122122787 : f32
    %2389 = vector.broadcast %cst_795 : f32 to vector<8x1xf32>
    %2390 = arith.mulf %2324, %2389 : vector<8x1xf32>
    %2391 = vector.broadcast %2390 : vector<8x1xf32> to vector<8x256xf32>
    %2392 = arith.addf %2388, %2391 : vector<8x256xf32>
    %2393 = arith.mulf %2392, %2392 : vector<8x256xf32>
    %2394 = vector.broadcast %2326 : vector<8x1xf32> to vector<8x256xf32>
    %2395 = arith.mulf %2394, %2393 : vector<8x256xf32>
    %2396 = arith.addf %2311, %2395 : vector<8x256xf32>
    %2397 = vector.broadcast %2328 : vector<8x1xf32> to vector<8x256xf32>
    %2398 = arith.mulf %2397, %2392 : vector<8x256xf32>
    %2399 = arith.addf %2221, %2398 : vector<8x256xf32>
    %cst_796 = arith.constant -0.0435616411 : f32
    %2400 = vector.broadcast %cst_796 : f32 to vector<8x256xf32>
    %2401 = arith.mulf %2400, %2338 : vector<8x256xf32>
    %cst_797 = arith.constant 1.02944195 : f32
    %2402 = vector.broadcast %cst_797 : f32 to vector<8x256xf32>
    %2403 = arith.mulf %2402, %2348 : vector<8x256xf32>
    %2404 = arith.addf %2401, %2403 : vector<8x256xf32>
    %cst_798 = arith.constant 0.0361964963 : f32
    %2405 = vector.broadcast %cst_798 : f32 to vector<8x256xf32>
    %2406 = arith.mulf %2405, %2358 : vector<8x256xf32>
    %2407 = arith.addf %2404, %2406 : vector<8x256xf32>
    %cst_799 = arith.constant -0.0512799099 : f32
    %2408 = vector.broadcast %cst_799 : f32 to vector<8x256xf32>
    %2409 = arith.mulf %2408, %2368 : vector<8x256xf32>
    %2410 = arith.addf %2407, %2409 : vector<8x256xf32>
    %2411 = vector.broadcast %2320 : vector<8x1xf32> to vector<8x256xf32>
    %2412 = arith.mulf %2411, %2348 : vector<8x256xf32>
    %c1_800 = arith.constant 1 : index
    %c0_801 = arith.constant 0 : index
    %c0_802 = arith.constant 0 : index
    %2413 = vector.load %arg2[%c1_800, %c0_801, %c0_802] : memref<4x1x256xf32, #tpu.memory_space<vmem>>, vector<1x1x256xf32>
    %2414 = vector.shape_cast %2413 : vector<1x1x256xf32> to vector<1x256xf32>
    %2415 = vector.broadcast %2414 : vector<1x256xf32> to vector<8x256xf32>
    %2416 = arith.subf %2412, %2415 : vector<8x256xf32>
    %2417 = vector.broadcast %2322 : vector<8x1xf32> to vector<8x256xf32>
    %2418 = arith.mulf %2417, %2410 : vector<8x256xf32>
    %2419 = arith.addf %2416, %2418 : vector<8x256xf32>
    %cst_803 = arith.constant -0.101784028 : f32
    %2420 = vector.broadcast %cst_803 : f32 to vector<8x1xf32>
    %2421 = arith.mulf %2324, %2420 : vector<8x1xf32>
    %2422 = vector.broadcast %2421 : vector<8x1xf32> to vector<8x256xf32>
    %2423 = arith.addf %2419, %2422 : vector<8x256xf32>
    %2424 = arith.mulf %2423, %2423 : vector<8x256xf32>
    %2425 = vector.broadcast %2326 : vector<8x1xf32> to vector<8x256xf32>
    %2426 = arith.mulf %2425, %2424 : vector<8x256xf32>
    %2427 = arith.addf %2396, %2426 : vector<8x256xf32>
    %2428 = vector.broadcast %2328 : vector<8x1xf32> to vector<8x256xf32>
    %2429 = arith.mulf %2428, %2423 : vector<8x256xf32>
    %2430 = arith.addf %2252, %2429 : vector<8x256xf32>
    %cst_804 = arith.constant 8.308140e-02 : f32
    %2431 = vector.broadcast %cst_804 : f32 to vector<8x256xf32>
    %2432 = arith.mulf %2431, %2338 : vector<8x256xf32>
    %cst_805 = arith.constant -0.0945512577 : f32
    %2433 = vector.broadcast %cst_805 : f32 to vector<8x256xf32>
    %2434 = arith.mulf %2433, %2348 : vector<8x256xf32>
    %2435 = arith.addf %2432, %2434 : vector<8x256xf32>
    %cst_806 = arith.constant 0.935553312 : f32
    %2436 = vector.broadcast %cst_806 : f32 to vector<8x256xf32>
    %2437 = arith.mulf %2436, %2358 : vector<8x256xf32>
    %2438 = arith.addf %2435, %2437 : vector<8x256xf32>
    %cst_807 = arith.constant 0.00668034563 : f32
    %2439 = vector.broadcast %cst_807 : f32 to vector<8x256xf32>
    %2440 = arith.mulf %2439, %2368 : vector<8x256xf32>
    %2441 = arith.addf %2438, %2440 : vector<8x256xf32>
    %2442 = vector.broadcast %2320 : vector<8x1xf32> to vector<8x256xf32>
    %2443 = arith.mulf %2442, %2358 : vector<8x256xf32>
    %c2_808 = arith.constant 2 : index
    %c0_809 = arith.constant 0 : index
    %c0_810 = arith.constant 0 : index
    %2444 = vector.load %arg2[%c2_808, %c0_809, %c0_810] : memref<4x1x256xf32, #tpu.memory_space<vmem>>, vector<1x1x256xf32>
    %2445 = vector.shape_cast %2444 : vector<1x1x256xf32> to vector<1x256xf32>
    %2446 = vector.broadcast %2445 : vector<1x256xf32> to vector<8x256xf32>
    %2447 = arith.subf %2443, %2446 : vector<8x256xf32>
    %2448 = vector.broadcast %2322 : vector<8x1xf32> to vector<8x256xf32>
    %2449 = arith.mulf %2448, %2441 : vector<8x256xf32>
    %2450 = arith.addf %2447, %2449 : vector<8x256xf32>
    %cst_811 = arith.constant 0.0102772117 : f32
    %2451 = vector.broadcast %cst_811 : f32 to vector<8x1xf32>
    %2452 = arith.mulf %2324, %2451 : vector<8x1xf32>
    %2453 = vector.broadcast %2452 : vector<8x1xf32> to vector<8x256xf32>
    %2454 = arith.addf %2450, %2453 : vector<8x256xf32>
    %2455 = arith.mulf %2454, %2454 : vector<8x256xf32>
    %2456 = vector.broadcast %2326 : vector<8x1xf32> to vector<8x256xf32>
    %2457 = arith.mulf %2456, %2455 : vector<8x256xf32>
    %2458 = arith.addf %2427, %2457 : vector<8x256xf32>
    %2459 = vector.broadcast %2328 : vector<8x1xf32> to vector<8x256xf32>
    %2460 = arith.mulf %2459, %2454 : vector<8x256xf32>
    %2461 = arith.addf %2283, %2460 : vector<8x256xf32>
    %cst_812 = arith.constant -0.0576519631 : f32
    %2462 = vector.broadcast %cst_812 : f32 to vector<8x256xf32>
    %2463 = arith.mulf %2462, %2338 : vector<8x256xf32>
    %cst_813 = arith.constant 0.0119648147 : f32
    %2464 = vector.broadcast %cst_813 : f32 to vector<8x256xf32>
    %2465 = arith.mulf %2464, %2348 : vector<8x256xf32>
    %2466 = arith.addf %2463, %2465 : vector<8x256xf32>
    %cst_814 = arith.constant 0.0872403681 : f32
    %2467 = vector.broadcast %cst_814 : f32 to vector<8x256xf32>
    %2468 = arith.mulf %2467, %2358 : vector<8x256xf32>
    %2469 = arith.addf %2466, %2468 : vector<8x256xf32>
    %cst_815 = arith.constant 1.02525091 : f32
    %2470 = vector.broadcast %cst_815 : f32 to vector<8x256xf32>
    %2471 = arith.mulf %2470, %2368 : vector<8x256xf32>
    %2472 = arith.addf %2469, %2471 : vector<8x256xf32>
    %2473 = vector.broadcast %2320 : vector<8x1xf32> to vector<8x256xf32>
    %2474 = arith.mulf %2473, %2368 : vector<8x256xf32>
    %c3_816 = arith.constant 3 : index
    %c0_817 = arith.constant 0 : index
    %c0_818 = arith.constant 0 : index
    %2475 = vector.load %arg2[%c3_816, %c0_817, %c0_818] : memref<4x1x256xf32, #tpu.memory_space<vmem>>, vector<1x1x256xf32>
    %2476 = vector.shape_cast %2475 : vector<1x1x256xf32> to vector<1x256xf32>
    %2477 = vector.broadcast %2476 : vector<1x256xf32> to vector<8x256xf32>
    %2478 = arith.subf %2474, %2477 : vector<8x256xf32>
    %2479 = vector.broadcast %2322 : vector<8x1xf32> to vector<8x256xf32>
    %2480 = arith.mulf %2479, %2472 : vector<8x256xf32>
    %2481 = arith.addf %2478, %2480 : vector<8x256xf32>
    %cst_819 = arith.constant -0.0176775102 : f32
    %2482 = vector.broadcast %cst_819 : f32 to vector<8x1xf32>
    %2483 = arith.mulf %2324, %2482 : vector<8x1xf32>
    %2484 = vector.broadcast %2483 : vector<8x1xf32> to vector<8x256xf32>
    %2485 = arith.addf %2481, %2484 : vector<8x256xf32>
    %2486 = arith.mulf %2485, %2485 : vector<8x256xf32>
    %2487 = vector.broadcast %2326 : vector<8x1xf32> to vector<8x256xf32>
    %2488 = arith.mulf %2487, %2486 : vector<8x256xf32>
    %2489 = arith.addf %2458, %2488 : vector<8x256xf32>
    %2490 = vector.broadcast %2328 : vector<8x1xf32> to vector<8x256xf32>
    %2491 = arith.mulf %2490, %2485 : vector<8x256xf32>
    %2492 = arith.addf %2314, %2491 : vector<8x256xf32>
    %c14_i32 = arith.constant 14 : i32
    %c8_i32_820 = arith.constant 8 : i32
    %2493 = arith.muli %c14_i32, %c8_i32_820 : i32
    %2494 = tpu.assume_multiple %2493, 8 : i32
    %2495 = arith.index_cast %2494 : i32 to index
    %c0_821 = arith.constant 0 : index
    %2496 = vector.load %arg1[%2495, %c0_821] : memref<128x8xf32, #tpu.memory_space<vmem>>, vector<8x1xf32>
    %2497 = arith.index_cast %2494 : i32 to index
    %c1_822 = arith.constant 1 : index
    %2498 = vector.load %arg1[%2497, %c1_822] : memref<128x8xf32, #tpu.memory_space<vmem>>, vector<8x1xf32>
    %2499 = arith.index_cast %2494 : i32 to index
    %c2_823 = arith.constant 2 : index
    %2500 = vector.load %arg1[%2499, %c2_823] : memref<128x8xf32, #tpu.memory_space<vmem>>, vector<8x1xf32>
    %2501 = arith.index_cast %2494 : i32 to index
    %c3_824 = arith.constant 3 : index
    %2502 = vector.load %arg1[%2501, %c3_824] : memref<128x8xf32, #tpu.memory_space<vmem>>, vector<8x1xf32>
    %2503 = arith.index_cast %2494 : i32 to index
    %c4_825 = arith.constant 4 : index
    %2504 = vector.load %arg1[%2503, %c4_825] : memref<128x8xf32, #tpu.memory_space<vmem>>, vector<8x1xf32>
    %2505 = arith.index_cast %2494 : i32 to index
    %c5_826 = arith.constant 5 : index
    %2506 = vector.load %arg1[%2505, %c5_826] : memref<128x8xf32, #tpu.memory_space<vmem>>, vector<8x1xf32>
    %c0_827 = arith.constant 0 : index
    %c0_828 = arith.constant 0 : index
    %c0_829 = arith.constant 0 : index
    %2507 = vector.load %arg2[%c0_827, %c0_828, %c0_829] : memref<4x1x256xf32, #tpu.memory_space<vmem>>, vector<1x1x256xf32>
    %2508 = vector.shape_cast %2507 : vector<1x1x256xf32> to vector<1x256xf32>
    %c0_830 = arith.constant 0 : index
    %2509 = arith.index_cast %2494 : i32 to index
    %c0_831 = arith.constant 0 : index
    %2510 = vector.load %arg3[%c0_830, %2509, %c0_831] : memref<4x128x256xbf16, #tpu.memory_space<vmem>>, vector<1x8x256xbf16>
    %2511 = vector.shape_cast %2510 : vector<1x8x256xbf16> to vector<8x256xbf16>
    %2512 = arith.extf %2511 : vector<8x256xbf16> to vector<8x256xf32>
    %2513 = vector.broadcast %2496 : vector<8x1xf32> to vector<8x256xf32>
    %2514 = arith.mulf %2512, %2513 : vector<8x256xf32>
    %2515 = vector.broadcast %2508 : vector<1x256xf32> to vector<8x256xf32>
    %2516 = arith.addf %2515, %2514 : vector<8x256xf32>
    %c1_832 = arith.constant 1 : index
    %c0_833 = arith.constant 0 : index
    %c0_834 = arith.constant 0 : index
    %2517 = vector.load %arg2[%c1_832, %c0_833, %c0_834] : memref<4x1x256xf32, #tpu.memory_space<vmem>>, vector<1x1x256xf32>
    %2518 = vector.shape_cast %2517 : vector<1x1x256xf32> to vector<1x256xf32>
    %c1_835 = arith.constant 1 : index
    %2519 = arith.index_cast %2494 : i32 to index
    %c0_836 = arith.constant 0 : index
    %2520 = vector.load %arg3[%c1_835, %2519, %c0_836] : memref<4x128x256xbf16, #tpu.memory_space<vmem>>, vector<1x8x256xbf16>
    %2521 = vector.shape_cast %2520 : vector<1x8x256xbf16> to vector<8x256xbf16>
    %2522 = arith.extf %2521 : vector<8x256xbf16> to vector<8x256xf32>
    %2523 = vector.broadcast %2496 : vector<8x1xf32> to vector<8x256xf32>
    %2524 = arith.mulf %2522, %2523 : vector<8x256xf32>
    %2525 = vector.broadcast %2518 : vector<1x256xf32> to vector<8x256xf32>
    %2526 = arith.addf %2525, %2524 : vector<8x256xf32>
    %c2_837 = arith.constant 2 : index
    %c0_838 = arith.constant 0 : index
    %c0_839 = arith.constant 0 : index
    %2527 = vector.load %arg2[%c2_837, %c0_838, %c0_839] : memref<4x1x256xf32, #tpu.memory_space<vmem>>, vector<1x1x256xf32>
    %2528 = vector.shape_cast %2527 : vector<1x1x256xf32> to vector<1x256xf32>
    %c2_840 = arith.constant 2 : index
    %2529 = arith.index_cast %2494 : i32 to index
    %c0_841 = arith.constant 0 : index
    %2530 = vector.load %arg3[%c2_840, %2529, %c0_841] : memref<4x128x256xbf16, #tpu.memory_space<vmem>>, vector<1x8x256xbf16>
    %2531 = vector.shape_cast %2530 : vector<1x8x256xbf16> to vector<8x256xbf16>
    %2532 = arith.extf %2531 : vector<8x256xbf16> to vector<8x256xf32>
    %2533 = vector.broadcast %2496 : vector<8x1xf32> to vector<8x256xf32>
    %2534 = arith.mulf %2532, %2533 : vector<8x256xf32>
    %2535 = vector.broadcast %2528 : vector<1x256xf32> to vector<8x256xf32>
    %2536 = arith.addf %2535, %2534 : vector<8x256xf32>
    %c3_842 = arith.constant 3 : index
    %c0_843 = arith.constant 0 : index
    %c0_844 = arith.constant 0 : index
    %2537 = vector.load %arg2[%c3_842, %c0_843, %c0_844] : memref<4x1x256xf32, #tpu.memory_space<vmem>>, vector<1x1x256xf32>
    %2538 = vector.shape_cast %2537 : vector<1x1x256xf32> to vector<1x256xf32>
    %c3_845 = arith.constant 3 : index
    %2539 = arith.index_cast %2494 : i32 to index
    %c0_846 = arith.constant 0 : index
    %2540 = vector.load %arg3[%c3_845, %2539, %c0_846] : memref<4x128x256xbf16, #tpu.memory_space<vmem>>, vector<1x8x256xbf16>
    %2541 = vector.shape_cast %2540 : vector<1x8x256xbf16> to vector<8x256xbf16>
    %2542 = arith.extf %2541 : vector<8x256xbf16> to vector<8x256xf32>
    %2543 = vector.broadcast %2496 : vector<8x1xf32> to vector<8x256xf32>
    %2544 = arith.mulf %2542, %2543 : vector<8x256xf32>
    %2545 = vector.broadcast %2538 : vector<1x256xf32> to vector<8x256xf32>
    %2546 = arith.addf %2545, %2544 : vector<8x256xf32>
    %cst_847 = arith.constant 1.0502007 : f32
    %2547 = vector.broadcast %cst_847 : f32 to vector<8x256xf32>
    %2548 = arith.mulf %2547, %2516 : vector<8x256xf32>
    %cst_848 = arith.constant -0.0453168601 : f32
    %2549 = vector.broadcast %cst_848 : f32 to vector<8x256xf32>
    %2550 = arith.mulf %2549, %2526 : vector<8x256xf32>
    %2551 = arith.addf %2548, %2550 : vector<8x256xf32>
    %cst_849 = arith.constant -0.0374086127 : f32
    %2552 = vector.broadcast %cst_849 : f32 to vector<8x256xf32>
    %2553 = arith.mulf %2552, %2536 : vector<8x256xf32>
    %2554 = arith.addf %2551, %2553 : vector<8x256xf32>
    %cst_850 = arith.constant -0.0585683472 : f32
    %2555 = vector.broadcast %cst_850 : f32 to vector<8x256xf32>
    %2556 = arith.mulf %2555, %2546 : vector<8x256xf32>
    %2557 = arith.addf %2554, %2556 : vector<8x256xf32>
    %2558 = vector.broadcast %2498 : vector<8x1xf32> to vector<8x256xf32>
    %2559 = arith.mulf %2558, %2516 : vector<8x256xf32>
    %c0_851 = arith.constant 0 : index
    %c0_852 = arith.constant 0 : index
    %c0_853 = arith.constant 0 : index
    %2560 = vector.load %arg2[%c0_851, %c0_852, %c0_853] : memref<4x1x256xf32, #tpu.memory_space<vmem>>, vector<1x1x256xf32>
    %2561 = vector.shape_cast %2560 : vector<1x1x256xf32> to vector<1x256xf32>
    %2562 = vector.broadcast %2561 : vector<1x256xf32> to vector<8x256xf32>
    %2563 = arith.subf %2559, %2562 : vector<8x256xf32>
    %2564 = vector.broadcast %2500 : vector<8x1xf32> to vector<8x256xf32>
    %2565 = arith.mulf %2564, %2557 : vector<8x256xf32>
    %2566 = arith.addf %2563, %2565 : vector<8x256xf32>
    %cst_854 = arith.constant -0.122122787 : f32
    %2567 = vector.broadcast %cst_854 : f32 to vector<8x1xf32>
    %2568 = arith.mulf %2502, %2567 : vector<8x1xf32>
    %2569 = vector.broadcast %2568 : vector<8x1xf32> to vector<8x256xf32>
    %2570 = arith.addf %2566, %2569 : vector<8x256xf32>
    %2571 = arith.mulf %2570, %2570 : vector<8x256xf32>
    %2572 = vector.broadcast %2504 : vector<8x1xf32> to vector<8x256xf32>
    %2573 = arith.mulf %2572, %2571 : vector<8x256xf32>
    %2574 = arith.addf %2489, %2573 : vector<8x256xf32>
    %2575 = vector.broadcast %2506 : vector<8x1xf32> to vector<8x256xf32>
    %2576 = arith.mulf %2575, %2570 : vector<8x256xf32>
    %2577 = arith.addf %2399, %2576 : vector<8x256xf32>
    %cst_855 = arith.constant -0.0435616411 : f32
    %2578 = vector.broadcast %cst_855 : f32 to vector<8x256xf32>
    %2579 = arith.mulf %2578, %2516 : vector<8x256xf32>
    %cst_856 = arith.constant 1.02944195 : f32
    %2580 = vector.broadcast %cst_856 : f32 to vector<8x256xf32>
    %2581 = arith.mulf %2580, %2526 : vector<8x256xf32>
    %2582 = arith.addf %2579, %2581 : vector<8x256xf32>
    %cst_857 = arith.constant 0.0361964963 : f32
    %2583 = vector.broadcast %cst_857 : f32 to vector<8x256xf32>
    %2584 = arith.mulf %2583, %2536 : vector<8x256xf32>
    %2585 = arith.addf %2582, %2584 : vector<8x256xf32>
    %cst_858 = arith.constant -0.0512799099 : f32
    %2586 = vector.broadcast %cst_858 : f32 to vector<8x256xf32>
    %2587 = arith.mulf %2586, %2546 : vector<8x256xf32>
    %2588 = arith.addf %2585, %2587 : vector<8x256xf32>
    %2589 = vector.broadcast %2498 : vector<8x1xf32> to vector<8x256xf32>
    %2590 = arith.mulf %2589, %2526 : vector<8x256xf32>
    %c1_859 = arith.constant 1 : index
    %c0_860 = arith.constant 0 : index
    %c0_861 = arith.constant 0 : index
    %2591 = vector.load %arg2[%c1_859, %c0_860, %c0_861] : memref<4x1x256xf32, #tpu.memory_space<vmem>>, vector<1x1x256xf32>
    %2592 = vector.shape_cast %2591 : vector<1x1x256xf32> to vector<1x256xf32>
    %2593 = vector.broadcast %2592 : vector<1x256xf32> to vector<8x256xf32>
    %2594 = arith.subf %2590, %2593 : vector<8x256xf32>
    %2595 = vector.broadcast %2500 : vector<8x1xf32> to vector<8x256xf32>
    %2596 = arith.mulf %2595, %2588 : vector<8x256xf32>
    %2597 = arith.addf %2594, %2596 : vector<8x256xf32>
    %cst_862 = arith.constant -0.101784028 : f32
    %2598 = vector.broadcast %cst_862 : f32 to vector<8x1xf32>
    %2599 = arith.mulf %2502, %2598 : vector<8x1xf32>
    %2600 = vector.broadcast %2599 : vector<8x1xf32> to vector<8x256xf32>
    %2601 = arith.addf %2597, %2600 : vector<8x256xf32>
    %2602 = arith.mulf %2601, %2601 : vector<8x256xf32>
    %2603 = vector.broadcast %2504 : vector<8x1xf32> to vector<8x256xf32>
    %2604 = arith.mulf %2603, %2602 : vector<8x256xf32>
    %2605 = arith.addf %2574, %2604 : vector<8x256xf32>
    %2606 = vector.broadcast %2506 : vector<8x1xf32> to vector<8x256xf32>
    %2607 = arith.mulf %2606, %2601 : vector<8x256xf32>
    %2608 = arith.addf %2430, %2607 : vector<8x256xf32>
    %cst_863 = arith.constant 8.308140e-02 : f32
    %2609 = vector.broadcast %cst_863 : f32 to vector<8x256xf32>
    %2610 = arith.mulf %2609, %2516 : vector<8x256xf32>
    %cst_864 = arith.constant -0.0945512577 : f32
    %2611 = vector.broadcast %cst_864 : f32 to vector<8x256xf32>
    %2612 = arith.mulf %2611, %2526 : vector<8x256xf32>
    %2613 = arith.addf %2610, %2612 : vector<8x256xf32>
    %cst_865 = arith.constant 0.935553312 : f32
    %2614 = vector.broadcast %cst_865 : f32 to vector<8x256xf32>
    %2615 = arith.mulf %2614, %2536 : vector<8x256xf32>
    %2616 = arith.addf %2613, %2615 : vector<8x256xf32>
    %cst_866 = arith.constant 0.00668034563 : f32
    %2617 = vector.broadcast %cst_866 : f32 to vector<8x256xf32>
    %2618 = arith.mulf %2617, %2546 : vector<8x256xf32>
    %2619 = arith.addf %2616, %2618 : vector<8x256xf32>
    %2620 = vector.broadcast %2498 : vector<8x1xf32> to vector<8x256xf32>
    %2621 = arith.mulf %2620, %2536 : vector<8x256xf32>
    %c2_867 = arith.constant 2 : index
    %c0_868 = arith.constant 0 : index
    %c0_869 = arith.constant 0 : index
    %2622 = vector.load %arg2[%c2_867, %c0_868, %c0_869] : memref<4x1x256xf32, #tpu.memory_space<vmem>>, vector<1x1x256xf32>
    %2623 = vector.shape_cast %2622 : vector<1x1x256xf32> to vector<1x256xf32>
    %2624 = vector.broadcast %2623 : vector<1x256xf32> to vector<8x256xf32>
    %2625 = arith.subf %2621, %2624 : vector<8x256xf32>
    %2626 = vector.broadcast %2500 : vector<8x1xf32> to vector<8x256xf32>
    %2627 = arith.mulf %2626, %2619 : vector<8x256xf32>
    %2628 = arith.addf %2625, %2627 : vector<8x256xf32>
    %cst_870 = arith.constant 0.0102772117 : f32
    %2629 = vector.broadcast %cst_870 : f32 to vector<8x1xf32>
    %2630 = arith.mulf %2502, %2629 : vector<8x1xf32>
    %2631 = vector.broadcast %2630 : vector<8x1xf32> to vector<8x256xf32>
    %2632 = arith.addf %2628, %2631 : vector<8x256xf32>
    %2633 = arith.mulf %2632, %2632 : vector<8x256xf32>
    %2634 = vector.broadcast %2504 : vector<8x1xf32> to vector<8x256xf32>
    %2635 = arith.mulf %2634, %2633 : vector<8x256xf32>
    %2636 = arith.addf %2605, %2635 : vector<8x256xf32>
    %2637 = vector.broadcast %2506 : vector<8x1xf32> to vector<8x256xf32>
    %2638 = arith.mulf %2637, %2632 : vector<8x256xf32>
    %2639 = arith.addf %2461, %2638 : vector<8x256xf32>
    %cst_871 = arith.constant -0.0576519631 : f32
    %2640 = vector.broadcast %cst_871 : f32 to vector<8x256xf32>
    %2641 = arith.mulf %2640, %2516 : vector<8x256xf32>
    %cst_872 = arith.constant 0.0119648147 : f32
    %2642 = vector.broadcast %cst_872 : f32 to vector<8x256xf32>
    %2643 = arith.mulf %2642, %2526 : vector<8x256xf32>
    %2644 = arith.addf %2641, %2643 : vector<8x256xf32>
    %cst_873 = arith.constant 0.0872403681 : f32
    %2645 = vector.broadcast %cst_873 : f32 to vector<8x256xf32>
    %2646 = arith.mulf %2645, %2536 : vector<8x256xf32>
    %2647 = arith.addf %2644, %2646 : vector<8x256xf32>
    %cst_874 = arith.constant 1.02525091 : f32
    %2648 = vector.broadcast %cst_874 : f32 to vector<8x256xf32>
    %2649 = arith.mulf %2648, %2546 : vector<8x256xf32>
    %2650 = arith.addf %2647, %2649 : vector<8x256xf32>
    %2651 = vector.broadcast %2498 : vector<8x1xf32> to vector<8x256xf32>
    %2652 = arith.mulf %2651, %2546 : vector<8x256xf32>
    %c3_875 = arith.constant 3 : index
    %c0_876 = arith.constant 0 : index
    %c0_877 = arith.constant 0 : index
    %2653 = vector.load %arg2[%c3_875, %c0_876, %c0_877] : memref<4x1x256xf32, #tpu.memory_space<vmem>>, vector<1x1x256xf32>
    %2654 = vector.shape_cast %2653 : vector<1x1x256xf32> to vector<1x256xf32>
    %2655 = vector.broadcast %2654 : vector<1x256xf32> to vector<8x256xf32>
    %2656 = arith.subf %2652, %2655 : vector<8x256xf32>
    %2657 = vector.broadcast %2500 : vector<8x1xf32> to vector<8x256xf32>
    %2658 = arith.mulf %2657, %2650 : vector<8x256xf32>
    %2659 = arith.addf %2656, %2658 : vector<8x256xf32>
    %cst_878 = arith.constant -0.0176775102 : f32
    %2660 = vector.broadcast %cst_878 : f32 to vector<8x1xf32>
    %2661 = arith.mulf %2502, %2660 : vector<8x1xf32>
    %2662 = vector.broadcast %2661 : vector<8x1xf32> to vector<8x256xf32>
    %2663 = arith.addf %2659, %2662 : vector<8x256xf32>
    %2664 = arith.mulf %2663, %2663 : vector<8x256xf32>
    %2665 = vector.broadcast %2504 : vector<8x1xf32> to vector<8x256xf32>
    %2666 = arith.mulf %2665, %2664 : vector<8x256xf32>
    %2667 = arith.addf %2636, %2666 : vector<8x256xf32>
    %2668 = vector.broadcast %2506 : vector<8x1xf32> to vector<8x256xf32>
    %2669 = arith.mulf %2668, %2663 : vector<8x256xf32>
    %2670 = arith.addf %2492, %2669 : vector<8x256xf32>
    %c15_i32 = arith.constant 15 : i32
    %c8_i32_879 = arith.constant 8 : i32
    %2671 = arith.muli %c15_i32, %c8_i32_879 : i32
    %2672 = tpu.assume_multiple %2671, 8 : i32
    %2673 = arith.index_cast %2672 : i32 to index
    %c0_880 = arith.constant 0 : index
    %2674 = vector.load %arg1[%2673, %c0_880] : memref<128x8xf32, #tpu.memory_space<vmem>>, vector<8x1xf32>
    %2675 = arith.index_cast %2672 : i32 to index
    %c1_881 = arith.constant 1 : index
    %2676 = vector.load %arg1[%2675, %c1_881] : memref<128x8xf32, #tpu.memory_space<vmem>>, vector<8x1xf32>
    %2677 = arith.index_cast %2672 : i32 to index
    %c2_882 = arith.constant 2 : index
    %2678 = vector.load %arg1[%2677, %c2_882] : memref<128x8xf32, #tpu.memory_space<vmem>>, vector<8x1xf32>
    %2679 = arith.index_cast %2672 : i32 to index
    %c3_883 = arith.constant 3 : index
    %2680 = vector.load %arg1[%2679, %c3_883] : memref<128x8xf32, #tpu.memory_space<vmem>>, vector<8x1xf32>
    %2681 = arith.index_cast %2672 : i32 to index
    %c4_884 = arith.constant 4 : index
    %2682 = vector.load %arg1[%2681, %c4_884] : memref<128x8xf32, #tpu.memory_space<vmem>>, vector<8x1xf32>
    %2683 = arith.index_cast %2672 : i32 to index
    %c5_885 = arith.constant 5 : index
    %2684 = vector.load %arg1[%2683, %c5_885] : memref<128x8xf32, #tpu.memory_space<vmem>>, vector<8x1xf32>
    %c0_886 = arith.constant 0 : index
    %c0_887 = arith.constant 0 : index
    %c0_888 = arith.constant 0 : index
    %2685 = vector.load %arg2[%c0_886, %c0_887, %c0_888] : memref<4x1x256xf32, #tpu.memory_space<vmem>>, vector<1x1x256xf32>
    %2686 = vector.shape_cast %2685 : vector<1x1x256xf32> to vector<1x256xf32>
    %c0_889 = arith.constant 0 : index
    %2687 = arith.index_cast %2672 : i32 to index
    %c0_890 = arith.constant 0 : index
    %2688 = vector.load %arg3[%c0_889, %2687, %c0_890] : memref<4x128x256xbf16, #tpu.memory_space<vmem>>, vector<1x8x256xbf16>
    %2689 = vector.shape_cast %2688 : vector<1x8x256xbf16> to vector<8x256xbf16>
    %2690 = arith.extf %2689 : vector<8x256xbf16> to vector<8x256xf32>
    %2691 = vector.broadcast %2674 : vector<8x1xf32> to vector<8x256xf32>
    %2692 = arith.mulf %2690, %2691 : vector<8x256xf32>
    %2693 = vector.broadcast %2686 : vector<1x256xf32> to vector<8x256xf32>
    %2694 = arith.addf %2693, %2692 : vector<8x256xf32>
    %c1_891 = arith.constant 1 : index
    %c0_892 = arith.constant 0 : index
    %c0_893 = arith.constant 0 : index
    %2695 = vector.load %arg2[%c1_891, %c0_892, %c0_893] : memref<4x1x256xf32, #tpu.memory_space<vmem>>, vector<1x1x256xf32>
    %2696 = vector.shape_cast %2695 : vector<1x1x256xf32> to vector<1x256xf32>
    %c1_894 = arith.constant 1 : index
    %2697 = arith.index_cast %2672 : i32 to index
    %c0_895 = arith.constant 0 : index
    %2698 = vector.load %arg3[%c1_894, %2697, %c0_895] : memref<4x128x256xbf16, #tpu.memory_space<vmem>>, vector<1x8x256xbf16>
    %2699 = vector.shape_cast %2698 : vector<1x8x256xbf16> to vector<8x256xbf16>
    %2700 = arith.extf %2699 : vector<8x256xbf16> to vector<8x256xf32>
    %2701 = vector.broadcast %2674 : vector<8x1xf32> to vector<8x256xf32>
    %2702 = arith.mulf %2700, %2701 : vector<8x256xf32>
    %2703 = vector.broadcast %2696 : vector<1x256xf32> to vector<8x256xf32>
    %2704 = arith.addf %2703, %2702 : vector<8x256xf32>
    %c2_896 = arith.constant 2 : index
    %c0_897 = arith.constant 0 : index
    %c0_898 = arith.constant 0 : index
    %2705 = vector.load %arg2[%c2_896, %c0_897, %c0_898] : memref<4x1x256xf32, #tpu.memory_space<vmem>>, vector<1x1x256xf32>
    %2706 = vector.shape_cast %2705 : vector<1x1x256xf32> to vector<1x256xf32>
    %c2_899 = arith.constant 2 : index
    %2707 = arith.index_cast %2672 : i32 to index
    %c0_900 = arith.constant 0 : index
    %2708 = vector.load %arg3[%c2_899, %2707, %c0_900] : memref<4x128x256xbf16, #tpu.memory_space<vmem>>, vector<1x8x256xbf16>
    %2709 = vector.shape_cast %2708 : vector<1x8x256xbf16> to vector<8x256xbf16>
    %2710 = arith.extf %2709 : vector<8x256xbf16> to vector<8x256xf32>
    %2711 = vector.broadcast %2674 : vector<8x1xf32> to vector<8x256xf32>
    %2712 = arith.mulf %2710, %2711 : vector<8x256xf32>
    %2713 = vector.broadcast %2706 : vector<1x256xf32> to vector<8x256xf32>
    %2714 = arith.addf %2713, %2712 : vector<8x256xf32>
    %c3_901 = arith.constant 3 : index
    %c0_902 = arith.constant 0 : index
    %c0_903 = arith.constant 0 : index
    %2715 = vector.load %arg2[%c3_901, %c0_902, %c0_903] : memref<4x1x256xf32, #tpu.memory_space<vmem>>, vector<1x1x256xf32>
    %2716 = vector.shape_cast %2715 : vector<1x1x256xf32> to vector<1x256xf32>
    %c3_904 = arith.constant 3 : index
    %2717 = arith.index_cast %2672 : i32 to index
    %c0_905 = arith.constant 0 : index
    %2718 = vector.load %arg3[%c3_904, %2717, %c0_905] : memref<4x128x256xbf16, #tpu.memory_space<vmem>>, vector<1x8x256xbf16>
    %2719 = vector.shape_cast %2718 : vector<1x8x256xbf16> to vector<8x256xbf16>
    %2720 = arith.extf %2719 : vector<8x256xbf16> to vector<8x256xf32>
    %2721 = vector.broadcast %2674 : vector<8x1xf32> to vector<8x256xf32>
    %2722 = arith.mulf %2720, %2721 : vector<8x256xf32>
    %2723 = vector.broadcast %2716 : vector<1x256xf32> to vector<8x256xf32>
    %2724 = arith.addf %2723, %2722 : vector<8x256xf32>
    %cst_906 = arith.constant 1.0502007 : f32
    %2725 = vector.broadcast %cst_906 : f32 to vector<8x256xf32>
    %2726 = arith.mulf %2725, %2694 : vector<8x256xf32>
    %cst_907 = arith.constant -0.0453168601 : f32
    %2727 = vector.broadcast %cst_907 : f32 to vector<8x256xf32>
    %2728 = arith.mulf %2727, %2704 : vector<8x256xf32>
    %2729 = arith.addf %2726, %2728 : vector<8x256xf32>
    %cst_908 = arith.constant -0.0374086127 : f32
    %2730 = vector.broadcast %cst_908 : f32 to vector<8x256xf32>
    %2731 = arith.mulf %2730, %2714 : vector<8x256xf32>
    %2732 = arith.addf %2729, %2731 : vector<8x256xf32>
    %cst_909 = arith.constant -0.0585683472 : f32
    %2733 = vector.broadcast %cst_909 : f32 to vector<8x256xf32>
    %2734 = arith.mulf %2733, %2724 : vector<8x256xf32>
    %2735 = arith.addf %2732, %2734 : vector<8x256xf32>
    %2736 = vector.broadcast %2676 : vector<8x1xf32> to vector<8x256xf32>
    %2737 = arith.mulf %2736, %2694 : vector<8x256xf32>
    %c0_910 = arith.constant 0 : index
    %c0_911 = arith.constant 0 : index
    %c0_912 = arith.constant 0 : index
    %2738 = vector.load %arg2[%c0_910, %c0_911, %c0_912] : memref<4x1x256xf32, #tpu.memory_space<vmem>>, vector<1x1x256xf32>
    %2739 = vector.shape_cast %2738 : vector<1x1x256xf32> to vector<1x256xf32>
    %2740 = vector.broadcast %2739 : vector<1x256xf32> to vector<8x256xf32>
    %2741 = arith.subf %2737, %2740 : vector<8x256xf32>
    %2742 = vector.broadcast %2678 : vector<8x1xf32> to vector<8x256xf32>
    %2743 = arith.mulf %2742, %2735 : vector<8x256xf32>
    %2744 = arith.addf %2741, %2743 : vector<8x256xf32>
    %cst_913 = arith.constant -0.122122787 : f32
    %2745 = vector.broadcast %cst_913 : f32 to vector<8x1xf32>
    %2746 = arith.mulf %2680, %2745 : vector<8x1xf32>
    %2747 = vector.broadcast %2746 : vector<8x1xf32> to vector<8x256xf32>
    %2748 = arith.addf %2744, %2747 : vector<8x256xf32>
    %2749 = arith.mulf %2748, %2748 : vector<8x256xf32>
    %2750 = vector.broadcast %2682 : vector<8x1xf32> to vector<8x256xf32>
    %2751 = arith.mulf %2750, %2749 : vector<8x256xf32>
    %2752 = arith.addf %2667, %2751 : vector<8x256xf32>
    %2753 = vector.broadcast %2684 : vector<8x1xf32> to vector<8x256xf32>
    %2754 = arith.mulf %2753, %2748 : vector<8x256xf32>
    %2755 = arith.addf %2577, %2754 : vector<8x256xf32>
    %cst_914 = arith.constant -0.0435616411 : f32
    %2756 = vector.broadcast %cst_914 : f32 to vector<8x256xf32>
    %2757 = arith.mulf %2756, %2694 : vector<8x256xf32>
    %cst_915 = arith.constant 1.02944195 : f32
    %2758 = vector.broadcast %cst_915 : f32 to vector<8x256xf32>
    %2759 = arith.mulf %2758, %2704 : vector<8x256xf32>
    %2760 = arith.addf %2757, %2759 : vector<8x256xf32>
    %cst_916 = arith.constant 0.0361964963 : f32
    %2761 = vector.broadcast %cst_916 : f32 to vector<8x256xf32>
    %2762 = arith.mulf %2761, %2714 : vector<8x256xf32>
    %2763 = arith.addf %2760, %2762 : vector<8x256xf32>
    %cst_917 = arith.constant -0.0512799099 : f32
    %2764 = vector.broadcast %cst_917 : f32 to vector<8x256xf32>
    %2765 = arith.mulf %2764, %2724 : vector<8x256xf32>
    %2766 = arith.addf %2763, %2765 : vector<8x256xf32>
    %2767 = vector.broadcast %2676 : vector<8x1xf32> to vector<8x256xf32>
    %2768 = arith.mulf %2767, %2704 : vector<8x256xf32>
    %c1_918 = arith.constant 1 : index
    %c0_919 = arith.constant 0 : index
    %c0_920 = arith.constant 0 : index
    %2769 = vector.load %arg2[%c1_918, %c0_919, %c0_920] : memref<4x1x256xf32, #tpu.memory_space<vmem>>, vector<1x1x256xf32>
    %2770 = vector.shape_cast %2769 : vector<1x1x256xf32> to vector<1x256xf32>
    %2771 = vector.broadcast %2770 : vector<1x256xf32> to vector<8x256xf32>
    %2772 = arith.subf %2768, %2771 : vector<8x256xf32>
    %2773 = vector.broadcast %2678 : vector<8x1xf32> to vector<8x256xf32>
    %2774 = arith.mulf %2773, %2766 : vector<8x256xf32>
    %2775 = arith.addf %2772, %2774 : vector<8x256xf32>
    %cst_921 = arith.constant -0.101784028 : f32
    %2776 = vector.broadcast %cst_921 : f32 to vector<8x1xf32>
    %2777 = arith.mulf %2680, %2776 : vector<8x1xf32>
    %2778 = vector.broadcast %2777 : vector<8x1xf32> to vector<8x256xf32>
    %2779 = arith.addf %2775, %2778 : vector<8x256xf32>
    %2780 = arith.mulf %2779, %2779 : vector<8x256xf32>
    %2781 = vector.broadcast %2682 : vector<8x1xf32> to vector<8x256xf32>
    %2782 = arith.mulf %2781, %2780 : vector<8x256xf32>
    %2783 = arith.addf %2752, %2782 : vector<8x256xf32>
    %2784 = vector.broadcast %2684 : vector<8x1xf32> to vector<8x256xf32>
    %2785 = arith.mulf %2784, %2779 : vector<8x256xf32>
    %2786 = arith.addf %2608, %2785 : vector<8x256xf32>
    %cst_922 = arith.constant 8.308140e-02 : f32
    %2787 = vector.broadcast %cst_922 : f32 to vector<8x256xf32>
    %2788 = arith.mulf %2787, %2694 : vector<8x256xf32>
    %cst_923 = arith.constant -0.0945512577 : f32
    %2789 = vector.broadcast %cst_923 : f32 to vector<8x256xf32>
    %2790 = arith.mulf %2789, %2704 : vector<8x256xf32>
    %2791 = arith.addf %2788, %2790 : vector<8x256xf32>
    %cst_924 = arith.constant 0.935553312 : f32
    %2792 = vector.broadcast %cst_924 : f32 to vector<8x256xf32>
    %2793 = arith.mulf %2792, %2714 : vector<8x256xf32>
    %2794 = arith.addf %2791, %2793 : vector<8x256xf32>
    %cst_925 = arith.constant 0.00668034563 : f32
    %2795 = vector.broadcast %cst_925 : f32 to vector<8x256xf32>
    %2796 = arith.mulf %2795, %2724 : vector<8x256xf32>
    %2797 = arith.addf %2794, %2796 : vector<8x256xf32>
    %2798 = vector.broadcast %2676 : vector<8x1xf32> to vector<8x256xf32>
    %2799 = arith.mulf %2798, %2714 : vector<8x256xf32>
    %c2_926 = arith.constant 2 : index
    %c0_927 = arith.constant 0 : index
    %c0_928 = arith.constant 0 : index
    %2800 = vector.load %arg2[%c2_926, %c0_927, %c0_928] : memref<4x1x256xf32, #tpu.memory_space<vmem>>, vector<1x1x256xf32>
    %2801 = vector.shape_cast %2800 : vector<1x1x256xf32> to vector<1x256xf32>
    %2802 = vector.broadcast %2801 : vector<1x256xf32> to vector<8x256xf32>
    %2803 = arith.subf %2799, %2802 : vector<8x256xf32>
    %2804 = vector.broadcast %2678 : vector<8x1xf32> to vector<8x256xf32>
    %2805 = arith.mulf %2804, %2797 : vector<8x256xf32>
    %2806 = arith.addf %2803, %2805 : vector<8x256xf32>
    %cst_929 = arith.constant 0.0102772117 : f32
    %2807 = vector.broadcast %cst_929 : f32 to vector<8x1xf32>
    %2808 = arith.mulf %2680, %2807 : vector<8x1xf32>
    %2809 = vector.broadcast %2808 : vector<8x1xf32> to vector<8x256xf32>
    %2810 = arith.addf %2806, %2809 : vector<8x256xf32>
    %2811 = arith.mulf %2810, %2810 : vector<8x256xf32>
    %2812 = vector.broadcast %2682 : vector<8x1xf32> to vector<8x256xf32>
    %2813 = arith.mulf %2812, %2811 : vector<8x256xf32>
    %2814 = arith.addf %2783, %2813 : vector<8x256xf32>
    %2815 = vector.broadcast %2684 : vector<8x1xf32> to vector<8x256xf32>
    %2816 = arith.mulf %2815, %2810 : vector<8x256xf32>
    %2817 = arith.addf %2639, %2816 : vector<8x256xf32>
    %cst_930 = arith.constant -0.0576519631 : f32
    %2818 = vector.broadcast %cst_930 : f32 to vector<8x256xf32>
    %2819 = arith.mulf %2818, %2694 : vector<8x256xf32>
    %cst_931 = arith.constant 0.0119648147 : f32
    %2820 = vector.broadcast %cst_931 : f32 to vector<8x256xf32>
    %2821 = arith.mulf %2820, %2704 : vector<8x256xf32>
    %2822 = arith.addf %2819, %2821 : vector<8x256xf32>
    %cst_932 = arith.constant 0.0872403681 : f32
    %2823 = vector.broadcast %cst_932 : f32 to vector<8x256xf32>
    %2824 = arith.mulf %2823, %2714 : vector<8x256xf32>
    %2825 = arith.addf %2822, %2824 : vector<8x256xf32>
    %cst_933 = arith.constant 1.02525091 : f32
    %2826 = vector.broadcast %cst_933 : f32 to vector<8x256xf32>
    %2827 = arith.mulf %2826, %2724 : vector<8x256xf32>
    %2828 = arith.addf %2825, %2827 : vector<8x256xf32>
    %2829 = vector.broadcast %2676 : vector<8x1xf32> to vector<8x256xf32>
    %2830 = arith.mulf %2829, %2724 : vector<8x256xf32>
    %c3_934 = arith.constant 3 : index
    %c0_935 = arith.constant 0 : index
    %c0_936 = arith.constant 0 : index
    %2831 = vector.load %arg2[%c3_934, %c0_935, %c0_936] : memref<4x1x256xf32, #tpu.memory_space<vmem>>, vector<1x1x256xf32>
    %2832 = vector.shape_cast %2831 : vector<1x1x256xf32> to vector<1x256xf32>
    %2833 = vector.broadcast %2832 : vector<1x256xf32> to vector<8x256xf32>
    %2834 = arith.subf %2830, %2833 : vector<8x256xf32>
    %2835 = vector.broadcast %2678 : vector<8x1xf32> to vector<8x256xf32>
    %2836 = arith.mulf %2835, %2828 : vector<8x256xf32>
    %2837 = arith.addf %2834, %2836 : vector<8x256xf32>
    %cst_937 = arith.constant -0.0176775102 : f32
    %2838 = vector.broadcast %cst_937 : f32 to vector<8x1xf32>
    %2839 = arith.mulf %2680, %2838 : vector<8x1xf32>
    %2840 = vector.broadcast %2839 : vector<8x1xf32> to vector<8x256xf32>
    %2841 = arith.addf %2837, %2840 : vector<8x256xf32>
    %2842 = arith.mulf %2841, %2841 : vector<8x256xf32>
    %2843 = vector.broadcast %2682 : vector<8x1xf32> to vector<8x256xf32>
    %2844 = arith.mulf %2843, %2842 : vector<8x256xf32>
    %2845 = arith.addf %2814, %2844 : vector<8x256xf32>
    %2846 = vector.broadcast %2684 : vector<8x1xf32> to vector<8x256xf32>
    %2847 = arith.mulf %2846, %2841 : vector<8x256xf32>
    %2848 = arith.addf %2670, %2847 : vector<8x256xf32>
    %c16_i32 = arith.constant 16 : i32
    %c0_938 = arith.constant 0 : index
    %c0_939 = arith.constant 0 : index
    %2849 = vector.load %arg4[%c0_938, %c0_939] : memref<40x256xf32, #tpu.memory_space<vmem>>, vector<8x256xf32>
    tpu.vector_store %arg4[%c0_938, %c0_939], %2845 {strides = array<i32>} : memref<40x256xf32, #tpu.memory_space<vmem>>, vector<8x256xf32>,
    %c8 = arith.constant 8 : index
    %c0_940 = arith.constant 0 : index
    %2850 = vector.load %arg4[%c8, %c0_940] : memref<40x256xf32, #tpu.memory_space<vmem>>, vector<8x256xf32>
    tpu.vector_store %arg4[%c8, %c0_940], %2755 {strides = array<i32>} : memref<40x256xf32, #tpu.memory_space<vmem>>, vector<8x256xf32>,
    %c16 = arith.constant 16 : index
    %c0_941 = arith.constant 0 : index
    %2851 = vector.load %arg4[%c16, %c0_941] : memref<40x256xf32, #tpu.memory_space<vmem>>, vector<8x256xf32>
    tpu.vector_store %arg4[%c16, %c0_941], %2786 {strides = array<i32>} : memref<40x256xf32, #tpu.memory_space<vmem>>, vector<8x256xf32>,
    %c24 = arith.constant 24 : index
    %c0_942 = arith.constant 0 : index
    %2852 = vector.load %arg4[%c24, %c0_942] : memref<40x256xf32, #tpu.memory_space<vmem>>, vector<8x256xf32>
    tpu.vector_store %arg4[%c24, %c0_942], %2817 {strides = array<i32>} : memref<40x256xf32, #tpu.memory_space<vmem>>, vector<8x256xf32>,
    %c32 = arith.constant 32 : index
    %c0_943 = arith.constant 0 : index
    %2853 = vector.load %arg4[%c32, %c0_943] : memref<40x256xf32, #tpu.memory_space<vmem>>, vector<8x256xf32>
    tpu.vector_store %arg4[%c32, %c0_943], %2848 {strides = array<i32>} : memref<40x256xf32, #tpu.memory_space<vmem>>, vector<8x256xf32>,
    return
  }
  func.func @transform_0(%arg0: i32) -> (i32, i32) {
    %c0_i32 = arith.constant 0 : i32
    %c0_i32_0 = arith.constant 0 : i32
    %c0_i32_1 = arith.constant 0 : i32
    return %c0_i32, %c0_i32_0 : i32, i32
  }
  func.func @transform_1(%arg0: i32) -> (i32, i32, i32) {
    %c0_i32 = arith.constant 0 : i32
    %c0_i32_0 = arith.constant 0 : i32
    %c0_i32_1 = arith.constant 0 : i32
    %c0_i32_2 = arith.constant 0 : i32
    return %c0_i32, %c0_i32_0, %c0_i32_1 : i32, i32, i32
  }
  func.func @transform_2(%arg0: i32) -> (i32, i32, i32) {
    %c0_i32 = arith.constant 0 : i32
    %c0_i32_0 = arith.constant 0 : i32
    %c0_i32_1 = arith.constant 0 : i32
    %c0_i32_2 = arith.constant 0 : i32
    return %c0_i32, %c0_i32_0, %c0_i32_1 : i32, i32, i32
  }
  func.func @transform_3(%arg0: i32) -> (i32, i32) {
    %c0_i32 = arith.constant 0 : i32
    %c0_i32_0 = arith.constant 0 : i32
    %c0_i32_1 = arith.constant 0 : i32
    return %c0_i32, %c0_i32_0 : i32, i32
  }
}

</mosaic_0001>

<llo_original>
// kernel: squeeze.1
$region0: #{squeeze.1}
  %s0 = inlined_call_operand.vmem [shape: f32[1,4,16,16], index: 0, kind: input, shape index: {}]
  %s1 = inlined_call_operand.vmem [shape: f32[4,1,256], index: 1, kind: output, shape index: {}]
  $region1: #{squeeze.1} parent=0
    #allocation0 [shape = 'u8[32768]{0}', space=vmem, size = 0x8000, scoped, tag = 'scoped mem for output reshape']
    %v2 = vld [vmem:[%s0] ss:$8 sm:$0xf]
    %v3 = vld [vmem:[%s0] ss:$8 sm:$0xf0]
    %vm4 = vcmask 1047556
    %v5 = vsel %vm4, %v3, %v2
    %vm6 = vcmask 130048
    %7 = vst.msk [vmem:[#allocation0] ss:$8 sm:$0xf] %vm6, %v5
    %8 = vst.msk [vmem:[#allocation0] ss:$8 sm:$0xf0] %vm6, %v5
    %s9 = scalar_lea.vmem %s0, 7
    %v10 = vld [vmem:[%s9] ss:$8 sm:$0xf]
    %s11 = scalar_lea.vmem %s0, 7
    %v12 = vld [vmem:[%s11] ss:$8 sm:$0xf0]
    %vm13 = vcmask 1047556
    %v14 = vsel %vm13, %v12, %v10
    %15 = vrot.lane.b32.xlu0 %v14, 112
    %v16 = vpop.permute.xlu0 %15
    %vm17 = vcmask 1048448
    %18 = vst.msk [vmem:[#allocation0] ss:$8 sm:$0xf] %vm17, %v16
    %19 = vst.msk [vmem:[#allocation0] ss:$8 sm:$0xf0] %vm17, %v16
    %s20 = scalar_lea.vmem %s0, 6
    %v21 = vld [vmem:[%s20] ss:$8 sm:$0xf]
    %s22 = scalar_lea.vmem %s0, 6
    %v23 = vld [vmem:[%s22] ss:$8 sm:$0xf0]
    %vm24 = vcmask 1047556
    %v25 = vsel %vm24, %v23, %v21
    %26 = vrot.lane.b32.xlu0 %v25, 96
    %v27 = vpop.permute.xlu0 %26
    %vm28 = vcmask 917248
    %29 = vst.msk [vmem:[#allocation0] ss:$8 sm:$0xf] %vm28, %v27
    %30 = vst.msk [vmem:[#allocation0] ss:$8 sm:$0xf0] %vm28, %v27
    %s31 = scalar_lea.vmem %s0, 5
    %v32 = vld [vmem:[%s31] ss:$8 sm:$0xf]
    %s33 = scalar_lea.vmem %s0, 5
    %v34 = vld [vmem:[%s33] ss:$8 sm:$0xf0]
    %vm35 = vcmask 1047556
    %v36 = vsel %vm35, %v34, %v32
    %37 = vrot.lane.b32.xlu0 %v36, 80
    %v38 = vpop.permute.xlu0 %37
    %vm39 = vcmask 786048
    %40 = vst.msk [vmem:[#allocation0] ss:$8 sm:$0xf] %vm39, %v38
    %41 = vst.msk [vmem:[#allocation0] ss:$8 sm:$0xf0] %vm39, %v38
    %s42 = scalar_lea.vmem %s0, 4
    %v43 = vld [vmem:[%s42] ss:$8 sm:$0xf]
    %s44 = scalar_lea.vmem %s0, 4
    %v45 = vld [vmem:[%s44] ss:$8 sm:$0xf0]
    %vm46 = vcmask 1047556
    %v47 = vsel %vm46, %v45, %v43
    %48 = vrot.lane.b32.xlu0 %v47, 64
    %v49 = vpop.permute.xlu0 %48
    %vm50 = vcmask 654848
    %51 = vst.msk [vmem:[#allocation0] ss:$8 sm:$0xf] %vm50, %v49
    %52 = vst.msk [vmem:[#allocation0] ss:$8 sm:$0xf0] %vm50, %v49
    %s53 = scalar_lea.vmem %s0, 3
    %v54 = vld [vmem:[%s53] ss:$8 sm:$0xf]
    %s55 = scalar_lea.vmem %s0, 3
    %v56 = vld [vmem:[%s55] ss:$8 sm:$0xf0]
    %vm57 = vcmask 1047556
    %v58 = vsel %vm57, %v56, %v54
    %59 = vrot.lane.b32.xlu0 %v58, 48
    %v60 = vpop.permute.xlu0 %59
    %vm61 = vcmask 523648
    %62 = vst.msk [vmem:[#allocation0] ss:$8 sm:$0xf] %vm61, %v60
    %63 = vst.msk [vmem:[#allocation0] ss:$8 sm:$0xf0] %vm61, %v60
    %s64 = scalar_lea.vmem %s0, 2
    %v65 = vld [vmem:[%s64] ss:$8 sm:$0xf]
    %s66 = scalar_lea.vmem %s0, 2
    %v67 = vld [vmem:[%s66] ss:$8 sm:$0xf0]
    %vm68 = vcmask 1047556
    %v69 = vsel %vm68, %v67, %v65
    %70 = vrot.lane.b32.xlu0 %v69, 32
    %v71 = vpop.permute.xlu0 %70
    %vm72 = vcmask 392448
    %73 = vst.msk [vmem:[#allocation0] ss:$8 sm:$0xf] %vm72, %v71
    %74 = vst.msk [vmem:[#allocation0] ss:$8 sm:$0xf0] %vm72, %v71
    %s75 = scalar_lea.vmem %s0, 1
    %v76 = vld [vmem:[%s75] ss:$8 sm:$0xf]
    %s77 = scalar_lea.vmem %s0, 1
    %v78 = vld [vmem:[%s77] ss:$8 sm:$0xf0]
    %vm79 = vcmask 1047556
    %v80 = vsel %vm79, %v78, %v76
    %81 = vrot.lane.b32.xlu0 %v80, 16
    %v82 = vpop.permute.xlu0 %81
    %vm83 = vcmask 261248
    %84 = vst.msk [vmem:[#allocation0] ss:$8 sm:$0xf] %vm83, %v82
    %85 = vst.msk [vmem:[#allocation0] ss:$8 sm:$0xf0] %vm83, %v82
    %s87 = sshllo.u32 0, 1
    %v89 = vld [vmem:[#allocation0] sm:%s87]
    %s90 = sshllo.u32 0, 1
    %91 = vst [vmem:[%s1] sm:%s90] %v89
    %s92 = scalar_lea.vmem [#allocation0], 8
    %v93 = vld [vmem:[%s92] sm:%s87]
    %s94 = sshllo.u32 0, 1
    %s95 = scalar_lea.vmem %s1, 1
    %96 = vst [vmem:[%s95] sm:%s94] %v93
    %s97 = scalar_lea.vmem [#allocation0], 16
    %v98 = vld [vmem:[%s97] sm:%s87]
    %s99 = sshllo.u32 0, 1
    %s100 = smul.addr 1, 2
    %s101 = scalar_lea.vmem %s1, %s100
    %102 = vst [vmem:[%s101] sm:%s99] %v98
    %s103 = scalar_lea.vmem [#allocation0], 24
    %v104 = vld [vmem:[%s103] sm:%s87]
    %s105 = sshllo.u32 0, 1
    %s106 = smul.addr 1, 3
    %s107 = scalar_lea.vmem %s1, %s106
    %108 = vst [vmem:[%s107] sm:%s105] %v104
    %s109 = scalar_lea.vmem [#allocation0], 32
    %v110 = vld [vmem:[%s109] sm:%s87]
    %s111 = sshllo.u32 0, 1
    %s112 = smul.addr 1, 4
    %s113 = scalar_lea.vmem %s1, %s112
    %114 = vst [vmem:[%s113] sm:%s111] %v110
    %s115 = scalar_lea.vmem [#allocation0], 40
    %v116 = vld [vmem:[%s115] sm:%s87]
    %s117 = sshllo.u32 0, 1
    %s118 = smul.addr 1, 5
    %s119 = scalar_lea.vmem %s1, %s118
    %120 = vst [vmem:[%s119] sm:%s117] %v116
    %s121 = scalar_lea.vmem [#allocation0], 48
    %v122 = vld [vmem:[%s121] sm:%s87]
    %s123 = sshllo.u32 0, 1
    %s124 = smul.addr 1, 6
    %s125 = scalar_lea.vmem %s1, %s124
    %126 = vst [vmem:[%s125] sm:%s123] %v122
    %s127 = scalar_lea.vmem [#allocation0], 56
    %v128 = vld [vmem:[%s127] sm:%s87]
    %s129 = sshllo.u32 0, 1
    %s130 = smul.addr 1, 7
    %s131 = scalar_lea.vmem %s1, %s130
    %132 = vst [vmem:[%s131] sm:%s129] %v128

// kernel: _forward_impl.1
$region0: #{_forward_impl.1}
  #allocation0 [shape = 'u32[]', space=smem, size = 0x4, offset = 0x4, fixed_abs, tag = 'smem constant byte address 0x4 - core index']
  #allocation1 [shape = 'u32[144,128]{1,0:T(1,128)}', space=vmem, size = 0x12000, scoped, tag = 'internal scratch']
  %s0 = inlined_call_operand.vmem [shape: f32[128,8], index: 0, kind: input, shape index: {}]
  %s1 = inlined_call_operand.vmem [shape: f32[4,1,256], index: 1, kind: input, shape index: {}]
  %s2 = inlined_call_operand.vmem [shape: bf16[4,128,256], index: 2, kind: input, shape index: {}]
  %s3 = inlined_call_operand.vmem [shape: f32[40,256], index: 3, kind: output, shape index: {}]
  %s4 = sld [smem:[#allocation0]]
  $region22: #{_forward_impl.1} parent=0
    _
  %s6 = ssub.s32 1, %s4
  %s7 = scalar_select 0, %s6, %s4
  // Predicated region
  $region2: #{_forward_impl.1} parent=0 // pred_check
    _
  $region3: #{_forward_impl.1} parent=0 // pred_check_branch
    %9 = sbr.rel (0) target = $region5
  $region4: #{_forward_impl.1} parent=0 // pred_region
    _
  $region5: #{_forward_impl.1} parent=0 // pred_fallthru
    _
  // Predicated region
  $region6: #{_forward_impl.1} parent=0 // pred_check
    _
  $region7: #{_forward_impl.1} parent=0 // pred_check_branch
    %11 = sbr.rel (0) target = $region9
  $region8: #{_forward_impl.1} parent=0 // pred_region
    _
  $region9: #{_forward_impl.1} parent=0 // pred_fallthru
    _
  // Predicated region
  $region10: #{_forward_impl.1} parent=0 // pred_check
    _
  $region11: #{_forward_impl.1} parent=0 // pred_check_branch
    %13 = sbr.rel (0) target = $region13
  $region12: #{_forward_impl.1} parent=0 // pred_region
    _
  $region13: #{_forward_impl.1} parent=0 // pred_fallthru
    _
  %v14 = vld [vmem:[%s0] sm:$0xff]
  %v15 = vld [vmem:[%s1] sm:$0x3]
  %s16 = smul.u32 0, 2
  %s17 = smul.addr %s16, 4
  %s18 = scalar_lea.vmem %s2, %s17
  %v19 = vld [vmem:[%s18] sm:$0xff]
  %v20 = vunpack.c.l.bf16 %v19
  %v21 = vunpack.c.h.bf16 %v19
  %23 = vset.pattern.permute.xlu0 0
  %24 = vperm.xlu0 %23, %v14
  %v25 = vpop.permute.xlu0 %24
  %v27 = vmul.f32 %v20, %v25
  %v28 = vmul.f32 %v21, %v25
  %v30 = vlaneseq
  %v31 = vshrl.u32 %v30, 7
  %v32 = vsub.s32 0, %v31
  %v33 = vrot.slane %v15, %v32
  %v34 = vlaneseq
  %v35 = vshrl.u32 %v34, 7
  %v36 = vsub.s32 1, %v35
  %v37 = vrot.slane %v15, %v36
  %v40 = vadd.f32 %v33, %v27
  %v41 = vadd.f32 %v37, %v28
  %s42 = scalar_lea.vmem %s1, 2
  %v43 = vld [vmem:[%s42] sm:$0x3]
  %s44 = sadd.s32 %s16, 32
  %s45 = smul.addr %s44, 4
  %s46 = scalar_lea.vmem %s2, %s45
  %v47 = vld [vmem:[%s46] sm:$0xff]
  %v48 = vunpack.c.l.bf16 %v47
  %v49 = vunpack.c.h.bf16 %v47
  %v50 = vmul.f32 %v48, %v25
  %v51 = vmul.f32 %v49, %v25
  %v53 = vlaneseq
  %v54 = vshrl.u32 %v53, 7
  %v55 = vsub.s32 0, %v54
  %v56 = vrot.slane %v43, %v55
  %v57 = vlaneseq
  %v58 = vshrl.u32 %v57, 7
  %v59 = vsub.s32 1, %v58
  %v60 = vrot.slane %v43, %v59
  %v63 = vadd.f32 %v56, %v50
  %v64 = vadd.f32 %v60, %v51
  %s65 = scalar_lea.vmem %s1, 4
  %v66 = vld [vmem:[%s65] sm:$0x3]
  %s67 = sadd.s32 %s16, 64
  %s68 = smul.addr %s67, 4
  %s69 = scalar_lea.vmem %s2, %s68
  %v70 = vld [vmem:[%s69] sm:$0xff]
  %v71 = vunpack.c.l.bf16 %v70
  %v72 = vunpack.c.h.bf16 %v70
  %v73 = vmul.f32 %v71, %v25
  %v74 = vmul.f32 %v72, %v25
  %v76 = vlaneseq
  %v77 = vshrl.u32 %v76, 7
  %v78 = vsub.s32 0, %v77
  %v79 = vrot.slane %v66, %v78
  %v80 = vlaneseq
  %v81 = vshrl.u32 %v80, 7
  %v82 = vsub.s32 1, %v81
  %v83 = vrot.slane %v66, %v82
  %v86 = vadd.f32 %v79, %v73
  %v87 = vadd.f32 %v83, %v74
  %s88 = scalar_lea.vmem %s1, 6
  %v89 = vld [vmem:[%s88] sm:$0x3]
  %s90 = sadd.s32 %s16, 96
  %s91 = smul.addr %s90, 4
  %s92 = scalar_lea.vmem %s2, %s91
  %v93 = vld [vmem:[%s92] sm:$0xff]
  %v94 = vunpack.c.l.bf16 %v93
  %v95 = vunpack.c.h.bf16 %v93
  %v96 = vmul.f32 %v94, %v25
  %v97 = vmul.f32 %v95, %v25
  %v99 = vlaneseq
  %v100 = vshrl.u32 %v99, 7
  %v101 = vsub.s32 0, %v100
  %v102 = vrot.slane %v89, %v101
  %v103 = vlaneseq
  %v104 = vshrl.u32 %v103, 7
  %v105 = vsub.s32 1, %v104
  %v106 = vrot.slane %v89, %v105
  %v109 = vadd.f32 %v102, %v96
  %v110 = vadd.f32 %v106, %v97
  %v111 = vmul.f32 %v40, 1.0502007
  %v112 = vmul.f32 %v41, 1.0502007
  %v113 = vmul.f32 %v63, -0.04531686
  %v114 = vmul.f32 %v64, -0.04531686
  %v115 = vadd.f32 %v111, %v113
  %v116 = vadd.f32 %v112, %v114
  %v117 = vmul.f32 %v86, -0.037408613
  %v118 = vmul.f32 %v87, -0.037408613
  %v119 = vadd.f32 %v115, %v117
  %v120 = vadd.f32 %v116, %v118
  %v121 = vmul.f32 %v109, -0.058568347
  %v122 = vmul.f32 %v110, -0.058568347
  %v123 = vadd.f32 %v119, %v121
  %v124 = vadd.f32 %v120, %v122
  %125 = vset.pattern.permute.xlu0 1
  %126 = vperm.xlu0 %125, %v14
  %v127 = vpop.permute.xlu0 %126
  %v129 = vmul.f32 %v127, %v40
  %v130 = vmul.f32 %v127, %v41
  %v131 = vsub.f32 %v129, %v33
  %v132 = vsub.f32 %v130, %v37
  %133 = vset.pattern.permute.xlu0 2
  %134 = vperm.xlu0 %133, %v14
  %v135 = vpop.permute.xlu0 %134
  %v137 = vmul.f32 %v135, %v123
  %v138 = vmul.f32 %v135, %v124
  %v139 = vadd.f32 %v131, %v137
  %v140 = vadd.f32 %v132, %v138
  %v141 = vmul.f32 %v14, -0.12212279
  %143 = vset.pattern.permute.xlu0 3
  %144 = vperm.xlu0 %143, %v141
  %v145 = vpop.permute.xlu0 %144
  %v147 = vadd.f32 %v139, %v145
  %v148 = vadd.f32 %v140, %v145
  %v149 = vmul.f32 %v147, %v147
  %v150 = vmul.f32 %v148, %v148
  %151 = vset.pattern.permute.xlu0 4
  %152 = vperm.xlu0 %151, %v14
  %v153 = vpop.permute.xlu0 %152
  %v155 = vmul.f32 %v153, %v149
  %v156 = vmul.f32 %v153, %v150
  %v157 = vadd.f32 %v155, 0.0
  %v158 = vadd.f32 %v156, 0.0
  %159 = vset.pattern.permute.xlu0 5
  %160 = vperm.xlu0 %159, %v14
  %v161 = vpop.permute.xlu0 %160
  %v163 = vmul.f32 %v161, %v147
  %v164 = vmul.f32 %v161, %v148
  %v165 = vadd.f32 %v163, 0.0
  %v166 = vadd.f32 %v164, 0.0
  %v167 = vmul.f32 %v40, -0.04356164
  %v168 = vmul.f32 %v41, -0.04356164
  %v169 = vmul.f32 %v63, 1.029442
  %v170 = vmul.f32 %v64, 1.029442
  %v171 = vadd.f32 %v167, %v169
  %v172 = vadd.f32 %v168, %v170
  %v173 = vmul.f32 %v86, 0.036196496
  %v174 = vmul.f32 %v87, 0.036196496
  %v175 = vadd.f32 %v171, %v173
  %v176 = vadd.f32 %v172, %v174
  %v177 = vmul.f32 %v109, -0.05127991
  %v178 = vmul.f32 %v110, -0.05127991
  %v179 = vadd.f32 %v175, %v177
  %v180 = vadd.f32 %v176, %v178
  %v181 = vmul.f32 %v127, %v63
  %v182 = vmul.f32 %v127, %v64
  %v183 = vsub.f32 %v181, %v56
  %v184 = vsub.f32 %v182, %v60
  %v185 = vmul.f32 %v135, %v179
  %v186 = vmul.f32 %v135, %v180
  %v187 = vadd.f32 %v183, %v185
  %v188 = vadd.f32 %v184, %v186
  %v189 = vmul.f32 %v14, -0.10178403
  %191 = vset.pattern.permute.xlu0 3
  %192 = vperm.xlu0 %191, %v189
  %v193 = vpop.permute.xlu0 %192
  %v195 = vadd.f32 %v187, %v193
  %v196 = vadd.f32 %v188, %v193
  %v197 = vmul.f32 %v195, %v195
  %v198 = vmul.f32 %v196, %v196
  %v199 = vmul.f32 %v153, %v197
  %v200 = vmul.f32 %v153, %v198
  %v201 = vadd.f32 %v157, %v199
  %v202 = vadd.f32 %v158, %v200
  %v203 = vmul.f32 %v161, %v195
  %v204 = vmul.f32 %v161, %v196
  %v205 = vadd.f32 %v203, 0.0
  %v206 = vadd.f32 %v204, 0.0
  %v207 = vmul.f32 %v40, 0.0830814
  %v208 = vmul.f32 %v41, 0.0830814
  %v209 = vmul.f32 %v63, -0.09455126
  %v210 = vmul.f32 %v64, -0.09455126
  %v211 = vadd.f32 %v207, %v209
  %v212 = vadd.f32 %v208, %v210
  %v213 = vmul.f32 %v86, 0.9355533
  %v214 = vmul.f32 %v87, 0.9355533
  %v215 = vadd.f32 %v211, %v213
  %v216 = vadd.f32 %v212, %v214
  %v217 = vmul.f32 %v109, 0.0066803456
  %v218 = vmul.f32 %v110, 0.0066803456
  %v219 = vadd.f32 %v215, %v217
  %v220 = vadd.f32 %v216, %v218
  %v221 = vmul.f32 %v127, %v86
  %v222 = vmul.f32 %v127, %v87
  %v223 = vsub.f32 %v221, %v79
  %v224 = vsub.f32 %v222, %v83
  %v225 = vmul.f32 %v135, %v219
  %v226 = vmul.f32 %v135, %v220
  %v227 = vadd.f32 %v223, %v225
  %v228 = vadd.f32 %v224, %v226
  %v229 = vmul.f32 %v14, 0.010277212
  %231 = vset.pattern.permute.xlu0 3
  %232 = vperm.xlu0 %231, %v229
  %v233 = vpop.permute.xlu0 %232
  %v235 = vadd.f32 %v227, %v233
  %v236 = vadd.f32 %v228, %v233
  %v237 = vmul.f32 %v235, %v235
  %v238 = vmul.f32 %v236, %v236
  %v239 = vmul.f32 %v153, %v237
  %v240 = vmul.f32 %v153, %v238
  %v241 = vadd.f32 %v201, %v239
  %v242 = vadd.f32 %v202, %v240
  %v243 = vmul.f32 %v161, %v235
  %v244 = vmul.f32 %v161, %v236
  %v245 = vadd.f32 %v243, 0.0
  %v246 = vadd.f32 %v244, 0.0
  %v247 = vmul.f32 %v40, -0.057651963
  %v248 = vmul.f32 %v41, -0.057651963
  %v249 = vmul.f32 %v63, 0.011964815
  %v250 = vmul.f32 %v64, 0.011964815
  %v251 = vadd.f32 %v247, %v249
  %v252 = vadd.f32 %v248, %v250
  %v253 = vmul.f32 %v86, 0.08724037
  %v254 = vmul.f32 %v87, 0.08724037
  %v255 = vadd.f32 %v251, %v253
  %v256 = vadd.f32 %v252, %v254
  %v257 = vmul.f32 %v109, 1.0252509
  %v258 = vmul.f32 %v110, 1.0252509
  %v259 = vadd.f32 %v255, %v257
  %v260 = vadd.f32 %v256, %v258
  %v261 = vmul.f32 %v127, %v109
  %v262 = vmul.f32 %v127, %v110
  %v263 = vsub.f32 %v261, %v102
  %v264 = vsub.f32 %v262, %v106
  %v265 = vmul.f32 %v135, %v259
  %v266 = vmul.f32 %v135, %v260
  %v267 = vadd.f32 %v263, %v265
  %v268 = vadd.f32 %v264, %v266
  %v269 = vmul.f32 %v14, -0.01767751
  %271 = vset.pattern.permute.xlu0 3
  %272 = vperm.xlu0 %271, %v269
  %v273 = vpop.permute.xlu0 %272
  %v275 = vadd.f32 %v267, %v273
  %v276 = vadd.f32 %v268, %v273
  %v277 = vmul.f32 %v275, %v275
  %v278 = vmul.f32 %v276, %v276
  %v279 = vmul.f32 %v153, %v277
  %v280 = vmul.f32 %v153, %v278
  %v281 = vadd.f32 %v241, %v279
  %v282 = vadd.f32 %v242, %v280
  %v283 = vmul.f32 %v161, %v275
  %v284 = vmul.f32 %v161, %v276
  %v285 = vadd.f32 %v283, 0.0
  %v286 = vadd.f32 %v284, 0.0
  %s287 = scalar_lea.vmem %s0, 8
  %v288 = vld [vmem:[%s287] sm:$0xff]
  %s289 = smul.u32 1, 2
  %s290 = smul.addr %s289, 4
  %s291 = scalar_lea.vmem %s2, %s290
  %v292 = vld [vmem:[%s291] sm:$0xff]
  %v293 = vunpack.c.l.bf16 %v292
  %v294 = vunpack.c.h.bf16 %v292
  %296 = vset.pattern.permute.xlu0 0
  %297 = vperm.xlu0 %296, %v288
  %v298 = vpop.permute.xlu0 %297
  %v300 = vmul.f32 %v293, %v298
  %v301 = vmul.f32 %v294, %v298
  %v302 = vadd.f32 %v33, %v300
  %v303 = vadd.f32 %v37, %v301
  %s304 = sadd.s32 %s289, 32
  %s305 = smul.addr %s304, 4
  %s306 = scalar_lea.vmem %s2, %s305
  %v307 = vld [vmem:[%s306] sm:$0xff]
  %v308 = vunpack.c.l.bf16 %v307
  %v309 = vunpack.c.h.bf16 %v307
  %v310 = vmul.f32 %v308, %v298
  %v311 = vmul.f32 %v309, %v298
  %v312 = vadd.f32 %v56, %v310
  %v313 = vadd.f32 %v60, %v311
  %s314 = sadd.s32 %s289, 64
  %s315 = smul.addr %s314, 4
  %s316 = scalar_lea.vmem %s2, %s315
  %v317 = vld [vmem:[%s316] sm:$0xff]
  %v318 = vunpack.c.l.bf16 %v317
  %v319 = vunpack.c.h.bf16 %v317
  %v320 = vmul.f32 %v318, %v298
  %v321 = vmul.f32 %v319, %v298
  %v322 = vadd.f32 %v79, %v320
  %v323 = vadd.f32 %v83, %v321
  %s324 = sadd.s32 %s289, 96
  %s325 = smul.addr %s324, 4
  %s326 = scalar_lea.vmem %s2, %s325
  %v327 = vld [vmem:[%s326] sm:$0xff]
  %v328 = vunpack.c.l.bf16 %v327
  %v329 = vunpack.c.h.bf16 %v327
  %v330 = vmul.f32 %v328, %v298
  %v331 = vmul.f32 %v329, %v298
  %v332 = vadd.f32 %v102, %v330
  %v333 = vadd.f32 %v106, %v331
  %v334 = vmul.f32 %v302, 1.0502007
  %v335 = vmul.f32 %v303, 1.0502007
  %v336 = vmul.f32 %v312, -0.04531686
  %v337 = vmul.f32 %v313, -0.04531686
  %v338 = vadd.f32 %v334, %v336
  %v339 = vadd.f32 %v335, %v337
  %v340 = vmul.f32 %v322, -0.037408613
  %v341 = vmul.f32 %v323, -0.037408613
  %v342 = vadd.f32 %v338, %v340
  %v343 = vadd.f32 %v339, %v341
  %v344 = vmul.f32 %v332, -0.058568347
  %v345 = vmul.f32 %v333, -0.058568347
  %v346 = vadd.f32 %v342, %v344
  %v347 = vadd.f32 %v343, %v345
  %348 = vset.pattern.permute.xlu0 1
  %349 = vperm.xlu0 %348, %v288
  %v350 = vpop.permute.xlu0 %349
  %v352 = vmul.f32 %v350, %v302
  %v353 = vmul.f32 %v350, %v303
  %v354 = vsub.f32 %v352, %v33
  %v355 = vsub.f32 %v353, %v37
  %356 = vset.pattern.permute.xlu0 2
  %357 = vperm.xlu0 %356, %v288
  %v358 = vpop.permute.xlu0 %357
  %v360 = vmul.f32 %v358, %v346
  %v361 = vmul.f32 %v358, %v347
  %v362 = vadd.f32 %v354, %v360
  %v363 = vadd.f32 %v355, %v361
  %v364 = vmul.f32 %v288, -0.12212279
  %366 = vset.pattern.permute.xlu0 3
  %367 = vperm.xlu0 %366, %v364
  %v368 = vpop.permute.xlu0 %367
  %v370 = vadd.f32 %v362, %v368
  %v371 = vadd.f32 %v363, %v368
  %v372 = vmul.f32 %v370, %v370
  %v373 = vmul.f32 %v371, %v371
  %374 = vset.pattern.permute.xlu0 4
  %375 = vperm.xlu0 %374, %v288
  %v376 = vpop.permute.xlu0 %375
  %v378 = vmul.f32 %v376, %v372
  %v379 = vmul.f32 %v376, %v373
  %v380 = vadd.f32 %v281, %v378
  %v381 = vadd.f32 %v282, %v379
  %382 = vset.pattern.permute.xlu0 5
  %383 = vperm.xlu0 %382, %v288
  %v384 = vpop.permute.xlu0 %383
  %v386 = vmul.f32 %v384, %v370
  %v387 = vmul.f32 %v384, %v371
  %v388 = vadd.f32 %v165, %v386
  %v389 = vadd.f32 %v166, %v387
  %v390 = vmul.f32 %v302, -0.04356164
  %v391 = vmul.f32 %v303, -0.04356164
  %v392 = vmul.f32 %v312, 1.029442
  %v393 = vmul.f32 %v313, 1.029442
  %v394 = vadd.f32 %v390, %v392
  %v395 = vadd.f32 %v391, %v393
  %v396 = vmul.f32 %v322, 0.036196496
  %v397 = vmul.f32 %v323, 0.036196496
  %v398 = vadd.f32 %v394, %v396
  %v399 = vadd.f32 %v395, %v397
  %v400 = vmul.f32 %v332, -0.05127991
  %v401 = vmul.f32 %v333, -0.05127991
  %v402 = vadd.f32 %v398, %v400
  %v403 = vadd.f32 %v399, %v401
  %v404 = vmul.f32 %v350, %v312
  %v405 = vmul.f32 %v350, %v313
  %v406 = vsub.f32 %v404, %v56
  %v407 = vsub.f32 %v405, %v60
  %v408 = vmul.f32 %v358, %v402
  %v409 = vmul.f32 %v358, %v403
  %v410 = vadd.f32 %v406, %v408
  %v411 = vadd.f32 %v407, %v409
  %v412 = vmul.f32 %v288, -0.10178403
  %414 = vset.pattern.permute.xlu0 3
  %415 = vperm.xlu0 %414, %v412
  %v416 = vpop.permute.xlu0 %415
  %v418 = vadd.f32 %v410, %v416
  %v419 = vadd.f32 %v411, %v416
  %v420 = vmul.f32 %v418, %v418
  %v421 = vmul.f32 %v419, %v419
  %v422 = vmul.f32 %v376, %v420
  %v423 = vmul.f32 %v376, %v421
  %v424 = vadd.f32 %v380, %v422
  %v425 = vadd.f32 %v381, %v423
  %v426 = vmul.f32 %v384, %v418
  %v427 = vmul.f32 %v384, %v419
  %v428 = vadd.f32 %v205, %v426
  %v429 = vadd.f32 %v206, %v427
  %v430 = vmul.f32 %v302, 0.0830814
  %v431 = vmul.f32 %v303, 0.0830814
  %v432 = vmul.f32 %v312, -0.09455126
  %v433 = vmul.f32 %v313, -0.09455126
  %v434 = vadd.f32 %v430, %v432
  %v435 = vadd.f32 %v431, %v433
  %v436 = vmul.f32 %v322, 0.9355533
  %v437 = vmul.f32 %v323, 0.9355533
  %v438 = vadd.f32 %v434, %v436
  %v439 = vadd.f32 %v435, %v437
  %v440 = vmul.f32 %v332, 0.0066803456
  %v441 = vmul.f32 %v333, 0.0066803456
  %v442 = vadd.f32 %v438, %v440
  %v443 = vadd.f32 %v439, %v441
  %v444 = vmul.f32 %v350, %v322
  %v445 = vmul.f32 %v350, %v323
  %v446 = vsub.f32 %v444, %v79
  %v447 = vsub.f32 %v445, %v83
  %v448 = vmul.f32 %v358, %v442
  %v449 = vmul.f32 %v358, %v443
  %v450 = vadd.f32 %v446, %v448
  %v451 = vadd.f32 %v447, %v449
  %v452 = vmul.f32 %v288, 0.010277212
  %454 = vset.pattern.permute.xlu0 3
  %455 = vperm.xlu0 %454, %v452
  %v456 = vpop.permute.xlu0 %455
  %v458 = vadd.f32 %v450, %v456
  %v459 = vadd.f32 %v451, %v456
  %v460 = vmul.f32 %v458, %v458
  %v461 = vmul.f32 %v459, %v459
  %v462 = vmul.f32 %v376, %v460
  %v463 = vmul.f32 %v376, %v461
  %v464 = vadd.f32 %v424, %v462
  %v465 = vadd.f32 %v425, %v463
  %v466 = vmul.f32 %v384, %v458
  %v467 = vmul.f32 %v384, %v459
  %v468 = vadd.f32 %v245, %v466
  %v469 = vadd.f32 %v246, %v467
  %v470 = vmul.f32 %v302, -0.057651963
  %v471 = vmul.f32 %v303, -0.057651963
  %v472 = vmul.f32 %v312, 0.011964815
  %v473 = vmul.f32 %v313, 0.011964815
  %v474 = vadd.f32 %v470, %v472
  %v475 = vadd.f32 %v471, %v473
  %v476 = vmul.f32 %v322, 0.08724037
  %v477 = vmul.f32 %v323, 0.08724037
  %v478 = vadd.f32 %v474, %v476
  %v479 = vadd.f32 %v475, %v477
  %v480 = vmul.f32 %v332, 1.0252509
  %v481 = vmul.f32 %v333, 1.0252509
  %v482 = vadd.f32 %v478, %v480
  %v483 = vadd.f32 %v479, %v481
  %v484 = vmul.f32 %v350, %v332
  %v485 = vmul.f32 %v350, %v333
  %v486 = vsub.f32 %v484, %v102
  %v487 = vsub.f32 %v485, %v106
  %v488 = vmul.f32 %v358, %v482
  %v489 = vmul.f32 %v358, %v483
  %v490 = vadd.f32 %v486, %v488
  %v491 = vadd.f32 %v487, %v489
  %v492 = vmul.f32 %v288, -0.01767751
  %494 = vset.pattern.permute.xlu0 3
  %495 = vperm.xlu0 %494, %v492
  %v496 = vpop.permute.xlu0 %495
  %v498 = vadd.f32 %v490, %v496
  %v499 = vadd.f32 %v491, %v496
  %v500 = vmul.f32 %v498, %v498
  %v501 = vmul.f32 %v499, %v499
  %v502 = vmul.f32 %v376, %v500
  %v503 = vmul.f32 %v376, %v501
  %v504 = vadd.f32 %v464, %v502
  %v505 = vadd.f32 %v465, %v503
  %v506 = vmul.f32 %v384, %v498
  %v507 = vmul.f32 %v384, %v499
  %v508 = vadd.f32 %v285, %v506
  %v509 = vadd.f32 %v286, %v507
  %s510 = scalar_lea.vmem %s0, 16
  %v511 = vld [vmem:[%s510] sm:$0xff]
  %s512 = smul.u32 2, 2
  %s513 = smul.addr %s512, 4
  %s514 = scalar_lea.vmem %s2, %s513
  %v515 = vld [vmem:[%s514] sm:$0xff]
  %v516 = vunpack.c.l.bf16 %v515
  %v517 = vunpack.c.h.bf16 %v515
  %519 = vset.pattern.permute.xlu0 0
  %520 = vperm.xlu0 %519, %v511
  %v521 = vpop.permute.xlu0 %520
  %v523 = vmul.f32 %v516, %v521
  %v524 = vmul.f32 %v517, %v521
  %v525 = vadd.f32 %v33, %v523
  %v526 = vadd.f32 %v37, %v524
  %s527 = sadd.s32 %s512, 32
  %s528 = smul.addr %s527, 4
  %s529 = scalar_lea.vmem %s2, %s528
  %v530 = vld [vmem:[%s529] sm:$0xff]
  %v531 = vunpack.c.l.bf16 %v530
  %v532 = vunpack.c.h.bf16 %v530
  %v533 = vmul.f32 %v531, %v521
  %v534 = vmul.f32 %v532, %v521
  %v535 = vadd.f32 %v56, %v533
  %v536 = vadd.f32 %v60, %v534
  %s537 = sadd.s32 %s512, 64
  %s538 = smul.addr %s537, 4
  %s539 = scalar_lea.vmem %s2, %s538
  %v540 = vld [vmem:[%s539] sm:$0xff]
  %v541 = vunpack.c.l.bf16 %v540
  %v542 = vunpack.c.h.bf16 %v540
  %v543 = vmul.f32 %v541, %v521
  %v544 = vmul.f32 %v542, %v521
  %v545 = vadd.f32 %v79, %v543
  %v546 = vadd.f32 %v83, %v544
  %s547 = sadd.s32 %s512, 96
  %s548 = smul.addr %s547, 4
  %s549 = scalar_lea.vmem %s2, %s548
  %v550 = vld [vmem:[%s549] sm:$0xff]
  %v551 = vunpack.c.l.bf16 %v550
  %v552 = vunpack.c.h.bf16 %v550
  %v553 = vmul.f32 %v551, %v521
  %v554 = vmul.f32 %v552, %v521
  %v555 = vadd.f32 %v102, %v553
  %v556 = vadd.f32 %v106, %v554
  %v557 = vmul.f32 %v525, 1.0502007
  %v558 = vmul.f32 %v526, 1.0502007
  %v559 = vmul.f32 %v535, -0.04531686
  %v560 = vmul.f32 %v536, -0.04531686
  %v561 = vadd.f32 %v557, %v559
  %v562 = vadd.f32 %v558, %v560
  %v563 = vmul.f32 %v545, -0.037408613
  %v564 = vmul.f32 %v546, -0.037408613
  %v565 = vadd.f32 %v561, %v563
  %v566 = vadd.f32 %v562, %v564
  %v567 = vmul.f32 %v555, -0.058568347
  %v568 = vmul.f32 %v556, -0.058568347
  %v569 = vadd.f32 %v565, %v567
  %v570 = vadd.f32 %v566, %v568
  %571 = vset.pattern.permute.xlu0 1
  %572 = vperm.xlu0 %571, %v511
  %v573 = vpop.permute.xlu0 %572
  %v575 = vmul.f32 %v573, %v525
  %v576 = vmul.f32 %v573, %v526
  %v577 = vsub.f32 %v575, %v33
  %v578 = vsub.f32 %v576, %v37
  %579 = vset.pattern.permute.xlu0 2
  %580 = vperm.xlu0 %579, %v511
  %v581 = vpop.permute.xlu0 %580
  %v583 = vmul.f32 %v581, %v569
  %v584 = vmul.f32 %v581, %v570
  %v585 = vadd.f32 %v577, %v583
  %v586 = vadd.f32 %v578, %v584
  %v587 = vmul.f32 %v511, -0.12212279
  %589 = vset.pattern.permute.xlu0 3
  %590 = vperm.xlu0 %589, %v587
  %v591 = vpop.permute.xlu0 %590
  %v593 = vadd.f32 %v585, %v591
  %v594 = vadd.f32 %v586, %v591
  %v595 = vmul.f32 %v593, %v593
  %v596 = vmul.f32 %v594, %v594
  %597 = vset.pattern.permute.xlu0 4
  %598 = vperm.xlu0 %597, %v511
  %v599 = vpop.permute.xlu0 %598
  %v601 = vmul.f32 %v599, %v595
  %v602 = vmul.f32 %v599, %v596
  %v603 = vadd.f32 %v504, %v601
  %v604 = vadd.f32 %v505, %v602
  %605 = vset.pattern.permute.xlu0 5
  %606 = vperm.xlu0 %605, %v511
  %v607 = vpop.permute.xlu0 %606
  %v609 = vmul.f32 %v607, %v593
  %v610 = vmul.f32 %v607, %v594
  %v611 = vadd.f32 %v388, %v609
  %v612 = vadd.f32 %v389, %v610
  %v613 = vmul.f32 %v525, -0.04356164
  %v614 = vmul.f32 %v526, -0.04356164
  %v615 = vmul.f32 %v535, 1.029442
  %v616 = vmul.f32 %v536, 1.029442
  %v617 = vadd.f32 %v613, %v615
  %v618 = vadd.f32 %v614, %v616
  %v619 = vmul.f32 %v545, 0.036196496
  %v620 = vmul.f32 %v546, 0.036196496
  %v621 = vadd.f32 %v617, %v619
  %v622 = vadd.f32 %v618, %v620
  %v623 = vmul.f32 %v555, -0.05127991
  %v624 = vmul.f32 %v556, -0.05127991
  %v625 = vadd.f32 %v621, %v623
  %v626 = vadd.f32 %v622, %v624
  %v627 = vmul.f32 %v573, %v535
  %v628 = vmul.f32 %v573, %v536
  %v629 = vsub.f32 %v627, %v56
  %v630 = vsub.f32 %v628, %v60
  %v631 = vmul.f32 %v581, %v625
  %v632 = vmul.f32 %v581, %v626
  %v633 = vadd.f32 %v629, %v631
  %v634 = vadd.f32 %v630, %v632
  %v635 = vmul.f32 %v511, -0.10178403
  %637 = vset.pattern.permute.xlu0 3
  %638 = vperm.xlu0 %637, %v635
  %v639 = vpop.permute.xlu0 %638
  %v641 = vadd.f32 %v633, %v639
  %v642 = vadd.f32 %v634, %v639
  %v643 = vmul.f32 %v641, %v641
  %v644 = vmul.f32 %v642, %v642
  %v645 = vmul.f32 %v599, %v643
  %v646 = vmul.f32 %v599, %v644
  %v647 = vadd.f32 %v603, %v645
  %v648 = vadd.f32 %v604, %v646
  %v649 = vmul.f32 %v607, %v641
  %v650 = vmul.f32 %v607, %v642
  %v651 = vadd.f32 %v428, %v649
  %v652 = vadd.f32 %v429, %v650
  %v653 = vmul.f32 %v525, 0.0830814
  %v654 = vmul.f32 %v526, 0.0830814
  %v655 = vmul.f32 %v535, -0.09455126
  %v656 = vmul.f32 %v536, -0.09455126
  %v657 = vadd.f32 %v653, %v655
  %v658 = vadd.f32 %v654, %v656
  %v659 = vmul.f32 %v545, 0.9355533
  %v660 = vmul.f32 %v546, 0.9355533
  %v661 = vadd.f32 %v657, %v659
  %v662 = vadd.f32 %v658, %v660
  %v663 = vmul.f32 %v555, 0.0066803456
  %v664 = vmul.f32 %v556, 0.0066803456
  %v665 = vadd.f32 %v661, %v663
  %v666 = vadd.f32 %v662, %v664
  %v667 = vmul.f32 %v573, %v545
  %v668 = vmul.f32 %v573, %v546
  %v669 = vsub.f32 %v667, %v79
  %v670 = vsub.f32 %v668, %v83
  %v671 = vmul.f32 %v581, %v665
  %v672 = vmul.f32 %v581, %v666
  %v673 = vadd.f32 %v669, %v671
  %v674 = vadd.f32 %v670, %v672
  %v675 = vmul.f32 %v511, 0.010277212
  %677 = vset.pattern.permute.xlu0 3
  %678 = vperm.xlu0 %677, %v675
  %v679 = vpop.permute.xlu0 %678
  %v681 = vadd.f32 %v673, %v679
  %v682 = vadd.f32 %v674, %v679
  %v683 = vmul.f32 %v681, %v681
  %v684 = vmul.f32 %v682, %v682
  %v685 = vmul.f32 %v599, %v683
  %v686 = vmul.f32 %v599, %v684
  %v687 = vadd.f32 %v647, %v685
  %v688 = vadd.f32 %v648, %v686
  %v689 = vmul.f32 %v607, %v681
  %v690 = vmul.f32 %v607, %v682
  %v691 = vadd.f32 %v468, %v689
  %v692 = vadd.f32 %v469, %v690
  %v693 = vmul.f32 %v525, -0.057651963
  %v694 = vmul.f32 %v526, -0.057651963
  %v695 = vmul.f32 %v535, 0.011964815
  %v696 = vmul.f32 %v536, 0.011964815
  %v697 = vadd.f32 %v693, %v695
  %v698 = vadd.f32 %v694, %v696
  %v699 = vmul.f32 %v545, 0.08724037
  %v700 = vmul.f32 %v546, 0.08724037
  %v701 = vadd.f32 %v697, %v699
  %v702 = vadd.f32 %v698, %v700
  %v703 = vmul.f32 %v555, 1.0252509
  %v704 = vmul.f32 %v556, 1.0252509
  %v705 = vadd.f32 %v701, %v703
  %v706 = vadd.f32 %v702, %v704
  %v707 = vmul.f32 %v573, %v555
  %v708 = vmul.f32 %v573, %v556
  %v709 = vsub.f32 %v707, %v102
  %v710 = vsub.f32 %v708, %v106
  %v711 = vmul.f32 %v581, %v705
  %v712 = vmul.f32 %v581, %v706
  %v713 = vadd.f32 %v709, %v711
  %v714 = vadd.f32 %v710, %v712
  %v715 = vmul.f32 %v511, -0.01767751
  %717 = vset.pattern.permute.xlu0 3
  %718 = vperm.xlu0 %717, %v715
  %v719 = vpop.permute.xlu0 %718
  %v721 = vadd.f32 %v713, %v719
  %v722 = vadd.f32 %v714, %v719
  %v723 = vmul.f32 %v721, %v721
  %v724 = vmul.f32 %v722, %v722
  %v725 = vmul.f32 %v599, %v723
  %v726 = vmul.f32 %v599, %v724
  %v727 = vadd.f32 %v687, %v725
  %v728 = vadd.f32 %v688, %v726
  %v729 = vmul.f32 %v607, %v721
  %v730 = vmul.f32 %v607, %v722
  %v731 = vadd.f32 %v508, %v729
  %v732 = vadd.f32 %v509, %v730
  %s733 = scalar_lea.vmem %s0, 24
  %v734 = vld [vmem:[%s733] sm:$0xff]
  %s735 = smul.u32 3, 2
  %s736 = smul.addr %s735, 4
  %s737 = scalar_lea.vmem %s2, %s736
  %v738 = vld [vmem:[%s737] sm:$0xff]
  %v739 = vunpack.c.l.bf16 %v738
  %v740 = vunpack.c.h.bf16 %v738
  %742 = vset.pattern.permute.xlu0 0
  %743 = vperm.xlu0 %742, %v734
  %v744 = vpop.permute.xlu0 %743
  %v746 = vmul.f32 %v739, %v744
  %v747 = vmul.f32 %v740, %v744
  %v748 = vadd.f32 %v33, %v746
  %v749 = vadd.f32 %v37, %v747
  %s750 = sadd.s32 %s735, 32
  %s751 = smul.addr %s750, 4
  %s752 = scalar_lea.vmem %s2, %s751
  %v753 = vld [vmem:[%s752] sm:$0xff]
  %v754 = vunpack.c.l.bf16 %v753
  %v755 = vunpack.c.h.bf16 %v753
  %v756 = vmul.f32 %v754, %v744
  %v757 = vmul.f32 %v755, %v744
  %v758 = vadd.f32 %v56, %v756
  %v759 = vadd.f32 %v60, %v757
  %s760 = sadd.s32 %s735, 64
  %s761 = smul.addr %s760, 4
  %s762 = scalar_lea.vmem %s2, %s761
  %v763 = vld [vmem:[%s762] sm:$0xff]
  %v764 = vunpack.c.l.bf16 %v763
  %v765 = vunpack.c.h.bf16 %v763
  %v766 = vmul.f32 %v764, %v744
  %v767 = vmul.f32 %v765, %v744
  %v768 = vadd.f32 %v79, %v766
  %v769 = vadd.f32 %v83, %v767
  %s770 = sadd.s32 %s735, 96
  %s771 = smul.addr %s770, 4
  %s772 = scalar_lea.vmem %s2, %s771
  %v773 = vld [vmem:[%s772] sm:$0xff]
  %v774 = vunpack.c.l.bf16 %v773
  %v775 = vunpack.c.h.bf16 %v773
  %v776 = vmul.f32 %v774, %v744
  %v777 = vmul.f32 %v775, %v744
  %v778 = vadd.f32 %v102, %v776
  %v779 = vadd.f32 %v106, %v777
  %v780 = vmul.f32 %v748, 1.0502007
  %v781 = vmul.f32 %v749, 1.0502007
  %v782 = vmul.f32 %v758, -0.04531686
  %v783 = vmul.f32 %v759, -0.04531686
  %v784 = vadd.f32 %v780, %v782
  %v785 = vadd.f32 %v781, %v783
  %v786 = vmul.f32 %v768, -0.037408613
  %v787 = vmul.f32 %v769, -0.037408613
  %v788 = vadd.f32 %v784, %v786
  %v789 = vadd.f32 %v785, %v787
  %v790 = vmul.f32 %v778, -0.058568347
  %v791 = vmul.f32 %v779, -0.058568347
  %v792 = vadd.f32 %v788, %v790
  %v793 = vadd.f32 %v789, %v791
  %794 = vset.pattern.permute.xlu0 1
  %795 = vperm.xlu0 %794, %v734
  %v796 = vpop.permute.xlu0 %795
  %v798 = vmul.f32 %v796, %v748
  %v799 = vmul.f32 %v796, %v749
  %v800 = vsub.f32 %v798, %v33
  %v801 = vsub.f32 %v799, %v37
  %802 = vset.pattern.permute.xlu0 2
  %803 = vperm.xlu0 %802, %v734
  %v804 = vpop.permute.xlu0 %803
  %v806 = vmul.f32 %v804, %v792
  %v807 = vmul.f32 %v804, %v793
  %v808 = vadd.f32 %v800, %v806
  %v809 = vadd.f32 %v801, %v807
  %v810 = vmul.f32 %v734, -0.12212279
  %812 = vset.pattern.permute.xlu0 3
  %813 = vperm.xlu0 %812, %v810
  %v814 = vpop.permute.xlu0 %813
  %v816 = vadd.f32 %v808, %v814
  %v817 = vadd.f32 %v809, %v814
  %v818 = vmul.f32 %v816, %v816
  %v819 = vmul.f32 %v817, %v817
  %820 = vset.pattern.permute.xlu0 4
  %821 = vperm.xlu0 %820, %v734
  %v822 = vpop.permute.xlu0 %821
  %v824 = vmul.f32 %v822, %v818
  %v825 = vmul.f32 %v822, %v819
  %v826 = vadd.f32 %v727, %v824
  %v827 = vadd.f32 %v728, %v825
  %828 = vset.pattern.permute.xlu0 5
  %829 = vperm.xlu0 %828, %v734
  %v830 = vpop.permute.xlu0 %829
  %v832 = vmul.f32 %v830, %v816
  %v833 = vmul.f32 %v830, %v817
  %v834 = vadd.f32 %v611, %v832
  %v835 = vadd.f32 %v612, %v833
  %v836 = vmul.f32 %v748, -0.04356164
  %v837 = vmul.f32 %v749, -0.04356164
  %v838 = vmul.f32 %v758, 1.029442
  %v839 = vmul.f32 %v759, 1.029442
  %v840 = vadd.f32 %v836, %v838
  %v841 = vadd.f32 %v837, %v839
  %v842 = vmul.f32 %v768, 0.036196496
  %v843 = vmul.f32 %v769, 0.036196496
  %v844 = vadd.f32 %v840, %v842
  %v845 = vadd.f32 %v841, %v843
  %v846 = vmul.f32 %v778, -0.05127991
  %v847 = vmul.f32 %v779, -0.05127991
  %v848 = vadd.f32 %v844, %v846
  %v849 = vadd.f32 %v845, %v847
  %v850 = vmul.f32 %v796, %v758
  %v851 = vmul.f32 %v796, %v759
  %v852 = vsub.f32 %v850, %v56
  %v853 = vsub.f32 %v851, %v60
  %v854 = vmul.f32 %v804, %v848
  %v855 = vmul.f32 %v804, %v849
  %v856 = vadd.f32 %v852, %v854
  %v857 = vadd.f32 %v853, %v855
  %v858 = vmul.f32 %v734, -0.10178403
  %860 = vset.pattern.permute.xlu0 3
  %861 = vperm.xlu0 %860, %v858
  %v862 = vpop.permute.xlu0 %861
  %v864 = vadd.f32 %v856, %v862
  %v865 = vadd.f32 %v857, %v862
  %v866 = vmul.f32 %v864, %v864
  %v867 = vmul.f32 %v865, %v865
  %v868 = vmul.f32 %v822, %v866
  %v869 = vmul.f32 %v822, %v867
  %v870 = vadd.f32 %v826, %v868
  %v871 = vadd.f32 %v827, %v869
  %v872 = vmul.f32 %v830, %v864
  %v873 = vmul.f32 %v830, %v865
  %v874 = vadd.f32 %v651, %v872
  %v875 = vadd.f32 %v652, %v873
  %v876 = vmul.f32 %v748, 0.0830814
  %v877 = vmul.f32 %v749, 0.0830814
  %v878 = vmul.f32 %v758, -0.09455126
  %v879 = vmul.f32 %v759, -0.09455126
  %v880 = vadd.f32 %v876, %v878
  %v881 = vadd.f32 %v877, %v879
  %v882 = vmul.f32 %v768, 0.9355533
  %v883 = vmul.f32 %v769, 0.9355533
  %v884 = vadd.f32 %v880, %v882
  %v885 = vadd.f32 %v881, %v883
  %v886 = vmul.f32 %v778, 0.0066803456
  %v887 = vmul.f32 %v779, 0.0066803456
  %v888 = vadd.f32 %v884, %v886
  %v889 = vadd.f32 %v885, %v887
  %v890 = vmul.f32 %v796, %v768
  %v891 = vmul.f32 %v796, %v769
  %v892 = vsub.f32 %v890, %v79
  %v893 = vsub.f32 %v891, %v83
  %v894 = vmul.f32 %v804, %v888
  %v895 = vmul.f32 %v804, %v889
  %v896 = vadd.f32 %v892, %v894
  %v897 = vadd.f32 %v893, %v895
  %v898 = vmul.f32 %v734, 0.010277212
  %900 = vset.pattern.permute.xlu0 3
  %901 = vperm.xlu0 %900, %v898
  %v902 = vpop.permute.xlu0 %901
  %v904 = vadd.f32 %v896, %v902
  %v905 = vadd.f32 %v897, %v902
  %v906 = vmul.f32 %v904, %v904
  %v907 = vmul.f32 %v905, %v905
  %v908 = vmul.f32 %v822, %v906
  %v909 = vmul.f32 %v822, %v907
  %v910 = vadd.f32 %v870, %v908
  %v911 = vadd.f32 %v871, %v909
  %v912 = vmul.f32 %v830, %v904
  %v913 = vmul.f32 %v830, %v905
  %v914 = vadd.f32 %v691, %v912
  %v915 = vadd.f32 %v692, %v913
  %v916 = vmul.f32 %v748, -0.057651963
  %v917 = vmul.f32 %v749, -0.057651963
  %v918 = vmul.f32 %v758, 0.011964815
  %v919 = vmul.f32 %v759, 0.011964815
  %v920 = vadd.f32 %v916, %v918
  %v921 = vadd.f32 %v917, %v919
  %v922 = vmul.f32 %v768, 0.08724037
  %v923 = vmul.f32 %v769, 0.08724037
  %v924 = vadd.f32 %v920, %v922
  %v925 = vadd.f32 %v921, %v923
  %v926 = vmul.f32 %v778, 1.0252509
  %v927 = vmul.f32 %v779, 1.0252509
  %v928 = vadd.f32 %v924, %v926
  %v929 = vadd.f32 %v925, %v927
  %v930 = vmul.f32 %v796, %v778
  %v931 = vmul.f32 %v796, %v779
  %v932 = vsub.f32 %v930, %v102
  %v933 = vsub.f32 %v931, %v106
  %v934 = vmul.f32 %v804, %v928
  %v935 = vmul.f32 %v804, %v929
  %v936 = vadd.f32 %v932, %v934
  %v937 = vadd.f32 %v933, %v935
  %v938 = vmul.f32 %v734, -0.01767751
  %940 = vset.pattern.permute.xlu0 3
  %941 = vperm.xlu0 %940, %v938
  %v942 = vpop.permute.xlu0 %941
  %v944 = vadd.f32 %v936, %v942
  %v945 = vadd.f32 %v937, %v942
  %v946 = vmul.f32 %v944, %v944
  %v947 = vmul.f32 %v945, %v945
  %v948 = vmul.f32 %v822, %v946
  %v949 = vmul.f32 %v822, %v947
  %v950 = vadd.f32 %v910, %v948
  %v951 = vadd.f32 %v911, %v949
  %v952 = vmul.f32 %v830, %v944
  %v953 = vmul.f32 %v830, %v945
  %v954 = vadd.f32 %v731, %v952
  %v955 = vadd.f32 %v732, %v953
  %s956 = scalar_lea.vmem %s0, 32
  %v957 = vld [vmem:[%s956] sm:$0xff]
  %s958 = smul.u32 4, 2
  %s959 = smul.addr %s958, 4
  %s960 = scalar_lea.vmem %s2, %s959
  %v961 = vld [vmem:[%s960] sm:$0xff]
  %v962 = vunpack.c.l.bf16 %v961
  %v963 = vunpack.c.h.bf16 %v961
  %965 = vset.pattern.permute.xlu0 0
  %966 = vperm.xlu0 %965, %v957
  %v967 = vpop.permute.xlu0 %966
  %v969 = vmul.f32 %v962, %v967
  %v970 = vmul.f32 %v963, %v967
  %v971 = vadd.f32 %v33, %v969
  %v972 = vadd.f32 %v37, %v970
  %s973 = sadd.s32 %s958, 32
  %s974 = smul.addr %s973, 4
  %s975 = scalar_lea.vmem %s2, %s974
  %v976 = vld [vmem:[%s975] sm:$0xff]
  %v977 = vunpack.c.l.bf16 %v976
  %v978 = vunpack.c.h.bf16 %v976
  %v979 = vmul.f32 %v977, %v967
  %v980 = vmul.f32 %v978, %v967
  %v981 = vadd.f32 %v56, %v979
  %v982 = vadd.f32 %v60, %v980
  %s983 = sadd.s32 %s958, 64
  %s984 = smul.addr %s983, 4
  %s985 = scalar_lea.vmem %s2, %s984
  %v986 = vld [vmem:[%s985] sm:$0xff]
  %v987 = vunpack.c.l.bf16 %v986
  %v988 = vunpack.c.h.bf16 %v986
  %v989 = vmul.f32 %v987, %v967
  %v990 = vmul.f32 %v988, %v967
  %v991 = vadd.f32 %v79, %v989
  %v992 = vadd.f32 %v83, %v990
  %s993 = sadd.s32 %s958, 96
  %s994 = smul.addr %s993, 4
  %s995 = scalar_lea.vmem %s2, %s994
  %v996 = vld [vmem:[%s995] sm:$0xff]
  %v997 = vunpack.c.l.bf16 %v996
  %v998 = vunpack.c.h.bf16 %v996
  %v999 = vmul.f32 %v997, %v967
  %v1000 = vmul.f32 %v998, %v967
  %v1001 = vadd.f32 %v102, %v999
  %v1002 = vadd.f32 %v106, %v1000
  %v1003 = vmul.f32 %v971, 1.0502007
  %v1004 = vmul.f32 %v972, 1.0502007
  %v1005 = vmul.f32 %v981, -0.04531686
  %v1006 = vmul.f32 %v982, -0.04531686
  %v1007 = vadd.f32 %v1003, %v1005
  %v1008 = vadd.f32 %v1004, %v1006
  %v1009 = vmul.f32 %v991, -0.037408613
  %v1010 = vmul.f32 %v992, -0.037408613
  %v1011 = vadd.f32 %v1007, %v1009
  %v1012 = vadd.f32 %v1008, %v1010
  %v1013 = vmul.f32 %v1001, -0.058568347
  %v1014 = vmul.f32 %v1002, -0.058568347
  %v1015 = vadd.f32 %v1011, %v1013
  %v1016 = vadd.f32 %v1012, %v1014
  %1017 = vset.pattern.permute.xlu0 1
  %1018 = vperm.xlu0 %1017, %v957
  %v1019 = vpop.permute.xlu0 %1018
  %v1021 = vmul.f32 %v1019, %v971
  %v1022 = vmul.f32 %v1019, %v972
  %v1023 = vsub.f32 %v1021, %v33
  %v1024 = vsub.f32 %v1022, %v37
  %1025 = vset.pattern.permute.xlu0 2
  %1026 = vperm.xlu0 %1025, %v957
  %v1027 = vpop.permute.xlu0 %1026
  %v1029 = vmul.f32 %v1027, %v1015
  %v1030 = vmul.f32 %v1027, %v1016
  %v1031 = vadd.f32 %v1023, %v1029
  %v1032 = vadd.f32 %v1024, %v1030
  %v1033 = vmul.f32 %v957, -0.12212279
  %1035 = vset.pattern.permute.xlu0 3
  %1036 = vperm.xlu0 %1035, %v1033
  %v1037 = vpop.permute.xlu0 %1036
  %v1039 = vadd.f32 %v1031, %v1037
  %v1040 = vadd.f32 %v1032, %v1037
  %v1041 = vmul.f32 %v1039, %v1039
  %v1042 = vmul.f32 %v1040, %v1040
  %1043 = vset.pattern.permute.xlu0 4
  %1044 = vperm.xlu0 %1043, %v957
  %v1045 = vpop.permute.xlu0 %1044
  %v1047 = vmul.f32 %v1045, %v1041
  %v1048 = vmul.f32 %v1045, %v1042
  %v1049 = vadd.f32 %v950, %v1047
  %v1050 = vadd.f32 %v951, %v1048
  %1051 = vset.pattern.permute.xlu0 5
  %1052 = vperm.xlu0 %1051, %v957
  %v1053 = vpop.permute.xlu0 %1052
  %v1055 = vmul.f32 %v1053, %v1039
  %v1056 = vmul.f32 %v1053, %v1040
  %v1057 = vadd.f32 %v834, %v1055
  %v1058 = vadd.f32 %v835, %v1056
  %v1059 = vmul.f32 %v971, -0.04356164
  %v1060 = vmul.f32 %v972, -0.04356164
  %v1061 = vmul.f32 %v981, 1.029442
  %v1062 = vmul.f32 %v982, 1.029442
  %v1063 = vadd.f32 %v1059, %v1061
  %v1064 = vadd.f32 %v1060, %v1062
  %v1065 = vmul.f32 %v991, 0.036196496
  %v1066 = vmul.f32 %v992, 0.036196496
  %v1067 = vadd.f32 %v1063, %v1065
  %v1068 = vadd.f32 %v1064, %v1066
  %v1069 = vmul.f32 %v1001, -0.05127991
  %v1070 = vmul.f32 %v1002, -0.05127991
  %v1071 = vadd.f32 %v1067, %v1069
  %v1072 = vadd.f32 %v1068, %v1070
  %v1073 = vmul.f32 %v1019, %v981
  %v1074 = vmul.f32 %v1019, %v982
  %v1075 = vsub.f32 %v1073, %v56
  %v1076 = vsub.f32 %v1074, %v60
  %v1077 = vmul.f32 %v1027, %v1071
  %v1078 = vmul.f32 %v1027, %v1072
  %v1079 = vadd.f32 %v1075, %v1077
  %v1080 = vadd.f32 %v1076, %v1078
  %v1081 = vmul.f32 %v957, -0.10178403
  %1083 = vset.pattern.permute.xlu0 3
  %1084 = vperm.xlu0 %1083, %v1081
  %v1085 = vpop.permute.xlu0 %1084
  %v1087 = vadd.f32 %v1079, %v1085
  %v1088 = vadd.f32 %v1080, %v1085
  %v1089 = vmul.f32 %v1087, %v1087
  %v1090 = vmul.f32 %v1088, %v1088
  %v1091 = vmul.f32 %v1045, %v1089
  %v1092 = vmul.f32 %v1045, %v1090
  %v1093 = vadd.f32 %v1049, %v1091
  %v1094 = vadd.f32 %v1050, %v1092
  %v1095 = vmul.f32 %v1053, %v1087
  %v1096 = vmul.f32 %v1053, %v1088
  %v1097 = vadd.f32 %v874, %v1095
  %v1098 = vadd.f32 %v875, %v1096
  %v1099 = vmul.f32 %v971, 0.0830814
  %v1100 = vmul.f32 %v972, 0.0830814
  %v1101 = vmul.f32 %v981, -0.09455126
  %v1102 = vmul.f32 %v982, -0.09455126
  %v1103 = vadd.f32 %v1099, %v1101
  %v1104 = vadd.f32 %v1100, %v1102
  %v1105 = vmul.f32 %v991, 0.9355533
  %v1106 = vmul.f32 %v992, 0.9355533
  %v1107 = vadd.f32 %v1103, %v1105
  %v1108 = vadd.f32 %v1104, %v1106
  %v1109 = vmul.f32 %v1001, 0.0066803456
  %v1110 = vmul.f32 %v1002, 0.0066803456
  %v1111 = vadd.f32 %v1107, %v1109
  %v1112 = vadd.f32 %v1108, %v1110
  %v1113 = vmul.f32 %v1019, %v991
  %v1114 = vmul.f32 %v1019, %v992
  %v1115 = vsub.f32 %v1113, %v79
  %v1116 = vsub.f32 %v1114, %v83
  %v1117 = vmul.f32 %v1027, %v1111
  %v1118 = vmul.f32 %v1027, %v1112
  %v1119 = vadd.f32 %v1115, %v1117
  %v1120 = vadd.f32 %v1116, %v1118
  %v1121 = vmul.f32 %v957, 0.010277212
  %1123 = vset.pattern.permute.xlu0 3
  %1124 = vperm.xlu0 %1123, %v1121
  %v1125 = vpop.permute.xlu0 %1124
  %v1127 = vadd.f32 %v1119, %v1125
  %v1128 = vadd.f32 %v1120, %v1125
  %v1129 = vmul.f32 %v1127, %v1127
  %v1130 = vmul.f32 %v1128, %v1128
  %v1131 = vmul.f32 %v1045, %v1129
  %v1132 = vmul.f32 %v1045, %v1130
  %v1133 = vadd.f32 %v1093, %v1131
  %v1134 = vadd.f32 %v1094, %v1132
  %v1135 = vmul.f32 %v1053, %v1127
  %v1136 = vmul.f32 %v1053, %v1128
  %v1137 = vadd.f32 %v914, %v1135
  %v1138 = vadd.f32 %v915, %v1136
  %v1139 = vmul.f32 %v971, -0.057651963
  %v1140 = vmul.f32 %v972, -0.057651963
  %v1141 = vmul.f32 %v981, 0.011964815
  %v1142 = vmul.f32 %v982, 0.011964815
  %v1143 = vadd.f32 %v1139, %v1141
  %v1144 = vadd.f32 %v1140, %v1142
  %v1145 = vmul.f32 %v991, 0.08724037
  %v1146 = vmul.f32 %v992, 0.08724037
  %v1147 = vadd.f32 %v1143, %v1145
  %v1148 = vadd.f32 %v1144, %v1146
  %v1149 = vmul.f32 %v1001, 1.0252509
  %v1150 = vmul.f32 %v1002, 1.0252509
  %v1151 = vadd.f32 %v1147, %v1149
  %v1152 = vadd.f32 %v1148, %v1150
  %v1153 = vmul.f32 %v1019, %v1001
  %v1154 = vmul.f32 %v1019, %v1002
  %v1155 = vsub.f32 %v1153, %v102
  %v1156 = vsub.f32 %v1154, %v106
  %v1157 = vmul.f32 %v1027, %v1151
  %v1158 = vmul.f32 %v1027, %v1152
  %v1159 = vadd.f32 %v1155, %v1157
  %v1160 = vadd.f32 %v1156, %v1158
  %v1161 = vmul.f32 %v957, -0.01767751
  %1163 = vset.pattern.permute.xlu0 3
  %1164 = vperm.xlu0 %1163, %v1161
  %v1165 = vpop.permute.xlu0 %1164
  %v1167 = vadd.f32 %v1159, %v1165
  %v1168 = vadd.f32 %v1160, %v1165
  %v1169 = vmul.f32 %v1167, %v1167
  %v1170 = vmul.f32 %v1168, %v1168
  %v1171 = vmul.f32 %v1045, %v1169
  %v1172 = vmul.f32 %v1045, %v1170
  %v1173 = vadd.f32 %v1133, %v1171
  %v1174 = vadd.f32 %v1134, %v1172
  %v1175 = vmul.f32 %v1053, %v1167
  %v1176 = vmul.f32 %v1053, %v1168
  %v1177 = vadd.f32 %v954, %v1175
  %v1178 = vadd.f32 %v955, %v1176
  %s1179 = scalar_lea.vmem %s0, 40
  %v1180 = vld [vmem:[%s1179] sm:$0xff]
  %s1181 = smul.u32 5, 2
  %s1182 = smul.addr %s1181, 4
  %s1183 = scalar_lea.vmem %s2, %s1182
  %v1184 = vld [vmem:[%s1183] sm:$0xff]
  %v1185 = vunpack.c.l.bf16 %v1184
  %v1186 = vunpack.c.h.bf16 %v1184
  %1188 = vset.pattern.permute.xlu0 0
  %1189 = vperm.xlu0 %1188, %v1180
  %v1190 = vpop.permute.xlu0 %1189
  %v1192 = vmul.f32 %v1185, %v1190
  %v1193 = vmul.f32 %v1186, %v1190
  %v1194 = vadd.f32 %v33, %v1192
  %v1195 = vadd.f32 %v37, %v1193
  %s1196 = sadd.s32 %s1181, 32
  %s1197 = smul.addr %s1196, 4
  %s1198 = scalar_lea.vmem %s2, %s1197
  %v1199 = vld [vmem:[%s1198] sm:$0xff]
  %v1200 = vunpack.c.l.bf16 %v1199
  %v1201 = vunpack.c.h.bf16 %v1199
  %v1202 = vmul.f32 %v1200, %v1190
  %v1203 = vmul.f32 %v1201, %v1190
  %v1204 = vadd.f32 %v56, %v1202
  %v1205 = vadd.f32 %v60, %v1203
  %s1206 = sadd.s32 %s1181, 64
  %s1207 = smul.addr %s1206, 4
  %s1208 = scalar_lea.vmem %s2, %s1207
  %v1209 = vld [vmem:[%s1208] sm:$0xff]
  %v1210 = vunpack.c.l.bf16 %v1209
  %v1211 = vunpack.c.h.bf16 %v1209
  %v1212 = vmul.f32 %v1210, %v1190
  %v1213 = vmul.f32 %v1211, %v1190
  %v1214 = vadd.f32 %v79, %v1212
  %v1215 = vadd.f32 %v83, %v1213
  %s1216 = sadd.s32 %s1181, 96
  %s1217 = smul.addr %s1216, 4
  %s1218 = scalar_lea.vmem %s2, %s1217
  %v1219 = vld [vmem:[%s1218] sm:$0xff]
  %v1220 = vunpack.c.l.bf16 %v1219
  %v1221 = vunpack.c.h.bf16 %v1219
  %v1222 = vmul.f32 %v1220, %v1190
  %v1223 = vmul.f32 %v1221, %v1190
  %v1224 = vadd.f32 %v102, %v1222
  %v1225 = vadd.f32 %v106, %v1223
  %v1226 = vmul.f32 %v1194, 1.0502007
  %v1227 = vmul.f32 %v1195, 1.0502007
  %v1228 = vmul.f32 %v1204, -0.04531686
  %v1229 = vmul.f32 %v1205, -0.04531686
  %v1230 = vadd.f32 %v1226, %v1228
  %v1231 = vadd.f32 %v1227, %v1229
  %v1232 = vmul.f32 %v1214, -0.037408613
  %v1233 = vmul.f32 %v1215, -0.037408613
  %v1234 = vadd.f32 %v1230, %v1232
  %v1235 = vadd.f32 %v1231, %v1233
  %v1236 = vmul.f32 %v1224, -0.058568347
  %v1237 = vmul.f32 %v1225, -0.058568347
  %v1238 = vadd.f32 %v1234, %v1236
  %v1239 = vadd.f32 %v1235, %v1237
  %1240 = vset.pattern.permute.xlu0 1
  %1241 = vperm.xlu0 %1240, %v1180
  %v1242 = vpop.permute.xlu0 %1241
  %v1244 = vmul.f32 %v1242, %v1194
  %v1245 = vmul.f32 %v1242, %v1195
  %v1246 = vsub.f32 %v1244, %v33
  %v1247 = vsub.f32 %v1245, %v37
  %1248 = vset.pattern.permute.xlu0 2
  %1249 = vperm.xlu0 %1248, %v1180
  %v1250 = vpop.permute.xlu0 %1249
  %v1252 = vmul.f32 %v1250, %v1238
  %v1253 = vmul.f32 %v1250, %v1239
  %v1254 = vadd.f32 %v1246, %v1252
  %v1255 = vadd.f32 %v1247, %v1253
  %v1256 = vmul.f32 %v1180, -0.12212279
  %1258 = vset.pattern.permute.xlu0 3
  %1259 = vperm.xlu0 %1258, %v1256
  %v1260 = vpop.permute.xlu0 %1259
  %v1262 = vadd.f32 %v1254, %v1260
  %v1263 = vadd.f32 %v1255, %v1260
  %v1264 = vmul.f32 %v1262, %v1262
  %v1265 = vmul.f32 %v1263, %v1263
  %1266 = vset.pattern.permute.xlu0 4
  %1267 = vperm.xlu0 %1266, %v1180
  %v1268 = vpop.permute.xlu0 %1267
  %v1270 = vmul.f32 %v1268, %v1264
  %v1271 = vmul.f32 %v1268, %v1265
  %v1272 = vadd.f32 %v1173, %v1270
  %v1273 = vadd.f32 %v1174, %v1271
  %1274 = vset.pattern.permute.xlu0 5
  %1275 = vperm.xlu0 %1274, %v1180
  %v1276 = vpop.permute.xlu0 %1275
  %v1278 = vmul.f32 %v1276, %v1262
  %v1279 = vmul.f32 %v1276, %v1263
  %v1280 = vadd.f32 %v1057, %v1278
  %v1281 = vadd.f32 %v1058, %v1279
  %v1282 = vmul.f32 %v1194, -0.04356164
  %v1283 = vmul.f32 %v1195, -0.04356164
  %v1284 = vmul.f32 %v1204, 1.029442
  %v1285 = vmul.f32 %v1205, 1.029442
  %v1286 = vadd.f32 %v1282, %v1284
  %v1287 = vadd.f32 %v1283, %v1285
  %v1288 = vmul.f32 %v1214, 0.036196496
  %v1289 = vmul.f32 %v1215, 0.036196496
  %v1290 = vadd.f32 %v1286, %v1288
  %v1291 = vadd.f32 %v1287, %v1289
  %v1292 = vmul.f32 %v1224, -0.05127991
  %v1293 = vmul.f32 %v1225, -0.05127991
  %v1294 = vadd.f32 %v1290, %v1292
  %v1295 = vadd.f32 %v1291, %v1293
  %v1296 = vmul.f32 %v1242, %v1204
  %v1297 = vmul.f32 %v1242, %v1205
  %v1298 = vsub.f32 %v1296, %v56
  %v1299 = vsub.f32 %v1297, %v60
  %v1300 = vmul.f32 %v1250, %v1294
  %v1301 = vmul.f32 %v1250, %v1295
  %v1302 = vadd.f32 %v1298, %v1300
  %v1303 = vadd.f32 %v1299, %v1301
  %v1304 = vmul.f32 %v1180, -0.10178403
  %1306 = vset.pattern.permute.xlu0 3
  %1307 = vperm.xlu0 %1306, %v1304
  %v1308 = vpop.permute.xlu0 %1307
  %v1310 = vadd.f32 %v1302, %v1308
  %v1311 = vadd.f32 %v1303, %v1308
  %v1312 = vmul.f32 %v1310, %v1310
  %v1313 = vmul.f32 %v1311, %v1311
  %v1314 = vmul.f32 %v1268, %v1312
  %v1315 = vmul.f32 %v1268, %v1313
  %v1316 = vadd.f32 %v1272, %v1314
  %v1317 = vadd.f32 %v1273, %v1315
  %v1318 = vmul.f32 %v1276, %v1310
  %v1319 = vmul.f32 %v1276, %v1311
  %v1320 = vadd.f32 %v1097, %v1318
  %v1321 = vadd.f32 %v1098, %v1319
  %v1322 = vmul.f32 %v1194, 0.0830814
  %v1323 = vmul.f32 %v1195, 0.0830814
  %v1324 = vmul.f32 %v1204, -0.09455126
  %v1325 = vmul.f32 %v1205, -0.09455126
  %v1326 = vadd.f32 %v1322, %v1324
  %v1327 = vadd.f32 %v1323, %v1325
  %v1328 = vmul.f32 %v1214, 0.9355533
  %v1329 = vmul.f32 %v1215, 0.9355533
  %v1330 = vadd.f32 %v1326, %v1328
  %v1331 = vadd.f32 %v1327, %v1329
  %v1332 = vmul.f32 %v1224, 0.0066803456
  %v1333 = vmul.f32 %v1225, 0.0066803456
  %v1334 = vadd.f32 %v1330, %v1332
  %v1335 = vadd.f32 %v1331, %v1333
  %v1336 = vmul.f32 %v1242, %v1214
  %v1337 = vmul.f32 %v1242, %v1215
  %v1338 = vsub.f32 %v1336, %v79
  %v1339 = vsub.f32 %v1337, %v83
  %v1340 = vmul.f32 %v1250, %v1334
  %v1341 = vmul.f32 %v1250, %v1335
  %v1342 = vadd.f32 %v1338, %v1340
  %v1343 = vadd.f32 %v1339, %v1341
  %v1344 = vmul.f32 %v1180, 0.010277212
  %1346 = vset.pattern.permute.xlu0 3
  %1347 = vperm.xlu0 %1346, %v1344
  %v1348 = vpop.permute.xlu0 %1347
  %v1350 = vadd.f32 %v1342, %v1348
  %v1351 = vadd.f32 %v1343, %v1348
  %v1352 = vmul.f32 %v1350, %v1350
  %v1353 = vmul.f32 %v1351, %v1351
  %v1354 = vmul.f32 %v1268, %v1352
  %v1355 = vmul.f32 %v1268, %v1353
  %v1356 = vadd.f32 %v1316, %v1354
  %v1357 = vadd.f32 %v1317, %v1355
  %v1358 = vmul.f32 %v1276, %v1350
  %v1359 = vmul.f32 %v1276, %v1351
  %v1360 = vadd.f32 %v1137, %v1358
  %v1361 = vadd.f32 %v1138, %v1359
  %v1362 = vmul.f32 %v1194, -0.057651963
  %v1363 = vmul.f32 %v1195, -0.057651963
  %v1364 = vmul.f32 %v1204, 0.011964815
  %v1365 = vmul.f32 %v1205, 0.011964815
  %v1366 = vadd.f32 %v1362, %v1364
  %v1367 = vadd.f32 %v1363, %v1365
  %v1368 = vmul.f32 %v1214, 0.08724037
  %v1369 = vmul.f32 %v1215, 0.08724037
  %v1370 = vadd.f32 %v1366, %v1368
  %v1371 = vadd.f32 %v1367, %v1369
  %v1372 = vmul.f32 %v1224, 1.0252509
  %v1373 = vmul.f32 %v1225, 1.0252509
  %v1374 = vadd.f32 %v1370, %v1372
  %v1375 = vadd.f32 %v1371, %v1373
  %v1376 = vmul.f32 %v1242, %v1224
  %v1377 = vmul.f32 %v1242, %v1225
  %v1378 = vsub.f32 %v1376, %v102
  %v1379 = vsub.f32 %v1377, %v106
  %v1380 = vmul.f32 %v1250, %v1374
  %v1381 = vmul.f32 %v1250, %v1375
  %v1382 = vadd.f32 %v1378, %v1380
  %v1383 = vadd.f32 %v1379, %v1381
  %v1384 = vmul.f32 %v1180, -0.01767751
  %1386 = vset.pattern.permute.xlu0 3
  %1387 = vperm.xlu0 %1386, %v1384
  %v1388 = vpop.permute.xlu0 %1387
  %v1390 = vadd.f32 %v1382, %v1388
  %v1391 = vadd.f32 %v1383, %v1388
  %v1392 = vmul.f32 %v1390, %v1390
  %v1393 = vmul.f32 %v1391, %v1391
  %v1394 = vmul.f32 %v1268, %v1392
  %v1395 = vmul.f32 %v1268, %v1393
  %v1396 = vadd.f32 %v1356, %v1394
  %v1397 = vadd.f32 %v1357, %v1395
  %v1398 = vmul.f32 %v1276, %v1390
  %v1399 = vmul.f32 %v1276, %v1391
  %v1400 = vadd.f32 %v1177, %v1398
  %v1401 = vadd.f32 %v1178, %v1399
  %s1402 = scalar_lea.vmem %s0, 48
  %v1403 = vld [vmem:[%s1402] sm:$0xff]
  %s1404 = smul.u32 6, 2
  %s1405 = smul.addr %s1404, 4
  %s1406 = scalar_lea.vmem %s2, %s1405
  %v1407 = vld [vmem:[%s1406] sm:$0xff]
  %v1408 = vunpack.c.l.bf16 %v1407
  %v1409 = vunpack.c.h.bf16 %v1407
  %1411 = vset.pattern.permute.xlu0 0
  %1412 = vperm.xlu0 %1411, %v1403
  %v1413 = vpop.permute.xlu0 %1412
  %v1415 = vmul.f32 %v1408, %v1413
  %v1416 = vmul.f32 %v1409, %v1413
  %v1417 = vadd.f32 %v33, %v1415
  %v1418 = vadd.f32 %v37, %v1416
  %s1419 = sadd.s32 %s1404, 32
  %s1420 = smul.addr %s1419, 4
  %s1421 = scalar_lea.vmem %s2, %s1420
  %v1422 = vld [vmem:[%s1421] sm:$0xff]
  %v1423 = vunpack.c.l.bf16 %v1422
  %v1424 = vunpack.c.h.bf16 %v1422
  %v1425 = vmul.f32 %v1423, %v1413
  %v1426 = vmul.f32 %v1424, %v1413
  %v1427 = vadd.f32 %v56, %v1425
  %v1428 = vadd.f32 %v60, %v1426
  %s1429 = sadd.s32 %s1404, 64
  %s1430 = smul.addr %s1429, 4
  %s1431 = scalar_lea.vmem %s2, %s1430
  %v1432 = vld [vmem:[%s1431] sm:$0xff]
  %v1433 = vunpack.c.l.bf16 %v1432
  %v1434 = vunpack.c.h.bf16 %v1432
  %v1435 = vmul.f32 %v1433, %v1413
  %v1436 = vmul.f32 %v1434, %v1413
  %v1437 = vadd.f32 %v79, %v1435
  %v1438 = vadd.f32 %v83, %v1436
  %s1439 = sadd.s32 %s1404, 96
  %s1440 = smul.addr %s1439, 4
  %s1441 = scalar_lea.vmem %s2, %s1440
  %v1442 = vld [vmem:[%s1441] sm:$0xff]
  %v1443 = vunpack.c.l.bf16 %v1442
  %v1444 = vunpack.c.h.bf16 %v1442
  %v1445 = vmul.f32 %v1443, %v1413
  %v1446 = vmul.f32 %v1444, %v1413
  %v1447 = vadd.f32 %v102, %v1445
  %v1448 = vadd.f32 %v106, %v1446
  %v1449 = vmul.f32 %v1417, 1.0502007
  %v1450 = vmul.f32 %v1418, 1.0502007
  %v1451 = vmul.f32 %v1427, -0.04531686
  %v1452 = vmul.f32 %v1428, -0.04531686
  %v1453 = vadd.f32 %v1449, %v1451
  %v1454 = vadd.f32 %v1450, %v1452
  %v1455 = vmul.f32 %v1437, -0.037408613
  %v1456 = vmul.f32 %v1438, -0.037408613
  %v1457 = vadd.f32 %v1453, %v1455
  %v1458 = vadd.f32 %v1454, %v1456
  %v1459 = vmul.f32 %v1447, -0.058568347
  %v1460 = vmul.f32 %v1448, -0.058568347
  %v1461 = vadd.f32 %v1457, %v1459
  %v1462 = vadd.f32 %v1458, %v1460
  %1463 = vset.pattern.permute.xlu0 1
  %1464 = vperm.xlu0 %1463, %v1403
  %v1465 = vpop.permute.xlu0 %1464
  %v1467 = vmul.f32 %v1465, %v1417
  %v1468 = vmul.f32 %v1465, %v1418
  %v1469 = vsub.f32 %v1467, %v33
  %v1470 = vsub.f32 %v1468, %v37
  %1471 = vset.pattern.permute.xlu0 2
  %1472 = vperm.xlu0 %1471, %v1403
  %v1473 = vpop.permute.xlu0 %1472
  %v1475 = vmul.f32 %v1473, %v1461
  %v1476 = vmul.f32 %v1473, %v1462
  %v1477 = vadd.f32 %v1469, %v1475
  %v1478 = vadd.f32 %v1470, %v1476
  %v1479 = vmul.f32 %v1403, -0.12212279
  %1481 = vset.pattern.permute.xlu0 3
  %1482 = vperm.xlu0 %1481, %v1479
  %v1483 = vpop.permute.xlu0 %1482
  %v1485 = vadd.f32 %v1477, %v1483
  %v1486 = vadd.f32 %v1478, %v1483
  %v1487 = vmul.f32 %v1485, %v1485
  %v1488 = vmul.f32 %v1486, %v1486
  %1489 = vset.pattern.permute.xlu0 4
  %1490 = vperm.xlu0 %1489, %v1403
  %v1491 = vpop.permute.xlu0 %1490
  %v1493 = vmul.f32 %v1491, %v1487
  %v1494 = vmul.f32 %v1491, %v1488
  %v1495 = vadd.f32 %v1396, %v1493
  %v1496 = vadd.f32 %v1397, %v1494
  %1497 = vset.pattern.permute.xlu0 5
  %1498 = vperm.xlu0 %1497, %v1403
  %v1499 = vpop.permute.xlu0 %1498
  %v1501 = vmul.f32 %v1499, %v1485
  %v1502 = vmul.f32 %v1499, %v1486
  %v1503 = vadd.f32 %v1280, %v1501
  %v1504 = vadd.f32 %v1281, %v1502
  %v1505 = vmul.f32 %v1417, -0.04356164
  %v1506 = vmul.f32 %v1418, -0.04356164
  %v1507 = vmul.f32 %v1427, 1.029442
  %v1508 = vmul.f32 %v1428, 1.029442
  %v1509 = vadd.f32 %v1505, %v1507
  %v1510 = vadd.f32 %v1506, %v1508
  %v1511 = vmul.f32 %v1437, 0.036196496
  %v1512 = vmul.f32 %v1438, 0.036196496
  %v1513 = vadd.f32 %v1509, %v1511
  %v1514 = vadd.f32 %v1510, %v1512
  %v1515 = vmul.f32 %v1447, -0.05127991
  %v1516 = vmul.f32 %v1448, -0.05127991
  %v1517 = vadd.f32 %v1513, %v1515
  %v1518 = vadd.f32 %v1514, %v1516
  %v1519 = vmul.f32 %v1465, %v1427
  %v1520 = vmul.f32 %v1465, %v1428
  %v1521 = vsub.f32 %v1519, %v56
  %v1522 = vsub.f32 %v1520, %v60
  %v1523 = vmul.f32 %v1473, %v1517
  %v1524 = vmul.f32 %v1473, %v1518
  %v1525 = vadd.f32 %v1521, %v1523
  %v1526 = vadd.f32 %v1522, %v1524
  %v1527 = vmul.f32 %v1403, -0.10178403
  %1529 = vset.pattern.permute.xlu0 3
  %1530 = vperm.xlu0 %1529, %v1527
  %v1531 = vpop.permute.xlu0 %1530
  %v1533 = vadd.f32 %v1525, %v1531
  %v1534 = vadd.f32 %v1526, %v1531
  %v1535 = vmul.f32 %v1533, %v1533
  %v1536 = vmul.f32 %v1534, %v1534
  %v1537 = vmul.f32 %v1491, %v1535
  %v1538 = vmul.f32 %v1491, %v1536
  %v1539 = vadd.f32 %v1495, %v1537
  %v1540 = vadd.f32 %v1496, %v1538
  %v1541 = vmul.f32 %v1499, %v1533
  %v1542 = vmul.f32 %v1499, %v1534
  %v1543 = vadd.f32 %v1320, %v1541
  %v1544 = vadd.f32 %v1321, %v1542
  %v1545 = vmul.f32 %v1417, 0.0830814
  %v1546 = vmul.f32 %v1418, 0.0830814
  %v1547 = vmul.f32 %v1427, -0.09455126
  %v1548 = vmul.f32 %v1428, -0.09455126
  %v1549 = vadd.f32 %v1545, %v1547
  %v1550 = vadd.f32 %v1546, %v1548
  %v1551 = vmul.f32 %v1437, 0.9355533
  %v1552 = vmul.f32 %v1438, 0.9355533
  %v1553 = vadd.f32 %v1549, %v1551
  %v1554 = vadd.f32 %v1550, %v1552
  %v1555 = vmul.f32 %v1447, 0.0066803456
  %v1556 = vmul.f32 %v1448, 0.0066803456
  %v1557 = vadd.f32 %v1553, %v1555
  %v1558 = vadd.f32 %v1554, %v1556
  %v1559 = vmul.f32 %v1465, %v1437
  %v1560 = vmul.f32 %v1465, %v1438
  %v1561 = vsub.f32 %v1559, %v79
  %v1562 = vsub.f32 %v1560, %v83
  %v1563 = vmul.f32 %v1473, %v1557
  %v1564 = vmul.f32 %v1473, %v1558
  %v1565 = vadd.f32 %v1561, %v1563
  %v1566 = vadd.f32 %v1562, %v1564
  %v1567 = vmul.f32 %v1403, 0.010277212
  %1569 = vset.pattern.permute.xlu0 3
  %1570 = vperm.xlu0 %1569, %v1567
  %v1571 = vpop.permute.xlu0 %1570
  %v1573 = vadd.f32 %v1565, %v1571
  %v1574 = vadd.f32 %v1566, %v1571
  %v1575 = vmul.f32 %v1573, %v1573
  %v1576 = vmul.f32 %v1574, %v1574
  %v1577 = vmul.f32 %v1491, %v1575
  %v1578 = vmul.f32 %v1491, %v1576
  %v1579 = vadd.f32 %v1539, %v1577
  %v1580 = vadd.f32 %v1540, %v1578
  %v1581 = vmul.f32 %v1499, %v1573
  %v1582 = vmul.f32 %v1499, %v1574
  %v1583 = vadd.f32 %v1360, %v1581
  %v1584 = vadd.f32 %v1361, %v1582
  %v1585 = vmul.f32 %v1417, -0.057651963
  %v1586 = vmul.f32 %v1418, -0.057651963
  %v1587 = vmul.f32 %v1427, 0.011964815
  %v1588 = vmul.f32 %v1428, 0.011964815
  %v1589 = vadd.f32 %v1585, %v1587
  %v1590 = vadd.f32 %v1586, %v1588
  %v1591 = vmul.f32 %v1437, 0.08724037
  %v1592 = vmul.f32 %v1438, 0.08724037
  %v1593 = vadd.f32 %v1589, %v1591
  %v1594 = vadd.f32 %v1590, %v1592
  %v1595 = vmul.f32 %v1447, 1.0252509
  %v1596 = vmul.f32 %v1448, 1.0252509
  %v1597 = vadd.f32 %v1593, %v1595
  %v1598 = vadd.f32 %v1594, %v1596
  %v1599 = vmul.f32 %v1465, %v1447
  %v1600 = vmul.f32 %v1465, %v1448
  %v1601 = vsub.f32 %v1599, %v102
  %v1602 = vsub.f32 %v1600, %v106
  %v1603 = vmul.f32 %v1473, %v1597
  %v1604 = vmul.f32 %v1473, %v1598
  %v1605 = vadd.f32 %v1601, %v1603
  %v1606 = vadd.f32 %v1602, %v1604
  %v1607 = vmul.f32 %v1403, -0.01767751
  %1609 = vset.pattern.permute.xlu0 3
  %1610 = vperm.xlu0 %1609, %v1607
  %v1611 = vpop.permute.xlu0 %1610
  %v1613 = vadd.f32 %v1605, %v1611
  %v1614 = vadd.f32 %v1606, %v1611
  %v1615 = vmul.f32 %v1613, %v1613
  %v1616 = vmul.f32 %v1614, %v1614
  %v1617 = vmul.f32 %v1491, %v1615
  %v1618 = vmul.f32 %v1491, %v1616
  %v1619 = vadd.f32 %v1579, %v1617
  %v1620 = vadd.f32 %v1580, %v1618
  %v1621 = vmul.f32 %v1499, %v1613
  %v1622 = vmul.f32 %v1499, %v1614
  %v1623 = vadd.f32 %v1400, %v1621
  %v1624 = vadd.f32 %v1401, %v1622
  %s1625 = scalar_lea.vmem %s0, 56
  %v1626 = vld [vmem:[%s1625] sm:$0xff]
  %s1627 = smul.u32 7, 2
  %s1628 = smul.addr %s1627, 4
  %s1629 = scalar_lea.vmem %s2, %s1628
  %v1630 = vld [vmem:[%s1629] sm:$0xff]
  %v1631 = vunpack.c.l.bf16 %v1630
  %v1632 = vunpack.c.h.bf16 %v1630
  %1634 = vset.pattern.permute.xlu0 0
  %1635 = vperm.xlu0 %1634, %v1626
  %v1636 = vpop.permute.xlu0 %1635
  %v1638 = vmul.f32 %v1631, %v1636
  %v1639 = vmul.f32 %v1632, %v1636
  %v1640 = vadd.f32 %v33, %v1638
  %v1641 = vadd.f32 %v37, %v1639
  %s1642 = sadd.s32 %s1627, 32
  %s1643 = smul.addr %s1642, 4
  %s1644 = scalar_lea.vmem %s2, %s1643
  %v1645 = vld [vmem:[%s1644] sm:$0xff]
  %v1646 = vunpack.c.l.bf16 %v1645
  %v1647 = vunpack.c.h.bf16 %v1645
  %v1648 = vmul.f32 %v1646, %v1636
  %v1649 = vmul.f32 %v1647, %v1636
  %v1650 = vadd.f32 %v56, %v1648
  %v1651 = vadd.f32 %v60, %v1649
  %s1652 = sadd.s32 %s1627, 64
  %s1653 = smul.addr %s1652, 4
  %s1654 = scalar_lea.vmem %s2, %s1653
  %v1655 = vld [vmem:[%s1654] sm:$0xff]
  %v1656 = vunpack.c.l.bf16 %v1655
  %v1657 = vunpack.c.h.bf16 %v1655
  %v1658 = vmul.f32 %v1656, %v1636
  %v1659 = vmul.f32 %v1657, %v1636
  %v1660 = vadd.f32 %v79, %v1658
  %v1661 = vadd.f32 %v83, %v1659
  %s1662 = sadd.s32 %s1627, 96
  %s1663 = smul.addr %s1662, 4
  %s1664 = scalar_lea.vmem %s2, %s1663
  %v1665 = vld [vmem:[%s1664] sm:$0xff]
  %v1666 = vunpack.c.l.bf16 %v1665
  %v1667 = vunpack.c.h.bf16 %v1665
  %v1668 = vmul.f32 %v1666, %v1636
  %v1669 = vmul.f32 %v1667, %v1636
  %v1670 = vadd.f32 %v102, %v1668
  %v1671 = vadd.f32 %v106, %v1669
  %v1672 = vmul.f32 %v1640, 1.0502007
  %v1673 = vmul.f32 %v1641, 1.0502007
  %v1674 = vmul.f32 %v1650, -0.04531686
  %v1675 = vmul.f32 %v1651, -0.04531686
  %v1676 = vadd.f32 %v1672, %v1674
  %v1677 = vadd.f32 %v1673, %v1675
  %v1678 = vmul.f32 %v1660, -0.037408613
  %v1679 = vmul.f32 %v1661, -0.037408613
  %v1680 = vadd.f32 %v1676, %v1678
  %v1681 = vadd.f32 %v1677, %v1679
  %v1682 = vmul.f32 %v1670, -0.058568347
  %v1683 = vmul.f32 %v1671, -0.058568347
  %v1684 = vadd.f32 %v1680, %v1682
  %v1685 = vadd.f32 %v1681, %v1683
  %1686 = vset.pattern.permute.xlu0 1
  %1687 = vperm.xlu0 %1686, %v1626
  %v1688 = vpop.permute.xlu0 %1687
  %v1690 = vmul.f32 %v1688, %v1640
  %v1691 = vmul.f32 %v1688, %v1641
  %v1692 = vsub.f32 %v1690, %v33
  %v1693 = vsub.f32 %v1691, %v37
  %1694 = vset.pattern.permute.xlu0 2
  %1695 = vperm.xlu0 %1694, %v1626
  %v1696 = vpop.permute.xlu0 %1695
  %v1698 = vmul.f32 %v1696, %v1684
  %v1699 = vmul.f32 %v1696, %v1685
  %v1700 = vadd.f32 %v1692, %v1698
  %v1701 = vadd.f32 %v1693, %v1699
  %v1702 = vmul.f32 %v1626, -0.12212279
  %1704 = vset.pattern.permute.xlu0 3
  %1705 = vperm.xlu0 %1704, %v1702
  %v1706 = vpop.permute.xlu0 %1705
  %v1708 = vadd.f32 %v1700, %v1706
  %v1709 = vadd.f32 %v1701, %v1706
  %v1710 = vmul.f32 %v1708, %v1708
  %v1711 = vmul.f32 %v1709, %v1709
  %1712 = vset.pattern.permute.xlu0 4
  %1713 = vperm.xlu0 %1712, %v1626
  %v1714 = vpop.permute.xlu0 %1713
  %v1716 = vmul.f32 %v1714, %v1710
  %v1717 = vmul.f32 %v1714, %v1711
  %v1718 = vadd.f32 %v1619, %v1716
  %v1719 = vadd.f32 %v1620, %v1717
  %1720 = vset.pattern.permute.xlu0 5
  %1721 = vperm.xlu0 %1720, %v1626
  %v1722 = vpop.permute.xlu0 %1721
  %v1724 = vmul.f32 %v1722, %v1708
  %v1725 = vmul.f32 %v1722, %v1709
  %v1726 = vadd.f32 %v1503, %v1724
  %v1727 = vadd.f32 %v1504, %v1725
  %v1728 = vmul.f32 %v1640, -0.04356164
  %v1729 = vmul.f32 %v1641, -0.04356164
  %v1730 = vmul.f32 %v1650, 1.029442
  %v1731 = vmul.f32 %v1651, 1.029442
  %v1732 = vadd.f32 %v1728, %v1730
  %v1733 = vadd.f32 %v1729, %v1731
  %v1734 = vmul.f32 %v1660, 0.036196496
  %v1735 = vmul.f32 %v1661, 0.036196496
  %v1736 = vadd.f32 %v1732, %v1734
  %v1737 = vadd.f32 %v1733, %v1735
  %v1738 = vmul.f32 %v1670, -0.05127991
  %v1739 = vmul.f32 %v1671, -0.05127991
  %v1740 = vadd.f32 %v1736, %v1738
  %v1741 = vadd.f32 %v1737, %v1739
  %v1742 = vmul.f32 %v1688, %v1650
  %v1743 = vmul.f32 %v1688, %v1651
  %v1744 = vsub.f32 %v1742, %v56
  %v1745 = vsub.f32 %v1743, %v60
  %v1746 = vmul.f32 %v1696, %v1740
  %v1747 = vmul.f32 %v1696, %v1741
  %v1748 = vadd.f32 %v1744, %v1746
  %v1749 = vadd.f32 %v1745, %v1747
  %v1750 = vmul.f32 %v1626, -0.10178403
  %1752 = vset.pattern.permute.xlu0 3
  %1753 = vperm.xlu0 %1752, %v1750
  %v1754 = vpop.permute.xlu0 %1753
  %v1756 = vadd.f32 %v1748, %v1754
  %v1757 = vadd.f32 %v1749, %v1754
  %v1758 = vmul.f32 %v1756, %v1756
  %v1759 = vmul.f32 %v1757, %v1757
  %v1760 = vmul.f32 %v1714, %v1758
  %v1761 = vmul.f32 %v1714, %v1759
  %v1762 = vadd.f32 %v1718, %v1760
  %v1763 = vadd.f32 %v1719, %v1761
  %v1764 = vmul.f32 %v1722, %v1756
  %v1765 = vmul.f32 %v1722, %v1757
  %v1766 = vadd.f32 %v1543, %v1764
  %v1767 = vadd.f32 %v1544, %v1765
  %v1768 = vmul.f32 %v1640, 0.0830814
  %v1769 = vmul.f32 %v1641, 0.0830814
  %v1770 = vmul.f32 %v1650, -0.09455126
  %v1771 = vmul.f32 %v1651, -0.09455126
  %v1772 = vadd.f32 %v1768, %v1770
  %v1773 = vadd.f32 %v1769, %v1771
  %v1774 = vmul.f32 %v1660, 0.9355533
  %v1775 = vmul.f32 %v1661, 0.9355533
  %v1776 = vadd.f32 %v1772, %v1774
  %v1777 = vadd.f32 %v1773, %v1775
  %v1778 = vmul.f32 %v1670, 0.0066803456
  %v1779 = vmul.f32 %v1671, 0.0066803456
  %v1780 = vadd.f32 %v1776, %v1778
  %v1781 = vadd.f32 %v1777, %v1779
  %v1782 = vmul.f32 %v1688, %v1660
  %v1783 = vmul.f32 %v1688, %v1661
  %v1784 = vsub.f32 %v1782, %v79
  %v1785 = vsub.f32 %v1783, %v83
  %v1786 = vmul.f32 %v1696, %v1780
  %v1787 = vmul.f32 %v1696, %v1781
  %v1788 = vadd.f32 %v1784, %v1786
  %v1789 = vadd.f32 %v1785, %v1787
  %v1790 = vmul.f32 %v1626, 0.010277212
  %1792 = vset.pattern.permute.xlu0 3
  %1793 = vperm.xlu0 %1792, %v1790
  %v1794 = vpop.permute.xlu0 %1793
  %v1796 = vadd.f32 %v1788, %v1794
  %v1797 = vadd.f32 %v1789, %v1794
  %v1798 = vmul.f32 %v1796, %v1796
  %v1799 = vmul.f32 %v1797, %v1797
  %v1800 = vmul.f32 %v1714, %v1798
  %v1801 = vmul.f32 %v1714, %v1799
  %v1802 = vadd.f32 %v1762, %v1800
  %v1803 = vadd.f32 %v1763, %v1801
  %v1804 = vmul.f32 %v1722, %v1796
  %v1805 = vmul.f32 %v1722, %v1797
  %v1806 = vadd.f32 %v1583, %v1804
  %v1807 = vadd.f32 %v1584, %v1805
  %v1808 = vmul.f32 %v1640, -0.057651963
  %v1809 = vmul.f32 %v1641, -0.057651963
  %v1810 = vmul.f32 %v1650, 0.011964815
  %v1811 = vmul.f32 %v1651, 0.011964815
  %v1812 = vadd.f32 %v1808, %v1810
  %v1813 = vadd.f32 %v1809, %v1811
  %v1814 = vmul.f32 %v1660, 0.08724037
  %v1815 = vmul.f32 %v1661, 0.08724037
  %v1816 = vadd.f32 %v1812, %v1814
  %v1817 = vadd.f32 %v1813, %v1815
  %v1818 = vmul.f32 %v1670, 1.0252509
  %v1819 = vmul.f32 %v1671, 1.0252509
  %v1820 = vadd.f32 %v1816, %v1818
  %v1821 = vadd.f32 %v1817, %v1819
  %v1822 = vmul.f32 %v1688, %v1670
  %v1823 = vmul.f32 %v1688, %v1671
  %v1824 = vsub.f32 %v1822, %v102
  %v1825 = vsub.f32 %v1823, %v106
  %v1826 = vmul.f32 %v1696, %v1820
  %v1827 = vmul.f32 %v1696, %v1821
  %v1828 = vadd.f32 %v1824, %v1826
  %v1829 = vadd.f32 %v1825, %v1827
  %v1830 = vmul.f32 %v1626, -0.01767751
  %1832 = vset.pattern.permute.xlu0 3
  %1833 = vperm.xlu0 %1832, %v1830
  %v1834 = vpop.permute.xlu0 %1833
  %v1836 = vadd.f32 %v1828, %v1834
  %v1837 = vadd.f32 %v1829, %v1834
  %v1838 = vmul.f32 %v1836, %v1836
  %v1839 = vmul.f32 %v1837, %v1837
  %v1840 = vmul.f32 %v1714, %v1838
  %v1841 = vmul.f32 %v1714, %v1839
  %v1842 = vadd.f32 %v1802, %v1840
  %v1843 = vadd.f32 %v1803, %v1841
  %v1844 = vmul.f32 %v1722, %v1836
  %v1845 = vmul.f32 %v1722, %v1837
  %v1846 = vadd.f32 %v1623, %v1844
  %v1847 = vadd.f32 %v1624, %v1845
  %s1848 = scalar_lea.vmem %s0, 64
  %v1849 = vld [vmem:[%s1848] sm:$0xff]
  %s1850 = smul.u32 8, 2
  %s1851 = smul.addr %s1850, 4
  %s1852 = scalar_lea.vmem %s2, %s1851
  %v1853 = vld [vmem:[%s1852] sm:$0xff]
  %v1854 = vunpack.c.l.bf16 %v1853
  %v1855 = vunpack.c.h.bf16 %v1853
  %1857 = vset.pattern.permute.xlu0 0
  %1858 = vperm.xlu0 %1857, %v1849
  %v1859 = vpop.permute.xlu0 %1858
  %v1861 = vmul.f32 %v1854, %v1859
  %v1862 = vmul.f32 %v1855, %v1859
  %v1863 = vadd.f32 %v33, %v1861
  %v1864 = vadd.f32 %v37, %v1862
  %s1865 = sadd.s32 %s1850, 32
  %s1866 = smul.addr %s1865, 4
  %s1867 = scalar_lea.vmem %s2, %s1866
  %v1868 = vld [vmem:[%s1867] sm:$0xff]
  %v1869 = vunpack.c.l.bf16 %v1868
  %v1870 = vunpack.c.h.bf16 %v1868
  %v1871 = vmul.f32 %v1869, %v1859
  %v1872 = vmul.f32 %v1870, %v1859
  %v1873 = vadd.f32 %v56, %v1871
  %v1874 = vadd.f32 %v60, %v1872
  %s1875 = sadd.s32 %s1850, 64
  %s1876 = smul.addr %s1875, 4
  %s1877 = scalar_lea.vmem %s2, %s1876
  %v1878 = vld [vmem:[%s1877] sm:$0xff]
  %v1879 = vunpack.c.l.bf16 %v1878
  %v1880 = vunpack.c.h.bf16 %v1878
  %v1881 = vmul.f32 %v1879, %v1859
  %v1882 = vmul.f32 %v1880, %v1859
  %v1883 = vadd.f32 %v79, %v1881
  %v1884 = vadd.f32 %v83, %v1882
  %s1885 = sadd.s32 %s1850, 96
  %s1886 = smul.addr %s1885, 4
  %s1887 = scalar_lea.vmem %s2, %s1886
  %v1888 = vld [vmem:[%s1887] sm:$0xff]
  %v1889 = vunpack.c.l.bf16 %v1888
  %v1890 = vunpack.c.h.bf16 %v1888
  %v1891 = vmul.f32 %v1889, %v1859
  %v1892 = vmul.f32 %v1890, %v1859
  %v1893 = vadd.f32 %v102, %v1891
  %v1894 = vadd.f32 %v106, %v1892
  %v1895 = vmul.f32 %v1863, 1.0502007
  %v1896 = vmul.f32 %v1864, 1.0502007
  %v1897 = vmul.f32 %v1873, -0.04531686
  %v1898 = vmul.f32 %v1874, -0.04531686
  %v1899 = vadd.f32 %v1895, %v1897
  %v1900 = vadd.f32 %v1896, %v1898
  %v1901 = vmul.f32 %v1883, -0.037408613
  %v1902 = vmul.f32 %v1884, -0.037408613
  %v1903 = vadd.f32 %v1899, %v1901
  %v1904 = vadd.f32 %v1900, %v1902
  %v1905 = vmul.f32 %v1893, -0.058568347
  %v1906 = vmul.f32 %v1894, -0.058568347
  %v1907 = vadd.f32 %v1903, %v1905
  %v1908 = vadd.f32 %v1904, %v1906
  %1909 = vset.pattern.permute.xlu0 1
  %1910 = vperm.xlu0 %1909, %v1849
  %v1911 = vpop.permute.xlu0 %1910
  %v1913 = vmul.f32 %v1911, %v1863
  %v1914 = vmul.f32 %v1911, %v1864
  %v1915 = vsub.f32 %v1913, %v33
  %v1916 = vsub.f32 %v1914, %v37
  %1917 = vset.pattern.permute.xlu0 2
  %1918 = vperm.xlu0 %1917, %v1849
  %v1919 = vpop.permute.xlu0 %1918
  %v1921 = vmul.f32 %v1919, %v1907
  %v1922 = vmul.f32 %v1919, %v1908
  %v1923 = vadd.f32 %v1915, %v1921
  %v1924 = vadd.f32 %v1916, %v1922
  %v1925 = vmul.f32 %v1849, -0.12212279
  %1927 = vset.pattern.permute.xlu0 3
  %1928 = vperm.xlu0 %1927, %v1925
  %v1929 = vpop.permute.xlu0 %1928
  %v1931 = vadd.f32 %v1923, %v1929
  %v1932 = vadd.f32 %v1924, %v1929
  %v1933 = vmul.f32 %v1931, %v1931
  %v1934 = vmul.f32 %v1932, %v1932
  %1935 = vset.pattern.permute.xlu0 4
  %1936 = vperm.xlu0 %1935, %v1849
  %v1937 = vpop.permute.xlu0 %1936
  %v1939 = vmul.f32 %v1937, %v1933
  %v1940 = vmul.f32 %v1937, %v1934
  %v1941 = vadd.f32 %v1842, %v1939
  %v1942 = vadd.f32 %v1843, %v1940
  %1943 = vset.pattern.permute.xlu0 5
  %1944 = vperm.xlu0 %1943, %v1849
  %v1945 = vpop.permute.xlu0 %1944
  %v1947 = vmul.f32 %v1945, %v1931
  %v1948 = vmul.f32 %v1945, %v1932
  %v1949 = vadd.f32 %v1726, %v1947
  %v1950 = vadd.f32 %v1727, %v1948
  %v1951 = vmul.f32 %v1863, -0.04356164
  %v1952 = vmul.f32 %v1864, -0.04356164
  %v1953 = vmul.f32 %v1873, 1.029442
  %v1954 = vmul.f32 %v1874, 1.029442
  %v1955 = vadd.f32 %v1951, %v1953
  %v1956 = vadd.f32 %v1952, %v1954
  %v1957 = vmul.f32 %v1883, 0.036196496
  %v1958 = vmul.f32 %v1884, 0.036196496
  %v1959 = vadd.f32 %v1955, %v1957
  %v1960 = vadd.f32 %v1956, %v1958
  %v1961 = vmul.f32 %v1893, -0.05127991
  %v1962 = vmul.f32 %v1894, -0.05127991
  %v1963 = vadd.f32 %v1959, %v1961
  %v1964 = vadd.f32 %v1960, %v1962
  %v1965 = vmul.f32 %v1911, %v1873
  %v1966 = vmul.f32 %v1911, %v1874
  %v1967 = vsub.f32 %v1965, %v56
  %v1968 = vsub.f32 %v1966, %v60
  %v1969 = vmul.f32 %v1919, %v1963
  %v1970 = vmul.f32 %v1919, %v1964
  %v1971 = vadd.f32 %v1967, %v1969
  %v1972 = vadd.f32 %v1968, %v1970
  %v1973 = vmul.f32 %v1849, -0.10178403
  %1975 = vset.pattern.permute.xlu0 3
  %1976 = vperm.xlu0 %1975, %v1973
  %v1977 = vpop.permute.xlu0 %1976
  %v1979 = vadd.f32 %v1971, %v1977
  %v1980 = vadd.f32 %v1972, %v1977
  %v1981 = vmul.f32 %v1979, %v1979
  %v1982 = vmul.f32 %v1980, %v1980
  %v1983 = vmul.f32 %v1937, %v1981
  %v1984 = vmul.f32 %v1937, %v1982
  %v1985 = vadd.f32 %v1941, %v1983
  %v1986 = vadd.f32 %v1942, %v1984
  %v1987 = vmul.f32 %v1945, %v1979
  %v1988 = vmul.f32 %v1945, %v1980
  %v1989 = vadd.f32 %v1766, %v1987
  %v1990 = vadd.f32 %v1767, %v1988
  %v1991 = vmul.f32 %v1863, 0.0830814
  %v1992 = vmul.f32 %v1864, 0.0830814
  %v1993 = vmul.f32 %v1873, -0.09455126
  %v1994 = vmul.f32 %v1874, -0.09455126
  %v1995 = vadd.f32 %v1991, %v1993
  %v1996 = vadd.f32 %v1992, %v1994
  %v1997 = vmul.f32 %v1883, 0.9355533
  %v1998 = vmul.f32 %v1884, 0.9355533
  %v1999 = vadd.f32 %v1995, %v1997
  %v2000 = vadd.f32 %v1996, %v1998
  %v2001 = vmul.f32 %v1893, 0.0066803456
  %v2002 = vmul.f32 %v1894, 0.0066803456
  %v2003 = vadd.f32 %v1999, %v2001
  %v2004 = vadd.f32 %v2000, %v2002
  %v2005 = vmul.f32 %v1911, %v1883
  %v2006 = vmul.f32 %v1911, %v1884
  %v2007 = vsub.f32 %v2005, %v79
  %v2008 = vsub.f32 %v2006, %v83
  %v2009 = vmul.f32 %v1919, %v2003
  %v2010 = vmul.f32 %v1919, %v2004
  %v2011 = vadd.f32 %v2007, %v2009
  %v2012 = vadd.f32 %v2008, %v2010
  %v2013 = vmul.f32 %v1849, 0.010277212
  %2015 = vset.pattern.permute.xlu0 3
  %2016 = vperm.xlu0 %2015, %v2013
  %v2017 = vpop.permute.xlu0 %2016
  %v2019 = vadd.f32 %v2011, %v2017
  %v2020 = vadd.f32 %v2012, %v2017
  %v2021 = vmul.f32 %v2019, %v2019
  %v2022 = vmul.f32 %v2020, %v2020
  %v2023 = vmul.f32 %v1937, %v2021
  %v2024 = vmul.f32 %v1937, %v2022
  %v2025 = vadd.f32 %v1985, %v2023
  %v2026 = vadd.f32 %v1986, %v2024
  %v2027 = vmul.f32 %v1945, %v2019
  %v2028 = vmul.f32 %v1945, %v2020
  %v2029 = vadd.f32 %v1806, %v2027
  %v2030 = vadd.f32 %v1807, %v2028
  %v2031 = vmul.f32 %v1863, -0.057651963
  %v2032 = vmul.f32 %v1864, -0.057651963
  %v2033 = vmul.f32 %v1873, 0.011964815
  %v2034 = vmul.f32 %v1874, 0.011964815
  %v2035 = vadd.f32 %v2031, %v2033
  %v2036 = vadd.f32 %v2032, %v2034
  %v2037 = vmul.f32 %v1883, 0.08724037
  %v2038 = vmul.f32 %v1884, 0.08724037
  %v2039 = vadd.f32 %v2035, %v2037
  %v2040 = vadd.f32 %v2036, %v2038
  %v2041 = vmul.f32 %v1893, 1.0252509
  %v2042 = vmul.f32 %v1894, 1.0252509
  %v2043 = vadd.f32 %v2039, %v2041
  %v2044 = vadd.f32 %v2040, %v2042
  %v2045 = vmul.f32 %v1911, %v1893
  %v2046 = vmul.f32 %v1911, %v1894
  %v2047 = vsub.f32 %v2045, %v102
  %v2048 = vsub.f32 %v2046, %v106
  %v2049 = vmul.f32 %v1919, %v2043
  %v2050 = vmul.f32 %v1919, %v2044
  %v2051 = vadd.f32 %v2047, %v2049
  %v2052 = vadd.f32 %v2048, %v2050
  %v2053 = vmul.f32 %v1849, -0.01767751
  %2055 = vset.pattern.permute.xlu0 3
  %2056 = vperm.xlu0 %2055, %v2053
  %v2057 = vpop.permute.xlu0 %2056
  %v2059 = vadd.f32 %v2051, %v2057
  %v2060 = vadd.f32 %v2052, %v2057
  %v2061 = vmul.f32 %v2059, %v2059
  %v2062 = vmul.f32 %v2060, %v2060
  %v2063 = vmul.f32 %v1937, %v2061
  %v2064 = vmul.f32 %v1937, %v2062
  %v2065 = vadd.f32 %v2025, %v2063
  %v2066 = vadd.f32 %v2026, %v2064
  %v2067 = vmul.f32 %v1945, %v2059
  %v2068 = vmul.f32 %v1945, %v2060
  %v2069 = vadd.f32 %v1846, %v2067
  %v2070 = vadd.f32 %v1847, %v2068
  %s2071 = scalar_lea.vmem %s0, 72
  %v2072 = vld [vmem:[%s2071] sm:$0xff]
  %s2073 = smul.u32 9, 2
  %s2074 = smul.addr %s2073, 4
  %s2075 = scalar_lea.vmem %s2, %s2074
  %v2076 = vld [vmem:[%s2075] sm:$0xff]
  %v2077 = vunpack.c.l.bf16 %v2076
  %v2078 = vunpack.c.h.bf16 %v2076
  %2080 = vset.pattern.permute.xlu0 0
  %2081 = vperm.xlu0 %2080, %v2072
  %v2082 = vpop.permute.xlu0 %2081
  %v2084 = vmul.f32 %v2077, %v2082
  %v2085 = vmul.f32 %v2078, %v2082
  %v2086 = vadd.f32 %v33, %v2084
  %v2087 = vadd.f32 %v37, %v2085
  %s2088 = sadd.s32 %s2073, 32
  %s2089 = smul.addr %s2088, 4
  %s2090 = scalar_lea.vmem %s2, %s2089
  %v2091 = vld [vmem:[%s2090] sm:$0xff]
  %v2092 = vunpack.c.l.bf16 %v2091
  %v2093 = vunpack.c.h.bf16 %v2091
  %v2094 = vmul.f32 %v2092, %v2082
  %v2095 = vmul.f32 %v2093, %v2082
  %v2096 = vadd.f32 %v56, %v2094
  %v2097 = vadd.f32 %v60, %v2095
  %s2098 = sadd.s32 %s2073, 64
  %s2099 = smul.addr %s2098, 4
  %s2100 = scalar_lea.vmem %s2, %s2099
  %v2101 = vld [vmem:[%s2100] sm:$0xff]
  %v2102 = vunpack.c.l.bf16 %v2101
  %v2103 = vunpack.c.h.bf16 %v2101
  %v2104 = vmul.f32 %v2102, %v2082
  %v2105 = vmul.f32 %v2103, %v2082
  %v2106 = vadd.f32 %v79, %v2104
  %v2107 = vadd.f32 %v83, %v2105
  %s2108 = sadd.s32 %s2073, 96
  %s2109 = smul.addr %s2108, 4
  %s2110 = scalar_lea.vmem %s2, %s2109
  %v2111 = vld [vmem:[%s2110] sm:$0xff]
  %v2112 = vunpack.c.l.bf16 %v2111
  %v2113 = vunpack.c.h.bf16 %v2111
  %v2114 = vmul.f32 %v2112, %v2082
  %v2115 = vmul.f32 %v2113, %v2082
  %v2116 = vadd.f32 %v102, %v2114
  %v2117 = vadd.f32 %v106, %v2115
  %v2118 = vmul.f32 %v2086, 1.0502007
  %v2119 = vmul.f32 %v2087, 1.0502007
  %v2120 = vmul.f32 %v2096, -0.04531686
  %v2121 = vmul.f32 %v2097, -0.04531686
  %v2122 = vadd.f32 %v2118, %v2120
  %v2123 = vadd.f32 %v2119, %v2121
  %v2124 = vmul.f32 %v2106, -0.037408613
  %v2125 = vmul.f32 %v2107, -0.037408613
  %v2126 = vadd.f32 %v2122, %v2124
  %v2127 = vadd.f32 %v2123, %v2125
  %v2128 = vmul.f32 %v2116, -0.058568347
  %v2129 = vmul.f32 %v2117, -0.058568347
  %v2130 = vadd.f32 %v2126, %v2128
  %v2131 = vadd.f32 %v2127, %v2129
  %2132 = vset.pattern.permute.xlu0 1
  %2133 = vperm.xlu0 %2132, %v2072
  %v2134 = vpop.permute.xlu0 %2133
  %v2136 = vmul.f32 %v2134, %v2086
  %v2137 = vmul.f32 %v2134, %v2087
  %v2138 = vsub.f32 %v2136, %v33
  %v2139 = vsub.f32 %v2137, %v37
  %2140 = vset.pattern.permute.xlu0 2
  %2141 = vperm.xlu0 %2140, %v2072
  %v2142 = vpop.permute.xlu0 %2141
  %v2144 = vmul.f32 %v2142, %v2130
  %v2145 = vmul.f32 %v2142, %v2131
  %v2146 = vadd.f32 %v2138, %v2144
  %v2147 = vadd.f32 %v2139, %v2145
  %v2148 = vmul.f32 %v2072, -0.12212279
  %2150 = vset.pattern.permute.xlu0 3
  %2151 = vperm.xlu0 %2150, %v2148
  %v2152 = vpop.permute.xlu0 %2151
  %v2154 = vadd.f32 %v2146, %v2152
  %v2155 = vadd.f32 %v2147, %v2152
  %v2156 = vmul.f32 %v2154, %v2154
  %v2157 = vmul.f32 %v2155, %v2155
  %2158 = vset.pattern.permute.xlu0 4
  %2159 = vperm.xlu0 %2158, %v2072
  %v2160 = vpop.permute.xlu0 %2159
  %v2162 = vmul.f32 %v2160, %v2156
  %v2163 = vmul.f32 %v2160, %v2157
  %v2164 = vadd.f32 %v2065, %v2162
  %v2165 = vadd.f32 %v2066, %v2163
  %2166 = vset.pattern.permute.xlu0 5
  %2167 = vperm.xlu0 %2166, %v2072
  %v2168 = vpop.permute.xlu0 %2167
  %v2170 = vmul.f32 %v2168, %v2154
  %v2171 = vmul.f32 %v2168, %v2155
  %v2172 = vadd.f32 %v1949, %v2170
  %v2173 = vadd.f32 %v1950, %v2171
  %v2174 = vmul.f32 %v2086, -0.04356164
  %v2175 = vmul.f32 %v2087, -0.04356164
  %v2176 = vmul.f32 %v2096, 1.029442
  %v2177 = vmul.f32 %v2097, 1.029442
  %v2178 = vadd.f32 %v2174, %v2176
  %v2179 = vadd.f32 %v2175, %v2177
  %v2180 = vmul.f32 %v2106, 0.036196496
  %v2181 = vmul.f32 %v2107, 0.036196496
  %v2182 = vadd.f32 %v2178, %v2180
  %v2183 = vadd.f32 %v2179, %v2181
  %v2184 = vmul.f32 %v2116, -0.05127991
  %v2185 = vmul.f32 %v2117, -0.05127991
  %v2186 = vadd.f32 %v2182, %v2184
  %v2187 = vadd.f32 %v2183, %v2185
  %v2188 = vmul.f32 %v2134, %v2096
  %v2189 = vmul.f32 %v2134, %v2097
  %v2190 = vsub.f32 %v2188, %v56
  %v2191 = vsub.f32 %v2189, %v60
  %v2192 = vmul.f32 %v2142, %v2186
  %v2193 = vmul.f32 %v2142, %v2187
  %v2194 = vadd.f32 %v2190, %v2192
  %v2195 = vadd.f32 %v2191, %v2193
  %v2196 = vmul.f32 %v2072, -0.10178403
  %2198 = vset.pattern.permute.xlu0 3
  %2199 = vperm.xlu0 %2198, %v2196
  %v2200 = vpop.permute.xlu0 %2199
  %v2202 = vadd.f32 %v2194, %v2200
  %v2203 = vadd.f32 %v2195, %v2200
  %v2204 = vmul.f32 %v2202, %v2202
  %v2205 = vmul.f32 %v2203, %v2203
  %v2206 = vmul.f32 %v2160, %v2204
  %v2207 = vmul.f32 %v2160, %v2205
  %v2208 = vadd.f32 %v2164, %v2206
  %v2209 = vadd.f32 %v2165, %v2207
  %v2210 = vmul.f32 %v2168, %v2202
  %v2211 = vmul.f32 %v2168, %v2203
  %v2212 = vadd.f32 %v1989, %v2210
  %v2213 = vadd.f32 %v1990, %v2211
  %v2214 = vmul.f32 %v2086, 0.0830814
  %v2215 = vmul.f32 %v2087, 0.0830814
  %v2216 = vmul.f32 %v2096, -0.09455126
  %v2217 = vmul.f32 %v2097, -0.09455126
  %v2218 = vadd.f32 %v2214, %v2216
  %v2219 = vadd.f32 %v2215, %v2217
  %v2220 = vmul.f32 %v2106, 0.9355533
  %v2221 = vmul.f32 %v2107, 0.9355533
  %v2222 = vadd.f32 %v2218, %v2220
  %v2223 = vadd.f32 %v2219, %v2221
  %v2224 = vmul.f32 %v2116, 0.0066803456
  %v2225 = vmul.f32 %v2117, 0.0066803456
  %v2226 = vadd.f32 %v2222, %v2224
  %v2227 = vadd.f32 %v2223, %v2225
  %v2228 = vmul.f32 %v2134, %v2106
  %v2229 = vmul.f32 %v2134, %v2107
  %v2230 = vsub.f32 %v2228, %v79
  %v2231 = vsub.f32 %v2229, %v83
  %v2232 = vmul.f32 %v2142, %v2226
  %v2233 = vmul.f32 %v2142, %v2227
  %v2234 = vadd.f32 %v2230, %v2232
  %v2235 = vadd.f32 %v2231, %v2233
  %v2236 = vmul.f32 %v2072, 0.010277212
  %2238 = vset.pattern.permute.xlu0 3
  %2239 = vperm.xlu0 %2238, %v2236
  %v2240 = vpop.permute.xlu0 %2239
  %v2242 = vadd.f32 %v2234, %v2240
  %v2243 = vadd.f32 %v2235, %v2240
  %v2244 = vmul.f32 %v2242, %v2242
  %v2245 = vmul.f32 %v2243, %v2243
  %v2246 = vmul.f32 %v2160, %v2244
  %v2247 = vmul.f32 %v2160, %v2245
  %v2248 = vadd.f32 %v2208, %v2246
  %v2249 = vadd.f32 %v2209, %v2247
  %v2250 = vmul.f32 %v2168, %v2242
  %v2251 = vmul.f32 %v2168, %v2243
  %v2252 = vadd.f32 %v2029, %v2250
  %v2253 = vadd.f32 %v2030, %v2251
  %v2254 = vmul.f32 %v2086, -0.057651963
  %v2255 = vmul.f32 %v2087, -0.057651963
  %v2256 = vmul.f32 %v2096, 0.011964815
  %v2257 = vmul.f32 %v2097, 0.011964815
  %v2258 = vadd.f32 %v2254, %v2256
  %v2259 = vadd.f32 %v2255, %v2257
  %v2260 = vmul.f32 %v2106, 0.08724037
  %v2261 = vmul.f32 %v2107, 0.08724037
  %v2262 = vadd.f32 %v2258, %v2260
  %v2263 = vadd.f32 %v2259, %v2261
  %v2264 = vmul.f32 %v2116, 1.0252509
  %v2265 = vmul.f32 %v2117, 1.0252509
  %v2266 = vadd.f32 %v2262, %v2264
  %v2267 = vadd.f32 %v2263, %v2265
  %v2268 = vmul.f32 %v2134, %v2116
  %v2269 = vmul.f32 %v2134, %v2117
  %v2270 = vsub.f32 %v2268, %v102
  %v2271 = vsub.f32 %v2269, %v106
  %v2272 = vmul.f32 %v2142, %v2266
  %v2273 = vmul.f32 %v2142, %v2267
  %v2274 = vadd.f32 %v2270, %v2272
  %v2275 = vadd.f32 %v2271, %v2273
  %v2276 = vmul.f32 %v2072, -0.01767751
  %2278 = vset.pattern.permute.xlu0 3
  %2279 = vperm.xlu0 %2278, %v2276
  %v2280 = vpop.permute.xlu0 %2279
  %v2282 = vadd.f32 %v2274, %v2280
  %v2283 = vadd.f32 %v2275, %v2280
  %v2284 = vmul.f32 %v2282, %v2282
  %v2285 = vmul.f32 %v2283, %v2283
  %v2286 = vmul.f32 %v2160, %v2284
  %v2287 = vmul.f32 %v2160, %v2285
  %v2288 = vadd.f32 %v2248, %v2286
  %v2289 = vadd.f32 %v2249, %v2287
  %v2290 = vmul.f32 %v2168, %v2282
  %v2291 = vmul.f32 %v2168, %v2283
  %v2292 = vadd.f32 %v2069, %v2290
  %v2293 = vadd.f32 %v2070, %v2291
  %s2294 = scalar_lea.vmem %s0, 80
  %v2295 = vld [vmem:[%s2294] sm:$0xff]
  %s2296 = smul.u32 10, 2
  %s2297 = smul.addr %s2296, 4
  %s2298 = scalar_lea.vmem %s2, %s2297
  %v2299 = vld [vmem:[%s2298] sm:$0xff]
  %v2300 = vunpack.c.l.bf16 %v2299
  %v2301 = vunpack.c.h.bf16 %v2299
  %2303 = vset.pattern.permute.xlu0 0
  %2304 = vperm.xlu0 %2303, %v2295
  %v2305 = vpop.permute.xlu0 %2304
  %v2307 = vmul.f32 %v2300, %v2305
  %v2308 = vmul.f32 %v2301, %v2305
  %v2309 = vadd.f32 %v33, %v2307
  %v2310 = vadd.f32 %v37, %v2308
  %s2311 = sadd.s32 %s2296, 32
  %s2312 = smul.addr %s2311, 4
  %s2313 = scalar_lea.vmem %s2, %s2312
  %v2314 = vld [vmem:[%s2313] sm:$0xff]
  %v2315 = vunpack.c.l.bf16 %v2314
  %v2316 = vunpack.c.h.bf16 %v2314
  %v2317 = vmul.f32 %v2315, %v2305
  %v2318 = vmul.f32 %v2316, %v2305
  %v2319 = vadd.f32 %v56, %v2317
  %v2320 = vadd.f32 %v60, %v2318
  %s2321 = sadd.s32 %s2296, 64
  %s2322 = smul.addr %s2321, 4
  %s2323 = scalar_lea.vmem %s2, %s2322
  %v2324 = vld [vmem:[%s2323] sm:$0xff]
  %v2325 = vunpack.c.l.bf16 %v2324
  %v2326 = vunpack.c.h.bf16 %v2324
  %v2327 = vmul.f32 %v2325, %v2305
  %v2328 = vmul.f32 %v2326, %v2305
  %v2329 = vadd.f32 %v79, %v2327
  %v2330 = vadd.f32 %v83, %v2328
  %s2331 = sadd.s32 %s2296, 96
  %s2332 = smul.addr %s2331, 4
  %s2333 = scalar_lea.vmem %s2, %s2332
  %v2334 = vld [vmem:[%s2333] sm:$0xff]
  %v2335 = vunpack.c.l.bf16 %v2334
  %v2336 = vunpack.c.h.bf16 %v2334
  %v2337 = vmul.f32 %v2335, %v2305
  %v2338 = vmul.f32 %v2336, %v2305
  %v2339 = vadd.f32 %v102, %v2337
  %v2340 = vadd.f32 %v106, %v2338
  %v2341 = vmul.f32 %v2309, 1.0502007
  %v2342 = vmul.f32 %v2310, 1.0502007
  %v2343 = vmul.f32 %v2319, -0.04531686
  %v2344 = vmul.f32 %v2320, -0.04531686
  %v2345 = vadd.f32 %v2341, %v2343
  %v2346 = vadd.f32 %v2342, %v2344
  %v2347 = vmul.f32 %v2329, -0.037408613
  %v2348 = vmul.f32 %v2330, -0.037408613
  %v2349 = vadd.f32 %v2345, %v2347
  %v2350 = vadd.f32 %v2346, %v2348
  %v2351 = vmul.f32 %v2339, -0.058568347
  %v2352 = vmul.f32 %v2340, -0.058568347
  %v2353 = vadd.f32 %v2349, %v2351
  %v2354 = vadd.f32 %v2350, %v2352
  %2355 = vset.pattern.permute.xlu0 1
  %2356 = vperm.xlu0 %2355, %v2295
  %v2357 = vpop.permute.xlu0 %2356
  %v2359 = vmul.f32 %v2357, %v2309
  %v2360 = vmul.f32 %v2357, %v2310
  %v2361 = vsub.f32 %v2359, %v33
  %v2362 = vsub.f32 %v2360, %v37
  %2363 = vset.pattern.permute.xlu0 2
  %2364 = vperm.xlu0 %2363, %v2295
  %v2365 = vpop.permute.xlu0 %2364
  %v2367 = vmul.f32 %v2365, %v2353
  %v2368 = vmul.f32 %v2365, %v2354
  %v2369 = vadd.f32 %v2361, %v2367
  %v2370 = vadd.f32 %v2362, %v2368
  %v2371 = vmul.f32 %v2295, -0.12212279
  %2373 = vset.pattern.permute.xlu0 3
  %2374 = vperm.xlu0 %2373, %v2371
  %v2375 = vpop.permute.xlu0 %2374
  %v2377 = vadd.f32 %v2369, %v2375
  %v2378 = vadd.f32 %v2370, %v2375
  %v2379 = vmul.f32 %v2377, %v2377
  %v2380 = vmul.f32 %v2378, %v2378
  %2381 = vset.pattern.permute.xlu0 4
  %2382 = vperm.xlu0 %2381, %v2295
  %v2383 = vpop.permute.xlu0 %2382
  %v2385 = vmul.f32 %v2383, %v2379
  %v2386 = vmul.f32 %v2383, %v2380
  %v2387 = vadd.f32 %v2288, %v2385
  %v2388 = vadd.f32 %v2289, %v2386
  %2389 = vset.pattern.permute.xlu0 5
  %2390 = vperm.xlu0 %2389, %v2295
  %v2391 = vpop.permute.xlu0 %2390
  %v2393 = vmul.f32 %v2391, %v2377
  %v2394 = vmul.f32 %v2391, %v2378
  %v2395 = vadd.f32 %v2172, %v2393
  %v2396 = vadd.f32 %v2173, %v2394
  %v2397 = vmul.f32 %v2309, -0.04356164
  %v2398 = vmul.f32 %v2310, -0.04356164
  %v2399 = vmul.f32 %v2319, 1.029442
  %v2400 = vmul.f32 %v2320, 1.029442
  %v2401 = vadd.f32 %v2397, %v2399
  %v2402 = vadd.f32 %v2398, %v2400
  %v2403 = vmul.f32 %v2329, 0.036196496
  %v2404 = vmul.f32 %v2330, 0.036196496
  %v2405 = vadd.f32 %v2401, %v2403
  %v2406 = vadd.f32 %v2402, %v2404
  %v2407 = vmul.f32 %v2339, -0.05127991
  %v2408 = vmul.f32 %v2340, -0.05127991
  %v2409 = vadd.f32 %v2405, %v2407
  %v2410 = vadd.f32 %v2406, %v2408
  %v2411 = vmul.f32 %v2357, %v2319
  %v2412 = vmul.f32 %v2357, %v2320
  %v2413 = vsub.f32 %v2411, %v56
  %v2414 = vsub.f32 %v2412, %v60
  %v2415 = vmul.f32 %v2365, %v2409
  %v2416 = vmul.f32 %v2365, %v2410
  %v2417 = vadd.f32 %v2413, %v2415
  %v2418 = vadd.f32 %v2414, %v2416
  %v2419 = vmul.f32 %v2295, -0.10178403
  %2421 = vset.pattern.permute.xlu0 3
  %2422 = vperm.xlu0 %2421, %v2419
  %v2423 = vpop.permute.xlu0 %2422
  %v2425 = vadd.f32 %v2417, %v2423
  %v2426 = vadd.f32 %v2418, %v2423
  %v2427 = vmul.f32 %v2425, %v2425
  %v2428 = vmul.f32 %v2426, %v2426
  %v2429 = vmul.f32 %v2383, %v2427
  %v2430 = vmul.f32 %v2383, %v2428
  %v2431 = vadd.f32 %v2387, %v2429
  %v2432 = vadd.f32 %v2388, %v2430
  %v2433 = vmul.f32 %v2391, %v2425
  %v2434 = vmul.f32 %v2391, %v2426
  %v2435 = vadd.f32 %v2212, %v2433
  %v2436 = vadd.f32 %v2213, %v2434
  %v2437 = vmul.f32 %v2309, 0.0830814
  %v2438 = vmul.f32 %v2310, 0.0830814
  %v2439 = vmul.f32 %v2319, -0.09455126
  %v2440 = vmul.f32 %v2320, -0.09455126
  %v2441 = vadd.f32 %v2437, %v2439
  %v2442 = vadd.f32 %v2438, %v2440
  %v2443 = vmul.f32 %v2329, 0.9355533
  %v2444 = vmul.f32 %v2330, 0.9355533
  %v2445 = vadd.f32 %v2441, %v2443
  %v2446 = vadd.f32 %v2442, %v2444
  %v2447 = vmul.f32 %v2339, 0.0066803456
  %v2448 = vmul.f32 %v2340, 0.0066803456
  %v2449 = vadd.f32 %v2445, %v2447
  %v2450 = vadd.f32 %v2446, %v2448
  %v2451 = vmul.f32 %v2357, %v2329
  %v2452 = vmul.f32 %v2357, %v2330
  %v2453 = vsub.f32 %v2451, %v79
  %v2454 = vsub.f32 %v2452, %v83
  %v2455 = vmul.f32 %v2365, %v2449
  %v2456 = vmul.f32 %v2365, %v2450
  %v2457 = vadd.f32 %v2453, %v2455
  %v2458 = vadd.f32 %v2454, %v2456
  %v2459 = vmul.f32 %v2295, 0.010277212
  %2461 = vset.pattern.permute.xlu0 3
  %2462 = vperm.xlu0 %2461, %v2459
  %v2463 = vpop.permute.xlu0 %2462
  %v2465 = vadd.f32 %v2457, %v2463
  %v2466 = vadd.f32 %v2458, %v2463
  %v2467 = vmul.f32 %v2465, %v2465
  %v2468 = vmul.f32 %v2466, %v2466
  %v2469 = vmul.f32 %v2383, %v2467
  %v2470 = vmul.f32 %v2383, %v2468
  %v2471 = vadd.f32 %v2431, %v2469
  %v2472 = vadd.f32 %v2432, %v2470
  %v2473 = vmul.f32 %v2391, %v2465
  %v2474 = vmul.f32 %v2391, %v2466
  %v2475 = vadd.f32 %v2252, %v2473
  %v2476 = vadd.f32 %v2253, %v2474
  %v2477 = vmul.f32 %v2309, -0.057651963
  %v2478 = vmul.f32 %v2310, -0.057651963
  %v2479 = vmul.f32 %v2319, 0.011964815
  %v2480 = vmul.f32 %v2320, 0.011964815
  %v2481 = vadd.f32 %v2477, %v2479
  %v2482 = vadd.f32 %v2478, %v2480
  %v2483 = vmul.f32 %v2329, 0.08724037
  %v2484 = vmul.f32 %v2330, 0.08724037
  %v2485 = vadd.f32 %v2481, %v2483
  %v2486 = vadd.f32 %v2482, %v2484
  %v2487 = vmul.f32 %v2339, 1.0252509
  %v2488 = vmul.f32 %v2340, 1.0252509
  %v2489 = vadd.f32 %v2485, %v2487
  %v2490 = vadd.f32 %v2486, %v2488
  %v2491 = vmul.f32 %v2357, %v2339
  %v2492 = vmul.f32 %v2357, %v2340
  %v2493 = vsub.f32 %v2491, %v102
  %v2494 = vsub.f32 %v2492, %v106
  %v2495 = vmul.f32 %v2365, %v2489
  %v2496 = vmul.f32 %v2365, %v2490
  %v2497 = vadd.f32 %v2493, %v2495
  %v2498 = vadd.f32 %v2494, %v2496
  %v2499 = vmul.f32 %v2295, -0.01767751
  %2501 = vset.pattern.permute.xlu0 3
  %2502 = vperm.xlu0 %2501, %v2499
  %v2503 = vpop.permute.xlu0 %2502
  %v2505 = vadd.f32 %v2497, %v2503
  %v2506 = vadd.f32 %v2498, %v2503
  %v2507 = vmul.f32 %v2505, %v2505
  %v2508 = vmul.f32 %v2506, %v2506
  %v2509 = vmul.f32 %v2383, %v2507
  %v2510 = vmul.f32 %v2383, %v2508
  %v2511 = vadd.f32 %v2471, %v2509
  %v2512 = vadd.f32 %v2472, %v2510
  %v2513 = vmul.f32 %v2391, %v2505
  %v2514 = vmul.f32 %v2391, %v2506
  %v2515 = vadd.f32 %v2292, %v2513
  %v2516 = vadd.f32 %v2293, %v2514
  %s2517 = scalar_lea.vmem %s0, 88
  %v2518 = vld [vmem:[%s2517] sm:$0xff]
  %s2519 = smul.u32 11, 2
  %s2520 = smul.addr %s2519, 4
  %s2521 = scalar_lea.vmem %s2, %s2520
  %v2522 = vld [vmem:[%s2521] sm:$0xff]
  %v2523 = vunpack.c.l.bf16 %v2522
  %v2524 = vunpack.c.h.bf16 %v2522
  %2526 = vset.pattern.permute.xlu0 0
  %2527 = vperm.xlu0 %2526, %v2518
  %v2528 = vpop.permute.xlu0 %2527
  %v2530 = vmul.f32 %v2523, %v2528
  %v2531 = vmul.f32 %v2524, %v2528
  %v2532 = vadd.f32 %v33, %v2530
  %v2533 = vadd.f32 %v37, %v2531
  %s2534 = sadd.s32 %s2519, 32
  %s2535 = smul.addr %s2534, 4
  %s2536 = scalar_lea.vmem %s2, %s2535
  %v2537 = vld [vmem:[%s2536] sm:$0xff]
  %v2538 = vunpack.c.l.bf16 %v2537
  %v2539 = vunpack.c.h.bf16 %v2537
  %v2540 = vmul.f32 %v2538, %v2528
  %v2541 = vmul.f32 %v2539, %v2528
  %v2542 = vadd.f32 %v56, %v2540
  %v2543 = vadd.f32 %v60, %v2541
  %s2544 = sadd.s32 %s2519, 64
  %s2545 = smul.addr %s2544, 4
  %s2546 = scalar_lea.vmem %s2, %s2545
  %v2547 = vld [vmem:[%s2546] sm:$0xff]
  %v2548 = vunpack.c.l.bf16 %v2547
  %v2549 = vunpack.c.h.bf16 %v2547
  %v2550 = vmul.f32 %v2548, %v2528
  %v2551 = vmul.f32 %v2549, %v2528
  %v2552 = vadd.f32 %v79, %v2550
  %v2553 = vadd.f32 %v83, %v2551
  %s2554 = sadd.s32 %s2519, 96
  %s2555 = smul.addr %s2554, 4
  %s2556 = scalar_lea.vmem %s2, %s2555
  %v2557 = vld [vmem:[%s2556] sm:$0xff]
  %v2558 = vunpack.c.l.bf16 %v2557
  %v2559 = vunpack.c.h.bf16 %v2557
  %v2560 = vmul.f32 %v2558, %v2528
  %v2561 = vmul.f32 %v2559, %v2528
  %v2562 = vadd.f32 %v102, %v2560
  %v2563 = vadd.f32 %v106, %v2561
  %v2564 = vmul.f32 %v2532, 1.0502007
  %v2565 = vmul.f32 %v2533, 1.0502007
  %v2566 = vmul.f32 %v2542, -0.04531686
  %v2567 = vmul.f32 %v2543, -0.04531686
  %v2568 = vadd.f32 %v2564, %v2566
  %v2569 = vadd.f32 %v2565, %v2567
  %v2570 = vmul.f32 %v2552, -0.037408613
  %v2571 = vmul.f32 %v2553, -0.037408613
  %v2572 = vadd.f32 %v2568, %v2570
  %v2573 = vadd.f32 %v2569, %v2571
  %v2574 = vmul.f32 %v2562, -0.058568347
  %v2575 = vmul.f32 %v2563, -0.058568347
  %v2576 = vadd.f32 %v2572, %v2574
  %v2577 = vadd.f32 %v2573, %v2575
  %2578 = vset.pattern.permute.xlu0 1
  %2579 = vperm.xlu0 %2578, %v2518
  %v2580 = vpop.permute.xlu0 %2579
  %v2582 = vmul.f32 %v2580, %v2532
  %v2583 = vmul.f32 %v2580, %v2533
  %v2584 = vsub.f32 %v2582, %v33
  %v2585 = vsub.f32 %v2583, %v37
  %2586 = vset.pattern.permute.xlu0 2
  %2587 = vperm.xlu0 %2586, %v2518
  %v2588 = vpop.permute.xlu0 %2587
  %v2590 = vmul.f32 %v2588, %v2576
  %v2591 = vmul.f32 %v2588, %v2577
  %v2592 = vadd.f32 %v2584, %v2590
  %v2593 = vadd.f32 %v2585, %v2591
  %v2594 = vmul.f32 %v2518, -0.12212279
  %2596 = vset.pattern.permute.xlu0 3
  %2597 = vperm.xlu0 %2596, %v2594
  %v2598 = vpop.permute.xlu0 %2597
  %v2600 = vadd.f32 %v2592, %v2598
  %v2601 = vadd.f32 %v2593, %v2598
  %v2602 = vmul.f32 %v2600, %v2600
  %v2603 = vmul.f32 %v2601, %v2601
  %2604 = vset.pattern.permute.xlu0 4
  %2605 = vperm.xlu0 %2604, %v2518
  %v2606 = vpop.permute.xlu0 %2605
  %v2608 = vmul.f32 %v2606, %v2602
  %v2609 = vmul.f32 %v2606, %v2603
  %v2610 = vadd.f32 %v2511, %v2608
  %v2611 = vadd.f32 %v2512, %v2609
  %2612 = vset.pattern.permute.xlu0 5
  %2613 = vperm.xlu0 %2612, %v2518
  %v2614 = vpop.permute.xlu0 %2613
  %v2616 = vmul.f32 %v2614, %v2600
  %v2617 = vmul.f32 %v2614, %v2601
  %v2618 = vadd.f32 %v2395, %v2616
  %v2619 = vadd.f32 %v2396, %v2617
  %v2620 = vmul.f32 %v2532, -0.04356164
  %v2621 = vmul.f32 %v2533, -0.04356164
  %v2622 = vmul.f32 %v2542, 1.029442
  %v2623 = vmul.f32 %v2543, 1.029442
  %v2624 = vadd.f32 %v2620, %v2622
  %v2625 = vadd.f32 %v2621, %v2623
  %v2626 = vmul.f32 %v2552, 0.036196496
  %v2627 = vmul.f32 %v2553, 0.036196496
  %v2628 = vadd.f32 %v2624, %v2626
  %v2629 = vadd.f32 %v2625, %v2627
  %v2630 = vmul.f32 %v2562, -0.05127991
  %v2631 = vmul.f32 %v2563, -0.05127991
  %v2632 = vadd.f32 %v2628, %v2630
  %v2633 = vadd.f32 %v2629, %v2631
  %v2634 = vmul.f32 %v2580, %v2542
  %v2635 = vmul.f32 %v2580, %v2543
  %v2636 = vsub.f32 %v2634, %v56
  %v2637 = vsub.f32 %v2635, %v60
  %v2638 = vmul.f32 %v2588, %v2632
  %v2639 = vmul.f32 %v2588, %v2633
  %v2640 = vadd.f32 %v2636, %v2638
  %v2641 = vadd.f32 %v2637, %v2639
  %v2642 = vmul.f32 %v2518, -0.10178403
  %2644 = vset.pattern.permute.xlu0 3
  %2645 = vperm.xlu0 %2644, %v2642
  %v2646 = vpop.permute.xlu0 %2645
  %v2648 = vadd.f32 %v2640, %v2646
  %v2649 = vadd.f32 %v2641, %v2646
  %v2650 = vmul.f32 %v2648, %v2648
  %v2651 = vmul.f32 %v2649, %v2649
  %v2652 = vmul.f32 %v2606, %v2650
  %v2653 = vmul.f32 %v2606, %v2651
  %v2654 = vadd.f32 %v2610, %v2652
  %v2655 = vadd.f32 %v2611, %v2653
  %v2656 = vmul.f32 %v2614, %v2648
  %v2657 = vmul.f32 %v2614, %v2649
  %v2658 = vadd.f32 %v2435, %v2656
  %v2659 = vadd.f32 %v2436, %v2657
  %v2660 = vmul.f32 %v2532, 0.0830814
  %v2661 = vmul.f32 %v2533, 0.0830814
  %v2662 = vmul.f32 %v2542, -0.09455126
  %v2663 = vmul.f32 %v2543, -0.09455126
  %v2664 = vadd.f32 %v2660, %v2662
  %v2665 = vadd.f32 %v2661, %v2663
  %v2666 = vmul.f32 %v2552, 0.9355533
  %v2667 = vmul.f32 %v2553, 0.9355533
  %v2668 = vadd.f32 %v2664, %v2666
  %v2669 = vadd.f32 %v2665, %v2667
  %v2670 = vmul.f32 %v2562, 0.0066803456
  %v2671 = vmul.f32 %v2563, 0.0066803456
  %v2672 = vadd.f32 %v2668, %v2670
  %v2673 = vadd.f32 %v2669, %v2671
  %v2674 = vmul.f32 %v2580, %v2552
  %v2675 = vmul.f32 %v2580, %v2553
  %v2676 = vsub.f32 %v2674, %v79
  %v2677 = vsub.f32 %v2675, %v83
  %v2678 = vmul.f32 %v2588, %v2672
  %v2679 = vmul.f32 %v2588, %v2673
  %v2680 = vadd.f32 %v2676, %v2678
  %v2681 = vadd.f32 %v2677, %v2679
  %v2682 = vmul.f32 %v2518, 0.010277212
  %2684 = vset.pattern.permute.xlu0 3
  %2685 = vperm.xlu0 %2684, %v2682
  %v2686 = vpop.permute.xlu0 %2685
  %v2688 = vadd.f32 %v2680, %v2686
  %v2689 = vadd.f32 %v2681, %v2686
  %v2690 = vmul.f32 %v2688, %v2688
  %v2691 = vmul.f32 %v2689, %v2689
  %v2692 = vmul.f32 %v2606, %v2690
  %v2693 = vmul.f32 %v2606, %v2691
  %v2694 = vadd.f32 %v2654, %v2692
  %v2695 = vadd.f32 %v2655, %v2693
  %v2696 = vmul.f32 %v2614, %v2688
  %v2697 = vmul.f32 %v2614, %v2689
  %v2698 = vadd.f32 %v2475, %v2696
  %v2699 = vadd.f32 %v2476, %v2697
  %v2700 = vmul.f32 %v2532, -0.057651963
  %v2701 = vmul.f32 %v2533, -0.057651963
  %v2702 = vmul.f32 %v2542, 0.011964815
  %v2703 = vmul.f32 %v2543, 0.011964815
  %v2704 = vadd.f32 %v2700, %v2702
  %v2705 = vadd.f32 %v2701, %v2703
  %v2706 = vmul.f32 %v2552, 0.08724037
  %v2707 = vmul.f32 %v2553, 0.08724037
  %v2708 = vadd.f32 %v2704, %v2706
  %v2709 = vadd.f32 %v2705, %v2707
  %v2710 = vmul.f32 %v2562, 1.0252509
  %v2711 = vmul.f32 %v2563, 1.0252509
  %v2712 = vadd.f32 %v2708, %v2710
  %v2713 = vadd.f32 %v2709, %v2711
  %v2714 = vmul.f32 %v2580, %v2562
  %v2715 = vmul.f32 %v2580, %v2563
  %v2716 = vsub.f32 %v2714, %v102
  %v2717 = vsub.f32 %v2715, %v106
  %v2718 = vmul.f32 %v2588, %v2712
  %v2719 = vmul.f32 %v2588, %v2713
  %v2720 = vadd.f32 %v2716, %v2718
  %v2721 = vadd.f32 %v2717, %v2719
  %v2722 = vmul.f32 %v2518, -0.01767751
  %2724 = vset.pattern.permute.xlu0 3
  %2725 = vperm.xlu0 %2724, %v2722
  %v2726 = vpop.permute.xlu0 %2725
  %v2728 = vadd.f32 %v2720, %v2726
  %v2729 = vadd.f32 %v2721, %v2726
  %v2730 = vmul.f32 %v2728, %v2728
  %v2731 = vmul.f32 %v2729, %v2729
  %v2732 = vmul.f32 %v2606, %v2730
  %v2733 = vmul.f32 %v2606, %v2731
  %v2734 = vadd.f32 %v2694, %v2732
  %v2735 = vadd.f32 %v2695, %v2733
  %v2736 = vmul.f32 %v2614, %v2728
  %v2737 = vmul.f32 %v2614, %v2729
  %v2738 = vadd.f32 %v2515, %v2736
  %v2739 = vadd.f32 %v2516, %v2737
  %s2740 = scalar_lea.vmem %s0, 96
  %v2741 = vld [vmem:[%s2740] sm:$0xff]
  %s2742 = smul.u32 12, 2
  %s2743 = smul.addr %s2742, 4
  %s2744 = scalar_lea.vmem %s2, %s2743
  %v2745 = vld [vmem:[%s2744] sm:$0xff]
  %v2746 = vunpack.c.l.bf16 %v2745
  %v2747 = vunpack.c.h.bf16 %v2745
  %2749 = vset.pattern.permute.xlu0 0
  %2750 = vperm.xlu0 %2749, %v2741
  %v2751 = vpop.permute.xlu0 %2750
  %v2753 = vmul.f32 %v2746, %v2751
  %v2754 = vmul.f32 %v2747, %v2751
  %v2755 = vadd.f32 %v33, %v2753
  %v2756 = vadd.f32 %v37, %v2754
  %s2757 = sadd.s32 %s2742, 32
  %s2758 = smul.addr %s2757, 4
  %s2759 = scalar_lea.vmem %s2, %s2758
  %v2760 = vld [vmem:[%s2759] sm:$0xff]
  %v2761 = vunpack.c.l.bf16 %v2760
  %v2762 = vunpack.c.h.bf16 %v2760
  %v2763 = vmul.f32 %v2761, %v2751
  %v2764 = vmul.f32 %v2762, %v2751
  %v2765 = vadd.f32 %v56, %v2763
  %v2766 = vadd.f32 %v60, %v2764
  %s2767 = sadd.s32 %s2742, 64
  %s2768 = smul.addr %s2767, 4
  %s2769 = scalar_lea.vmem %s2, %s2768
  %v2770 = vld [vmem:[%s2769] sm:$0xff]
  %v2771 = vunpack.c.l.bf16 %v2770
  %v2772 = vunpack.c.h.bf16 %v2770
  %v2773 = vmul.f32 %v2771, %v2751
  %v2774 = vmul.f32 %v2772, %v2751
  %v2775 = vadd.f32 %v79, %v2773
  %v2776 = vadd.f32 %v83, %v2774
  %s2777 = sadd.s32 %s2742, 96
  %s2778 = smul.addr %s2777, 4
  %s2779 = scalar_lea.vmem %s2, %s2778
  %v2780 = vld [vmem:[%s2779] sm:$0xff]
  %v2781 = vunpack.c.l.bf16 %v2780
  %v2782 = vunpack.c.h.bf16 %v2780
  %v2783 = vmul.f32 %v2781, %v2751
  %v2784 = vmul.f32 %v2782, %v2751
  %v2785 = vadd.f32 %v102, %v2783
  %v2786 = vadd.f32 %v106, %v2784
  %v2787 = vmul.f32 %v2755, 1.0502007
  %v2788 = vmul.f32 %v2756, 1.0502007
  %v2789 = vmul.f32 %v2765, -0.04531686
  %v2790 = vmul.f32 %v2766, -0.04531686
  %v2791 = vadd.f32 %v2787, %v2789
  %v2792 = vadd.f32 %v2788, %v2790
  %v2793 = vmul.f32 %v2775, -0.037408613
  %v2794 = vmul.f32 %v2776, -0.037408613
  %v2795 = vadd.f32 %v2791, %v2793
  %v2796 = vadd.f32 %v2792, %v2794
  %v2797 = vmul.f32 %v2785, -0.058568347
  %v2798 = vmul.f32 %v2786, -0.058568347
  %v2799 = vadd.f32 %v2795, %v2797
  %v2800 = vadd.f32 %v2796, %v2798
  %2801 = vset.pattern.permute.xlu0 1
  %2802 = vperm.xlu0 %2801, %v2741
  %v2803 = vpop.permute.xlu0 %2802
  %v2805 = vmul.f32 %v2803, %v2755
  %v2806 = vmul.f32 %v2803, %v2756
  %v2807 = vsub.f32 %v2805, %v33
  %v2808 = vsub.f32 %v2806, %v37
  %2809 = vset.pattern.permute.xlu0 2
  %2810 = vperm.xlu0 %2809, %v2741
  %v2811 = vpop.permute.xlu0 %2810
  %v2813 = vmul.f32 %v2811, %v2799
  %v2814 = vmul.f32 %v2811, %v2800
  %v2815 = vadd.f32 %v2807, %v2813
  %v2816 = vadd.f32 %v2808, %v2814
  %v2817 = vmul.f32 %v2741, -0.12212279
  %2819 = vset.pattern.permute.xlu0 3
  %2820 = vperm.xlu0 %2819, %v2817
  %v2821 = vpop.permute.xlu0 %2820
  %v2823 = vadd.f32 %v2815, %v2821
  %v2824 = vadd.f32 %v2816, %v2821
  %v2825 = vmul.f32 %v2823, %v2823
  %v2826 = vmul.f32 %v2824, %v2824
  %2827 = vset.pattern.permute.xlu0 4
  %2828 = vperm.xlu0 %2827, %v2741
  %v2829 = vpop.permute.xlu0 %2828
  %v2831 = vmul.f32 %v2829, %v2825
  %v2832 = vmul.f32 %v2829, %v2826
  %v2833 = vadd.f32 %v2734, %v2831
  %v2834 = vadd.f32 %v2735, %v2832
  %2835 = vset.pattern.permute.xlu0 5
  %2836 = vperm.xlu0 %2835, %v2741
  %v2837 = vpop.permute.xlu0 %2836
  %v2839 = vmul.f32 %v2837, %v2823
  %v2840 = vmul.f32 %v2837, %v2824
  %v2841 = vadd.f32 %v2618, %v2839
  %v2842 = vadd.f32 %v2619, %v2840
  %v2843 = vmul.f32 %v2755, -0.04356164
  %v2844 = vmul.f32 %v2756, -0.04356164
  %v2845 = vmul.f32 %v2765, 1.029442
  %v2846 = vmul.f32 %v2766, 1.029442
  %v2847 = vadd.f32 %v2843, %v2845
  %v2848 = vadd.f32 %v2844, %v2846
  %v2849 = vmul.f32 %v2775, 0.036196496
  %v2850 = vmul.f32 %v2776, 0.036196496
  %v2851 = vadd.f32 %v2847, %v2849
  %v2852 = vadd.f32 %v2848, %v2850
  %v2853 = vmul.f32 %v2785, -0.05127991
  %v2854 = vmul.f32 %v2786, -0.05127991
  %v2855 = vadd.f32 %v2851, %v2853
  %v2856 = vadd.f32 %v2852, %v2854
  %v2857 = vmul.f32 %v2803, %v2765
  %v2858 = vmul.f32 %v2803, %v2766
  %v2859 = vsub.f32 %v2857, %v56
  %v2860 = vsub.f32 %v2858, %v60
  %v2861 = vmul.f32 %v2811, %v2855
  %v2862 = vmul.f32 %v2811, %v2856
  %v2863 = vadd.f32 %v2859, %v2861
  %v2864 = vadd.f32 %v2860, %v2862
  %v2865 = vmul.f32 %v2741, -0.10178403
  %2867 = vset.pattern.permute.xlu0 3
  %2868 = vperm.xlu0 %2867, %v2865
  %v2869 = vpop.permute.xlu0 %2868
  %v2871 = vadd.f32 %v2863, %v2869
  %v2872 = vadd.f32 %v2864, %v2869
  %v2873 = vmul.f32 %v2871, %v2871
  %v2874 = vmul.f32 %v2872, %v2872
  %v2875 = vmul.f32 %v2829, %v2873
  %v2876 = vmul.f32 %v2829, %v2874
  %v2877 = vadd.f32 %v2833, %v2875
  %v2878 = vadd.f32 %v2834, %v2876
  %v2879 = vmul.f32 %v2837, %v2871
  %v2880 = vmul.f32 %v2837, %v2872
  %v2881 = vadd.f32 %v2658, %v2879
  %v2882 = vadd.f32 %v2659, %v2880
  %v2883 = vmul.f32 %v2755, 0.0830814
  %v2884 = vmul.f32 %v2756, 0.0830814
  %v2885 = vmul.f32 %v2765, -0.09455126
  %v2886 = vmul.f32 %v2766, -0.09455126
  %v2887 = vadd.f32 %v2883, %v2885
  %v2888 = vadd.f32 %v2884, %v2886
  %v2889 = vmul.f32 %v2775, 0.9355533
  %v2890 = vmul.f32 %v2776, 0.9355533
  %v2891 = vadd.f32 %v2887, %v2889
  %v2892 = vadd.f32 %v2888, %v2890
  %v2893 = vmul.f32 %v2785, 0.0066803456
  %v2894 = vmul.f32 %v2786, 0.0066803456
  %v2895 = vadd.f32 %v2891, %v2893
  %v2896 = vadd.f32 %v2892, %v2894
  %v2897 = vmul.f32 %v2803, %v2775
  %v2898 = vmul.f32 %v2803, %v2776
  %v2899 = vsub.f32 %v2897, %v79
  %v2900 = vsub.f32 %v2898, %v83
  %v2901 = vmul.f32 %v2811, %v2895
  %v2902 = vmul.f32 %v2811, %v2896
  %v2903 = vadd.f32 %v2899, %v2901
  %v2904 = vadd.f32 %v2900, %v2902
  %v2905 = vmul.f32 %v2741, 0.010277212
  %2907 = vset.pattern.permute.xlu0 3
  %2908 = vperm.xlu0 %2907, %v2905
  %v2909 = vpop.permute.xlu0 %2908
  %v2911 = vadd.f32 %v2903, %v2909
  %v2912 = vadd.f32 %v2904, %v2909
  %v2913 = vmul.f32 %v2911, %v2911
  %v2914 = vmul.f32 %v2912, %v2912
  %v2915 = vmul.f32 %v2829, %v2913
  %v2916 = vmul.f32 %v2829, %v2914
  %v2917 = vadd.f32 %v2877, %v2915
  %v2918 = vadd.f32 %v2878, %v2916
  %v2919 = vmul.f32 %v2837, %v2911
  %v2920 = vmul.f32 %v2837, %v2912
  %v2921 = vadd.f32 %v2698, %v2919
  %v2922 = vadd.f32 %v2699, %v2920
  %v2923 = vmul.f32 %v2755, -0.057651963
  %v2924 = vmul.f32 %v2756, -0.057651963
  %v2925 = vmul.f32 %v2765, 0.011964815
  %v2926 = vmul.f32 %v2766, 0.011964815
  %v2927 = vadd.f32 %v2923, %v2925
  %v2928 = vadd.f32 %v2924, %v2926
  %v2929 = vmul.f32 %v2775, 0.08724037
  %v2930 = vmul.f32 %v2776, 0.08724037
  %v2931 = vadd.f32 %v2927, %v2929
  %v2932 = vadd.f32 %v2928, %v2930
  %v2933 = vmul.f32 %v2785, 1.0252509
  %v2934 = vmul.f32 %v2786, 1.0252509
  %v2935 = vadd.f32 %v2931, %v2933
  %v2936 = vadd.f32 %v2932, %v2934
  %v2937 = vmul.f32 %v2803, %v2785
  %v2938 = vmul.f32 %v2803, %v2786
  %v2939 = vsub.f32 %v2937, %v102
  %v2940 = vsub.f32 %v2938, %v106
  %v2941 = vmul.f32 %v2811, %v2935
  %v2942 = vmul.f32 %v2811, %v2936
  %v2943 = vadd.f32 %v2939, %v2941
  %v2944 = vadd.f32 %v2940, %v2942
  %v2945 = vmul.f32 %v2741, -0.01767751
  %2947 = vset.pattern.permute.xlu0 3
  %2948 = vperm.xlu0 %2947, %v2945
  %v2949 = vpop.permute.xlu0 %2948
  %v2951 = vadd.f32 %v2943, %v2949
  %v2952 = vadd.f32 %v2944, %v2949
  %v2953 = vmul.f32 %v2951, %v2951
  %v2954 = vmul.f32 %v2952, %v2952
  %v2955 = vmul.f32 %v2829, %v2953
  %v2956 = vmul.f32 %v2829, %v2954
  %v2957 = vadd.f32 %v2917, %v2955
  %v2958 = vadd.f32 %v2918, %v2956
  %v2959 = vmul.f32 %v2837, %v2951
  %v2960 = vmul.f32 %v2837, %v2952
  %v2961 = vadd.f32 %v2738, %v2959
  %v2962 = vadd.f32 %v2739, %v2960
  %s2963 = scalar_lea.vmem %s0, 104
  %v2964 = vld [vmem:[%s2963] sm:$0xff]
  %s2965 = smul.u32 13, 2
  %s2966 = smul.addr %s2965, 4
  %s2967 = scalar_lea.vmem %s2, %s2966
  %v2968 = vld [vmem:[%s2967] sm:$0xff]
  %v2969 = vunpack.c.l.bf16 %v2968
  %v2970 = vunpack.c.h.bf16 %v2968
  %2972 = vset.pattern.permute.xlu0 0
  %2973 = vperm.xlu0 %2972, %v2964
  %v2974 = vpop.permute.xlu0 %2973
  %v2976 = vmul.f32 %v2969, %v2974
  %v2977 = vmul.f32 %v2970, %v2974
  %v2978 = vadd.f32 %v33, %v2976
  %v2979 = vadd.f32 %v37, %v2977
  %s2980 = sadd.s32 %s2965, 32
  %s2981 = smul.addr %s2980, 4
  %s2982 = scalar_lea.vmem %s2, %s2981
  %v2983 = vld [vmem:[%s2982] sm:$0xff]
  %v2984 = vunpack.c.l.bf16 %v2983
  %v2985 = vunpack.c.h.bf16 %v2983
  %v2986 = vmul.f32 %v2984, %v2974
  %v2987 = vmul.f32 %v2985, %v2974
  %v2988 = vadd.f32 %v56, %v2986
  %v2989 = vadd.f32 %v60, %v2987
  %s2990 = sadd.s32 %s2965, 64
  %s2991 = smul.addr %s2990, 4
  %s2992 = scalar_lea.vmem %s2, %s2991
  %v2993 = vld [vmem:[%s2992] sm:$0xff]
  %v2994 = vunpack.c.l.bf16 %v2993
  %v2995 = vunpack.c.h.bf16 %v2993
  %v2996 = vmul.f32 %v2994, %v2974
  %v2997 = vmul.f32 %v2995, %v2974
  %v2998 = vadd.f32 %v79, %v2996
  %v2999 = vadd.f32 %v83, %v2997
  %s3000 = sadd.s32 %s2965, 96
  %s3001 = smul.addr %s3000, 4
  %s3002 = scalar_lea.vmem %s2, %s3001
  %v3003 = vld [vmem:[%s3002] sm:$0xff]
  %v3004 = vunpack.c.l.bf16 %v3003
  %v3005 = vunpack.c.h.bf16 %v3003
  %v3006 = vmul.f32 %v3004, %v2974
  %v3007 = vmul.f32 %v3005, %v2974
  %v3008 = vadd.f32 %v102, %v3006
  %v3009 = vadd.f32 %v106, %v3007
  %v3010 = vmul.f32 %v2978, 1.0502007
  %v3011 = vmul.f32 %v2979, 1.0502007
  %v3012 = vmul.f32 %v2988, -0.04531686
  %v3013 = vmul.f32 %v2989, -0.04531686
  %v3014 = vadd.f32 %v3010, %v3012
  %v3015 = vadd.f32 %v3011, %v3013
  %v3016 = vmul.f32 %v2998, -0.037408613
  %v3017 = vmul.f32 %v2999, -0.037408613
  %v3018 = vadd.f32 %v3014, %v3016
  %v3019 = vadd.f32 %v3015, %v3017
  %v3020 = vmul.f32 %v3008, -0.058568347
  %v3021 = vmul.f32 %v3009, -0.058568347
  %v3022 = vadd.f32 %v3018, %v3020
  %v3023 = vadd.f32 %v3019, %v3021
  %3024 = vset.pattern.permute.xlu0 1
  %3025 = vperm.xlu0 %3024, %v2964
  %v3026 = vpop.permute.xlu0 %3025
  %v3028 = vmul.f32 %v3026, %v2978
  %v3029 = vmul.f32 %v3026, %v2979
  %v3030 = vsub.f32 %v3028, %v33
  %v3031 = vsub.f32 %v3029, %v37
  %3032 = vset.pattern.permute.xlu0 2
  %3033 = vperm.xlu0 %3032, %v2964
  %v3034 = vpop.permute.xlu0 %3033
  %v3036 = vmul.f32 %v3034, %v3022
  %v3037 = vmul.f32 %v3034, %v3023
  %v3038 = vadd.f32 %v3030, %v3036
  %v3039 = vadd.f32 %v3031, %v3037
  %v3040 = vmul.f32 %v2964, -0.12212279
  %3042 = vset.pattern.permute.xlu0 3
  %3043 = vperm.xlu0 %3042, %v3040
  %v3044 = vpop.permute.xlu0 %3043
  %v3046 = vadd.f32 %v3038, %v3044
  %v3047 = vadd.f32 %v3039, %v3044
  %v3048 = vmul.f32 %v3046, %v3046
  %v3049 = vmul.f32 %v3047, %v3047
  %3050 = vset.pattern.permute.xlu0 4
  %3051 = vperm.xlu0 %3050, %v2964
  %v3052 = vpop.permute.xlu0 %3051
  %v3054 = vmul.f32 %v3052, %v3048
  %v3055 = vmul.f32 %v3052, %v3049
  %v3056 = vadd.f32 %v2957, %v3054
  %v3057 = vadd.f32 %v2958, %v3055
  %3058 = vset.pattern.permute.xlu0 5
  %3059 = vperm.xlu0 %3058, %v2964
  %v3060 = vpop.permute.xlu0 %3059
  %v3062 = vmul.f32 %v3060, %v3046
  %v3063 = vmul.f32 %v3060, %v3047
  %v3064 = vadd.f32 %v2841, %v3062
  %v3065 = vadd.f32 %v2842, %v3063
  %v3066 = vmul.f32 %v2978, -0.04356164
  %v3067 = vmul.f32 %v2979, -0.04356164
  %v3068 = vmul.f32 %v2988, 1.029442
  %v3069 = vmul.f32 %v2989, 1.029442
  %v3070 = vadd.f32 %v3066, %v3068
  %v3071 = vadd.f32 %v3067, %v3069
  %v3072 = vmul.f32 %v2998, 0.036196496
  %v3073 = vmul.f32 %v2999, 0.036196496
  %v3074 = vadd.f32 %v3070, %v3072
  %v3075 = vadd.f32 %v3071, %v3073
  %v3076 = vmul.f32 %v3008, -0.05127991
  %v3077 = vmul.f32 %v3009, -0.05127991
  %v3078 = vadd.f32 %v3074, %v3076
  %v3079 = vadd.f32 %v3075, %v3077
  %v3080 = vmul.f32 %v3026, %v2988
  %v3081 = vmul.f32 %v3026, %v2989
  %v3082 = vsub.f32 %v3080, %v56
  %v3083 = vsub.f32 %v3081, %v60
  %v3084 = vmul.f32 %v3034, %v3078
  %v3085 = vmul.f32 %v3034, %v3079
  %v3086 = vadd.f32 %v3082, %v3084
  %v3087 = vadd.f32 %v3083, %v3085
  %v3088 = vmul.f32 %v2964, -0.10178403
  %3090 = vset.pattern.permute.xlu0 3
  %3091 = vperm.xlu0 %3090, %v3088
  %v3092 = vpop.permute.xlu0 %3091
  %v3094 = vadd.f32 %v3086, %v3092
  %v3095 = vadd.f32 %v3087, %v3092
  %v3096 = vmul.f32 %v3094, %v3094
  %v3097 = vmul.f32 %v3095, %v3095
  %v3098 = vmul.f32 %v3052, %v3096
  %v3099 = vmul.f32 %v3052, %v3097
  %v3100 = vadd.f32 %v3056, %v3098
  %v3101 = vadd.f32 %v3057, %v3099
  %v3102 = vmul.f32 %v3060, %v3094
  %v3103 = vmul.f32 %v3060, %v3095
  %v3104 = vadd.f32 %v2881, %v3102
  %v3105 = vadd.f32 %v2882, %v3103
  %v3106 = vmul.f32 %v2978, 0.0830814
  %v3107 = vmul.f32 %v2979, 0.0830814
  %v3108 = vmul.f32 %v2988, -0.09455126
  %v3109 = vmul.f32 %v2989, -0.09455126
  %v3110 = vadd.f32 %v3106, %v3108
  %v3111 = vadd.f32 %v3107, %v3109
  %v3112 = vmul.f32 %v2998, 0.9355533
  %v3113 = vmul.f32 %v2999, 0.9355533
  %v3114 = vadd.f32 %v3110, %v3112
  %v3115 = vadd.f32 %v3111, %v3113
  %v3116 = vmul.f32 %v3008, 0.0066803456
  %v3117 = vmul.f32 %v3009, 0.0066803456
  %v3118 = vadd.f32 %v3114, %v3116
  %v3119 = vadd.f32 %v3115, %v3117
  %v3120 = vmul.f32 %v3026, %v2998
  %v3121 = vmul.f32 %v3026, %v2999
  %v3122 = vsub.f32 %v3120, %v79
  %v3123 = vsub.f32 %v3121, %v83
  %v3124 = vmul.f32 %v3034, %v3118
  %v3125 = vmul.f32 %v3034, %v3119
  %v3126 = vadd.f32 %v3122, %v3124
  %v3127 = vadd.f32 %v3123, %v3125
  %v3128 = vmul.f32 %v2964, 0.010277212
  %3130 = vset.pattern.permute.xlu0 3
  %3131 = vperm.xlu0 %3130, %v3128
  %v3132 = vpop.permute.xlu0 %3131
  %v3134 = vadd.f32 %v3126, %v3132
  %v3135 = vadd.f32 %v3127, %v3132
  %v3136 = vmul.f32 %v3134, %v3134
  %v3137 = vmul.f32 %v3135, %v3135
  %v3138 = vmul.f32 %v3052, %v3136
  %v3139 = vmul.f32 %v3052, %v3137
  %v3140 = vadd.f32 %v3100, %v3138
  %v3141 = vadd.f32 %v3101, %v3139
  %v3142 = vmul.f32 %v3060, %v3134
  %v3143 = vmul.f32 %v3060, %v3135
  %v3144 = vadd.f32 %v2921, %v3142
  %v3145 = vadd.f32 %v2922, %v3143
  %v3146 = vmul.f32 %v2978, -0.057651963
  %v3147 = vmul.f32 %v2979, -0.057651963
  %v3148 = vmul.f32 %v2988, 0.011964815
  %v3149 = vmul.f32 %v2989, 0.011964815
  %v3150 = vadd.f32 %v3146, %v3148
  %v3151 = vadd.f32 %v3147, %v3149
  %v3152 = vmul.f32 %v2998, 0.08724037
  %v3153 = vmul.f32 %v2999, 0.08724037
  %v3154 = vadd.f32 %v3150, %v3152
  %v3155 = vadd.f32 %v3151, %v3153
  %v3156 = vmul.f32 %v3008, 1.0252509
  %v3157 = vmul.f32 %v3009, 1.0252509
  %v3158 = vadd.f32 %v3154, %v3156
  %v3159 = vadd.f32 %v3155, %v3157
  %v3160 = vmul.f32 %v3026, %v3008
  %v3161 = vmul.f32 %v3026, %v3009
  %v3162 = vsub.f32 %v3160, %v102
  %v3163 = vsub.f32 %v3161, %v106
  %v3164 = vmul.f32 %v3034, %v3158
  %v3165 = vmul.f32 %v3034, %v3159
  %v3166 = vadd.f32 %v3162, %v3164
  %v3167 = vadd.f32 %v3163, %v3165
  %v3168 = vmul.f32 %v2964, -0.01767751
  %3170 = vset.pattern.permute.xlu0 3
  %3171 = vperm.xlu0 %3170, %v3168
  %v3172 = vpop.permute.xlu0 %3171
  %v3174 = vadd.f32 %v3166, %v3172
  %v3175 = vadd.f32 %v3167, %v3172
  %v3176 = vmul.f32 %v3174, %v3174
  %v3177 = vmul.f32 %v3175, %v3175
  %v3178 = vmul.f32 %v3052, %v3176
  %v3179 = vmul.f32 %v3052, %v3177
  %v3180 = vadd.f32 %v3140, %v3178
  %v3181 = vadd.f32 %v3141, %v3179
  %v3182 = vmul.f32 %v3060, %v3174
  %v3183 = vmul.f32 %v3060, %v3175
  %v3184 = vadd.f32 %v2961, %v3182
  %v3185 = vadd.f32 %v2962, %v3183
  %s3186 = scalar_lea.vmem %s0, 112
  %v3187 = vld [vmem:[%s3186] sm:$0xff]
  %s3188 = smul.u32 14, 2
  %s3189 = smul.addr %s3188, 4
  %s3190 = scalar_lea.vmem %s2, %s3189
  %v3191 = vld [vmem:[%s3190] sm:$0xff]
  %v3192 = vunpack.c.l.bf16 %v3191
  %v3193 = vunpack.c.h.bf16 %v3191
  %3195 = vset.pattern.permute.xlu0 0
  %3196 = vperm.xlu0 %3195, %v3187
  %v3197 = vpop.permute.xlu0 %3196
  %v3199 = vmul.f32 %v3192, %v3197
  %v3200 = vmul.f32 %v3193, %v3197
  %v3201 = vadd.f32 %v33, %v3199
  %v3202 = vadd.f32 %v37, %v3200
  %s3203 = sadd.s32 %s3188, 32
  %s3204 = smul.addr %s3203, 4
  %s3205 = scalar_lea.vmem %s2, %s3204
  %v3206 = vld [vmem:[%s3205] sm:$0xff]
  %v3207 = vunpack.c.l.bf16 %v3206
  %v3208 = vunpack.c.h.bf16 %v3206
  %v3209 = vmul.f32 %v3207, %v3197
  %v3210 = vmul.f32 %v3208, %v3197
  %v3211 = vadd.f32 %v56, %v3209
  %v3212 = vadd.f32 %v60, %v3210
  %s3213 = sadd.s32 %s3188, 64
  %s3214 = smul.addr %s3213, 4
  %s3215 = scalar_lea.vmem %s2, %s3214
  %v3216 = vld [vmem:[%s3215] sm:$0xff]
  %v3217 = vunpack.c.l.bf16 %v3216
  %v3218 = vunpack.c.h.bf16 %v3216
  %v3219 = vmul.f32 %v3217, %v3197
  %v3220 = vmul.f32 %v3218, %v3197
  %v3221 = vadd.f32 %v79, %v3219
  %v3222 = vadd.f32 %v83, %v3220
  %s3223 = sadd.s32 %s3188, 96
  %s3224 = smul.addr %s3223, 4
  %s3225 = scalar_lea.vmem %s2, %s3224
  %v3226 = vld [vmem:[%s3225] sm:$0xff]
  %v3227 = vunpack.c.l.bf16 %v3226
  %v3228 = vunpack.c.h.bf16 %v3226
  %v3229 = vmul.f32 %v3227, %v3197
  %v3230 = vmul.f32 %v3228, %v3197
  %v3231 = vadd.f32 %v102, %v3229
  %v3232 = vadd.f32 %v106, %v3230
  %v3233 = vmul.f32 %v3201, 1.0502007
  %v3234 = vmul.f32 %v3202, 1.0502007
  %v3235 = vmul.f32 %v3211, -0.04531686
  %v3236 = vmul.f32 %v3212, -0.04531686
  %v3237 = vadd.f32 %v3233, %v3235
  %v3238 = vadd.f32 %v3234, %v3236
  %v3239 = vmul.f32 %v3221, -0.037408613
  %v3240 = vmul.f32 %v3222, -0.037408613
  %v3241 = vadd.f32 %v3237, %v3239
  %v3242 = vadd.f32 %v3238, %v3240
  %v3243 = vmul.f32 %v3231, -0.058568347
  %v3244 = vmul.f32 %v3232, -0.058568347
  %v3245 = vadd.f32 %v3241, %v3243
  %v3246 = vadd.f32 %v3242, %v3244
  %3247 = vset.pattern.permute.xlu0 1
  %3248 = vperm.xlu0 %3247, %v3187
  %v3249 = vpop.permute.xlu0 %3248
  %v3251 = vmul.f32 %v3249, %v3201
  %v3252 = vmul.f32 %v3249, %v3202
  %v3253 = vsub.f32 %v3251, %v33
  %v3254 = vsub.f32 %v3252, %v37
  %3255 = vset.pattern.permute.xlu0 2
  %3256 = vperm.xlu0 %3255, %v3187
  %v3257 = vpop.permute.xlu0 %3256
  %v3259 = vmul.f32 %v3257, %v3245
  %v3260 = vmul.f32 %v3257, %v3246
  %v3261 = vadd.f32 %v3253, %v3259
  %v3262 = vadd.f32 %v3254, %v3260
  %v3263 = vmul.f32 %v3187, -0.12212279
  %3265 = vset.pattern.permute.xlu0 3
  %3266 = vperm.xlu0 %3265, %v3263
  %v3267 = vpop.permute.xlu0 %3266
  %v3269 = vadd.f32 %v3261, %v3267
  %v3270 = vadd.f32 %v3262, %v3267
  %v3271 = vmul.f32 %v3269, %v3269
  %v3272 = vmul.f32 %v3270, %v3270
  %3273 = vset.pattern.permute.xlu0 4
  %3274 = vperm.xlu0 %3273, %v3187
  %v3275 = vpop.permute.xlu0 %3274
  %v3277 = vmul.f32 %v3275, %v3271
  %v3278 = vmul.f32 %v3275, %v3272
  %v3279 = vadd.f32 %v3180, %v3277
  %v3280 = vadd.f32 %v3181, %v3278
  %3281 = vset.pattern.permute.xlu0 5
  %3282 = vperm.xlu0 %3281, %v3187
  %v3283 = vpop.permute.xlu0 %3282
  %v3285 = vmul.f32 %v3283, %v3269
  %v3286 = vmul.f32 %v3283, %v3270
  %v3287 = vadd.f32 %v3064, %v3285
  %v3288 = vadd.f32 %v3065, %v3286
  %v3289 = vmul.f32 %v3201, -0.04356164
  %v3290 = vmul.f32 %v3202, -0.04356164
  %v3291 = vmul.f32 %v3211, 1.029442
  %v3292 = vmul.f32 %v3212, 1.029442
  %v3293 = vadd.f32 %v3289, %v3291
  %v3294 = vadd.f32 %v3290, %v3292
  %v3295 = vmul.f32 %v3221, 0.036196496
  %v3296 = vmul.f32 %v3222, 0.036196496
  %v3297 = vadd.f32 %v3293, %v3295
  %v3298 = vadd.f32 %v3294, %v3296
  %v3299 = vmul.f32 %v3231, -0.05127991
  %v3300 = vmul.f32 %v3232, -0.05127991
  %v3301 = vadd.f32 %v3297, %v3299
  %v3302 = vadd.f32 %v3298, %v3300
  %v3303 = vmul.f32 %v3249, %v3211
  %v3304 = vmul.f32 %v3249, %v3212
  %v3305 = vsub.f32 %v3303, %v56
  %v3306 = vsub.f32 %v3304, %v60
  %v3307 = vmul.f32 %v3257, %v3301
  %v3308 = vmul.f32 %v3257, %v3302
  %v3309 = vadd.f32 %v3305, %v3307
  %v3310 = vadd.f32 %v3306, %v3308
  %v3311 = vmul.f32 %v3187, -0.10178403
  %3313 = vset.pattern.permute.xlu0 3
  %3314 = vperm.xlu0 %3313, %v3311
  %v3315 = vpop.permute.xlu0 %3314
  %v3317 = vadd.f32 %v3309, %v3315
  %v3318 = vadd.f32 %v3310, %v3315
  %v3319 = vmul.f32 %v3317, %v3317
  %v3320 = vmul.f32 %v3318, %v3318
  %v3321 = vmul.f32 %v3275, %v3319
  %v3322 = vmul.f32 %v3275, %v3320
  %v3323 = vadd.f32 %v3279, %v3321
  %v3324 = vadd.f32 %v3280, %v3322
  %v3325 = vmul.f32 %v3283, %v3317
  %v3326 = vmul.f32 %v3283, %v3318
  %v3327 = vadd.f32 %v3104, %v3325
  %v3328 = vadd.f32 %v3105, %v3326
  %v3329 = vmul.f32 %v3201, 0.0830814
  %v3330 = vmul.f32 %v3202, 0.0830814
  %v3331 = vmul.f32 %v3211, -0.09455126
  %v3332 = vmul.f32 %v3212, -0.09455126
  %v3333 = vadd.f32 %v3329, %v3331
  %v3334 = vadd.f32 %v3330, %v3332
  %v3335 = vmul.f32 %v3221, 0.9355533
  %v3336 = vmul.f32 %v3222, 0.9355533
  %v3337 = vadd.f32 %v3333, %v3335
  %v3338 = vadd.f32 %v3334, %v3336
  %v3339 = vmul.f32 %v3231, 0.0066803456
  %v3340 = vmul.f32 %v3232, 0.0066803456
  %v3341 = vadd.f32 %v3337, %v3339
  %v3342 = vadd.f32 %v3338, %v3340
  %v3343 = vmul.f32 %v3249, %v3221
  %v3344 = vmul.f32 %v3249, %v3222
  %v3345 = vsub.f32 %v3343, %v79
  %v3346 = vsub.f32 %v3344, %v83
  %v3347 = vmul.f32 %v3257, %v3341
  %v3348 = vmul.f32 %v3257, %v3342
  %v3349 = vadd.f32 %v3345, %v3347
  %v3350 = vadd.f32 %v3346, %v3348
  %v3351 = vmul.f32 %v3187, 0.010277212
  %3353 = vset.pattern.permute.xlu0 3
  %3354 = vperm.xlu0 %3353, %v3351
  %v3355 = vpop.permute.xlu0 %3354
  %v3357 = vadd.f32 %v3349, %v3355
  %v3358 = vadd.f32 %v3350, %v3355
  %v3359 = vmul.f32 %v3357, %v3357
  %v3360 = vmul.f32 %v3358, %v3358
  %v3361 = vmul.f32 %v3275, %v3359
  %v3362 = vmul.f32 %v3275, %v3360
  %v3363 = vadd.f32 %v3323, %v3361
  %v3364 = vadd.f32 %v3324, %v3362
  %v3365 = vmul.f32 %v3283, %v3357
  %v3366 = vmul.f32 %v3283, %v3358
  %v3367 = vadd.f32 %v3144, %v3365
  %v3368 = vadd.f32 %v3145, %v3366
  %v3369 = vmul.f32 %v3201, -0.057651963
  %v3370 = vmul.f32 %v3202, -0.057651963
  %v3371 = vmul.f32 %v3211, 0.011964815
  %v3372 = vmul.f32 %v3212, 0.011964815
  %v3373 = vadd.f32 %v3369, %v3371
  %v3374 = vadd.f32 %v3370, %v3372
  %v3375 = vmul.f32 %v3221, 0.08724037
  %v3376 = vmul.f32 %v3222, 0.08724037
  %v3377 = vadd.f32 %v3373, %v3375
  %v3378 = vadd.f32 %v3374, %v3376
  %v3379 = vmul.f32 %v3231, 1.0252509
  %v3380 = vmul.f32 %v3232, 1.0252509
  %v3381 = vadd.f32 %v3377, %v3379
  %v3382 = vadd.f32 %v3378, %v3380
  %v3383 = vmul.f32 %v3249, %v3231
  %v3384 = vmul.f32 %v3249, %v3232
  %v3385 = vsub.f32 %v3383, %v102
  %v3386 = vsub.f32 %v3384, %v106
  %v3387 = vmul.f32 %v3257, %v3381
  %v3388 = vmul.f32 %v3257, %v3382
  %v3389 = vadd.f32 %v3385, %v3387
  %v3390 = vadd.f32 %v3386, %v3388
  %v3391 = vmul.f32 %v3187, -0.01767751
  %3393 = vset.pattern.permute.xlu0 3
  %3394 = vperm.xlu0 %3393, %v3391
  %v3395 = vpop.permute.xlu0 %3394
  %v3397 = vadd.f32 %v3389, %v3395
  %v3398 = vadd.f32 %v3390, %v3395
  %v3399 = vmul.f32 %v3397, %v3397
  %v3400 = vmul.f32 %v3398, %v3398
  %v3401 = vmul.f32 %v3275, %v3399
  %v3402 = vmul.f32 %v3275, %v3400
  %v3403 = vadd.f32 %v3363, %v3401
  %v3404 = vadd.f32 %v3364, %v3402
  %v3405 = vmul.f32 %v3283, %v3397
  %v3406 = vmul.f32 %v3283, %v3398
  %v3407 = vadd.f32 %v3184, %v3405
  %v3408 = vadd.f32 %v3185, %v3406
  %s3409 = scalar_lea.vmem %s0, 120
  %v3410 = vld [vmem:[%s3409] sm:$0xff]
  %s3411 = smul.u32 15, 2
  %s3412 = smul.addr %s3411, 4
  %s3413 = scalar_lea.vmem %s2, %s3412
  %v3414 = vld [vmem:[%s3413] sm:$0xff]
  %v3415 = vunpack.c.l.bf16 %v3414
  %v3416 = vunpack.c.h.bf16 %v3414
  %3418 = vset.pattern.permute.xlu0 0
  %3419 = vperm.xlu0 %3418, %v3410
  %v3420 = vpop.permute.xlu0 %3419
  %v3422 = vmul.f32 %v3415, %v3420
  %v3423 = vmul.f32 %v3416, %v3420
  %v3424 = vadd.f32 %v33, %v3422
  %v3425 = vadd.f32 %v37, %v3423
  %s3426 = sadd.s32 %s3411, 32
  %s3427 = smul.addr %s3426, 4
  %s3428 = scalar_lea.vmem %s2, %s3427
  %v3429 = vld [vmem:[%s3428] sm:$0xff]
  %v3430 = vunpack.c.l.bf16 %v3429
  %v3431 = vunpack.c.h.bf16 %v3429
  %v3432 = vmul.f32 %v3430, %v3420
  %v3433 = vmul.f32 %v3431, %v3420
  %v3434 = vadd.f32 %v56, %v3432
  %v3435 = vadd.f32 %v60, %v3433
  %s3436 = sadd.s32 %s3411, 64
  %s3437 = smul.addr %s3436, 4
  %s3438 = scalar_lea.vmem %s2, %s3437
  %v3439 = vld [vmem:[%s3438] sm:$0xff]
  %v3440 = vunpack.c.l.bf16 %v3439
  %v3441 = vunpack.c.h.bf16 %v3439
  %v3442 = vmul.f32 %v3440, %v3420
  %v3443 = vmul.f32 %v3441, %v3420
  %v3444 = vadd.f32 %v79, %v3442
  %v3445 = vadd.f32 %v83, %v3443
  %s3446 = sadd.s32 %s3411, 96
  %s3447 = smul.addr %s3446, 4
  %s3448 = scalar_lea.vmem %s2, %s3447
  %v3449 = vld [vmem:[%s3448] sm:$0xff]
  %v3450 = vunpack.c.l.bf16 %v3449
  %v3451 = vunpack.c.h.bf16 %v3449
  %v3452 = vmul.f32 %v3450, %v3420
  %v3453 = vmul.f32 %v3451, %v3420
  %v3454 = vadd.f32 %v102, %v3452
  %v3455 = vadd.f32 %v106, %v3453
  %v3456 = vmul.f32 %v3424, 1.0502007
  %v3457 = vmul.f32 %v3425, 1.0502007
  %v3458 = vmul.f32 %v3434, -0.04531686
  %v3459 = vmul.f32 %v3435, -0.04531686
  %v3460 = vadd.f32 %v3456, %v3458
  %v3461 = vadd.f32 %v3457, %v3459
  %v3462 = vmul.f32 %v3444, -0.037408613
  %v3463 = vmul.f32 %v3445, -0.037408613
  %v3464 = vadd.f32 %v3460, %v3462
  %v3465 = vadd.f32 %v3461, %v3463
  %v3466 = vmul.f32 %v3454, -0.058568347
  %v3467 = vmul.f32 %v3455, -0.058568347
  %v3468 = vadd.f32 %v3464, %v3466
  %v3469 = vadd.f32 %v3465, %v3467
  %3470 = vset.pattern.permute.xlu0 1
  %3471 = vperm.xlu0 %3470, %v3410
  %v3472 = vpop.permute.xlu0 %3471
  %v3474 = vmul.f32 %v3472, %v3424
  %v3475 = vmul.f32 %v3472, %v3425
  %v3476 = vsub.f32 %v3474, %v33
  %v3477 = vsub.f32 %v3475, %v37
  %3478 = vset.pattern.permute.xlu0 2
  %3479 = vperm.xlu0 %3478, %v3410
  %v3480 = vpop.permute.xlu0 %3479
  %v3482 = vmul.f32 %v3480, %v3468
  %v3483 = vmul.f32 %v3480, %v3469
  %v3484 = vadd.f32 %v3476, %v3482
  %v3485 = vadd.f32 %v3477, %v3483
  %v3486 = vmul.f32 %v3410, -0.12212279
  %3488 = vset.pattern.permute.xlu0 3
  %3489 = vperm.xlu0 %3488, %v3486
  %v3490 = vpop.permute.xlu0 %3489
  %v3492 = vadd.f32 %v3484, %v3490
  %v3493 = vadd.f32 %v3485, %v3490
  %v3494 = vmul.f32 %v3492, %v3492
  %v3495 = vmul.f32 %v3493, %v3493
  %3496 = vset.pattern.permute.xlu0 4
  %3497 = vperm.xlu0 %3496, %v3410
  %v3498 = vpop.permute.xlu0 %3497
  %v3500 = vmul.f32 %v3498, %v3494
  %v3501 = vmul.f32 %v3498, %v3495
  %v3502 = vadd.f32 %v3403, %v3500
  %v3503 = vadd.f32 %v3404, %v3501
  %3504 = vset.pattern.permute.xlu0 5
  %3505 = vperm.xlu0 %3504, %v3410
  %v3506 = vpop.permute.xlu0 %3505
  %v3508 = vmul.f32 %v3506, %v3492
  %v3509 = vmul.f32 %v3506, %v3493
  %v3510 = vadd.f32 %v3287, %v3508
  %v3511 = vadd.f32 %v3288, %v3509
  %v3512 = vmul.f32 %v3424, -0.04356164
  %v3513 = vmul.f32 %v3425, -0.04356164
  %v3514 = vmul.f32 %v3434, 1.029442
  %v3515 = vmul.f32 %v3435, 1.029442
  %v3516 = vadd.f32 %v3512, %v3514
  %v3517 = vadd.f32 %v3513, %v3515
  %v3518 = vmul.f32 %v3444, 0.036196496
  %v3519 = vmul.f32 %v3445, 0.036196496
  %v3520 = vadd.f32 %v3516, %v3518
  %v3521 = vadd.f32 %v3517, %v3519
  %v3522 = vmul.f32 %v3454, -0.05127991
  %v3523 = vmul.f32 %v3455, -0.05127991
  %v3524 = vadd.f32 %v3520, %v3522
  %v3525 = vadd.f32 %v3521, %v3523
  %v3526 = vmul.f32 %v3472, %v3434
  %v3527 = vmul.f32 %v3472, %v3435
  %v3528 = vsub.f32 %v3526, %v56
  %v3529 = vsub.f32 %v3527, %v60
  %v3530 = vmul.f32 %v3480, %v3524
  %v3531 = vmul.f32 %v3480, %v3525
  %v3532 = vadd.f32 %v3528, %v3530
  %v3533 = vadd.f32 %v3529, %v3531
  %v3534 = vmul.f32 %v3410, -0.10178403
  %3536 = vset.pattern.permute.xlu0 3
  %3537 = vperm.xlu0 %3536, %v3534
  %v3538 = vpop.permute.xlu0 %3537
  %v3540 = vadd.f32 %v3532, %v3538
  %v3541 = vadd.f32 %v3533, %v3538
  %v3542 = vmul.f32 %v3540, %v3540
  %v3543 = vmul.f32 %v3541, %v3541
  %v3544 = vmul.f32 %v3498, %v3542
  %v3545 = vmul.f32 %v3498, %v3543
  %v3546 = vadd.f32 %v3502, %v3544
  %v3547 = vadd.f32 %v3503, %v3545
  %v3548 = vmul.f32 %v3506, %v3540
  %v3549 = vmul.f32 %v3506, %v3541
  %v3550 = vadd.f32 %v3327, %v3548
  %v3551 = vadd.f32 %v3328, %v3549
  %v3552 = vmul.f32 %v3424, 0.0830814
  %v3553 = vmul.f32 %v3425, 0.0830814
  %v3554 = vmul.f32 %v3434, -0.09455126
  %v3555 = vmul.f32 %v3435, -0.09455126
  %v3556 = vadd.f32 %v3552, %v3554
  %v3557 = vadd.f32 %v3553, %v3555
  %v3558 = vmul.f32 %v3444, 0.9355533
  %v3559 = vmul.f32 %v3445, 0.9355533
  %v3560 = vadd.f32 %v3556, %v3558
  %v3561 = vadd.f32 %v3557, %v3559
  %v3562 = vmul.f32 %v3454, 0.0066803456
  %v3563 = vmul.f32 %v3455, 0.0066803456
  %v3564 = vadd.f32 %v3560, %v3562
  %v3565 = vadd.f32 %v3561, %v3563
  %v3566 = vmul.f32 %v3472, %v3444
  %v3567 = vmul.f32 %v3472, %v3445
  %v3568 = vsub.f32 %v3566, %v79
  %v3569 = vsub.f32 %v3567, %v83
  %v3570 = vmul.f32 %v3480, %v3564
  %v3571 = vmul.f32 %v3480, %v3565
  %v3572 = vadd.f32 %v3568, %v3570
  %v3573 = vadd.f32 %v3569, %v3571
  %v3574 = vmul.f32 %v3410, 0.010277212
  %3576 = vset.pattern.permute.xlu0 3
  %3577 = vperm.xlu0 %3576, %v3574
  %v3578 = vpop.permute.xlu0 %3577
  %v3580 = vadd.f32 %v3572, %v3578
  %v3581 = vadd.f32 %v3573, %v3578
  %v3582 = vmul.f32 %v3580, %v3580
  %v3583 = vmul.f32 %v3581, %v3581
  %v3584 = vmul.f32 %v3498, %v3582
  %v3585 = vmul.f32 %v3498, %v3583
  %v3586 = vadd.f32 %v3546, %v3584
  %v3587 = vadd.f32 %v3547, %v3585
  %v3588 = vmul.f32 %v3506, %v3580
  %v3589 = vmul.f32 %v3506, %v3581
  %v3590 = vadd.f32 %v3367, %v3588
  %v3591 = vadd.f32 %v3368, %v3589
  %v3592 = vmul.f32 %v3424, -0.057651963
  %v3593 = vmul.f32 %v3425, -0.057651963
  %v3594 = vmul.f32 %v3434, 0.011964815
  %v3595 = vmul.f32 %v3435, 0.011964815
  %v3596 = vadd.f32 %v3592, %v3594
  %v3597 = vadd.f32 %v3593, %v3595
  %v3598 = vmul.f32 %v3444, 0.08724037
  %v3599 = vmul.f32 %v3445, 0.08724037
  %v3600 = vadd.f32 %v3596, %v3598
  %v3601 = vadd.f32 %v3597, %v3599
  %v3602 = vmul.f32 %v3454, 1.0252509
  %v3603 = vmul.f32 %v3455, 1.0252509
  %v3604 = vadd.f32 %v3600, %v3602
  %v3605 = vadd.f32 %v3601, %v3603
  %v3606 = vmul.f32 %v3472, %v3454
  %v3607 = vmul.f32 %v3472, %v3455
  %v3608 = vsub.f32 %v3606, %v102
  %v3609 = vsub.f32 %v3607, %v106
  %v3610 = vmul.f32 %v3480, %v3604
  %v3611 = vmul.f32 %v3480, %v3605
  %v3612 = vadd.f32 %v3608, %v3610
  %v3613 = vadd.f32 %v3609, %v3611
  %v3614 = vmul.f32 %v3410, -0.01767751
  %3616 = vset.pattern.permute.xlu0 3
  %3617 = vperm.xlu0 %3616, %v3614
  %v3618 = vpop.permute.xlu0 %3617
  %v3620 = vadd.f32 %v3612, %v3618
  %v3621 = vadd.f32 %v3613, %v3618
  %v3622 = vmul.f32 %v3620, %v3620
  %v3623 = vmul.f32 %v3621, %v3621
  %v3624 = vmul.f32 %v3498, %v3622
  %v3625 = vmul.f32 %v3498, %v3623
  %v3626 = vadd.f32 %v3586, %v3624
  %v3627 = vadd.f32 %v3587, %v3625
  %v3628 = vmul.f32 %v3506, %v3620
  %v3629 = vmul.f32 %v3506, %v3621
  %v3630 = vadd.f32 %v3407, %v3628
  %v3631 = vadd.f32 %v3408, %v3629
  %3632 = vst [vmem:[%s3] sm:$0xff] %v3626
  %3633 = vst [vmem:[%s3 + $0x8] sm:$0xff] %v3627
  %3634 = vst [vmem:[%s3 + $0x10] sm:$0xff] %v3510
  %3635 = vst [vmem:[%s3 + $0x18] sm:$0xff] %v3511
  %3636 = vst [vmem:[%s3 + $0x20] sm:$0xff] %v3550
  %3637 = vst [vmem:[%s3 + $0x28] sm:$0xff] %v3551
  %3638 = vst [vmem:[%s3 + $0x30] sm:$0xff] %v3590
  %3639 = vst [vmem:[%s3 + $0x38] sm:$0xff] %v3591
  %3640 = vst [vmem:[%s3 + $0x40] sm:$0xff] %v3630
  %3641 = vst [vmem:[%s3 + $0x48] sm:$0xff] %v3631
  // Predicated region
  $region14: #{_forward_impl.1} parent=0 // pred_check
    _
  $region15: #{_forward_impl.1} parent=0 // pred_check_branch
    %3643 = sbr.rel (0) target = $region17
  $region16: #{_forward_impl.1} parent=0 // pred_region
    _
  $region17: #{_forward_impl.1} parent=0 // pred_fallthru
    _
  // Predicated region
  $region18: #{_forward_impl.1} parent=0 // pred_check
    _
  $region19: #{_forward_impl.1} parent=0 // pred_check_branch
    %3645 = sbr.rel (0) target = $region21
  $region20: #{_forward_impl.1} parent=0 // pred_region
    _
  $region21: #{_forward_impl.1} parent=0 // pred_fallthru
    _

</llo_original>
